<compile_context>
chip_gen: v6e
topology: v6e:2x2x1
jax: 0.10.0
libtpu: 0.0.40
codegen_flags: <defaults>
</compile_context>

<pallas_src>
import functools
import math

import jax
import jax.numpy as jnp
from jax.experimental import pallas as pl
from jax.experimental.pallas import tpu as pltpu

_VMEM_LIMIT = 56 * 1024 * 1024   # safe on v5e/v6e (128 MiB) and v7x (64 MiB physical)
_EPS_BN = 1e-5


# ---------------------------------------------------------------------------
# Tiling helpers
# ---------------------------------------------------------------------------
def _pick_cout_tile(c_out):
    # Up to 256 output rows per tile: fills the 256-wide v6e/v7x MXU output dim.
    for t in (256, 128, 64, 32, 16, 8):
        if c_out % t == 0:
            return t
    return c_out


def _cols_budget(depth_rows, t_co, cols_cap):
    # ~12 MiB working set per grid step (streamed inputs + f32 acc + bf16 out).
    budget = (12 << 20) // max(1, 8 * t_co + 8 * depth_rows)
    budget = max(budget, 256)
    if cols_cap is not None:
        budget = min(budget, cols_cap)
    return budget


def _pick_cols_tile(n_cols, batch, budget_cols):
    # Lane tiles must be a multiple of lcm(B, 128) (BlockSpec rule + group-aligned
    # halos); otherwise fall back to a single full-width tile.
    base = (batch * 128) // math.gcd(batch, 128)
    if n_cols % base != 0:
        return n_cols
    units = n_cols // base
    k_hi = max(1, min(units, budget_cols // base))
    for k in range(k_hi, 0, -1):
        if units % k == 0:
            return k * base
    return n_cols


# ---------------------------------------------------------------------------
# Kernels
# ---------------------------------------------------------------------------
def _accum_bn_stats(y, s_ref, q_ref, acc_s, acc_q):
    """Accumulate per-channel sum / sum-of-squares across the inner N axis."""
    j = pl.program_id(1)

    @pl.when(j == 0)
    def _():
        acc_s[...] = jnp.zeros_like(acc_s)
        acc_q[...] = jnp.zeros_like(acc_q)

    acc_s[...] += jnp.sum(y, axis=1, keepdims=True)
    acc_q[...] += jnp.sum(y * y, axis=1, keepdims=True)

    @pl.when(j == pl.num_programs(1) - 1)
    def _():
        s_ref[...] = acc_s[...]
        q_ref[...] = acc_q[...]


def _conv_taps_stats_kernel(me_ref, mo_ref, he_ref, ho_ref, w_ref, b_ref,
                            y_ref, s_ref, q_ref, acc_s, acc_q,
                            *, batch, k_taps):
    """Per-tap accumulation conv (C_in >= 8): 15 MXU matmuls of depth C_in."""
    c_in = me_ref.shape[0]
    tn = me_ref.shape[1]
    # main tile + 7-group halo -> every tap is a static in-window slice
    win_e = jnp.concatenate([me_ref[...], he_ref[0]], axis=1)   # (C_in, tn + 7B)
    win_o = jnp.concatenate([mo_ref[...], ho_ref[0]], axis=1)

    acc = None
    for k in range(k_taps):
        off = (k // 2) * batch
        src = win_e if (k % 2 == 0) else win_o
        xk = src[:, off:off + tn]                               # (C_in, tn)
        wk = w_ref[:, k * c_in:(k + 1) * c_in]                  # (t_co, C_in)
        d = jnp.dot(wk, xk, preferred_element_type=jnp.float32)
        acc = d if acc is None else acc + d

    y = acc + b_ref[...]                                        # conv bias, f32
    y_ref[...] = y.astype(y_ref.dtype)                          # bf16 store
    _accum_bn_stats(y, s_ref, q_ref, acc_s, acc_q)


def _conv_im2col_stats_kernel(x2_ref, w_ref, b_ref,
                              y_ref, s_ref, q_ref, acc_s, acc_q):
    """Single concat-matmul conv for the narrow first block (C_in == 1)."""
    y = jnp.dot(w_ref[...], x2_ref[...],
                preferred_element_type=jnp.float32) + b_ref[...]
    y_ref[...] = y.astype(y_ref.dtype)
    _accum_bn_stats(y, s_ref, q_ref, acc_s, acc_q)


def _bn_relu_kernel(y_ref, s_ref, q_ref, g_ref, bt_ref, o_ref, *, inv_n):
    """Pass 2: apply train-mode BatchNorm1d + ReLU from the pass-1 statistics."""
    mean = s_ref[...] * inv_n
    # NOTE: one-pass E[x^2]-E[x]^2 (clamped); see header for the caveat.
    var = jnp.maximum(q_ref[...] * inv_n - mean * mean, 0.0)
    a = g_ref[...] * jax.lax.rsqrt(var + _EPS_BN)
    c = bt_ref[...] - mean * a
    o_ref[...] = jnp.maximum(
        y_ref[...].astype(jnp.float32) * a + c, 0.0).astype(o_ref.dtype)


def _head_kernel(h_ref, wa_ref, ba_ref, wt_ref, bf_ref, o_ref, pool_acc,
                 *, batch, inv_len):
    """1x1 attention conv + sigmoid gate + avg-pool(1) + Linear + L2 normalize."""
    j = pl.program_id(0)

    @pl.when(j == 0)
    def _():
        pool_acc[...] = jnp.zeros_like(pool_acc)

    h = h_ref[...].astype(jnp.float32)                                  # (C, tn)
    logits = jnp.dot(wa_ref[...], h,
                     preferred_element_type=jnp.float32) + ba_ref[...]  # (1, tn)
    gated = h * jax.nn.sigmoid(logits)                                  # (C, tn)

    # per-batch pooling selector built in-kernel (no dense HBM pool matrix)
    tn = h.shape[1]
    col = jax.lax.broadcasted_iota(jnp.int32, (tn, batch), 0)
    row = jax.lax.broadcasted_iota(jnp.int32, (tn, batch), 1)
    sel = ((col % batch) == row).astype(jnp.float32)                    # (tn, B)
    # pooled partial sums accumulated directly as (B, C) (no transposes)
    pool_acc[...] += jax.lax.dot_general(
        sel, gated, (((0,), (1,)), ((), ())),
        preferred_element_type=jnp.float32)

    @pl.when(j == pl.num_programs(0) - 1)
    def _():
        pooled = pool_acc[...] * inv_len                                # (B, C)
        emb = jnp.dot(pooled, wt_ref[...],
                      preferred_element_type=jnp.float32) + bf_ref[...]  # (B, E)
        nrm2 = jnp.sum(emb * emb, axis=1, keepdims=True)
        # == emb / max(||emb||, 1e-12)  (F.normalize); rsqrt goes to the EUP slot
        o_ref[...] = emb * jax.lax.rsqrt(jnp.maximum(nrm2, 1e-24))


# ---------------------------------------------------------------------------
# Conv1d(k=15, s=2, p=3) + BatchNorm1d(train) + ReLU block
# ---------------------------------------------------------------------------
def conv_bn_relu_block(h, w, b, gamma, beta, *, cols_cap=None):
    # h: (C_in, L, B) bf16;  w: (C_out, C_in, K);  b/gamma/beta: (C_out,)
    c_in, L, B = h.shape
    c_out, _, K = w.shape
    l_out = (L + 6 - K) // 2 + 1
    assert l_out >= 1, "input too short for this conv stack"
    n_cols = l_out * B

    t_co = _pick_cout_tile(c_out)
    use_taps = c_in >= 8
    depth = c_in if use_taps else K * c_in
    tn = _pick_cols_tile(n_cols, B, _cols_budget(depth, t_co, cols_cap))
    n_tiles = n_cols // tn

    # Zero-pad L by (3, 4); the extra right column only feeds halo groups that
    # never contribute to a real output position.
    hp = jnp.pad(h, ((0, 0), (3, 4), (0, 0)))                  # (C_in, L+7, B)

    # W2[co, k*C_in + ci] = w[co, ci, k]  (matches the kernels' tap ordering)
    w2 = jnp.transpose(w, (0, 2, 1)).reshape(c_out, K * c_in).astype(jnp.bfloat16)
    b2 = b.reshape(c_out, 1).astype(jnp.float32)

    if use_taps:
        # even/odd phase of the padded input, lane = l*B + b
        main_e = hp[:, 0:2 * l_out:2, :].reshape(c_in, n_cols)
        main_o = hp[:, 1:2 * l_out:2, :].reshape(c_in, n_cols)
        # per-tile halo: the 7 phase groups that follow each main tile
        tg = tn // B
        grp = (jnp.arange(n_tiles)[:, None] + 1) * tg + jnp.arange(7)[None, :]
        halo_e = jnp.transpose(hp[:, 2 * grp, :], (1, 0, 2, 3)
                               ).reshape(n_tiles, c_in, 7 * B)
        halo_o = jnp.transpose(hp[:, 2 * grp + 1, :], (1, 0, 2, 3)
                               ).reshape(n_tiles, c_in, 7 * B)
        operands = (main_e, main_o, halo_e, halo_o, w2, b2)
        in_specs = [
            pl.BlockSpec((c_in, tn), lambda i, j: (0, j)),
            pl.BlockSpec((c_in, tn), lambda i, j: (0, j)),
            pl.BlockSpec((1, c_in, 7 * B), lambda i, j: (j, 0, 0)),
            pl.BlockSpec((1, c_in, 7 * B), lambda i, j: (j, 0, 0)),
            pl.BlockSpec((t_co, K * c_in), lambda i, j: (i, 0)),
            pl.BlockSpec((t_co, 1), lambda i, j: (i, 0)),
        ]
        kern = functools.partial(_conv_taps_stats_kernel, batch=B, k_taps=K)
    else:
        # narrow first block: tiny (K*C_in, N) im2col built once here, streamed
        eph = hp[:, 0::2, :][:, :l_out + 7, :].reshape(c_in, (l_out + 7) * B)
        oph = hp[:, 1::2, :][:, :l_out + 7, :].reshape(c_in, (l_out + 7) * B)
        rows = []
        for k in range(K):
            src = eph if (k % 2 == 0) else oph
            off = (k // 2) * B
            rows.append(src[:, off:off + n_cols])
        x2 = jnp.concatenate(rows, axis=0)                     # (K*C_in, N) bf16
        operands = (x2, w2, b2)
        in_specs = [
            pl.BlockSpec((K * c_in, tn), lambda i, j: (0, j)),
            pl.BlockSpec((t_co, K * c_in), lambda i, j: (i, 0)),
            pl.BlockSpec((t_co, 1), lambda i, j: (i, 0)),
        ]
        kern = _conv_im2col_stats_kernel

    # Pass 1: conv + bias (bf16 out) and per-channel BN statistics.
    y, s, q = pl.pallas_call(
        kern,
        out_shape=(jax.ShapeDtypeStruct((c_out, n_cols), jnp.bfloat16),
                   jax.ShapeDtypeStruct((c_out, 1), jnp.float32),
                   jax.ShapeDtypeStruct((c_out, 1), jnp.float32)),
        grid_spec=pltpu.PrefetchScalarGridSpec(
            num_scalar_prefetch=0,
            grid=(c_out // t_co, n_tiles),
            in_specs=in_specs,
            out_specs=[pl.BlockSpec((t_co, tn), lambda i, j: (i, j)),
                       pl.BlockSpec((t_co, 1), lambda i, j: (i, 0)),
                       pl.BlockSpec((t_co, 1), lambda i, j: (i, 0))],
            scratch_shapes=[pltpu.VMEM((t_co, 1), jnp.float32),
                            pltpu.VMEM((t_co, 1), jnp.float32)]),
        compiler_params=pltpu.CompilerParams(
            dimension_semantics=("parallel", "arbitrary"),
            vmem_limit_bytes=_VMEM_LIMIT),
    )(*operands)

    # Pass 2: BN scale/shift + ReLU (lightweight, lane-tiled, bf16 out).
    tn2 = _pick_cols_tile(n_cols, B, _cols_budget(c_out, c_out, cols_cap))
    hm = pl.pallas_call(
        functools.partial(_bn_relu_kernel, inv_n=1.0 / float(n_cols)),
        out_shape=jax.ShapeDtypeStruct((c_out, n_cols), jnp.bfloat16),
        grid_spec=pltpu.PrefetchScalarGridSpec(
            num_scalar_prefetch=0,
            grid=(n_cols // tn2,),
            in_specs=[pl.BlockSpec((c_out, tn2), lambda j: (0, j)),
                      pl.BlockSpec((c_out, 1), lambda j: (0, 0)),
                      pl.BlockSpec((c_out, 1), lambda j: (0, 0)),
                      pl.BlockSpec((c_out, 1), lambda j: (0, 0)),
                      pl.BlockSpec((c_out, 1), lambda j: (0, 0))],
            out_specs=pl.BlockSpec((c_out, tn2), lambda j: (0, j))),
        compiler_params=pltpu.CompilerParams(
            dimension_semantics=("parallel",),
            vmem_limit_bytes=_VMEM_LIMIT),
    )(y, s, q,
      gamma.reshape(c_out, 1).astype(jnp.float32),
      beta.reshape(c_out, 1).astype(jnp.float32))

    # TODO(synk): emit the next block's padded phase slabs directly from pass 2
    # instead of the XLA pad + strided-slice relayout between blocks.
    return hm.reshape(c_out, l_out, B)


# ---------------------------------------------------------------------------
# Head: 1x1 attention conv + sigmoid gate + avg-pool(1) + Linear + L2 normalize
# ---------------------------------------------------------------------------
def attn_pool_fc_norm(h, wa, ba, wf, bf, *, cols_cap=None):
    c, L, B = h.shape
    e_dim = wf.shape[0]
    n_cols = L * B
    tn = _pick_cols_tile(n_cols, B, _cols_budget(c, c, cols_cap))
    return pl.pallas_call(
        functools.partial(_head_kernel, batch=B, inv_len=1.0 / float(L)),
        out_shape=jax.ShapeDtypeStruct((B, e_dim), jnp.float32),
        grid_spec=pltpu.PrefetchScalarGridSpec(
            num_scalar_prefetch=0,
            grid=(n_cols // tn,),
            in_specs=[pl.BlockSpec((c, tn), lambda j: (0, j)),
                      pl.BlockSpec((1, c), lambda j: (0, 0)),
                      pl.BlockSpec((1, 1), lambda j: (0, 0)),
                      pl.BlockSpec((c, e_dim), lambda j: (0, 0)),
                      pl.BlockSpec((1, e_dim), lambda j: (0, 0))],
            out_specs=pl.BlockSpec((B, e_dim), lambda j: (0, 0)),
            scratch_shapes=[pltpu.VMEM((B, c), jnp.float32)]),
        compiler_params=pltpu.CompilerParams(
            dimension_semantics=("arbitrary",),
            vmem_limit_bytes=_VMEM_LIMIT),
    )(h.reshape(c, n_cols),
      wa.reshape(1, c).astype(jnp.float32),
      ba.reshape(1, 1).astype(jnp.float32),
      jnp.transpose(wf).astype(jnp.float32),
      bf.reshape(1, e_dim).astype(jnp.float32))


# ---------------------------------------------------------------------------
# Full forward pass
# ---------------------------------------------------------------------------
def ecg_encoder_forward(x, params, *, cols_cap=None):
    # x: (B, C_in, L) f32 -> canonical (C, L, B) bf16 activation layout
    h = jnp.transpose(x, (1, 2, 0)).astype(jnp.bfloat16)
    for (w, b, g, bt) in params["conv_blocks"]:
        h = conv_bn_relu_block(h, w, b, g, bt, cols_cap=cols_cap)
    wa, ba = params["attn"]
    wf, bf = params["fc"]
    return attn_pool_fc_norm(h, wa, ba, wf, bf, cols_cap=cols_cap)


# ---------------------------------------------------------------------------
# Deterministic parameter init (PyTorch-default-like shapes & scales)
# ---------------------------------------------------------------------------
def init_params(key, in_channels, base_channels, embedding_dim, kernel_size=15):
    channels = [in_channels, base_channels, base_channels * 2,
                base_channels * 4, base_channels * 8]
    keys = jax.random.split(key, 6)
    blocks = []
    for i in range(4):
        ci, co = channels[i], channels[i + 1]
        kw, kb = jax.random.split(keys[i])
        bound = 1.0 / math.sqrt(ci * kernel_size)
        w = jax.random.uniform(kw, (co, ci, kernel_size), jnp.float32, -bound, bound)
        b = jax.random.uniform(kb, (co,), jnp.float32, -bound, bound)
        g = jnp.ones((co,), jnp.float32)       # BatchNorm1d default gamma
        bt = jnp.zeros((co,), jnp.float32)     # BatchNorm1d default beta
        blocks.append((w, b, g, bt))
    c4 = channels[-1]
    kwa, kba = jax.random.split(keys[4])
    bound = 1.0 / math.sqrt(c4 * 1)
    wa = jax.random.uniform(kwa, (1, c4, 1), jnp.float32, -bound, bound)
    ba = jax.random.uniform(kba, (1,), jnp.float32, -bound, bound)
    kwf, kbf = jax.random.split(keys[5])
    bound = 1.0 / math.sqrt(c4)
    wf = jax.random.uniform(kwf, (embedding_dim, c4), jnp.float32, -bound, bound)
    bf = jax.random.uniform(kbf, (embedding_dim,), jnp.float32, -bound, bound)
    return {"conv_blocks": blocks, "attn": (wa, ba), "fc": (wf, bf)}


# ---------------------------------------------------------------------------
# Pure-JAX reference (mirrors the PyTorch forward, training-mode BN).
# quantized=True mirrors the kernels' bf16 matmul-input / intermediate storage
# so the structural check is tight.
# ---------------------------------------------------------------------------
def _q_bf16(t):
    return t.astype(jnp.bfloat16).astype(jnp.float32)


def reference_forward(x, params, quantized=False):
    q = _q_bf16 if quantized else (lambda t: t)
    h = x
    for (w, b, g, bt) in params["conv_blocks"]:
        y = jax.lax.conv_general_dilated(
            q(h), q(w), window_strides=(2,), padding=[(3, 3)],
            dimension_numbers=("NCH", "OIH", "NCH"),
            precision=jax.lax.Precision.HIGHEST)
        y = y + b[None, :, None]
        m = jnp.mean(y, axis=(0, 2), keepdims=True)
        v = jnp.mean((y - m) ** 2, axis=(0, 2), keepdims=True)
        yq = q(y)   # kernel stores the pre-BN conv output in bf16
        h = jnp.maximum((yq - m) * jax.lax.rsqrt(v + _EPS_BN) * g[None, :, None]
                        + bt[None, :, None], 0.0)
        h = q(h)    # kernel stores the block output in bf16
    wa, ba = params["attn"]
    logits = jnp.einsum("oc,bcl->bol", wa[:, :, 0], h,
                        precision=jax.lax.Precision.HIGHEST) + ba[None, :, None]
    h = h * jax.nn.sigmoid(logits)
    pooled = jnp.mean(h, axis=2)                       # adaptive_avg_pool1d(1)
    wf, bf = params["fc"]
    e = jnp.dot(pooled, wf.T, precision=jax.lax.Precision.HIGHEST) + bf
    n = jnp.sqrt(jnp.sum(e * e, axis=1, keepdims=True))
    return e / jnp.maximum(n, 1e-12)                   # F.normalize(dim=1)


if __name__ == "__main__":
    def _run_case(B, c_in, L, base, emb, cols_cap, seed):
        x = jax.random.normal(jax.random.PRNGKey(seed), (B, c_in, L), jnp.float32)
        params = init_params(jax.random.PRNGKey(seed + 1), c_in, base, emb)
        fwd = jax.jit(functools.partial(ecg_encoder_forward, cols_cap=cols_cap))
        out = jax.block_until_ready(fwd(x, params))
        assert out.shape == (B, emb), out.shape
        # Tight structural check vs a reference that mirrors the kernels'
        # bf16 matmul-input / intermediate-storage rounding.
        ref_q = reference_forward(x, params, quantized=True)
        err_q = float(jnp.max(jnp.abs(out - ref_q)))
        assert err_q < 5e-3, f"max |err| vs bf16-matched reference: {err_q}"
        # Loose sanity check vs the full-f32 PyTorch-semantics reference.
        ref_f = reference_forward(x, params, quantized=False)
        err_f = float(jnp.max(jnp.abs(out - ref_f)))
        assert err_f < 1e-1, f"max |err| vs f32 reference: {err_f}"

    # Small shapes consistent with the module: (batch, in_channels, length).
    _run_case(B=2, c_in=1, L=256, base=8, emb=16, cols_cap=None, seed=0)
    # Second tiny case with a forced small lane-tile budget so the multi-tile
    # paths (streamed N axis, halo tiles, cross-tile BN stats) are exercised.
    _run_case(B=128, c_in=1, L=128, base=8, emb=16, cols_cap=512, seed=2)

    print("KERNEL_OK")
</pallas_src>

<mosaic_0001>
module attributes {stable_mosaic.version = 11 : i64} {
  func.func @_bn_relu_kernel(%arg0: i32, %arg1: memref<8x248xbf16, #tpu.memory_space<vmem>>, %arg2: memref<8x1xf32, #tpu.memory_space<vmem>>, %arg3: memref<8x1xf32, #tpu.memory_space<vmem>>, %arg4: memref<8x1xf32, #tpu.memory_space<vmem>>, %arg5: memref<8x1xf32, #tpu.memory_space<vmem>>, %arg6: memref<8x248xbf16, #tpu.memory_space<vmem>>) attributes {dimension_semantics = [#tpu.dimension_semantics<parallel>], iteration_bounds = array<i64: 1>, scalar_prefetch = 0 : i64, scratch_operands = 0 : i64, tpu.core_type = #tpu.core_type<tc>, window_params = [{transform_indices = @transform_0, window_bounds = array<i64: 8, 248>}, {pipeline_mode = #tpu.pipeline_mode<synchronous>, transform_indices = @transform_1, window_bounds = array<i64: 8, 1>}, {pipeline_mode = #tpu.pipeline_mode<synchronous>, transform_indices = @transform_2, window_bounds = array<i64: 8, 1>}, {pipeline_mode = #tpu.pipeline_mode<synchronous>, transform_indices = @transform_3, window_bounds = array<i64: 8, 1>}, {pipeline_mode = #tpu.pipeline_mode<synchronous>, transform_indices = @transform_4, window_bounds = array<i64: 8, 1>}, {transform_indices = @transform_5, window_bounds = array<i64: 8, 248>}]} {
    %c0 = arith.constant 0 : index
    %c0_0 = arith.constant 0 : index
    %0 = vector.load %arg2[%c0, %c0_0] : memref<8x1xf32, #tpu.memory_space<vmem>>, vector<8x1xf32>
    %cst = arith.constant 0.00403225794 : f32
    %1 = vector.broadcast %cst : f32 to vector<8x1xf32>
    %2 = arith.mulf %0, %1 : vector<8x1xf32>
    %c0_1 = arith.constant 0 : index
    %c0_2 = arith.constant 0 : index
    %3 = vector.load %arg3[%c0_1, %c0_2] : memref<8x1xf32, #tpu.memory_space<vmem>>, vector<8x1xf32>
    %cst_3 = arith.constant 0.00403225794 : f32
    %4 = vector.broadcast %cst_3 : f32 to vector<8x1xf32>
    %5 = arith.mulf %3, %4 : vector<8x1xf32>
    %6 = arith.mulf %2, %2 : vector<8x1xf32>
    %7 = arith.subf %5, %6 : vector<8x1xf32>
    %cst_4 = arith.constant 0.000000e+00 : f32
    %8 = vector.broadcast %cst_4 : f32 to vector<8x1xf32>
    %9 = arith.maximumf %7, %8 : vector<8x1xf32>
    %c0_5 = arith.constant 0 : index
    %c0_6 = arith.constant 0 : index
    %10 = vector.load %arg4[%c0_5, %c0_6] : memref<8x1xf32, #tpu.memory_space<vmem>>, vector<8x1xf32>
    %cst_7 = arith.constant 9.99999974E-6 : f32
    %11 = vector.broadcast %cst_7 : f32 to vector<8x1xf32>
    %12 = arith.addf %9, %11 : vector<8x1xf32>
    %13 = math.rsqrt %12 : vector<8x1xf32>
    %14 = arith.mulf %10, %13 : vector<8x1xf32>
    %c0_8 = arith.constant 0 : index
    %c0_9 = arith.constant 0 : index
    %15 = vector.load %arg5[%c0_8, %c0_9] : memref<8x1xf32, #tpu.memory_space<vmem>>, vector<8x1xf32>
    %16 = arith.mulf %2, %14 : vector<8x1xf32>
    %17 = arith.subf %15, %16 : vector<8x1xf32>
    %c0_10 = arith.constant 0 : index
    %c0_11 = arith.constant 0 : index
    %18 = vector.load %arg1[%c0_10, %c0_11] : memref<8x248xbf16, #tpu.memory_space<vmem>>, vector<8x248xbf16>
    %19 = arith.extf %18 : vector<8x248xbf16> to vector<8x248xf32>
    %20 = vector.broadcast %14 : vector<8x1xf32> to vector<8x248xf32>
    %21 = arith.mulf %19, %20 : vector<8x248xf32>
    %22 = vector.broadcast %17 : vector<8x1xf32> to vector<8x248xf32>
    %23 = arith.addf %21, %22 : vector<8x248xf32>
    %cst_12 = arith.constant 0.000000e+00 : f32
    %24 = vector.broadcast %cst_12 : f32 to vector<8x248xf32>
    %25 = arith.maximumf %23, %24 : vector<8x248xf32>
    %26 = arith.truncf %25 : vector<8x248xf32> to vector<8x248xbf16>
    %c0_13 = arith.constant 0 : index
    %c0_14 = arith.constant 0 : index
    %27 = vector.load %arg6[%c0_13, %c0_14] : memref<8x248xbf16, #tpu.memory_space<vmem>>, vector<8x248xbf16>
    tpu.vector_store %arg6[%c0_13, %c0_14], %26 {strides = array<i32>} : memref<8x248xbf16, #tpu.memory_space<vmem>>, vector<8x248xbf16>,
    return
  }
  func.func @transform_0(%arg0: i32) -> (i32, i32) {
    %c0_i32 = arith.constant 0 : i32
    %c0_i32_0 = arith.constant 0 : i32
    return %c0_i32, %arg0 : i32, i32
  }
  func.func @transform_1(%arg0: i32) -> (i32, i32) {
    %c0_i32 = arith.constant 0 : i32
    %c0_i32_0 = arith.constant 0 : i32
    %c0_i32_1 = arith.constant 0 : i32
    return %c0_i32, %c0_i32_0 : i32, i32
  }
  func.func @transform_2(%arg0: i32) -> (i32, i32) {
    %c0_i32 = arith.constant 0 : i32
    %c0_i32_0 = arith.constant 0 : i32
    %c0_i32_1 = arith.constant 0 : i32
    return %c0_i32, %c0_i32_0 : i32, i32
  }
  func.func @transform_3(%arg0: i32) -> (i32, i32) {
    %c0_i32 = arith.constant 0 : i32
    %c0_i32_0 = arith.constant 0 : i32
    %c0_i32_1 = arith.constant 0 : i32
    return %c0_i32, %c0_i32_0 : i32, i32
  }
  func.func @transform_4(%arg0: i32) -> (i32, i32) {
    %c0_i32 = arith.constant 0 : i32
    %c0_i32_0 = arith.constant 0 : i32
    %c0_i32_1 = arith.constant 0 : i32
    return %c0_i32, %c0_i32_0 : i32, i32
  }
  func.func @transform_5(%arg0: i32) -> (i32, i32) {
    %c0_i32 = arith.constant 0 : i32
    %c0_i32_0 = arith.constant 0 : i32
    return %c0_i32, %arg0 : i32, i32
  }
}

module attributes {stable_mosaic.version = 11 : i64} {
  func.func @_conv_im2col_stats_kernel(%arg0: i32, %arg1: i32, %arg2: memref<15x248xbf16, #tpu.memory_space<vmem>>, %arg3: memref<8x15xbf16, #tpu.memory_space<vmem>>, %arg4: memref<8x1xf32, #tpu.memory_space<vmem>>, %arg5: memref<8x248xbf16, #tpu.memory_space<vmem>>, %arg6: memref<8x1xf32, #tpu.memory_space<vmem>>, %arg7: memref<8x1xf32, #tpu.memory_space<vmem>>, %arg8: memref<8x1xf32, #tpu.memory_space<vmem>>, %arg9: memref<8x1xf32, #tpu.memory_space<vmem>>) attributes {dimension_semantics = [#tpu.dimension_semantics<parallel>, #tpu.dimension_semantics<arbitrary>], iteration_bounds = array<i64: 1, 1>, scalar_prefetch = 0 : i64, scratch_operands = 2 : i64, tpu.core_type = #tpu.core_type<tc>, window_params = [{transform_indices = @transform_0, window_bounds = array<i64: 15, 248>}, {transform_indices = @transform_1, window_bounds = array<i64: 8, 15>}, {transform_indices = @transform_2, window_bounds = array<i64: 8, 1>}, {transform_indices = @transform_3, window_bounds = array<i64: 8, 248>}, {transform_indices = @transform_4, window_bounds = array<i64: 8, 1>}, {transform_indices = @transform_5, window_bounds = array<i64: 8, 1>}]} {
    %c0 = arith.constant 0 : index
    %c0_0 = arith.constant 0 : index
    %0 = vector.load %arg3[%c0, %c0_0] : memref<8x15xbf16, #tpu.memory_space<vmem>>, vector<8x15xbf16>
    %c0_1 = arith.constant 0 : index
    %c0_2 = arith.constant 0 : index
    %1 = vector.load %arg2[%c0_1, %c0_2] : memref<15x248xbf16, #tpu.memory_space<vmem>>, vector<15x248xbf16>
    %cst = arith.constant dense<0.000000e+00> : vector<8x248xf32>
    %2 = tpu.matmul %0, %1, %cst {dimension_numbers = #tpu.dot_dimension_numbers<[1], [0], [0], [1], [0, 0, 1, 1], [], []>} : vector<8x15xbf16>, vector<15x248xbf16>, vector<8x248xf32> -> vector<8x248xf32>
    %c0_3 = arith.constant 0 : index
    %c0_4 = arith.constant 0 : index
    %3 = vector.load %arg4[%c0_3, %c0_4] : memref<8x1xf32, #tpu.memory_space<vmem>>, vector<8x1xf32>
    %4 = vector.broadcast %3 : vector<8x1xf32> to vector<8x248xf32>
    %5 = arith.addf %2, %4 : vector<8x248xf32>
    %6 = arith.truncf %5 : vector<8x248xf32> to vector<8x248xbf16>
    %c0_5 = arith.constant 0 : index
    %c0_6 = arith.constant 0 : index
    %7 = vector.load %arg5[%c0_5, %c0_6] : memref<8x248xbf16, #tpu.memory_space<vmem>>, vector<8x248xbf16>
    tpu.vector_store %arg5[%c0_5, %c0_6], %6 {strides = array<i32>} : memref<8x248xbf16, #tpu.memory_space<vmem>>, vector<8x248xbf16>,
    %c0_i32 = arith.constant 0 : i32
    %8 = arith.cmpi eq, %arg1, %c0_i32 : i32
    %9 = arith.extui %8 : i1 to i32
    %c0_i32_7 = arith.constant 0 : i32
    %10 = arith.cmpi ne, %9, %c0_i32_7 : i32
    scf.if %10 {
      %cst_20 = arith.constant 0.000000e+00 : f32
      %25 = vector.broadcast %cst_20 : f32 to vector<8x1xf32>
      %c0_21 = arith.constant 0 : index
      %c0_22 = arith.constant 0 : index
      %26 = vector.load %arg8[%c0_21, %c0_22] : memref<8x1xf32, #tpu.memory_space<vmem>>, vector<8x1xf32>
      tpu.vector_store %arg8[%c0_21, %c0_22], %25 {strides = array<i32>} : memref<8x1xf32, #tpu.memory_space<vmem>>, vector<8x1xf32>,
      %cst_23 = arith.constant 0.000000e+00 : f32
      %27 = vector.broadcast %cst_23 : f32 to vector<8x1xf32>
      %c0_24 = arith.constant 0 : index
      %c0_25 = arith.constant 0 : index
      %28 = vector.load %arg9[%c0_24, %c0_25] : memref<8x1xf32, #tpu.memory_space<vmem>>, vector<8x1xf32>
      tpu.vector_store %arg9[%c0_24, %c0_25], %27 {strides = array<i32>} : memref<8x1xf32, #tpu.memory_space<vmem>>, vector<8x1xf32>,
    } else {
    }
    %c0_8 = arith.constant 0 : index
    %c0_9 = arith.constant 0 : index
    %11 = vector.load %arg8[%c0_8, %c0_9] : memref<8x1xf32, #tpu.memory_space<vmem>>, vector<8x1xf32>
    %cst_10 = arith.constant dense<0.000000e+00> : vector<8xf32>
    %12 = vector.multi_reduction <add>, %5, %cst_10 [1] : vector<8x248xf32> to vector<8xf32>
    %13 = vector.shape_cast %12 : vector<8xf32> to vector<8x1xf32>
    %14 = arith.addf %11, %13 : vector<8x1xf32>
    %c0_11 = arith.constant 0 : index
    %c0_12 = arith.constant 0 : index
    %15 = vector.load %arg8[%c0_11, %c0_12] : memref<8x1xf32, #tpu.memory_space<vmem>>, vector<8x1xf32>
    tpu.vector_store %arg8[%c0_11, %c0_12], %14 {strides = array<i32>} : memref<8x1xf32, #tpu.memory_space<vmem>>, vector<8x1xf32>,
    %c0_13 = arith.constant 0 : index
    %c0_14 = arith.constant 0 : index
    %16 = vector.load %arg9[%c0_13, %c0_14] : memref<8x1xf32, #tpu.memory_space<vmem>>, vector<8x1xf32>
    %17 = arith.mulf %5, %5 : vector<8x248xf32>
    %cst_15 = arith.constant dense<0.000000e+00> : vector<8xf32>
    %18 = vector.multi_reduction <add>, %17, %cst_15 [1] : vector<8x248xf32> to vector<8xf32>
    %19 = vector.shape_cast %18 : vector<8xf32> to vector<8x1xf32>
    %20 = arith.addf %16, %19 : vector<8x1xf32>
    %c0_16 = arith.constant 0 : index
    %c0_17 = arith.constant 0 : index
    %21 = vector.load %arg9[%c0_16, %c0_17] : memref<8x1xf32, #tpu.memory_space<vmem>>, vector<8x1xf32>
    tpu.vector_store %arg9[%c0_16, %c0_17], %20 {strides = array<i32>} : memref<8x1xf32, #tpu.memory_space<vmem>>, vector<8x1xf32>,
    %c0_i32_18 = arith.constant 0 : i32
    %22 = arith.cmpi eq, %arg1, %c0_i32_18 : i32
    %23 = arith.extui %22 : i1 to i32
    %c0_i32_19 = arith.constant 0 : i32
    %24 = arith.cmpi ne, %23, %c0_i32_19 : i32
    scf.if %24 {
      %c0_20 = arith.constant 0 : index
      %c0_21 = arith.constant 0 : index
      %25 = vector.load %arg8[%c0_20, %c0_21] : memref<8x1xf32, #tpu.memory_space<vmem>>, vector<8x1xf32>
      %c0_22 = arith.constant 0 : index
      %c0_23 = arith.constant 0 : index
      %26 = vector.load %arg6[%c0_22, %c0_23] : memref<8x1xf32, #tpu.memory_space<vmem>>, vector<8x1xf32>
      tpu.vector_store %arg6[%c0_22, %c0_23], %25 {strides = array<i32>} : memref<8x1xf32, #tpu.memory_space<vmem>>, vector<8x1xf32>,
      %c0_24 = arith.constant 0 : index
      %c0_25 = arith.constant 0 : index
      %27 = vector.load %arg9[%c0_24, %c0_25] : memref<8x1xf32, #tpu.memory_space<vmem>>, vector<8x1xf32>
      %c0_26 = arith.constant 0 : index
      %c0_27 = arith.constant 0 : index
      %28 = vector.load %arg7[%c0_26, %c0_27] : memref<8x1xf32, #tpu.memory_space<vmem>>, vector<8x1xf32>
      tpu.vector_store %arg7[%c0_26, %c0_27], %27 {strides = array<i32>} : memref<8x1xf32, #tpu.memory_space<vmem>>, vector<8x1xf32>,
    } else {
    }
    return
  }
  func.func @transform_0(%arg0: i32, %arg1: i32) -> (i32, i32) {
    %c0_i32 = arith.constant 0 : i32
    %c0_i32_0 = arith.constant 0 : i32
    return %c0_i32, %arg1 : i32, i32
  }
  func.func @transform_1(%arg0: i32, %arg1: i32) -> (i32, i32) {
    %c0_i32 = arith.constant 0 : i32
    %c0_i32_0 = arith.constant 0 : i32
    return %arg0, %c0_i32 : i32, i32
  }
  func.func @transform_2(%arg0: i32, %arg1: i32) -> (i32, i32) {
    %c0_i32 = arith.constant 0 : i32
    %c0_i32_0 = arith.constant 0 : i32
    return %arg0, %c0_i32 : i32, i32
  }
  func.func @transform_3(%arg0: i32, %arg1: i32) -> (i32, i32) {
    %c0_i32 = arith.constant 0 : i32
    return %arg0, %arg1 : i32, i32
  }
  func.func @transform_4(%arg0: i32, %arg1: i32) -> (i32, i32) {
    %c0_i32 = arith.constant 0 : i32
    %c0_i32_0 = arith.constant 0 : i32
    return %arg0, %c0_i32 : i32, i32
  }
  func.func @transform_5(%arg0: i32, %arg1: i32) -> (i32, i32) {
    %c0_i32 = arith.constant 0 : i32
    %c0_i32_0 = arith.constant 0 : i32
    return %arg0, %c0_i32 : i32, i32
  }
}

module attributes {stable_mosaic.version = 11 : i64} {
  func.func @_bn_relu_kernel(%arg0: i32, %arg1: memref<16x116xbf16, #tpu.memory_space<vmem>>, %arg2: memref<16x1xf32, #tpu.memory_space<vmem>>, %arg3: memref<16x1xf32, #tpu.memory_space<vmem>>, %arg4: memref<16x1xf32, #tpu.memory_space<vmem>>, %arg5: memref<16x1xf32, #tpu.memory_space<vmem>>, %arg6: memref<16x116xbf16, #tpu.memory_space<vmem>>) attributes {dimension_semantics = [#tpu.dimension_semantics<parallel>], iteration_bounds = array<i64: 1>, scalar_prefetch = 0 : i64, scratch_operands = 0 : i64, tpu.core_type = #tpu.core_type<tc>, window_params = [{transform_indices = @transform_0, window_bounds = array<i64: 16, 116>}, {pipeline_mode = #tpu.pipeline_mode<synchronous>, transform_indices = @transform_1, window_bounds = array<i64: 16, 1>}, {pipeline_mode = #tpu.pipeline_mode<synchronous>, transform_indices = @transform_2, window_bounds = array<i64: 16, 1>}, {pipeline_mode = #tpu.pipeline_mode<synchronous>, transform_indices = @transform_3, window_bounds = array<i64: 16, 1>}, {pipeline_mode = #tpu.pipeline_mode<synchronous>, transform_indices = @transform_4, window_bounds = array<i64: 16, 1>}, {transform_indices = @transform_5, window_bounds = array<i64: 16, 116>}]} {
    %c0 = arith.constant 0 : index
    %c0_0 = arith.constant 0 : index
    %0 = vector.load %arg2[%c0, %c0_0] : memref<16x1xf32, #tpu.memory_space<vmem>>, vector<16x1xf32>
    %cst = arith.constant 8.620690e-03 : f32
    %1 = vector.broadcast %cst : f32 to vector<16x1xf32>
    %2 = arith.mulf %0, %1 : vector<16x1xf32>
    %c0_1 = arith.constant 0 : index
    %c0_2 = arith.constant 0 : index
    %3 = vector.load %arg3[%c0_1, %c0_2] : memref<16x1xf32, #tpu.memory_space<vmem>>, vector<16x1xf32>
    %cst_3 = arith.constant 8.620690e-03 : f32
    %4 = vector.broadcast %cst_3 : f32 to vector<16x1xf32>
    %5 = arith.mulf %3, %4 : vector<16x1xf32>
    %6 = arith.mulf %2, %2 : vector<16x1xf32>
    %7 = arith.subf %5, %6 : vector<16x1xf32>
    %cst_4 = arith.constant 0.000000e+00 : f32
    %8 = vector.broadcast %cst_4 : f32 to vector<16x1xf32>
    %9 = arith.maximumf %7, %8 : vector<16x1xf32>
    %c0_5 = arith.constant 0 : index
    %c0_6 = arith.constant 0 : index
    %10 = vector.load %arg4[%c0_5, %c0_6] : memref<16x1xf32, #tpu.memory_space<vmem>>, vector<16x1xf32>
    %cst_7 = arith.constant 9.99999974E-6 : f32
    %11 = vector.broadcast %cst_7 : f32 to vector<16x1xf32>
    %12 = arith.addf %9, %11 : vector<16x1xf32>
    %13 = math.rsqrt %12 : vector<16x1xf32>
    %14 = arith.mulf %10, %13 : vector<16x1xf32>
    %c0_8 = arith.constant 0 : index
    %c0_9 = arith.constant 0 : index
    %15 = vector.load %arg5[%c0_8, %c0_9] : memref<16x1xf32, #tpu.memory_space<vmem>>, vector<16x1xf32>
    %16 = arith.mulf %2, %14 : vector<16x1xf32>
    %17 = arith.subf %15, %16 : vector<16x1xf32>
    %c0_10 = arith.constant 0 : index
    %c0_11 = arith.constant 0 : index
    %18 = vector.load %arg1[%c0_10, %c0_11] : memref<16x116xbf16, #tpu.memory_space<vmem>>, vector<16x116xbf16>
    %19 = arith.extf %18 : vector<16x116xbf16> to vector<16x116xf32>
    %20 = vector.broadcast %14 : vector<16x1xf32> to vector<16x116xf32>
    %21 = arith.mulf %19, %20 : vector<16x116xf32>
    %22 = vector.broadcast %17 : vector<16x1xf32> to vector<16x116xf32>
    %23 = arith.addf %21, %22 : vector<16x116xf32>
    %cst_12 = arith.constant 0.000000e+00 : f32
    %24 = vector.broadcast %cst_12 : f32 to vector<16x116xf32>
    %25 = arith.maximumf %23, %24 : vector<16x116xf32>
    %26 = arith.truncf %25 : vector<16x116xf32> to vector<16x116xbf16>
    %c0_13 = arith.constant 0 : index
    %c0_14 = arith.constant 0 : index
    %27 = vector.load %arg6[%c0_13, %c0_14] : memref<16x116xbf16, #tpu.memory_space<vmem>>, vector<16x116xbf16>
    tpu.vector_store %arg6[%c0_13, %c0_14], %26 {strides = array<i32>} : memref<16x116xbf16, #tpu.memory_space<vmem>>, vector<16x116xbf16>,
    return
  }
  func.func @transform_0(%arg0: i32) -> (i32, i32) {
    %c0_i32 = arith.constant 0 : i32
    %c0_i32_0 = arith.constant 0 : i32
    return %c0_i32, %arg0 : i32, i32
  }
  func.func @transform_1(%arg0: i32) -> (i32, i32) {
    %c0_i32 = arith.constant 0 : i32
    %c0_i32_0 = arith.constant 0 : i32
    %c0_i32_1 = arith.constant 0 : i32
    return %c0_i32, %c0_i32_0 : i32, i32
  }
  func.func @transform_2(%arg0: i32) -> (i32, i32) {
    %c0_i32 = arith.constant 0 : i32
    %c0_i32_0 = arith.constant 0 : i32
    %c0_i32_1 = arith.constant 0 : i32
    return %c0_i32, %c0_i32_0 : i32, i32
  }
  func.func @transform_3(%arg0: i32) -> (i32, i32) {
    %c0_i32 = arith.constant 0 : i32
    %c0_i32_0 = arith.constant 0 : i32
    %c0_i32_1 = arith.constant 0 : i32
    return %c0_i32, %c0_i32_0 : i32, i32
  }
  func.func @transform_4(%arg0: i32) -> (i32, i32) {
    %c0_i32 = arith.constant 0 : i32
    %c0_i32_0 = arith.constant 0 : i32
    %c0_i32_1 = arith.constant 0 : i32
    return %c0_i32, %c0_i32_0 : i32, i32
  }
  func.func @transform_5(%arg0: i32) -> (i32, i32) {
    %c0_i32 = arith.constant 0 : i32
    %c0_i32_0 = arith.constant 0 : i32
    return %c0_i32, %arg0 : i32, i32
  }
}

module attributes {stable_mosaic.version = 11 : i64} {
  func.func @_conv_taps_stats_kernel(%arg0: i32, %arg1: i32, %arg2: memref<8x116xbf16, #tpu.memory_space<vmem>>, %arg3: memref<8x116xbf16, #tpu.memory_space<vmem>>, %arg4: memref<1x8x14xbf16, #tpu.memory_space<vmem>>, %arg5: memref<1x8x14xbf16, #tpu.memory_space<vmem>>, %arg6: memref<16x120xbf16, #tpu.memory_space<vmem>>, %arg7: memref<16x1xf32, #tpu.memory_space<vmem>>, %arg8: memref<16x116xbf16, #tpu.memory_space<vmem>>, %arg9: memref<16x1xf32, #tpu.memory_space<vmem>>, %arg10: memref<16x1xf32, #tpu.memory_space<vmem>>, %arg11: memref<16x1xf32, #tpu.memory_space<vmem>>, %arg12: memref<16x1xf32, #tpu.memory_space<vmem>>) attributes {dimension_semantics = [#tpu.dimension_semantics<parallel>, #tpu.dimension_semantics<arbitrary>], iteration_bounds = array<i64: 1, 1>, scalar_prefetch = 0 : i64, scratch_operands = 2 : i64, tpu.core_type = #tpu.core_type<tc>, window_params = [{transform_indices = @transform_0, window_bounds = array<i64: 8, 116>}, {transform_indices = @transform_1, window_bounds = array<i64: 8, 116>}, {transform_indices = @transform_2, window_bounds = array<i64: 1, 8, 14>}, {transform_indices = @transform_3, window_bounds = array<i64: 1, 8, 14>}, {transform_indices = @transform_4, window_bounds = array<i64: 16, 120>}, {transform_indices = @transform_5, window_bounds = array<i64: 16, 1>}, {transform_indices = @transform_6, window_bounds = array<i64: 16, 116>}, {transform_indices = @transform_7, window_bounds = array<i64: 16, 1>}, {transform_indices = @transform_8, window_bounds = array<i64: 16, 1>}]} {
    %c0 = arith.constant 0 : index
    %c0_0 = arith.constant 0 : index
    %0 = vector.load %arg2[%c0, %c0_0] : memref<8x116xbf16, #tpu.memory_space<vmem>>, vector<8x116xbf16>
    %c0_1 = arith.constant 0 : index
    %c0_2 = arith.constant 0 : index
    %c0_3 = arith.constant 0 : index
    %1 = vector.load %arg4[%c0_1, %c0_2, %c0_3] : memref<1x8x14xbf16, #tpu.memory_space<vmem>>, vector<1x8x14xbf16>
    %2 = vector.shape_cast %1 : vector<1x8x14xbf16> to vector<8x14xbf16>
    %3 = tpu.concatenate %0, %2 in 1 : vector<8x116xbf16>, vector<8x14xbf16> -> vector<8x130xbf16>
    %c0_4 = arith.constant 0 : index
    %c0_5 = arith.constant 0 : index
    %4 = vector.load %arg3[%c0_4, %c0_5] : memref<8x116xbf16, #tpu.memory_space<vmem>>, vector<8x116xbf16>
    %c0_6 = arith.constant 0 : index
    %c0_7 = arith.constant 0 : index
    %c0_8 = arith.constant 0 : index
    %5 = vector.load %arg5[%c0_6, %c0_7, %c0_8] : memref<1x8x14xbf16, #tpu.memory_space<vmem>>, vector<1x8x14xbf16>
    %6 = vector.shape_cast %5 : vector<1x8x14xbf16> to vector<8x14xbf16>
    %7 = tpu.concatenate %4, %6 in 1 : vector<8x116xbf16>, vector<8x14xbf16> -> vector<8x130xbf16>
    %8 = vector.extract_strided_slice %3 {offsets = [0, 0], sizes = [8, 116], strides = [1, 1]} : vector<8x130xbf16> to vector<8x116xbf16>
    %c0_9 = arith.constant 0 : index
    %c0_10 = arith.constant 0 : index
    %9 = vector.load %arg6[%c0_9, %c0_10] : memref<16x120xbf16, #tpu.memory_space<vmem>>, vector<16x8xbf16>
    %cst = arith.constant dense<0.000000e+00> : vector<16x116xf32>
    %10 = tpu.matmul %9, %8, %cst {dimension_numbers = #tpu.dot_dimension_numbers<[1], [0], [0], [1], [0, 0, 1, 1], [], []>} : vector<16x8xbf16>, vector<8x116xbf16>, vector<16x116xf32> -> vector<16x116xf32>
    %11 = vector.extract_strided_slice %7 {offsets = [0, 0], sizes = [8, 116], strides = [1, 1]} : vector<8x130xbf16> to vector<8x116xbf16>
    %c0_11 = arith.constant 0 : index
    %c8 = arith.constant 8 : index
    %12 = vector.load %arg6[%c0_11, %c8] : memref<16x120xbf16, #tpu.memory_space<vmem>>, vector<16x8xbf16>
    %cst_12 = arith.constant dense<0.000000e+00> : vector<16x116xf32>
    %13 = tpu.matmul %12, %11, %cst_12 {dimension_numbers = #tpu.dot_dimension_numbers<[1], [0], [0], [1], [0, 0, 1, 1], [], []>} : vector<16x8xbf16>, vector<8x116xbf16>, vector<16x116xf32> -> vector<16x116xf32>
    %14 = arith.addf %10, %13 : vector<16x116xf32>
    %15 = vector.extract_strided_slice %3 {offsets = [0, 2], sizes = [8, 116], strides = [1, 1]} : vector<8x130xbf16> to vector<8x116xbf16>
    %c0_13 = arith.constant 0 : index
    %c16 = arith.constant 16 : index
    %16 = vector.load %arg6[%c0_13, %c16] : memref<16x120xbf16, #tpu.memory_space<vmem>>, vector<16x8xbf16>
    %cst_14 = arith.constant dense<0.000000e+00> : vector<16x116xf32>
    %17 = tpu.matmul %16, %15, %cst_14 {dimension_numbers = #tpu.dot_dimension_numbers<[1], [0], [0], [1], [0, 0, 1, 1], [], []>} : vector<16x8xbf16>, vector<8x116xbf16>, vector<16x116xf32> -> vector<16x116xf32>
    %18 = arith.addf %14, %17 : vector<16x116xf32>
    %19 = vector.extract_strided_slice %7 {offsets = [0, 2], sizes = [8, 116], strides = [1, 1]} : vector<8x130xbf16> to vector<8x116xbf16>
    %c0_15 = arith.constant 0 : index
    %c24 = arith.constant 24 : index
    %20 = vector.load %arg6[%c0_15, %c24] : memref<16x120xbf16, #tpu.memory_space<vmem>>, vector<16x8xbf16>
    %cst_16 = arith.constant dense<0.000000e+00> : vector<16x116xf32>
    %21 = tpu.matmul %20, %19, %cst_16 {dimension_numbers = #tpu.dot_dimension_numbers<[1], [0], [0], [1], [0, 0, 1, 1], [], []>} : vector<16x8xbf16>, vector<8x116xbf16>, vector<16x116xf32> -> vector<16x116xf32>
    %22 = arith.addf %18, %21 : vector<16x116xf32>
    %23 = vector.extract_strided_slice %3 {offsets = [0, 4], sizes = [8, 116], strides = [1, 1]} : vector<8x130xbf16> to vector<8x116xbf16>
    %c0_17 = arith.constant 0 : index
    %c32 = arith.constant 32 : index
    %24 = vector.load %arg6[%c0_17, %c32] : memref<16x120xbf16, #tpu.memory_space<vmem>>, vector<16x8xbf16>
    %cst_18 = arith.constant dense<0.000000e+00> : vector<16x116xf32>
    %25 = tpu.matmul %24, %23, %cst_18 {dimension_numbers = #tpu.dot_dimension_numbers<[1], [0], [0], [1], [0, 0, 1, 1], [], []>} : vector<16x8xbf16>, vector<8x116xbf16>, vector<16x116xf32> -> vector<16x116xf32>
    %26 = arith.addf %22, %25 : vector<16x116xf32>
    %27 = vector.extract_strided_slice %7 {offsets = [0, 4], sizes = [8, 116], strides = [1, 1]} : vector<8x130xbf16> to vector<8x116xbf16>
    %c0_19 = arith.constant 0 : index
    %c40 = arith.constant 40 : index
    %28 = vector.load %arg6[%c0_19, %c40] : memref<16x120xbf16, #tpu.memory_space<vmem>>, vector<16x8xbf16>
    %cst_20 = arith.constant dense<0.000000e+00> : vector<16x116xf32>
    %29 = tpu.matmul %28, %27, %cst_20 {dimension_numbers = #tpu.dot_dimension_numbers<[1], [0], [0], [1], [0, 0, 1, 1], [], []>} : vector<16x8xbf16>, vector<8x116xbf16>, vector<16x116xf32> -> vector<16x116xf32>
    %30 = arith.addf %26, %29 : vector<16x116xf32>
    %31 = vector.extract_strided_slice %3 {offsets = [0, 6], sizes = [8, 116], strides = [1, 1]} : vector<8x130xbf16> to vector<8x116xbf16>
    %c0_21 = arith.constant 0 : index
    %c48 = arith.constant 48 : index
    %32 = vector.load %arg6[%c0_21, %c48] : memref<16x120xbf16, #tpu.memory_space<vmem>>, vector<16x8xbf16>
    %cst_22 = arith.constant dense<0.000000e+00> : vector<16x116xf32>
    %33 = tpu.matmul %32, %31, %cst_22 {dimension_numbers = #tpu.dot_dimension_numbers<[1], [0], [0], [1], [0, 0, 1, 1], [], []>} : vector<16x8xbf16>, vector<8x116xbf16>, vector<16x116xf32> -> vector<16x116xf32>
    %34 = arith.addf %30, %33 : vector<16x116xf32>
    %35 = vector.extract_strided_slice %7 {offsets = [0, 6], sizes = [8, 116], strides = [1, 1]} : vector<8x130xbf16> to vector<8x116xbf16>
    %c0_23 = arith.constant 0 : index
    %c56 = arith.constant 56 : index
    %36 = vector.load %arg6[%c0_23, %c56] : memref<16x120xbf16, #tpu.memory_space<vmem>>, vector<16x8xbf16>
    %cst_24 = arith.constant dense<0.000000e+00> : vector<16x116xf32>
    %37 = tpu.matmul %36, %35, %cst_24 {dimension_numbers = #tpu.dot_dimension_numbers<[1], [0], [0], [1], [0, 0, 1, 1], [], []>} : vector<16x8xbf16>, vector<8x116xbf16>, vector<16x116xf32> -> vector<16x116xf32>
    %38 = arith.addf %34, %37 : vector<16x116xf32>
    %39 = vector.extract_strided_slice %3 {offsets = [0, 8], sizes = [8, 116], strides = [1, 1]} : vector<8x130xbf16> to vector<8x116xbf16>
    %c0_25 = arith.constant 0 : index
    %c64 = arith.constant 64 : index
    %40 = vector.load %arg6[%c0_25, %c64] : memref<16x120xbf16, #tpu.memory_space<vmem>>, vector<16x8xbf16>
    %cst_26 = arith.constant dense<0.000000e+00> : vector<16x116xf32>
    %41 = tpu.matmul %40, %39, %cst_26 {dimension_numbers = #tpu.dot_dimension_numbers<[1], [0], [0], [1], [0, 0, 1, 1], [], []>} : vector<16x8xbf16>, vector<8x116xbf16>, vector<16x116xf32> -> vector<16x116xf32>
    %42 = arith.addf %38, %41 : vector<16x116xf32>
    %43 = vector.extract_strided_slice %7 {offsets = [0, 8], sizes = [8, 116], strides = [1, 1]} : vector<8x130xbf16> to vector<8x116xbf16>
    %c0_27 = arith.constant 0 : index
    %c72 = arith.constant 72 : index
    %44 = vector.load %arg6[%c0_27, %c72] : memref<16x120xbf16, #tpu.memory_space<vmem>>, vector<16x8xbf16>
    %cst_28 = arith.constant dense<0.000000e+00> : vector<16x116xf32>
    %45 = tpu.matmul %44, %43, %cst_28 {dimension_numbers = #tpu.dot_dimension_numbers<[1], [0], [0], [1], [0, 0, 1, 1], [], []>} : vector<16x8xbf16>, vector<8x116xbf16>, vector<16x116xf32> -> vector<16x116xf32>
    %46 = arith.addf %42, %45 : vector<16x116xf32>
    %47 = vector.extract_strided_slice %3 {offsets = [0, 10], sizes = [8, 116], strides = [1, 1]} : vector<8x130xbf16> to vector<8x116xbf16>
    %c0_29 = arith.constant 0 : index
    %c80 = arith.constant 80 : index
    %48 = vector.load %arg6[%c0_29, %c80] : memref<16x120xbf16, #tpu.memory_space<vmem>>, vector<16x8xbf16>
    %cst_30 = arith.constant dense<0.000000e+00> : vector<16x116xf32>
    %49 = tpu.matmul %48, %47, %cst_30 {dimension_numbers = #tpu.dot_dimension_numbers<[1], [0], [0], [1], [0, 0, 1, 1], [], []>} : vector<16x8xbf16>, vector<8x116xbf16>, vector<16x116xf32> -> vector<16x116xf32>
    %50 = arith.addf %46, %49 : vector<16x116xf32>
    %51 = vector.extract_strided_slice %7 {offsets = [0, 10], sizes = [8, 116], strides = [1, 1]} : vector<8x130xbf16> to vector<8x116xbf16>
    %c0_31 = arith.constant 0 : index
    %c88 = arith.constant 88 : index
    %52 = vector.load %arg6[%c0_31, %c88] : memref<16x120xbf16, #tpu.memory_space<vmem>>, vector<16x8xbf16>
    %cst_32 = arith.constant dense<0.000000e+00> : vector<16x116xf32>
    %53 = tpu.matmul %52, %51, %cst_32 {dimension_numbers = #tpu.dot_dimension_numbers<[1], [0], [0], [1], [0, 0, 1, 1], [], []>} : vector<16x8xbf16>, vector<8x116xbf16>, vector<16x116xf32> -> vector<16x116xf32>
    %54 = arith.addf %50, %53 : vector<16x116xf32>
    %55 = vector.extract_strided_slice %3 {offsets = [0, 12], sizes = [8, 116], strides = [1, 1]} : vector<8x130xbf16> to vector<8x116xbf16>
    %c0_33 = arith.constant 0 : index
    %c96 = arith.constant 96 : index
    %56 = vector.load %arg6[%c0_33, %c96] : memref<16x120xbf16, #tpu.memory_space<vmem>>, vector<16x8xbf16>
    %cst_34 = arith.constant dense<0.000000e+00> : vector<16x116xf32>
    %57 = tpu.matmul %56, %55, %cst_34 {dimension_numbers = #tpu.dot_dimension_numbers<[1], [0], [0], [1], [0, 0, 1, 1], [], []>} : vector<16x8xbf16>, vector<8x116xbf16>, vector<16x116xf32> -> vector<16x116xf32>
    %58 = arith.addf %54, %57 : vector<16x116xf32>
    %59 = vector.extract_strided_slice %7 {offsets = [0, 12], sizes = [8, 116], strides = [1, 1]} : vector<8x130xbf16> to vector<8x116xbf16>
    %c0_35 = arith.constant 0 : index
    %c104 = arith.constant 104 : index
    %60 = vector.load %arg6[%c0_35, %c104] : memref<16x120xbf16, #tpu.memory_space<vmem>>, vector<16x8xbf16>
    %cst_36 = arith.constant dense<0.000000e+00> : vector<16x116xf32>
    %61 = tpu.matmul %60, %59, %cst_36 {dimension_numbers = #tpu.dot_dimension_numbers<[1], [0], [0], [1], [0, 0, 1, 1], [], []>} : vector<16x8xbf16>, vector<8x116xbf16>, vector<16x116xf32> -> vector<16x116xf32>
    %62 = arith.addf %58, %61 : vector<16x116xf32>
    %63 = vector.extract_strided_slice %3 {offsets = [0, 14], sizes = [8, 116], strides = [1, 1]} : vector<8x130xbf16> to vector<8x116xbf16>
    %c0_37 = arith.constant 0 : index
    %c112 = arith.constant 112 : index
    %64 = vector.load %arg6[%c0_37, %c112] : memref<16x120xbf16, #tpu.memory_space<vmem>>, vector<16x8xbf16>
    %cst_38 = arith.constant dense<0.000000e+00> : vector<16x116xf32>
    %65 = tpu.matmul %64, %63, %cst_38 {dimension_numbers = #tpu.dot_dimension_numbers<[1], [0], [0], [1], [0, 0, 1, 1], [], []>} : vector<16x8xbf16>, vector<8x116xbf16>, vector<16x116xf32> -> vector<16x116xf32>
    %66 = arith.addf %62, %65 : vector<16x116xf32>
    %c0_39 = arith.constant 0 : index
    %c0_40 = arith.constant 0 : index
    %67 = vector.load %arg7[%c0_39, %c0_40] : memref<16x1xf32, #tpu.memory_space<vmem>>, vector<16x1xf32>
    %68 = vector.broadcast %67 : vector<16x1xf32> to vector<16x116xf32>
    %69 = arith.addf %66, %68 : vector<16x116xf32>
    %70 = arith.truncf %69 : vector<16x116xf32> to vector<16x116xbf16>
    %c0_41 = arith.constant 0 : index
    %c0_42 = arith.constant 0 : index
    %71 = vector.load %arg8[%c0_41, %c0_42] : memref<16x116xbf16, #tpu.memory_space<vmem>>, vector<16x116xbf16>
    tpu.vector_store %arg8[%c0_41, %c0_42], %70 {strides = array<i32>} : memref<16x116xbf16, #tpu.memory_space<vmem>>, vector<16x116xbf16>,
    %c0_i32 = arith.constant 0 : i32
    %72 = arith.cmpi eq, %arg1, %c0_i32 : i32
    %73 = arith.extui %72 : i1 to i32
    %c0_i32_43 = arith.constant 0 : i32
    %74 = arith.cmpi ne, %73, %c0_i32_43 : i32
    scf.if %74 {
      %cst_56 = arith.constant 0.000000e+00 : f32
      %89 = vector.broadcast %cst_56 : f32 to vector<16x1xf32>
      %c0_57 = arith.constant 0 : index
      %c0_58 = arith.constant 0 : index
      %90 = vector.load %arg11[%c0_57, %c0_58] : memref<16x1xf32, #tpu.memory_space<vmem>>, vector<16x1xf32>
      tpu.vector_store %arg11[%c0_57, %c0_58], %89 {strides = array<i32>} : memref<16x1xf32, #tpu.memory_space<vmem>>, vector<16x1xf32>,
      %cst_59 = arith.constant 0.000000e+00 : f32
      %91 = vector.broadcast %cst_59 : f32 to vector<16x1xf32>
      %c0_60 = arith.constant 0 : index
      %c0_61 = arith.constant 0 : index
      %92 = vector.load %arg12[%c0_60, %c0_61] : memref<16x1xf32, #tpu.memory_space<vmem>>, vector<16x1xf32>
      tpu.vector_store %arg12[%c0_60, %c0_61], %91 {strides = array<i32>} : memref<16x1xf32, #tpu.memory_space<vmem>>, vector<16x1xf32>,
    } else {
    }
    %c0_44 = arith.constant 0 : index
    %c0_45 = arith.constant 0 : index
    %75 = vector.load %arg11[%c0_44, %c0_45] : memref<16x1xf32, #tpu.memory_space<vmem>>, vector<16x1xf32>
    %cst_46 = arith.constant dense<0.000000e+00> : vector<16xf32>
    %76 = vector.multi_reduction <add>, %69, %cst_46 [1] : vector<16x116xf32> to vector<16xf32>
    %77 = vector.shape_cast %76 : vector<16xf32> to vector<16x1xf32>
    %78 = arith.addf %75, %77 : vector<16x1xf32>
    %c0_47 = arith.constant 0 : index
    %c0_48 = arith.constant 0 : index
    %79 = vector.load %arg11[%c0_47, %c0_48] : memref<16x1xf32, #tpu.memory_space<vmem>>, vector<16x1xf32>
    tpu.vector_store %arg11[%c0_47, %c0_48], %78 {strides = array<i32>} : memref<16x1xf32, #tpu.memory_space<vmem>>, vector<16x1xf32>,
    %c0_49 = arith.constant 0 : index
    %c0_50 = arith.constant 0 : index
    %80 = vector.load %arg12[%c0_49, %c0_50] : memref<16x1xf32, #tpu.memory_space<vmem>>, vector<16x1xf32>
    %81 = arith.mulf %69, %69 : vector<16x116xf32>
    %cst_51 = arith.constant dense<0.000000e+00> : vector<16xf32>
    %82 = vector.multi_reduction <add>, %81, %cst_51 [1] : vector<16x116xf32> to vector<16xf32>
    %83 = vector.shape_cast %82 : vector<16xf32> to vector<16x1xf32>
    %84 = arith.addf %80, %83 : vector<16x1xf32>
    %c0_52 = arith.constant 0 : index
    %c0_53 = arith.constant 0 : index
    %85 = vector.load %arg12[%c0_52, %c0_53] : memref<16x1xf32, #tpu.memory_space<vmem>>, vector<16x1xf32>
    tpu.vector_store %arg12[%c0_52, %c0_53], %84 {strides = array<i32>} : memref<16x1xf32, #tpu.memory_space<vmem>>, vector<16x1xf32>,
    %c0_i32_54 = arith.constant 0 : i32
    %86 = arith.cmpi eq, %arg1, %c0_i32_54 : i32
    %87 = arith.extui %86 : i1 to i32
    %c0_i32_55 = arith.constant 0 : i32
    %88 = arith.cmpi ne, %87, %c0_i32_55 : i32
    scf.if %88 {
      %c0_56 = arith.constant 0 : index
      %c0_57 = arith.constant 0 : index
      %89 = vector.load %arg11[%c0_56, %c0_57] : memref<16x1xf32, #tpu.memory_space<vmem>>, vector<16x1xf32>
      %c0_58 = arith.constant 0 : index
      %c0_59 = arith.constant 0 : index
      %90 = vector.load %arg9[%c0_58, %c0_59] : memref<16x1xf32, #tpu.memory_space<vmem>>, vector<16x1xf32>
      tpu.vector_store %arg9[%c0_58, %c0_59], %89 {strides = array<i32>} : memref<16x1xf32, #tpu.memory_space<vmem>>, vector<16x1xf32>,
      %c0_60 = arith.constant 0 : index
      %c0_61 = arith.constant 0 : index
      %91 = vector.load %arg12[%c0_60, %c0_61] : memref<16x1xf32, #tpu.memory_space<vmem>>, vector<16x1xf32>
      %c0_62 = arith.constant 0 : index
      %c0_63 = arith.constant 0 : index
      %92 = vector.load %arg10[%c0_62, %c0_63] : memref<16x1xf32, #tpu.memory_space<vmem>>, vector<16x1xf32>
      tpu.vector_store %arg10[%c0_62, %c0_63], %91 {strides = array<i32>} : memref<16x1xf32, #tpu.memory_space<vmem>>, vector<16x1xf32>,
    } else {
    }
    return
  }
  func.func @transform_0(%arg0: i32, %arg1: i32) -> (i32, i32) {
    %c0_i32 = arith.constant 0 : i32
    %c0_i32_0 = arith.constant 0 : i32
    return %c0_i32, %arg1 : i32, i32
  }
  func.func @transform_1(%arg0: i32, %arg1: i32) -> (i32, i32) {
    %c0_i32 = arith.constant 0 : i32
    %c0_i32_0 = arith.constant 0 : i32
    return %c0_i32, %arg1 : i32, i32
  }
  func.func @transform_2(%arg0: i32, %arg1: i32) -> (i32, i32, i32) {
    %c0_i32 = arith.constant 0 : i32
    %c0_i32_0 = arith.constant 0 : i32
    %c0_i32_1 = arith.constant 0 : i32
    return %arg1, %c0_i32, %c0_i32_0 : i32, i32, i32
  }
  func.func @transform_3(%arg0: i32, %arg1: i32) -> (i32, i32, i32) {
    %c0_i32 = arith.constant 0 : i32
    %c0_i32_0 = arith.constant 0 : i32
    %c0_i32_1 = arith.constant 0 : i32
    return %arg1, %c0_i32, %c0_i32_0 : i32, i32, i32
  }
  func.func @transform_4(%arg0: i32, %arg1: i32) -> (i32, i32) {
    %c0_i32 = arith.constant 0 : i32
    %c0_i32_0 = arith.constant 0 : i32
    return %arg0, %c0_i32 : i32, i32
  }
  func.func @transform_5(%arg0: i32, %arg1: i32) -> (i32, i32) {
    %c0_i32 = arith.constant 0 : i32
    %c0_i32_0 = arith.constant 0 : i32
    return %arg0, %c0_i32 : i32, i32
  }
  func.func @transform_6(%arg0: i32, %arg1: i32) -> (i32, i32) {
    %c0_i32 = arith.constant 0 : i32
    return %arg0, %arg1 : i32, i32
  }
  func.func @transform_7(%arg0: i32, %arg1: i32) -> (i32, i32) {
    %c0_i32 = arith.constant 0 : i32
    %c0_i32_0 = arith.constant 0 : i32
    return %arg0, %c0_i32 : i32, i32
  }
  func.func @transform_8(%arg0: i32, %arg1: i32) -> (i32, i32) {
    %c0_i32 = arith.constant 0 : i32
    %c0_i32_0 = arith.constant 0 : i32
    return %arg0, %c0_i32 : i32, i32
  }
}

module attributes {stable_mosaic.version = 11 : i64} {
  func.func @_conv_taps_stats_kernel(%arg0: i32, %arg1: i32, %arg2: memref<16x50xbf16, #tpu.memory_space<vmem>>, %arg3: memref<16x50xbf16, #tpu.memory_space<vmem>>, %arg4: memref<1x16x14xbf16, #tpu.memory_space<vmem>>, %arg5: memref<1x16x14xbf16, #tpu.memory_space<vmem>>, %arg6: memref<32x240xbf16, #tpu.memory_space<vmem>>, %arg7: memref<32x1xf32, #tpu.memory_space<vmem>>, %arg8: memref<32x50xbf16, #tpu.memory_space<vmem>>, %arg9: memref<32x1xf32, #tpu.memory_space<vmem>>, %arg10: memref<32x1xf32, #tpu.memory_space<vmem>>, %arg11: memref<32x1xf32, #tpu.memory_space<vmem>>, %arg12: memref<32x1xf32, #tpu.memory_space<vmem>>) attributes {dimension_semantics = [#tpu.dimension_semantics<parallel>, #tpu.dimension_semantics<arbitrary>], iteration_bounds = array<i64: 1, 1>, scalar_prefetch = 0 : i64, scratch_operands = 2 : i64, tpu.core_type = #tpu.core_type<tc>, window_params = [{transform_indices = @transform_0, window_bounds = array<i64: 16, 50>}, {transform_indices = @transform_1, window_bounds = array<i64: 16, 50>}, {transform_indices = @transform_2, window_bounds = array<i64: 1, 16, 14>}, {transform_indices = @transform_3, window_bounds = array<i64: 1, 16, 14>}, {transform_indices = @transform_4, window_bounds = array<i64: 32, 240>}, {transform_indices = @transform_5, window_bounds = array<i64: 32, 1>}, {transform_indices = @transform_6, window_bounds = array<i64: 32, 50>}, {transform_indices = @transform_7, window_bounds = array<i64: 32, 1>}, {transform_indices = @transform_8, window_bounds = array<i64: 32, 1>}]} {
    %c0 = arith.constant 0 : index
    %c0_0 = arith.constant 0 : index
    %0 = vector.load %arg2[%c0, %c0_0] : memref<16x50xbf16, #tpu.memory_space<vmem>>, vector<16x50xbf16>
    %c0_1 = arith.constant 0 : index
    %c0_2 = arith.constant 0 : index
    %c0_3 = arith.constant 0 : index
    %1 = vector.load %arg4[%c0_1, %c0_2, %c0_3] : memref<1x16x14xbf16, #tpu.memory_space<vmem>>, vector<1x16x14xbf16>
    %2 = vector.shape_cast %1 : vector<1x16x14xbf16> to vector<16x14xbf16>
    %3 = tpu.concatenate %0, %2 in 1 : vector<16x50xbf16>, vector<16x14xbf16> -> vector<16x64xbf16>
    %c0_4 = arith.constant 0 : index
    %c0_5 = arith.constant 0 : index
    %4 = vector.load %arg3[%c0_4, %c0_5] : memref<16x50xbf16, #tpu.memory_space<vmem>>, vector<16x50xbf16>
    %c0_6 = arith.constant 0 : index
    %c0_7 = arith.constant 0 : index
    %c0_8 = arith.constant 0 : index
    %5 = vector.load %arg5[%c0_6, %c0_7, %c0_8] : memref<1x16x14xbf16, #tpu.memory_space<vmem>>, vector<1x16x14xbf16>
    %6 = vector.shape_cast %5 : vector<1x16x14xbf16> to vector<16x14xbf16>
    %7 = tpu.concatenate %4, %6 in 1 : vector<16x50xbf16>, vector<16x14xbf16> -> vector<16x64xbf16>
    %8 = vector.extract_strided_slice %3 {offsets = [0, 0], sizes = [16, 50], strides = [1, 1]} : vector<16x64xbf16> to vector<16x50xbf16>
    %c0_9 = arith.constant 0 : index
    %c0_10 = arith.constant 0 : index
    %9 = vector.load %arg6[%c0_9, %c0_10] : memref<32x240xbf16, #tpu.memory_space<vmem>>, vector<32x16xbf16>
    %cst = arith.constant dense<0.000000e+00> : vector<32x50xf32>
    %10 = tpu.matmul %9, %8, %cst {dimension_numbers = #tpu.dot_dimension_numbers<[1], [0], [0], [1], [0, 0, 1, 1], [], []>} : vector<32x16xbf16>, vector<16x50xbf16>, vector<32x50xf32> -> vector<32x50xf32>
    %11 = vector.extract_strided_slice %7 {offsets = [0, 0], sizes = [16, 50], strides = [1, 1]} : vector<16x64xbf16> to vector<16x50xbf16>
    %c0_11 = arith.constant 0 : index
    %c16 = arith.constant 16 : index
    %12 = vector.load %arg6[%c0_11, %c16] : memref<32x240xbf16, #tpu.memory_space<vmem>>, vector<32x16xbf16>
    %cst_12 = arith.constant dense<0.000000e+00> : vector<32x50xf32>
    %13 = tpu.matmul %12, %11, %cst_12 {dimension_numbers = #tpu.dot_dimension_numbers<[1], [0], [0], [1], [0, 0, 1, 1], [], []>} : vector<32x16xbf16>, vector<16x50xbf16>, vector<32x50xf32> -> vector<32x50xf32>
    %14 = arith.addf %10, %13 : vector<32x50xf32>
    %15 = vector.extract_strided_slice %3 {offsets = [0, 2], sizes = [16, 50], strides = [1, 1]} : vector<16x64xbf16> to vector<16x50xbf16>
    %c0_13 = arith.constant 0 : index
    %c32 = arith.constant 32 : index
    %16 = vector.load %arg6[%c0_13, %c32] : memref<32x240xbf16, #tpu.memory_space<vmem>>, vector<32x16xbf16>
    %cst_14 = arith.constant dense<0.000000e+00> : vector<32x50xf32>
    %17 = tpu.matmul %16, %15, %cst_14 {dimension_numbers = #tpu.dot_dimension_numbers<[1], [0], [0], [1], [0, 0, 1, 1], [], []>} : vector<32x16xbf16>, vector<16x50xbf16>, vector<32x50xf32> -> vector<32x50xf32>
    %18 = arith.addf %14, %17 : vector<32x50xf32>
    %19 = vector.extract_strided_slice %7 {offsets = [0, 2], sizes = [16, 50], strides = [1, 1]} : vector<16x64xbf16> to vector<16x50xbf16>
    %c0_15 = arith.constant 0 : index
    %c48 = arith.constant 48 : index
    %20 = vector.load %arg6[%c0_15, %c48] : memref<32x240xbf16, #tpu.memory_space<vmem>>, vector<32x16xbf16>
    %cst_16 = arith.constant dense<0.000000e+00> : vector<32x50xf32>
    %21 = tpu.matmul %20, %19, %cst_16 {dimension_numbers = #tpu.dot_dimension_numbers<[1], [0], [0], [1], [0, 0, 1, 1], [], []>} : vector<32x16xbf16>, vector<16x50xbf16>, vector<32x50xf32> -> vector<32x50xf32>
    %22 = arith.addf %18, %21 : vector<32x50xf32>
    %23 = vector.extract_strided_slice %3 {offsets = [0, 4], sizes = [16, 50], strides = [1, 1]} : vector<16x64xbf16> to vector<16x50xbf16>
    %c0_17 = arith.constant 0 : index
    %c64 = arith.constant 64 : index
    %24 = vector.load %arg6[%c0_17, %c64] : memref<32x240xbf16, #tpu.memory_space<vmem>>, vector<32x16xbf16>
    %cst_18 = arith.constant dense<0.000000e+00> : vector<32x50xf32>
    %25 = tpu.matmul %24, %23, %cst_18 {dimension_numbers = #tpu.dot_dimension_numbers<[1], [0], [0], [1], [0, 0, 1, 1], [], []>} : vector<32x16xbf16>, vector<16x50xbf16>, vector<32x50xf32> -> vector<32x50xf32>
    %26 = arith.addf %22, %25 : vector<32x50xf32>
    %27 = vector.extract_strided_slice %7 {offsets = [0, 4], sizes = [16, 50], strides = [1, 1]} : vector<16x64xbf16> to vector<16x50xbf16>
    %c0_19 = arith.constant 0 : index
    %c80 = arith.constant 80 : index
    %28 = vector.load %arg6[%c0_19, %c80] : memref<32x240xbf16, #tpu.memory_space<vmem>>, vector<32x16xbf16>
    %cst_20 = arith.constant dense<0.000000e+00> : vector<32x50xf32>
    %29 = tpu.matmul %28, %27, %cst_20 {dimension_numbers = #tpu.dot_dimension_numbers<[1], [0], [0], [1], [0, 0, 1, 1], [], []>} : vector<32x16xbf16>, vector<16x50xbf16>, vector<32x50xf32> -> vector<32x50xf32>
    %30 = arith.addf %26, %29 : vector<32x50xf32>
    %31 = vector.extract_strided_slice %3 {offsets = [0, 6], sizes = [16, 50], strides = [1, 1]} : vector<16x64xbf16> to vector<16x50xbf16>
    %c0_21 = arith.constant 0 : index
    %c96 = arith.constant 96 : index
    %32 = vector.load %arg6[%c0_21, %c96] : memref<32x240xbf16, #tpu.memory_space<vmem>>, vector<32x16xbf16>
    %cst_22 = arith.constant dense<0.000000e+00> : vector<32x50xf32>
    %33 = tpu.matmul %32, %31, %cst_22 {dimension_numbers = #tpu.dot_dimension_numbers<[1], [0], [0], [1], [0, 0, 1, 1], [], []>} : vector<32x16xbf16>, vector<16x50xbf16>, vector<32x50xf32> -> vector<32x50xf32>
    %34 = arith.addf %30, %33 : vector<32x50xf32>
    %35 = vector.extract_strided_slice %7 {offsets = [0, 6], sizes = [16, 50], strides = [1, 1]} : vector<16x64xbf16> to vector<16x50xbf16>
    %c0_23 = arith.constant 0 : index
    %c112 = arith.constant 112 : index
    %36 = vector.load %arg6[%c0_23, %c112] : memref<32x240xbf16, #tpu.memory_space<vmem>>, vector<32x16xbf16>
    %cst_24 = arith.constant dense<0.000000e+00> : vector<32x50xf32>
    %37 = tpu.matmul %36, %35, %cst_24 {dimension_numbers = #tpu.dot_dimension_numbers<[1], [0], [0], [1], [0, 0, 1, 1], [], []>} : vector<32x16xbf16>, vector<16x50xbf16>, vector<32x50xf32> -> vector<32x50xf32>
    %38 = arith.addf %34, %37 : vector<32x50xf32>
    %39 = vector.extract_strided_slice %3 {offsets = [0, 8], sizes = [16, 50], strides = [1, 1]} : vector<16x64xbf16> to vector<16x50xbf16>
    %c0_25 = arith.constant 0 : index
    %c128 = arith.constant 128 : index
    %40 = vector.load %arg6[%c0_25, %c128] : memref<32x240xbf16, #tpu.memory_space<vmem>>, vector<32x16xbf16>
    %cst_26 = arith.constant dense<0.000000e+00> : vector<32x50xf32>
    %41 = tpu.matmul %40, %39, %cst_26 {dimension_numbers = #tpu.dot_dimension_numbers<[1], [0], [0], [1], [0, 0, 1, 1], [], []>} : vector<32x16xbf16>, vector<16x50xbf16>, vector<32x50xf32> -> vector<32x50xf32>
    %42 = arith.addf %38, %41 : vector<32x50xf32>
    %43 = vector.extract_strided_slice %7 {offsets = [0, 8], sizes = [16, 50], strides = [1, 1]} : vector<16x64xbf16> to vector<16x50xbf16>
    %c0_27 = arith.constant 0 : index
    %c144 = arith.constant 144 : index
    %44 = vector.load %arg6[%c0_27, %c144] : memref<32x240xbf16, #tpu.memory_space<vmem>>, vector<32x16xbf16>
    %cst_28 = arith.constant dense<0.000000e+00> : vector<32x50xf32>
    %45 = tpu.matmul %44, %43, %cst_28 {dimension_numbers = #tpu.dot_dimension_numbers<[1], [0], [0], [1], [0, 0, 1, 1], [], []>} : vector<32x16xbf16>, vector<16x50xbf16>, vector<32x50xf32> -> vector<32x50xf32>
    %46 = arith.addf %42, %45 : vector<32x50xf32>
    %47 = vector.extract_strided_slice %3 {offsets = [0, 10], sizes = [16, 50], strides = [1, 1]} : vector<16x64xbf16> to vector<16x50xbf16>
    %c0_29 = arith.constant 0 : index
    %c160 = arith.constant 160 : index
    %48 = vector.load %arg6[%c0_29, %c160] : memref<32x240xbf16, #tpu.memory_space<vmem>>, vector<32x16xbf16>
    %cst_30 = arith.constant dense<0.000000e+00> : vector<32x50xf32>
    %49 = tpu.matmul %48, %47, %cst_30 {dimension_numbers = #tpu.dot_dimension_numbers<[1], [0], [0], [1], [0, 0, 1, 1], [], []>} : vector<32x16xbf16>, vector<16x50xbf16>, vector<32x50xf32> -> vector<32x50xf32>
    %50 = arith.addf %46, %49 : vector<32x50xf32>
    %51 = vector.extract_strided_slice %7 {offsets = [0, 10], sizes = [16, 50], strides = [1, 1]} : vector<16x64xbf16> to vector<16x50xbf16>
    %c0_31 = arith.constant 0 : index
    %c176 = arith.constant 176 : index
    %52 = vector.load %arg6[%c0_31, %c176] : memref<32x240xbf16, #tpu.memory_space<vmem>>, vector<32x16xbf16>
    %cst_32 = arith.constant dense<0.000000e+00> : vector<32x50xf32>
    %53 = tpu.matmul %52, %51, %cst_32 {dimension_numbers = #tpu.dot_dimension_numbers<[1], [0], [0], [1], [0, 0, 1, 1], [], []>} : vector<32x16xbf16>, vector<16x50xbf16>, vector<32x50xf32> -> vector<32x50xf32>
    %54 = arith.addf %50, %53 : vector<32x50xf32>
    %55 = vector.extract_strided_slice %3 {offsets = [0, 12], sizes = [16, 50], strides = [1, 1]} : vector<16x64xbf16> to vector<16x50xbf16>
    %c0_33 = arith.constant 0 : index
    %c192 = arith.constant 192 : index
    %56 = vector.load %arg6[%c0_33, %c192] : memref<32x240xbf16, #tpu.memory_space<vmem>>, vector<32x16xbf16>
    %cst_34 = arith.constant dense<0.000000e+00> : vector<32x50xf32>
    %57 = tpu.matmul %56, %55, %cst_34 {dimension_numbers = #tpu.dot_dimension_numbers<[1], [0], [0], [1], [0, 0, 1, 1], [], []>} : vector<32x16xbf16>, vector<16x50xbf16>, vector<32x50xf32> -> vector<32x50xf32>
    %58 = arith.addf %54, %57 : vector<32x50xf32>
    %59 = vector.extract_strided_slice %7 {offsets = [0, 12], sizes = [16, 50], strides = [1, 1]} : vector<16x64xbf16> to vector<16x50xbf16>
    %c0_35 = arith.constant 0 : index
    %c208 = arith.constant 208 : index
    %60 = vector.load %arg6[%c0_35, %c208] : memref<32x240xbf16, #tpu.memory_space<vmem>>, vector<32x16xbf16>
    %cst_36 = arith.constant dense<0.000000e+00> : vector<32x50xf32>
    %61 = tpu.matmul %60, %59, %cst_36 {dimension_numbers = #tpu.dot_dimension_numbers<[1], [0], [0], [1], [0, 0, 1, 1], [], []>} : vector<32x16xbf16>, vector<16x50xbf16>, vector<32x50xf32> -> vector<32x50xf32>
    %62 = arith.addf %58, %61 : vector<32x50xf32>
    %63 = vector.extract_strided_slice %3 {offsets = [0, 14], sizes = [16, 50], strides = [1, 1]} : vector<16x64xbf16> to vector<16x50xbf16>
    %c0_37 = arith.constant 0 : index
    %c224 = arith.constant 224 : index
    %64 = vector.load %arg6[%c0_37, %c224] : memref<32x240xbf16, #tpu.memory_space<vmem>>, vector<32x16xbf16>
    %cst_38 = arith.constant dense<0.000000e+00> : vector<32x50xf32>
    %65 = tpu.matmul %64, %63, %cst_38 {dimension_numbers = #tpu.dot_dimension_numbers<[1], [0], [0], [1], [0, 0, 1, 1], [], []>} : vector<32x16xbf16>, vector<16x50xbf16>, vector<32x50xf32> -> vector<32x50xf32>
    %66 = arith.addf %62, %65 : vector<32x50xf32>
    %c0_39 = arith.constant 0 : index
    %c0_40 = arith.constant 0 : index
    %67 = vector.load %arg7[%c0_39, %c0_40] : memref<32x1xf32, #tpu.memory_space<vmem>>, vector<32x1xf32>
    %68 = vector.broadcast %67 : vector<32x1xf32> to vector<32x50xf32>
    %69 = arith.addf %66, %68 : vector<32x50xf32>
    %70 = arith.truncf %69 : vector<32x50xf32> to vector<32x50xbf16>
    %c0_41 = arith.constant 0 : index
    %c0_42 = arith.constant 0 : index
    %71 = vector.load %arg8[%c0_41, %c0_42] : memref<32x50xbf16, #tpu.memory_space<vmem>>, vector<32x50xbf16>
    tpu.vector_store %arg8[%c0_41, %c0_42], %70 {strides = array<i32>} : memref<32x50xbf16, #tpu.memory_space<vmem>>, vector<32x50xbf16>,
    %c0_i32 = arith.constant 0 : i32
    %72 = arith.cmpi eq, %arg1, %c0_i32 : i32
    %73 = arith.extui %72 : i1 to i32
    %c0_i32_43 = arith.constant 0 : i32
    %74 = arith.cmpi ne, %73, %c0_i32_43 : i32
    scf.if %74 {
      %cst_56 = arith.constant 0.000000e+00 : f32
      %89 = vector.broadcast %cst_56 : f32 to vector<32x1xf32>
      %c0_57 = arith.constant 0 : index
      %c0_58 = arith.constant 0 : index
      %90 = vector.load %arg11[%c0_57, %c0_58] : memref<32x1xf32, #tpu.memory_space<vmem>>, vector<32x1xf32>
      tpu.vector_store %arg11[%c0_57, %c0_58], %89 {strides = array<i32>} : memref<32x1xf32, #tpu.memory_space<vmem>>, vector<32x1xf32>,
      %cst_59 = arith.constant 0.000000e+00 : f32
      %91 = vector.broadcast %cst_59 : f32 to vector<32x1xf32>
      %c0_60 = arith.constant 0 : index
      %c0_61 = arith.constant 0 : index
      %92 = vector.load %arg12[%c0_60, %c0_61] : memref<32x1xf32, #tpu.memory_space<vmem>>, vector<32x1xf32>
      tpu.vector_store %arg12[%c0_60, %c0_61], %91 {strides = array<i32>} : memref<32x1xf32, #tpu.memory_space<vmem>>, vector<32x1xf32>,
    } else {
    }
    %c0_44 = arith.constant 0 : index
    %c0_45 = arith.constant 0 : index
    %75 = vector.load %arg11[%c0_44, %c0_45] : memref<32x1xf32, #tpu.memory_space<vmem>>, vector<32x1xf32>
    %cst_46 = arith.constant dense<0.000000e+00> : vector<32xf32>
    %76 = vector.multi_reduction <add>, %69, %cst_46 [1] : vector<32x50xf32> to vector<32xf32>
    %77 = vector.shape_cast %76 : vector<32xf32> to vector<32x1xf32>
    %78 = arith.addf %75, %77 : vector<32x1xf32>
    %c0_47 = arith.constant 0 : index
    %c0_48 = arith.constant 0 : index
    %79 = vector.load %arg11[%c0_47, %c0_48] : memref<32x1xf32, #tpu.memory_space<vmem>>, vector<32x1xf32>
    tpu.vector_store %arg11[%c0_47, %c0_48], %78 {strides = array<i32>} : memref<32x1xf32, #tpu.memory_space<vmem>>, vector<32x1xf32>,
    %c0_49 = arith.constant 0 : index
    %c0_50 = arith.constant 0 : index
    %80 = vector.load %arg12[%c0_49, %c0_50] : memref<32x1xf32, #tpu.memory_space<vmem>>, vector<32x1xf32>
    %81 = arith.mulf %69, %69 : vector<32x50xf32>
    %cst_51 = arith.constant dense<0.000000e+00> : vector<32xf32>
    %82 = vector.multi_reduction <add>, %81, %cst_51 [1] : vector<32x50xf32> to vector<32xf32>
    %83 = vector.shape_cast %82 : vector<32xf32> to vector<32x1xf32>
    %84 = arith.addf %80, %83 : vector<32x1xf32>
    %c0_52 = arith.constant 0 : index
    %c0_53 = arith.constant 0 : index
    %85 = vector.load %arg12[%c0_52, %c0_53] : memref<32x1xf32, #tpu.memory_space<vmem>>, vector<32x1xf32>
    tpu.vector_store %arg12[%c0_52, %c0_53], %84 {strides = array<i32>} : memref<32x1xf32, #tpu.memory_space<vmem>>, vector<32x1xf32>,
    %c0_i32_54 = arith.constant 0 : i32
    %86 = arith.cmpi eq, %arg1, %c0_i32_54 : i32
    %87 = arith.extui %86 : i1 to i32
    %c0_i32_55 = arith.constant 0 : i32
    %88 = arith.cmpi ne, %87, %c0_i32_55 : i32
    scf.if %88 {
      %c0_56 = arith.constant 0 : index
      %c0_57 = arith.constant 0 : index
      %89 = vector.load %arg11[%c0_56, %c0_57] : memref<32x1xf32, #tpu.memory_space<vmem>>, vector<32x1xf32>
      %c0_58 = arith.constant 0 : index
      %c0_59 = arith.constant 0 : index
      %90 = vector.load %arg9[%c0_58, %c0_59] : memref<32x1xf32, #tpu.memory_space<vmem>>, vector<32x1xf32>
      tpu.vector_store %arg9[%c0_58, %c0_59], %89 {strides = array<i32>} : memref<32x1xf32, #tpu.memory_space<vmem>>, vector<32x1xf32>,
      %c0_60 = arith.constant 0 : index
      %c0_61 = arith.constant 0 : index
      %91 = vector.load %arg12[%c0_60, %c0_61] : memref<32x1xf32, #tpu.memory_space<vmem>>, vector<32x1xf32>
      %c0_62 = arith.constant 0 : index
      %c0_63 = arith.constant 0 : index
      %92 = vector.load %arg10[%c0_62, %c0_63] : memref<32x1xf32, #tpu.memory_space<vmem>>, vector<32x1xf32>
      tpu.vector_store %arg10[%c0_62, %c0_63], %91 {strides = array<i32>} : memref<32x1xf32, #tpu.memory_space<vmem>>, vector<32x1xf32>,
    } else {
    }
    return
  }
  func.func @transform_0(%arg0: i32, %arg1: i32) -> (i32, i32) {
    %c0_i32 = arith.constant 0 : i32
    %c0_i32_0 = arith.constant 0 : i32
    return %c0_i32, %arg1 : i32, i32
  }
  func.func @transform_1(%arg0: i32, %arg1: i32) -> (i32, i32) {
    %c0_i32 = arith.constant 0 : i32
    %c0_i32_0 = arith.constant 0 : i32
    return %c0_i32, %arg1 : i32, i32
  }
  func.func @transform_2(%arg0: i32, %arg1: i32) -> (i32, i32, i32) {
    %c0_i32 = arith.constant 0 : i32
    %c0_i32_0 = arith.constant 0 : i32
    %c0_i32_1 = arith.constant 0 : i32
    return %arg1, %c0_i32, %c0_i32_0 : i32, i32, i32
  }
  func.func @transform_3(%arg0: i32, %arg1: i32) -> (i32, i32, i32) {
    %c0_i32 = arith.constant 0 : i32
    %c0_i32_0 = arith.constant 0 : i32
    %c0_i32_1 = arith.constant 0 : i32
    return %arg1, %c0_i32, %c0_i32_0 : i32, i32, i32
  }
  func.func @transform_4(%arg0: i32, %arg1: i32) -> (i32, i32) {
    %c0_i32 = arith.constant 0 : i32
    %c0_i32_0 = arith.constant 0 : i32
    return %arg0, %c0_i32 : i32, i32
  }
  func.func @transform_5(%arg0: i32, %arg1: i32) -> (i32, i32) {
    %c0_i32 = arith.constant 0 : i32
    %c0_i32_0 = arith.constant 0 : i32
    return %arg0, %c0_i32 : i32, i32
  }
  func.func @transform_6(%arg0: i32, %arg1: i32) -> (i32, i32) {
    %c0_i32 = arith.constant 0 : i32
    return %arg0, %arg1 : i32, i32
  }
  func.func @transform_7(%arg0: i32, %arg1: i32) -> (i32, i32) {
    %c0_i32 = arith.constant 0 : i32
    %c0_i32_0 = arith.constant 0 : i32
    return %arg0, %c0_i32 : i32, i32
  }
  func.func @transform_8(%arg0: i32, %arg1: i32) -> (i32, i32) {
    %c0_i32 = arith.constant 0 : i32
    %c0_i32_0 = arith.constant 0 : i32
    return %arg0, %c0_i32 : i32, i32
  }
}

module attributes {stable_mosaic.version = 11 : i64} {
  func.func @_bn_relu_kernel(%arg0: i32, %arg1: memref<32x50xbf16, #tpu.memory_space<vmem>>, %arg2: memref<32x1xf32, #tpu.memory_space<vmem>>, %arg3: memref<32x1xf32, #tpu.memory_space<vmem>>, %arg4: memref<32x1xf32, #tpu.memory_space<vmem>>, %arg5: memref<32x1xf32, #tpu.memory_space<vmem>>, %arg6: memref<32x50xbf16, #tpu.memory_space<vmem>>) attributes {dimension_semantics = [#tpu.dimension_semantics<parallel>], iteration_bounds = array<i64: 1>, scalar_prefetch = 0 : i64, scratch_operands = 0 : i64, tpu.core_type = #tpu.core_type<tc>, window_params = [{transform_indices = @transform_0, window_bounds = array<i64: 32, 50>}, {pipeline_mode = #tpu.pipeline_mode<synchronous>, transform_indices = @transform_1, window_bounds = array<i64: 32, 1>}, {pipeline_mode = #tpu.pipeline_mode<synchronous>, transform_indices = @transform_2, window_bounds = array<i64: 32, 1>}, {pipeline_mode = #tpu.pipeline_mode<synchronous>, transform_indices = @transform_3, window_bounds = array<i64: 32, 1>}, {pipeline_mode = #tpu.pipeline_mode<synchronous>, transform_indices = @transform_4, window_bounds = array<i64: 32, 1>}, {transform_indices = @transform_5, window_bounds = array<i64: 32, 50>}]} {
    %c0 = arith.constant 0 : index
    %c0_0 = arith.constant 0 : index
    %0 = vector.load %arg2[%c0, %c0_0] : memref<32x1xf32, #tpu.memory_space<vmem>>, vector<32x1xf32>
    %cst = arith.constant 2.000000e-02 : f32
    %1 = vector.broadcast %cst : f32 to vector<32x1xf32>
    %2 = arith.mulf %0, %1 : vector<32x1xf32>
    %c0_1 = arith.constant 0 : index
    %c0_2 = arith.constant 0 : index
    %3 = vector.load %arg3[%c0_1, %c0_2] : memref<32x1xf32, #tpu.memory_space<vmem>>, vector<32x1xf32>
    %cst_3 = arith.constant 2.000000e-02 : f32
    %4 = vector.broadcast %cst_3 : f32 to vector<32x1xf32>
    %5 = arith.mulf %3, %4 : vector<32x1xf32>
    %6 = arith.mulf %2, %2 : vector<32x1xf32>
    %7 = arith.subf %5, %6 : vector<32x1xf32>
    %cst_4 = arith.constant 0.000000e+00 : f32
    %8 = vector.broadcast %cst_4 : f32 to vector<32x1xf32>
    %9 = arith.maximumf %7, %8 : vector<32x1xf32>
    %c0_5 = arith.constant 0 : index
    %c0_6 = arith.constant 0 : index
    %10 = vector.load %arg4[%c0_5, %c0_6] : memref<32x1xf32, #tpu.memory_space<vmem>>, vector<32x1xf32>
    %cst_7 = arith.constant 9.99999974E-6 : f32
    %11 = vector.broadcast %cst_7 : f32 to vector<32x1xf32>
    %12 = arith.addf %9, %11 : vector<32x1xf32>
    %13 = math.rsqrt %12 : vector<32x1xf32>
    %14 = arith.mulf %10, %13 : vector<32x1xf32>
    %c0_8 = arith.constant 0 : index
    %c0_9 = arith.constant 0 : index
    %15 = vector.load %arg5[%c0_8, %c0_9] : memref<32x1xf32, #tpu.memory_space<vmem>>, vector<32x1xf32>
    %16 = arith.mulf %2, %14 : vector<32x1xf32>
    %17 = arith.subf %15, %16 : vector<32x1xf32>
    %c0_10 = arith.constant 0 : index
    %c0_11 = arith.constant 0 : index
    %18 = vector.load %arg1[%c0_10, %c0_11] : memref<32x50xbf16, #tpu.memory_space<vmem>>, vector<32x50xbf16>
    %19 = arith.extf %18 : vector<32x50xbf16> to vector<32x50xf32>
    %20 = vector.broadcast %14 : vector<32x1xf32> to vector<32x50xf32>
    %21 = arith.mulf %19, %20 : vector<32x50xf32>
    %22 = vector.broadcast %17 : vector<32x1xf32> to vector<32x50xf32>
    %23 = arith.addf %21, %22 : vector<32x50xf32>
    %cst_12 = arith.constant 0.000000e+00 : f32
    %24 = vector.broadcast %cst_12 : f32 to vector<32x50xf32>
    %25 = arith.maximumf %23, %24 : vector<32x50xf32>
    %26 = arith.truncf %25 : vector<32x50xf32> to vector<32x50xbf16>
    %c0_13 = arith.constant 0 : index
    %c0_14 = arith.constant 0 : index
    %27 = vector.load %arg6[%c0_13, %c0_14] : memref<32x50xbf16, #tpu.memory_space<vmem>>, vector<32x50xbf16>
    tpu.vector_store %arg6[%c0_13, %c0_14], %26 {strides = array<i32>} : memref<32x50xbf16, #tpu.memory_space<vmem>>, vector<32x50xbf16>,
    return
  }
  func.func @transform_0(%arg0: i32) -> (i32, i32) {
    %c0_i32 = arith.constant 0 : i32
    %c0_i32_0 = arith.constant 0 : i32
    return %c0_i32, %arg0 : i32, i32
  }
  func.func @transform_1(%arg0: i32) -> (i32, i32) {
    %c0_i32 = arith.constant 0 : i32
    %c0_i32_0 = arith.constant 0 : i32
    %c0_i32_1 = arith.constant 0 : i32
    return %c0_i32, %c0_i32_0 : i32, i32
  }
  func.func @transform_2(%arg0: i32) -> (i32, i32) {
    %c0_i32 = arith.constant 0 : i32
    %c0_i32_0 = arith.constant 0 : i32
    %c0_i32_1 = arith.constant 0 : i32
    return %c0_i32, %c0_i32_0 : i32, i32
  }
  func.func @transform_3(%arg0: i32) -> (i32, i32) {
    %c0_i32 = arith.constant 0 : i32
    %c0_i32_0 = arith.constant 0 : i32
    %c0_i32_1 = arith.constant 0 : i32
    return %c0_i32, %c0_i32_0 : i32, i32
  }
  func.func @transform_4(%arg0: i32) -> (i32, i32) {
    %c0_i32 = arith.constant 0 : i32
    %c0_i32_0 = arith.constant 0 : i32
    %c0_i32_1 = arith.constant 0 : i32
    return %c0_i32, %c0_i32_0 : i32, i32
  }
  func.func @transform_5(%arg0: i32) -> (i32, i32) {
    %c0_i32 = arith.constant 0 : i32
    %c0_i32_0 = arith.constant 0 : i32
    return %c0_i32, %arg0 : i32, i32
  }
}

module attributes {stable_mosaic.version = 11 : i64} {
  func.func @_conv_taps_stats_kernel(%arg0: i32, %arg1: i32, %arg2: memref<32x18xbf16, #tpu.memory_space<vmem>>, %arg3: memref<32x18xbf16, #tpu.memory_space<vmem>>, %arg4: memref<1x32x14xbf16, #tpu.memory_space<vmem>>, %arg5: memref<1x32x14xbf16, #tpu.memory_space<vmem>>, %arg6: memref<64x480xbf16, #tpu.memory_space<vmem>>, %arg7: memref<64x1xf32, #tpu.memory_space<vmem>>, %arg8: memref<64x18xbf16, #tpu.memory_space<vmem>>, %arg9: memref<64x1xf32, #tpu.memory_space<vmem>>, %arg10: memref<64x1xf32, #tpu.memory_space<vmem>>, %arg11: memref<64x1xf32, #tpu.memory_space<vmem>>, %arg12: memref<64x1xf32, #tpu.memory_space<vmem>>) attributes {dimension_semantics = [#tpu.dimension_semantics<parallel>, #tpu.dimension_semantics<arbitrary>], iteration_bounds = array<i64: 1, 1>, scalar_prefetch = 0 : i64, scratch_operands = 2 : i64, tpu.core_type = #tpu.core_type<tc>, window_params = [{transform_indices = @transform_0, window_bounds = array<i64: 32, 18>}, {transform_indices = @transform_1, window_bounds = array<i64: 32, 18>}, {transform_indices = @transform_2, window_bounds = array<i64: 1, 32, 14>}, {transform_indices = @transform_3, window_bounds = array<i64: 1, 32, 14>}, {transform_indices = @transform_4, window_bounds = array<i64: 64, 480>}, {transform_indices = @transform_5, window_bounds = array<i64: 64, 1>}, {transform_indices = @transform_6, window_bounds = array<i64: 64, 18>}, {transform_indices = @transform_7, window_bounds = array<i64: 64, 1>}, {transform_indices = @transform_8, window_bounds = array<i64: 64, 1>}]} {
    %c0 = arith.constant 0 : index
    %c0_0 = arith.constant 0 : index
    %0 = vector.load %arg2[%c0, %c0_0] : memref<32x18xbf16, #tpu.memory_space<vmem>>, vector<32x18xbf16>
    %c0_1 = arith.constant 0 : index
    %c0_2 = arith.constant 0 : index
    %c0_3 = arith.constant 0 : index
    %1 = vector.load %arg4[%c0_1, %c0_2, %c0_3] : memref<1x32x14xbf16, #tpu.memory_space<vmem>>, vector<1x32x14xbf16>
    %2 = vector.shape_cast %1 : vector<1x32x14xbf16> to vector<32x14xbf16>
    %3 = tpu.concatenate %0, %2 in 1 : vector<32x18xbf16>, vector<32x14xbf16> -> vector<32x32xbf16>
    %c0_4 = arith.constant 0 : index
    %c0_5 = arith.constant 0 : index
    %4 = vector.load %arg3[%c0_4, %c0_5] : memref<32x18xbf16, #tpu.memory_space<vmem>>, vector<32x18xbf16>
    %c0_6 = arith.constant 0 : index
    %c0_7 = arith.constant 0 : index
    %c0_8 = arith.constant 0 : index
    %5 = vector.load %arg5[%c0_6, %c0_7, %c0_8] : memref<1x32x14xbf16, #tpu.memory_space<vmem>>, vector<1x32x14xbf16>
    %6 = vector.shape_cast %5 : vector<1x32x14xbf16> to vector<32x14xbf16>
    %7 = tpu.concatenate %4, %6 in 1 : vector<32x18xbf16>, vector<32x14xbf16> -> vector<32x32xbf16>
    %8 = vector.extract_strided_slice %3 {offsets = [0, 0], sizes = [32, 18], strides = [1, 1]} : vector<32x32xbf16> to vector<32x18xbf16>
    %c0_9 = arith.constant 0 : index
    %c0_10 = arith.constant 0 : index
    %9 = vector.load %arg6[%c0_9, %c0_10] : memref<64x480xbf16, #tpu.memory_space<vmem>>, vector<64x32xbf16>
    %cst = arith.constant dense<0.000000e+00> : vector<64x18xf32>
    %10 = tpu.matmul %9, %8, %cst {dimension_numbers = #tpu.dot_dimension_numbers<[1], [0], [0], [1], [0, 0, 1, 1], [], []>} : vector<64x32xbf16>, vector<32x18xbf16>, vector<64x18xf32> -> vector<64x18xf32>
    %11 = vector.extract_strided_slice %7 {offsets = [0, 0], sizes = [32, 18], strides = [1, 1]} : vector<32x32xbf16> to vector<32x18xbf16>
    %c0_11 = arith.constant 0 : index
    %c32 = arith.constant 32 : index
    %12 = vector.load %arg6[%c0_11, %c32] : memref<64x480xbf16, #tpu.memory_space<vmem>>, vector<64x32xbf16>
    %cst_12 = arith.constant dense<0.000000e+00> : vector<64x18xf32>
    %13 = tpu.matmul %12, %11, %cst_12 {dimension_numbers = #tpu.dot_dimension_numbers<[1], [0], [0], [1], [0, 0, 1, 1], [], []>} : vector<64x32xbf16>, vector<32x18xbf16>, vector<64x18xf32> -> vector<64x18xf32>
    %14 = arith.addf %10, %13 : vector<64x18xf32>
    %15 = vector.extract_strided_slice %3 {offsets = [0, 2], sizes = [32, 18], strides = [1, 1]} : vector<32x32xbf16> to vector<32x18xbf16>
    %c0_13 = arith.constant 0 : index
    %c64 = arith.constant 64 : index
    %16 = vector.load %arg6[%c0_13, %c64] : memref<64x480xbf16, #tpu.memory_space<vmem>>, vector<64x32xbf16>
    %cst_14 = arith.constant dense<0.000000e+00> : vector<64x18xf32>
    %17 = tpu.matmul %16, %15, %cst_14 {dimension_numbers = #tpu.dot_dimension_numbers<[1], [0], [0], [1], [0, 0, 1, 1], [], []>} : vector<64x32xbf16>, vector<32x18xbf16>, vector<64x18xf32> -> vector<64x18xf32>
    %18 = arith.addf %14, %17 : vector<64x18xf32>
    %19 = vector.extract_strided_slice %7 {offsets = [0, 2], sizes = [32, 18], strides = [1, 1]} : vector<32x32xbf16> to vector<32x18xbf16>
    %c0_15 = arith.constant 0 : index
    %c96 = arith.constant 96 : index
    %20 = vector.load %arg6[%c0_15, %c96] : memref<64x480xbf16, #tpu.memory_space<vmem>>, vector<64x32xbf16>
    %cst_16 = arith.constant dense<0.000000e+00> : vector<64x18xf32>
    %21 = tpu.matmul %20, %19, %cst_16 {dimension_numbers = #tpu.dot_dimension_numbers<[1], [0], [0], [1], [0, 0, 1, 1], [], []>} : vector<64x32xbf16>, vector<32x18xbf16>, vector<64x18xf32> -> vector<64x18xf32>
    %22 = arith.addf %18, %21 : vector<64x18xf32>
    %23 = vector.extract_strided_slice %3 {offsets = [0, 4], sizes = [32, 18], strides = [1, 1]} : vector<32x32xbf16> to vector<32x18xbf16>
    %c0_17 = arith.constant 0 : index
    %c128 = arith.constant 128 : index
    %24 = vector.load %arg6[%c0_17, %c128] : memref<64x480xbf16, #tpu.memory_space<vmem>>, vector<64x32xbf16>
    %cst_18 = arith.constant dense<0.000000e+00> : vector<64x18xf32>
    %25 = tpu.matmul %24, %23, %cst_18 {dimension_numbers = #tpu.dot_dimension_numbers<[1], [0], [0], [1], [0, 0, 1, 1], [], []>} : vector<64x32xbf16>, vector<32x18xbf16>, vector<64x18xf32> -> vector<64x18xf32>
    %26 = arith.addf %22, %25 : vector<64x18xf32>
    %27 = vector.extract_strided_slice %7 {offsets = [0, 4], sizes = [32, 18], strides = [1, 1]} : vector<32x32xbf16> to vector<32x18xbf16>
    %c0_19 = arith.constant 0 : index
    %c160 = arith.constant 160 : index
    %28 = vector.load %arg6[%c0_19, %c160] : memref<64x480xbf16, #tpu.memory_space<vmem>>, vector<64x32xbf16>
    %cst_20 = arith.constant dense<0.000000e+00> : vector<64x18xf32>
    %29 = tpu.matmul %28, %27, %cst_20 {dimension_numbers = #tpu.dot_dimension_numbers<[1], [0], [0], [1], [0, 0, 1, 1], [], []>} : vector<64x32xbf16>, vector<32x18xbf16>, vector<64x18xf32> -> vector<64x18xf32>
    %30 = arith.addf %26, %29 : vector<64x18xf32>
    %31 = vector.extract_strided_slice %3 {offsets = [0, 6], sizes = [32, 18], strides = [1, 1]} : vector<32x32xbf16> to vector<32x18xbf16>
    %c0_21 = arith.constant 0 : index
    %c192 = arith.constant 192 : index
    %32 = vector.load %arg6[%c0_21, %c192] : memref<64x480xbf16, #tpu.memory_space<vmem>>, vector<64x32xbf16>
    %cst_22 = arith.constant dense<0.000000e+00> : vector<64x18xf32>
    %33 = tpu.matmul %32, %31, %cst_22 {dimension_numbers = #tpu.dot_dimension_numbers<[1], [0], [0], [1], [0, 0, 1, 1], [], []>} : vector<64x32xbf16>, vector<32x18xbf16>, vector<64x18xf32> -> vector<64x18xf32>
    %34 = arith.addf %30, %33 : vector<64x18xf32>
    %35 = vector.extract_strided_slice %7 {offsets = [0, 6], sizes = [32, 18], strides = [1, 1]} : vector<32x32xbf16> to vector<32x18xbf16>
    %c0_23 = arith.constant 0 : index
    %c224 = arith.constant 224 : index
    %36 = vector.load %arg6[%c0_23, %c224] : memref<64x480xbf16, #tpu.memory_space<vmem>>, vector<64x32xbf16>
    %cst_24 = arith.constant dense<0.000000e+00> : vector<64x18xf32>
    %37 = tpu.matmul %36, %35, %cst_24 {dimension_numbers = #tpu.dot_dimension_numbers<[1], [0], [0], [1], [0, 0, 1, 1], [], []>} : vector<64x32xbf16>, vector<32x18xbf16>, vector<64x18xf32> -> vector<64x18xf32>
    %38 = arith.addf %34, %37 : vector<64x18xf32>
    %39 = vector.extract_strided_slice %3 {offsets = [0, 8], sizes = [32, 18], strides = [1, 1]} : vector<32x32xbf16> to vector<32x18xbf16>
    %c0_25 = arith.constant 0 : index
    %c256 = arith.constant 256 : index
    %40 = vector.load %arg6[%c0_25, %c256] : memref<64x480xbf16, #tpu.memory_space<vmem>>, vector<64x32xbf16>
    %cst_26 = arith.constant dense<0.000000e+00> : vector<64x18xf32>
    %41 = tpu.matmul %40, %39, %cst_26 {dimension_numbers = #tpu.dot_dimension_numbers<[1], [0], [0], [1], [0, 0, 1, 1], [], []>} : vector<64x32xbf16>, vector<32x18xbf16>, vector<64x18xf32> -> vector<64x18xf32>
    %42 = arith.addf %38, %41 : vector<64x18xf32>
    %43 = vector.extract_strided_slice %7 {offsets = [0, 8], sizes = [32, 18], strides = [1, 1]} : vector<32x32xbf16> to vector<32x18xbf16>
    %c0_27 = arith.constant 0 : index
    %c288 = arith.constant 288 : index
    %44 = vector.load %arg6[%c0_27, %c288] : memref<64x480xbf16, #tpu.memory_space<vmem>>, vector<64x32xbf16>
    %cst_28 = arith.constant dense<0.000000e+00> : vector<64x18xf32>
    %45 = tpu.matmul %44, %43, %cst_28 {dimension_numbers = #tpu.dot_dimension_numbers<[1], [0], [0], [1], [0, 0, 1, 1], [], []>} : vector<64x32xbf16>, vector<32x18xbf16>, vector<64x18xf32> -> vector<64x18xf32>
    %46 = arith.addf %42, %45 : vector<64x18xf32>
    %47 = vector.extract_strided_slice %3 {offsets = [0, 10], sizes = [32, 18], strides = [1, 1]} : vector<32x32xbf16> to vector<32x18xbf16>
    %c0_29 = arith.constant 0 : index
    %c320 = arith.constant 320 : index
    %48 = vector.load %arg6[%c0_29, %c320] : memref<64x480xbf16, #tpu.memory_space<vmem>>, vector<64x32xbf16>
    %cst_30 = arith.constant dense<0.000000e+00> : vector<64x18xf32>
    %49 = tpu.matmul %48, %47, %cst_30 {dimension_numbers = #tpu.dot_dimension_numbers<[1], [0], [0], [1], [0, 0, 1, 1], [], []>} : vector<64x32xbf16>, vector<32x18xbf16>, vector<64x18xf32> -> vector<64x18xf32>
    %50 = arith.addf %46, %49 : vector<64x18xf32>
    %51 = vector.extract_strided_slice %7 {offsets = [0, 10], sizes = [32, 18], strides = [1, 1]} : vector<32x32xbf16> to vector<32x18xbf16>
    %c0_31 = arith.constant 0 : index
    %c352 = arith.constant 352 : index
    %52 = vector.load %arg6[%c0_31, %c352] : memref<64x480xbf16, #tpu.memory_space<vmem>>, vector<64x32xbf16>
    %cst_32 = arith.constant dense<0.000000e+00> : vector<64x18xf32>
    %53 = tpu.matmul %52, %51, %cst_32 {dimension_numbers = #tpu.dot_dimension_numbers<[1], [0], [0], [1], [0, 0, 1, 1], [], []>} : vector<64x32xbf16>, vector<32x18xbf16>, vector<64x18xf32> -> vector<64x18xf32>
    %54 = arith.addf %50, %53 : vector<64x18xf32>
    %55 = vector.extract_strided_slice %3 {offsets = [0, 12], sizes = [32, 18], strides = [1, 1]} : vector<32x32xbf16> to vector<32x18xbf16>
    %c0_33 = arith.constant 0 : index
    %c384 = arith.constant 384 : index
    %56 = vector.load %arg6[%c0_33, %c384] : memref<64x480xbf16, #tpu.memory_space<vmem>>, vector<64x32xbf16>
    %cst_34 = arith.constant dense<0.000000e+00> : vector<64x18xf32>
    %57 = tpu.matmul %56, %55, %cst_34 {dimension_numbers = #tpu.dot_dimension_numbers<[1], [0], [0], [1], [0, 0, 1, 1], [], []>} : vector<64x32xbf16>, vector<32x18xbf16>, vector<64x18xf32> -> vector<64x18xf32>
    %58 = arith.addf %54, %57 : vector<64x18xf32>
    %59 = vector.extract_strided_slice %7 {offsets = [0, 12], sizes = [32, 18], strides = [1, 1]} : vector<32x32xbf16> to vector<32x18xbf16>
    %c0_35 = arith.constant 0 : index
    %c416 = arith.constant 416 : index
    %60 = vector.load %arg6[%c0_35, %c416] : memref<64x480xbf16, #tpu.memory_space<vmem>>, vector<64x32xbf16>
    %cst_36 = arith.constant dense<0.000000e+00> : vector<64x18xf32>
    %61 = tpu.matmul %60, %59, %cst_36 {dimension_numbers = #tpu.dot_dimension_numbers<[1], [0], [0], [1], [0, 0, 1, 1], [], []>} : vector<64x32xbf16>, vector<32x18xbf16>, vector<64x18xf32> -> vector<64x18xf32>
    %62 = arith.addf %58, %61 : vector<64x18xf32>
    %63 = vector.extract_strided_slice %3 {offsets = [0, 14], sizes = [32, 18], strides = [1, 1]} : vector<32x32xbf16> to vector<32x18xbf16>
    %c0_37 = arith.constant 0 : index
    %c448 = arith.constant 448 : index
    %64 = vector.load %arg6[%c0_37, %c448] : memref<64x480xbf16, #tpu.memory_space<vmem>>, vector<64x32xbf16>
    %cst_38 = arith.constant dense<0.000000e+00> : vector<64x18xf32>
    %65 = tpu.matmul %64, %63, %cst_38 {dimension_numbers = #tpu.dot_dimension_numbers<[1], [0], [0], [1], [0, 0, 1, 1], [], []>} : vector<64x32xbf16>, vector<32x18xbf16>, vector<64x18xf32> -> vector<64x18xf32>
    %66 = arith.addf %62, %65 : vector<64x18xf32>
    %c0_39 = arith.constant 0 : index
    %c0_40 = arith.constant 0 : index
    %67 = vector.load %arg7[%c0_39, %c0_40] : memref<64x1xf32, #tpu.memory_space<vmem>>, vector<64x1xf32>
    %68 = vector.broadcast %67 : vector<64x1xf32> to vector<64x18xf32>
    %69 = arith.addf %66, %68 : vector<64x18xf32>
    %70 = arith.truncf %69 : vector<64x18xf32> to vector<64x18xbf16>
    %c0_41 = arith.constant 0 : index
    %c0_42 = arith.constant 0 : index
    %71 = vector.load %arg8[%c0_41, %c0_42] : memref<64x18xbf16, #tpu.memory_space<vmem>>, vector<64x18xbf16>
    tpu.vector_store %arg8[%c0_41, %c0_42], %70 {strides = array<i32>} : memref<64x18xbf16, #tpu.memory_space<vmem>>, vector<64x18xbf16>,
    %c0_i32 = arith.constant 0 : i32
    %72 = arith.cmpi eq, %arg1, %c0_i32 : i32
    %73 = arith.extui %72 : i1 to i32
    %c0_i32_43 = arith.constant 0 : i32
    %74 = arith.cmpi ne, %73, %c0_i32_43 : i32
    scf.if %74 {
      %cst_56 = arith.constant 0.000000e+00 : f32
      %89 = vector.broadcast %cst_56 : f32 to vector<64x1xf32>
      %c0_57 = arith.constant 0 : index
      %c0_58 = arith.constant 0 : index
      %90 = vector.load %arg11[%c0_57, %c0_58] : memref<64x1xf32, #tpu.memory_space<vmem>>, vector<64x1xf32>
      tpu.vector_store %arg11[%c0_57, %c0_58], %89 {strides = array<i32>} : memref<64x1xf32, #tpu.memory_space<vmem>>, vector<64x1xf32>,
      %cst_59 = arith.constant 0.000000e+00 : f32
      %91 = vector.broadcast %cst_59 : f32 to vector<64x1xf32>
      %c0_60 = arith.constant 0 : index
      %c0_61 = arith.constant 0 : index
      %92 = vector.load %arg12[%c0_60, %c0_61] : memref<64x1xf32, #tpu.memory_space<vmem>>, vector<64x1xf32>
      tpu.vector_store %arg12[%c0_60, %c0_61], %91 {strides = array<i32>} : memref<64x1xf32, #tpu.memory_space<vmem>>, vector<64x1xf32>,
    } else {
    }
    %c0_44 = arith.constant 0 : index
    %c0_45 = arith.constant 0 : index
    %75 = vector.load %arg11[%c0_44, %c0_45] : memref<64x1xf32, #tpu.memory_space<vmem>>, vector<64x1xf32>
    %cst_46 = arith.constant dense<0.000000e+00> : vector<64xf32>
    %76 = vector.multi_reduction <add>, %69, %cst_46 [1] : vector<64x18xf32> to vector<64xf32>
    %77 = vector.shape_cast %76 : vector<64xf32> to vector<64x1xf32>
    %78 = arith.addf %75, %77 : vector<64x1xf32>
    %c0_47 = arith.constant 0 : index
    %c0_48 = arith.constant 0 : index
    %79 = vector.load %arg11[%c0_47, %c0_48] : memref<64x1xf32, #tpu.memory_space<vmem>>, vector<64x1xf32>
    tpu.vector_store %arg11[%c0_47, %c0_48], %78 {strides = array<i32>} : memref<64x1xf32, #tpu.memory_space<vmem>>, vector<64x1xf32>,
    %c0_49 = arith.constant 0 : index
    %c0_50 = arith.constant 0 : index
    %80 = vector.load %arg12[%c0_49, %c0_50] : memref<64x1xf32, #tpu.memory_space<vmem>>, vector<64x1xf32>
    %81 = arith.mulf %69, %69 : vector<64x18xf32>
    %cst_51 = arith.constant dense<0.000000e+00> : vector<64xf32>
    %82 = vector.multi_reduction <add>, %81, %cst_51 [1] : vector<64x18xf32> to vector<64xf32>
    %83 = vector.shape_cast %82 : vector<64xf32> to vector<64x1xf32>
    %84 = arith.addf %80, %83 : vector<64x1xf32>
    %c0_52 = arith.constant 0 : index
    %c0_53 = arith.constant 0 : index
    %85 = vector.load %arg12[%c0_52, %c0_53] : memref<64x1xf32, #tpu.memory_space<vmem>>, vector<64x1xf32>
    tpu.vector_store %arg12[%c0_52, %c0_53], %84 {strides = array<i32>} : memref<64x1xf32, #tpu.memory_space<vmem>>, vector<64x1xf32>,
    %c0_i32_54 = arith.constant 0 : i32
    %86 = arith.cmpi eq, %arg1, %c0_i32_54 : i32
    %87 = arith.extui %86 : i1 to i32
    %c0_i32_55 = arith.constant 0 : i32
    %88 = arith.cmpi ne, %87, %c0_i32_55 : i32
    scf.if %88 {
      %c0_56 = arith.constant 0 : index
      %c0_57 = arith.constant 0 : index
      %89 = vector.load %arg11[%c0_56, %c0_57] : memref<64x1xf32, #tpu.memory_space<vmem>>, vector<64x1xf32>
      %c0_58 = arith.constant 0 : index
      %c0_59 = arith.constant 0 : index
      %90 = vector.load %arg9[%c0_58, %c0_59] : memref<64x1xf32, #tpu.memory_space<vmem>>, vector<64x1xf32>
      tpu.vector_store %arg9[%c0_58, %c0_59], %89 {strides = array<i32>} : memref<64x1xf32, #tpu.memory_space<vmem>>, vector<64x1xf32>,
      %c0_60 = arith.constant 0 : index
      %c0_61 = arith.constant 0 : index
      %91 = vector.load %arg12[%c0_60, %c0_61] : memref<64x1xf32, #tpu.memory_space<vmem>>, vector<64x1xf32>
      %c0_62 = arith.constant 0 : index
      %c0_63 = arith.constant 0 : index
      %92 = vector.load %arg10[%c0_62, %c0_63] : memref<64x1xf32, #tpu.memory_space<vmem>>, vector<64x1xf32>
      tpu.vector_store %arg10[%c0_62, %c0_63], %91 {strides = array<i32>} : memref<64x1xf32, #tpu.memory_space<vmem>>, vector<64x1xf32>,
    } else {
    }
    return
  }
  func.func @transform_0(%arg0: i32, %arg1: i32) -> (i32, i32) {
    %c0_i32 = arith.constant 0 : i32
    %c0_i32_0 = arith.constant 0 : i32
    return %c0_i32, %arg1 : i32, i32
  }
  func.func @transform_1(%arg0: i32, %arg1: i32) -> (i32, i32) {
    %c0_i32 = arith.constant 0 : i32
    %c0_i32_0 = arith.constant 0 : i32
    return %c0_i32, %arg1 : i32, i32
  }
  func.func @transform_2(%arg0: i32, %arg1: i32) -> (i32, i32, i32) {
    %c0_i32 = arith.constant 0 : i32
    %c0_i32_0 = arith.constant 0 : i32
    %c0_i32_1 = arith.constant 0 : i32
    return %arg1, %c0_i32, %c0_i32_0 : i32, i32, i32
  }
  func.func @transform_3(%arg0: i32, %arg1: i32) -> (i32, i32, i32) {
    %c0_i32 = arith.constant 0 : i32
    %c0_i32_0 = arith.constant 0 : i32
    %c0_i32_1 = arith.constant 0 : i32
    return %arg1, %c0_i32, %c0_i32_0 : i32, i32, i32
  }
  func.func @transform_4(%arg0: i32, %arg1: i32) -> (i32, i32) {
    %c0_i32 = arith.constant 0 : i32
    %c0_i32_0 = arith.constant 0 : i32
    return %arg0, %c0_i32 : i32, i32
  }
  func.func @transform_5(%arg0: i32, %arg1: i32) -> (i32, i32) {
    %c0_i32 = arith.constant 0 : i32
    %c0_i32_0 = arith.constant 0 : i32
    return %arg0, %c0_i32 : i32, i32
  }
  func.func @transform_6(%arg0: i32, %arg1: i32) -> (i32, i32) {
    %c0_i32 = arith.constant 0 : i32
    return %arg0, %arg1 : i32, i32
  }
  func.func @transform_7(%arg0: i32, %arg1: i32) -> (i32, i32) {
    %c0_i32 = arith.constant 0 : i32
    %c0_i32_0 = arith.constant 0 : i32
    return %arg0, %c0_i32 : i32, i32
  }
  func.func @transform_8(%arg0: i32, %arg1: i32) -> (i32, i32) {
    %c0_i32 = arith.constant 0 : i32
    %c0_i32_0 = arith.constant 0 : i32
    return %arg0, %c0_i32 : i32, i32
  }
}

module attributes {stable_mosaic.version = 11 : i64} {
  func.func @_bn_relu_kernel(%arg0: i32, %arg1: memref<64x18xbf16, #tpu.memory_space<vmem>>, %arg2: memref<64x1xf32, #tpu.memory_space<vmem>>, %arg3: memref<64x1xf32, #tpu.memory_space<vmem>>, %arg4: memref<64x1xf32, #tpu.memory_space<vmem>>, %arg5: memref<64x1xf32, #tpu.memory_space<vmem>>, %arg6: memref<64x18xbf16, #tpu.memory_space<vmem>>) attributes {dimension_semantics = [#tpu.dimension_semantics<parallel>], iteration_bounds = array<i64: 1>, scalar_prefetch = 0 : i64, scratch_operands = 0 : i64, tpu.core_type = #tpu.core_type<tc>, window_params = [{transform_indices = @transform_0, window_bounds = array<i64: 64, 18>}, {pipeline_mode = #tpu.pipeline_mode<synchronous>, transform_indices = @transform_1, window_bounds = array<i64: 64, 1>}, {pipeline_mode = #tpu.pipeline_mode<synchronous>, transform_indices = @transform_2, window_bounds = array<i64: 64, 1>}, {pipeline_mode = #tpu.pipeline_mode<synchronous>, transform_indices = @transform_3, window_bounds = array<i64: 64, 1>}, {pipeline_mode = #tpu.pipeline_mode<synchronous>, transform_indices = @transform_4, window_bounds = array<i64: 64, 1>}, {transform_indices = @transform_5, window_bounds = array<i64: 64, 18>}]} {
    %c0 = arith.constant 0 : index
    %c0_0 = arith.constant 0 : index
    %0 = vector.load %arg2[%c0, %c0_0] : memref<64x1xf32, #tpu.memory_space<vmem>>, vector<64x1xf32>
    %cst = arith.constant 0.055555556 : f32
    %1 = vector.broadcast %cst : f32 to vector<64x1xf32>
    %2 = arith.mulf %0, %1 : vector<64x1xf32>
    %c0_1 = arith.constant 0 : index
    %c0_2 = arith.constant 0 : index
    %3 = vector.load %arg3[%c0_1, %c0_2] : memref<64x1xf32, #tpu.memory_space<vmem>>, vector<64x1xf32>
    %cst_3 = arith.constant 0.055555556 : f32
    %4 = vector.broadcast %cst_3 : f32 to vector<64x1xf32>
    %5 = arith.mulf %3, %4 : vector<64x1xf32>
    %6 = arith.mulf %2, %2 : vector<64x1xf32>
    %7 = arith.subf %5, %6 : vector<64x1xf32>
    %cst_4 = arith.constant 0.000000e+00 : f32
    %8 = vector.broadcast %cst_4 : f32 to vector<64x1xf32>
    %9 = arith.maximumf %7, %8 : vector<64x1xf32>
    %c0_5 = arith.constant 0 : index
    %c0_6 = arith.constant 0 : index
    %10 = vector.load %arg4[%c0_5, %c0_6] : memref<64x1xf32, #tpu.memory_space<vmem>>, vector<64x1xf32>
    %cst_7 = arith.constant 9.99999974E-6 : f32
    %11 = vector.broadcast %cst_7 : f32 to vector<64x1xf32>
    %12 = arith.addf %9, %11 : vector<64x1xf32>
    %13 = math.rsqrt %12 : vector<64x1xf32>
    %14 = arith.mulf %10, %13 : vector<64x1xf32>
    %c0_8 = arith.constant 0 : index
    %c0_9 = arith.constant 0 : index
    %15 = vector.load %arg5[%c0_8, %c0_9] : memref<64x1xf32, #tpu.memory_space<vmem>>, vector<64x1xf32>
    %16 = arith.mulf %2, %14 : vector<64x1xf32>
    %17 = arith.subf %15, %16 : vector<64x1xf32>
    %c0_10 = arith.constant 0 : index
    %c0_11 = arith.constant 0 : index
    %18 = vector.load %arg1[%c0_10, %c0_11] : memref<64x18xbf16, #tpu.memory_space<vmem>>, vector<64x18xbf16>
    %19 = arith.extf %18 : vector<64x18xbf16> to vector<64x18xf32>
    %20 = vector.broadcast %14 : vector<64x1xf32> to vector<64x18xf32>
    %21 = arith.mulf %19, %20 : vector<64x18xf32>
    %22 = vector.broadcast %17 : vector<64x1xf32> to vector<64x18xf32>
    %23 = arith.addf %21, %22 : vector<64x18xf32>
    %cst_12 = arith.constant 0.000000e+00 : f32
    %24 = vector.broadcast %cst_12 : f32 to vector<64x18xf32>
    %25 = arith.maximumf %23, %24 : vector<64x18xf32>
    %26 = arith.truncf %25 : vector<64x18xf32> to vector<64x18xbf16>
    %c0_13 = arith.constant 0 : index
    %c0_14 = arith.constant 0 : index
    %27 = vector.load %arg6[%c0_13, %c0_14] : memref<64x18xbf16, #tpu.memory_space<vmem>>, vector<64x18xbf16>
    tpu.vector_store %arg6[%c0_13, %c0_14], %26 {strides = array<i32>} : memref<64x18xbf16, #tpu.memory_space<vmem>>, vector<64x18xbf16>,
    return
  }
  func.func @transform_0(%arg0: i32) -> (i32, i32) {
    %c0_i32 = arith.constant 0 : i32
    %c0_i32_0 = arith.constant 0 : i32
    return %c0_i32, %arg0 : i32, i32
  }
  func.func @transform_1(%arg0: i32) -> (i32, i32) {
    %c0_i32 = arith.constant 0 : i32
    %c0_i32_0 = arith.constant 0 : i32
    %c0_i32_1 = arith.constant 0 : i32
    return %c0_i32, %c0_i32_0 : i32, i32
  }
  func.func @transform_2(%arg0: i32) -> (i32, i32) {
    %c0_i32 = arith.constant 0 : i32
    %c0_i32_0 = arith.constant 0 : i32
    %c0_i32_1 = arith.constant 0 : i32
    return %c0_i32, %c0_i32_0 : i32, i32
  }
  func.func @transform_3(%arg0: i32) -> (i32, i32) {
    %c0_i32 = arith.constant 0 : i32
    %c0_i32_0 = arith.constant 0 : i32
    %c0_i32_1 = arith.constant 0 : i32
    return %c0_i32, %c0_i32_0 : i32, i32
  }
  func.func @transform_4(%arg0: i32) -> (i32, i32) {
    %c0_i32 = arith.constant 0 : i32
    %c0_i32_0 = arith.constant 0 : i32
    %c0_i32_1 = arith.constant 0 : i32
    return %c0_i32, %c0_i32_0 : i32, i32
  }
  func.func @transform_5(%arg0: i32) -> (i32, i32) {
    %c0_i32 = arith.constant 0 : i32
    %c0_i32_0 = arith.constant 0 : i32
    return %c0_i32, %arg0 : i32, i32
  }
}

module attributes {stable_mosaic.version = 11 : i64} {
  func.func @_head_kernel(%arg0: i32, %arg1: memref<64x18xbf16, #tpu.memory_space<vmem>>, %arg2: memref<1x64xf32, #tpu.memory_space<vmem>>, %arg3: memref<1x1xf32, #tpu.memory_space<vmem>>, %arg4: memref<64x16xf32, #tpu.memory_space<vmem>>, %arg5: memref<1x16xf32, #tpu.memory_space<vmem>>, %arg6: memref<2x16xf32, #tpu.memory_space<vmem>>, %arg7: memref<2x64xf32, #tpu.memory_space<vmem>>) attributes {dimension_semantics = [#tpu.dimension_semantics<arbitrary>], iteration_bounds = array<i64: 1>, scalar_prefetch = 0 : i64, scratch_operands = 1 : i64, tpu.core_type = #tpu.core_type<tc>, window_params = [{transform_indices = @transform_0, window_bounds = array<i64: 64, 18>}, {pipeline_mode = #tpu.pipeline_mode<synchronous>, transform_indices = @transform_1, window_bounds = array<i64: 1, 64>}, {pipeline_mode = #tpu.pipeline_mode<synchronous>, transform_indices = @transform_2, window_bounds = array<i64: 1, 1>}, {pipeline_mode = #tpu.pipeline_mode<synchronous>, transform_indices = @transform_3, window_bounds = array<i64: 64, 16>}, {pipeline_mode = #tpu.pipeline_mode<synchronous>, transform_indices = @transform_4, window_bounds = array<i64: 1, 16>}, {pipeline_mode = #tpu.pipeline_mode<synchronous>, transform_indices = @transform_5, window_bounds = array<i64: 2, 16>}]} {
    %c0_i32 = arith.constant 0 : i32
    %0 = arith.cmpi eq, %arg0, %c0_i32 : i32
    %1 = arith.extui %0 : i1 to i32
    %c0_i32_0 = arith.constant 0 : i32
    %2 = arith.cmpi ne, %1, %c0_i32_0 : i32
    scf.if %2 {
      %cst_18 = arith.constant 0.000000e+00 : f32
      %45 = vector.broadcast %cst_18 : f32 to vector<2x64xf32>
      %c0_19 = arith.constant 0 : index
      %c0_20 = arith.constant 0 : index
      %46 = vector.load %arg7[%c0_19, %c0_20] : memref<2x64xf32, #tpu.memory_space<vmem>>, vector<2x64xf32>
      tpu.vector_store %arg7[%c0_19, %c0_20], %45 {strides = array<i32>} : memref<2x64xf32, #tpu.memory_space<vmem>>, vector<2x64xf32>,
    } else {
    }
    %c0 = arith.constant 0 : index
    %c0_1 = arith.constant 0 : index
    %3 = vector.load %arg1[%c0, %c0_1] : memref<64x18xbf16, #tpu.memory_space<vmem>>, vector<64x18xbf16>
    %4 = arith.extf %3 : vector<64x18xbf16> to vector<64x18xf32>
    %c0_2 = arith.constant 0 : index
    %c0_3 = arith.constant 0 : index
    %5 = vector.load %arg2[%c0_2, %c0_3] : memref<1x64xf32, #tpu.memory_space<vmem>>, vector<1x64xf32>
    %cst = arith.constant dense<0.000000e+00> : vector<1x18xf32>
    %6 = tpu.matmul %5, %4, %cst {dimension_numbers = #tpu.dot_dimension_numbers<[1], [0], [0], [1], [0, 0, 1, 1], [], []>} : vector<1x64xf32>, vector<64x18xf32>, vector<1x18xf32> -> vector<1x18xf32>
    %c0_4 = arith.constant 0 : index
    %c0_5 = arith.constant 0 : index
    %7 = vector.load %arg3[%c0_4, %c0_5] : memref<1x1xf32, #tpu.memory_space<vmem>>, vector<1x1xf32>
    %8 = vector.broadcast %7 : vector<1x1xf32> to vector<1x18xf32>
    %9 = arith.addf %6, %8 : vector<1x18xf32>
    %10 = arith.negf %9 : vector<1x18xf32>
    %11 = math.exp %10 : vector<1x18xf32>
    %cst_6 = arith.constant 1.000000e+00 : f32
    %12 = vector.broadcast %cst_6 : f32 to vector<1x18xf32>
    %13 = arith.addf %12, %11 : vector<1x18xf32>
    %14 = arith.divf %12, %13 : vector<1x18xf32>
    %15 = vector.broadcast %14 : vector<1x18xf32> to vector<64x18xf32>
    %16 = arith.mulf %4, %15 : vector<64x18xf32>
    %17 = tpu.iota {dimensions = array<i32: 0>} : vector<18x2xi32>
    %18 = tpu.iota {dimensions = array<i32: 1>} : vector<18x2xi32>
    %c2_i32 = arith.constant 2 : i32
    %c0_i32_7 = arith.constant 0 : i32
    %19 = arith.cmpi eq, %c2_i32, %c0_i32_7 : i32
    %c1_i32 = arith.constant 1 : i32
    %20 = arith.select %19, %c1_i32, %c2_i32 : i32
    %21 = vector.broadcast %20 : i32 to vector<18x2xi32>
    %22 = arith.remsi %17, %21 : vector<18x2xi32>
    %c0_i32_8 = arith.constant 0 : i32
    %23 = vector.broadcast %c0_i32_8 : i32 to vector<18x2xi32>
    %24 = arith.cmpi ne, %22, %23 : vector<18x2xi32>
    %c0_i32_9 = arith.constant 0 : i32
    %25 = vector.broadcast %c0_i32_9 : i32 to vector<18x2xi32>
    %26 = arith.cmpi slt, %22, %25 : vector<18x2xi32>
    %c0_i32_10 = arith.constant 0 : i32
    %27 = arith.cmpi slt, %20, %c0_i32_10 : i32
    %28 = vector.broadcast %27 : i1 to vector<18x2xi1>
    %29 = vector.broadcast %28 : vector<18x2xi1> to vector<18x2xi1>
    %30 = arith.xori %26, %29 : vector<18x2xi1>
    %31 = arith.andi %30, %24 : vector<18x2xi1>
    %32 = vector.broadcast %20 : i32 to vector<18x2xi32>
    %33 = arith.addi %22, %32 : vector<18x2xi32>
    %34 = arith.select %31, %33, %22 : vector<18x2xi1>, vector<18x2xi32>
    %35 = arith.cmpi eq, %34, %18 : vector<18x2xi32>
    %36 = arith.extui %35 : vector<18x2xi1> to vector<18x2xi32>
    %37 = arith.sitofp %36 : vector<18x2xi32> to vector<18x2xf32>
    %c0_11 = arith.constant 0 : index
    %c0_12 = arith.constant 0 : index
    %38 = vector.load %arg7[%c0_11, %c0_12] : memref<2x64xf32, #tpu.memory_space<vmem>>, vector<2x64xf32>
    %cst_13 = arith.constant dense<0.000000e+00> : vector<2x64xf32>
    %39 = tpu.matmul %37, %16, %cst_13 {dimension_numbers = #tpu.dot_dimension_numbers<[0], [1], [1], [0], [0, 1, 1, 0], [], []>} : vector<18x2xf32>, vector<64x18xf32>, vector<2x64xf32> -> vector<2x64xf32>
    %40 = arith.addf %38, %39 : vector<2x64xf32>
    %c0_14 = arith.constant 0 : index
    %c0_15 = arith.constant 0 : index
    %41 = vector.load %arg7[%c0_14, %c0_15] : memref<2x64xf32, #tpu.memory_space<vmem>>, vector<2x64xf32>
    tpu.vector_store %arg7[%c0_14, %c0_15], %40 {strides = array<i32>} : memref<2x64xf32, #tpu.memory_space<vmem>>, vector<2x64xf32>,
    %c0_i32_16 = arith.constant 0 : i32
    %42 = arith.cmpi eq, %arg0, %c0_i32_16 : i32
    %43 = arith.extui %42 : i1 to i32
    %c0_i32_17 = arith.constant 0 : i32
    %44 = arith.cmpi ne, %43, %c0_i32_17 : i32
    scf.if %44 {
      %c0_18 = arith.constant 0 : index
      %c0_19 = arith.constant 0 : index
      %45 = vector.load %arg7[%c0_18, %c0_19] : memref<2x64xf32, #tpu.memory_space<vmem>>, vector<2x64xf32>
      %cst_20 = arith.constant 0.111111112 : f32
      %46 = vector.broadcast %cst_20 : f32 to vector<2x64xf32>
      %47 = arith.mulf %45, %46 : vector<2x64xf32>
      %c0_21 = arith.constant 0 : index
      %c0_22 = arith.constant 0 : index
      %48 = vector.load %arg4[%c0_21, %c0_22] : memref<64x16xf32, #tpu.memory_space<vmem>>, vector<64x16xf32>
      %cst_23 = arith.constant dense<0.000000e+00> : vector<2x16xf32>
      %49 = tpu.matmul %47, %48, %cst_23 {dimension_numbers = #tpu.dot_dimension_numbers<[1], [0], [0], [1], [0, 0, 1, 1], [], []>} : vector<2x64xf32>, vector<64x16xf32>, vector<2x16xf32> -> vector<2x16xf32>
      %c0_24 = arith.constant 0 : index
      %c0_25 = arith.constant 0 : index
      %50 = vector.load %arg5[%c0_24, %c0_25] : memref<1x16xf32, #tpu.memory_space<vmem>>, vector<1x16xf32>
      %51 = vector.broadcast %50 : vector<1x16xf32> to vector<2x16xf32>
      %52 = arith.addf %49, %51 : vector<2x16xf32>
      %53 = arith.mulf %52, %52 : vector<2x16xf32>
      %cst_26 = arith.constant dense<0.000000e+00> : vector<2xf32>
      %54 = vector.multi_reduction <add>, %53, %cst_26 [1] : vector<2x16xf32> to vector<2xf32>
      %55 = vector.shape_cast %54 : vector<2xf32> to vector<2x1xf32>
      %cst_27 = arith.constant 1.000000e-24 : f32
      %56 = vector.broadcast %cst_27 : f32 to vector<2x1xf32>
      %57 = arith.maximumf %55, %56 : vector<2x1xf32>
      %58 = math.rsqrt %57 : vector<2x1xf32>
      %59 = vector.broadcast %58 : vector<2x1xf32> to vector<2x16xf32>
      %60 = arith.mulf %52, %59 : vector<2x16xf32>
      %c0_28 = arith.constant 0 : index
      %c0_29 = arith.constant 0 : index
      %61 = vector.load %arg6[%c0_28, %c0_29] : memref<2x16xf32, #tpu.memory_space<vmem>>, vector<2x16xf32>
      tpu.vector_store %arg6[%c0_28, %c0_29], %60 {strides = array<i32>} : memref<2x16xf32, #tpu.memory_space<vmem>>, vector<2x16xf32>,
    } else {
    }
    return
  }
  func.func @transform_0(%arg0: i32) -> (i32, i32) {
    %c0_i32 = arith.constant 0 : i32
    %c0_i32_0 = arith.constant 0 : i32
    return %c0_i32, %arg0 : i32, i32
  }
  func.func @transform_1(%arg0: i32) -> (i32, i32) {
    %c0_i32 = arith.constant 0 : i32
    %c0_i32_0 = arith.constant 0 : i32
    %c0_i32_1 = arith.constant 0 : i32
    return %c0_i32, %c0_i32_0 : i32, i32
  }
  func.func @transform_2(%arg0: i32) -> (i32, i32) {
    %c0_i32 = arith.constant 0 : i32
    %c0_i32_0 = arith.constant 0 : i32
    %c0_i32_1 = arith.constant 0 : i32
    return %c0_i32, %c0_i32_0 : i32, i32
  }
  func.func @transform_3(%arg0: i32) -> (i32, i32) {
    %c0_i32 = arith.constant 0 : i32
    %c0_i32_0 = arith.constant 0 : i32
    %c0_i32_1 = arith.constant 0 : i32
    return %c0_i32, %c0_i32_0 : i32, i32
  }
  func.func @transform_4(%arg0: i32) -> (i32, i32) {
    %c0_i32 = arith.constant 0 : i32
    %c0_i32_0 = arith.constant 0 : i32
    %c0_i32_1 = arith.constant 0 : i32
    return %c0_i32, %c0_i32_0 : i32, i32
  }
  func.func @transform_5(%arg0: i32) -> (i32, i32) {
    %c0_i32 = arith.constant 0 : i32
    %c0_i32_0 = arith.constant 0 : i32
    %c0_i32_1 = arith.constant 0 : i32
    return %c0_i32, %c0_i32_0 : i32, i32
  }
}

</mosaic_0001>

<llo_original>
// kernel: ecg_encoder_forward.9
$region0: #{ecg_encoder_forward.9}
  #allocation0 [shape = 'u32[]', space=smem, size = 0x4, offset = 0x4, fixed_abs, tag = 'smem constant byte address 0x4 - core index']
  #allocation1 [shape = 'u32[144,128]{1,0:T(1,128)}', space=vmem, size = 0x12000, scoped, tag = 'internal scratch']
  #allocation2 [shape = 'f32[8,1]{1,0:T(8,128)}', space=vmem, size = 0x1000, scoped, tag = 'scratch operand']
  #allocation3 [shape = 'f32[8,1]{1,0:T(8,128)}', space=vmem, size = 0x1000, scoped, tag = 'scratch operand']
  %s0 = inlined_call_operand.vmem [shape: bf16[15,248], index: 0, kind: input, shape index: {}]
  %s1 = inlined_call_operand.vmem [shape: bf16[8,15], index: 1, kind: input, shape index: {}]
  %s2 = inlined_call_operand.vmem [shape: f32[8,1], index: 2, kind: input, shape index: {}]
  %s3 = inlined_call_operand.vmem [shape: bf16[8,248], index: 3, kind: output, shape index: {0}]
  %s4 = inlined_call_operand.vmem [shape: f32[8,1], index: 4, kind: output, shape index: {1}]
  %s5 = inlined_call_operand.vmem [shape: f32[8,1], index: 5, kind: output, shape index: {2}]
  %6 = xla_tuple %s3, %s4, %s5
  %s7 = sld [smem:[#allocation0]]
  $region46: #{ecg_encoder_forward.9} parent=0
    _
  %s9 = ssub.s32 1, %s7
  %s10 = scalar_select 0, %s9, %s7
  // Predicated region
  $region2: #{ecg_encoder_forward.9} parent=0 // pred_check
    _
  $region3: #{ecg_encoder_forward.9} parent=0 // pred_check_branch
    %12 = sbr.rel (0) target = $region5
  $region4: #{ecg_encoder_forward.9} parent=0 // pred_region
    _
  $region5: #{ecg_encoder_forward.9} parent=0 // pred_fallthru
    _
  // Predicated region
  $region6: #{ecg_encoder_forward.9} parent=0 // pred_check
    _
  $region7: #{ecg_encoder_forward.9} parent=0 // pred_check_branch
    %14 = sbr.rel (0) target = $region9
  $region8: #{ecg_encoder_forward.9} parent=0 // pred_region
    _
  $region9: #{ecg_encoder_forward.9} parent=0 // pred_fallthru
    _
  // Predicated region
  $region10: #{ecg_encoder_forward.9} parent=0 // pred_check
    _
  $region11: #{ecg_encoder_forward.9} parent=0 // pred_check_branch
    %16 = sbr.rel (0) target = $region13
  $region12: #{ecg_encoder_forward.9} parent=0 // pred_region
    _
  $region13: #{ecg_encoder_forward.9} parent=0 // pred_fallthru
    _
  %v18 = vld [vmem:[%s1] sm:$0xf]
  %v19 = vld [vmem:[%s0] sm:$0xff]
  %v20 = vld [vmem:[%s0 + $0x8] sm:$0xff]
  %v21 = vld [vmem:[%s2] sm:$0xff]
  %23 = vset.pattern.permute.xlu0 0
  %24 = vperm.xlu0 %23, %v21
  %v25 = vpop.permute.xlu0 %24
  %v29 = vunpack.c.l.b16 %v19
  %v30 = vunpack.c.h.b16 %v19
  %v31 = vunpack.c.l.b16 %v20
  %v32 = vunpack.c.h.b16 %v20
  %v33 = vpack.c.b16 %v31, %v29
  %v34 = vpack.c.b16 %v32, %v30
  %vm35 = vcmask 121856
  %v37 = vsel %vm35, %v18, 0
  %vm39 = vcmask 1046528
  %vm40 = vcmask 1047552
  %v41 = vsel %vm39, 4294967295, 65535
  %v42 = vsel %vm40, %v41, 0
  %v44 = vand.u32 %v33, %v42
  %v47 = vand.u32 %v34, %v42
  %49 = vmatprep.subr.bf16.mxu0 0
  %50 = vmatpush1.bf16.msra.mxu0 0
  %51 = vmatprep.subr.bf16.mxu0 0
  %52 = vmatpush1.bf16.msra.mxu0 0
  %53 = vmatprep.subr.bf16.mxu0 0
  %54 = vmatpush1.bf16.msra.mxu0 0
  %55 = vmatprep.subr.bf16.mxu0 0
  %56 = vmatpush1.bf16.msra.mxu0 0
  %57 = vmatprep.subr.bf16.mxu0 0
  %58 = vmatpush1.bf16.msra.mxu0 0
  %59 = vmatprep.subr.bf16.mxu0 0
  %60 = vmatpush1.bf16.msra.mxu0 0
  %61 = vmatprep.subr.bf16.mxu0 0
  %62 = vmatpush1.bf16.msra.mxu0 0
  %63 = vmatprep.subr.bf16.mxu0 %v47
  %64 = vmatpush1.bf16.msra.mxu0 %v44
  %65 = vmatprep.subr.bf16.mxu0 0
  %66 = vmatpush2.bf16.msra.mxu0 0
  %67 = vmatprep.subr.bf16.mxu0 0
  %68 = vmatpush2.bf16.msra.mxu0 0
  %69 = vmatprep.subr.bf16.mxu0 0
  %70 = vmatpush2.bf16.msra.mxu0 0
  %71 = vmatprep.subr.bf16.mxu0 0
  %72 = vmatpush2.bf16.msra.mxu0 0
  %73 = vmatprep.subr.bf16.mxu0 0
  %74 = vmatpush2.bf16.msra.mxu0 0
  %75 = vmatprep.subr.bf16.mxu0 0
  %76 = vmatpush2.bf16.msra.mxu0 0
  %77 = vmatprep.subr.bf16.mxu0 0
  %78 = vmatpush2.bf16.msra.mxu0 0
  %79 = vmatprep.subr.bf16.mxu0 0
  %80 = vmatpush2.bf16.msra.mxu0 0
  %81 = vmatprep.mubr.bf16.mxu0 0
  %82 = vmatmul.mubr.bf16.gmra.mxu0 %v37
  %v83 = vpop.f32.mrf.mxu0
  %v84 = vadd.f32 %v25, %v83
  %v85 = vpop.f32.mrf.mxu0
  %v86 = vadd.f32 %v25, %v85
  %v87 = vpop.f32.mrf.mxu0
  %v88 = vpop.f32.mrf.mxu0
  %89 = vdwg.mxu0
  %v90 = vpack.c.bf16 %v84, %v84
  %v91 = vpack.c.bf16 %v86, %v86
  %v94 = vunpack.c.l.b16 %v90
  %v95 = vunpack.c.l.b16 %v91
  %v96 = vpack.c.b16 %v95, %v94
  %vm98 = vcmask 1043456
  %vm99 = vcmask 982020
  %vm100 = vmor %vm99, %vm98
  %101 = vst.msk [vmem:[%s3] sm:$0xff] %vm100, %v96
  %p102 = scmp.eq.s32.totalorder 0, 0
  // Predicated region
  $region14: #{ecg_encoder_forward.9} parent=0 // pred_check
    %p103 = pneg %p102
  $region15: #{ecg_encoder_forward.9} parent=0 // pred_check_branch
    %105 = sbr.rel (%p103) target = $region17
  $region16: #{ecg_encoder_forward.9} parent=0 // pred_region
    %vm106 = vcmask 7168
    %107 = vst.msk [vmem:[#allocation2] sm:$0xff] %vm106, 0.0
    %108 = vst.msk [vmem:[#allocation3] sm:$0xff] %vm106, 0.0
  $region17: #{ecg_encoder_forward.9} parent=0 // pred_fallthru
    _
  %v109 = vld [vmem:[#allocation2] sm:$0xff]
  %vm110 = vcmask 982016
  %v111 = vsel %vm110, %v86, 0.0
  %v112 = vadd.f32 %v84, %v111
  %113 = vadd.xlane.f32.xlu0 %v112
  %v114 = vpop.xlane.xlu0 %113
  %v115 = vadd.f32 %v109, %v114
  %vm116 = vcmask 7168
  %117 = vst.msk [vmem:[#allocation2] sm:$0xff] %vm116, %v115
  %v118 = vld [vmem:[#allocation3] sm:$0xff]
  %v119 = vmul.f32 %v84, %v84
  %v120 = vmul.f32 %v86, %v86
  %v121 = vsel %vm110, %v120, 0.0
  %v122 = vadd.f32 %v119, %v121
  %123 = vadd.xlane.f32.xlu0 %v122
  %v124 = vpop.xlane.xlu0 %123
  %v125 = vadd.f32 %v118, %v124
  %126 = vst.msk [vmem:[#allocation3] sm:$0xff] %vm116, %v125
  // Predicated region
  $region18: #{ecg_encoder_forward.9} parent=0 // pred_check
    %p127 = pneg %p102
  $region19: #{ecg_encoder_forward.9} parent=0 // pred_check_branch
    %129 = sbr.rel (%p127) target = $region21
  $region20: #{ecg_encoder_forward.9} parent=0 // pred_region
    %v130 = vld [vmem:[#allocation2] sm:$0xff]
    %131 = vst.msk [vmem:[%s4] sm:$0xff] %vm116, %v130
    %v132 = vld [vmem:[#allocation3] sm:$0xff]
    %133 = vst.msk [vmem:[%s5] sm:$0xff] %vm116, %v132
  $region21: #{ecg_encoder_forward.9} parent=0 // pred_fallthru
    _
  // Predicated region
  $region22: #{ecg_encoder_forward.9} parent=0 // pred_check
    _
  $region23: #{ecg_encoder_forward.9} parent=0 // pred_check_branch
    %135 = sbr.rel (0) target = $region25
  $region24: #{ecg_encoder_forward.9} parent=0 // pred_region
    _
  $region25: #{ecg_encoder_forward.9} parent=0 // pred_fallthru
    _
  // Predicated region
  $region26: #{ecg_encoder_forward.9} parent=0 // pred_check
    _
  $region27: #{ecg_encoder_forward.9} parent=0 // pred_check_branch
    %137 = sbr.rel (0) target = $region29
  $region28: #{ecg_encoder_forward.9} parent=0 // pred_region
    _
  $region29: #{ecg_encoder_forward.9} parent=0 // pred_fallthru
    _
  // Predicated region
  $region30: #{ecg_encoder_forward.9} parent=0 // pred_check
    _
  $region31: #{ecg_encoder_forward.9} parent=0 // pred_check_branch
    %139 = sbr.rel (0) target = $region33
  $region32: #{ecg_encoder_forward.9} parent=0 // pred_region
    _
  $region33: #{ecg_encoder_forward.9} parent=0 // pred_fallthru
    _
  // Predicated region
  $region34: #{ecg_encoder_forward.9} parent=0 // pred_check
    _
  $region35: #{ecg_encoder_forward.9} parent=0 // pred_check_branch
    %141 = sbr.rel (0) target = $region37
  $region36: #{ecg_encoder_forward.9} parent=0 // pred_region
    _
  $region37: #{ecg_encoder_forward.9} parent=0 // pred_fallthru
    _
  // Predicated region
  $region38: #{ecg_encoder_forward.9} parent=0 // pred_check
    _
  $region39: #{ecg_encoder_forward.9} parent=0 // pred_check_branch
    %143 = sbr.rel (0) target = $region41
  $region40: #{ecg_encoder_forward.9} parent=0 // pred_region
    _
  $region41: #{ecg_encoder_forward.9} parent=0 // pred_fallthru
    _
  // Predicated region
  $region42: #{ecg_encoder_forward.9} parent=0 // pred_check
    _
  $region43: #{ecg_encoder_forward.9} parent=0 // pred_check_branch
    %145 = sbr.rel (0) target = $region45
  $region44: #{ecg_encoder_forward.9} parent=0 // pred_region
    _
  $region45: #{ecg_encoder_forward.9} parent=0 // pred_fallthru
    _

// kernel: ecg_encoder_forward.10
$region0: #{ecg_encoder_forward.10}
  #allocation0 [shape = 'u32[]', space=smem, size = 0x4, offset = 0x4, fixed_abs, tag = 'smem constant byte address 0x4 - core index']
  #allocation1 [shape = 'u32[144,128]{1,0:T(1,128)}', space=vmem, size = 0x12000, scoped, tag = 'internal scratch']
  %s0 = inlined_call_operand.vmem [shape: bf16[8,248], index: 0, kind: input, shape index: {}]
  %s1 = inlined_call_operand.vmem [shape: f32[8,1], index: 1, kind: input, shape index: {}]
  %s2 = inlined_call_operand.vmem [shape: f32[8,1], index: 2, kind: input, shape index: {}]
  %s3 = inlined_call_operand.vmem [shape: f32[8,1], index: 3, kind: input, shape index: {}]
  %s4 = inlined_call_operand.vmem [shape: f32[8,1], index: 4, kind: input, shape index: {}]
  %s5 = inlined_call_operand.vmem [shape: bf16[8,248], index: 5, kind: output, shape index: {}]
  %s6 = sld [smem:[#allocation0]]
  $region30: #{ecg_encoder_forward.10} parent=0
    _
  %s8 = ssub.s32 1, %s6
  %s9 = scalar_select 0, %s8, %s6
  // Predicated region
  $region2: #{ecg_encoder_forward.10} parent=0 // pred_check
    _
  $region3: #{ecg_encoder_forward.10} parent=0 // pred_check_branch
    %11 = sbr.rel (0) target = $region5
  $region4: #{ecg_encoder_forward.10} parent=0 // pred_region
    _
  $region5: #{ecg_encoder_forward.10} parent=0 // pred_fallthru
    _
  // Predicated region
  $region6: #{ecg_encoder_forward.10} parent=0 // pred_check
    _
  $region7: #{ecg_encoder_forward.10} parent=0 // pred_check_branch
    %13 = sbr.rel (0) target = $region9
  $region8: #{ecg_encoder_forward.10} parent=0 // pred_region
    _
  $region9: #{ecg_encoder_forward.10} parent=0 // pred_fallthru
    _
  // Predicated region
  $region10: #{ecg_encoder_forward.10} parent=0 // pred_check
    _
  $region11: #{ecg_encoder_forward.10} parent=0 // pred_check_branch
    %15 = sbr.rel (0) target = $region13
  $region12: #{ecg_encoder_forward.10} parent=0 // pred_region
    _
  $region13: #{ecg_encoder_forward.10} parent=0 // pred_fallthru
    _
  // Predicated region
  $region14: #{ecg_encoder_forward.10} parent=0 // pred_check
    _
  $region15: #{ecg_encoder_forward.10} parent=0 // pred_check_branch
    %17 = sbr.rel (0) target = $region17
  $region16: #{ecg_encoder_forward.10} parent=0 // pred_region
    _
  $region17: #{ecg_encoder_forward.10} parent=0 // pred_fallthru
    _
  // Predicated region
  $region18: #{ecg_encoder_forward.10} parent=0 // pred_check
    _
  $region19: #{ecg_encoder_forward.10} parent=0 // pred_check_branch
    %19 = sbr.rel (0) target = $region21
  $region20: #{ecg_encoder_forward.10} parent=0 // pred_region
    _
  $region21: #{ecg_encoder_forward.10} parent=0 // pred_fallthru
    _
  %v20 = vld [vmem:[%s1] sm:$0xff]
  %v21 = vmul.f32 %v20, 0.004032258
  %v22 = vld [vmem:[%s2] sm:$0xff]
  %v23 = vmul.f32 %v22, 0.004032258
  %v24 = vmul.f32 %v21, %v21
  %v25 = vsub.f32 %v23, %v24
  %v26 = vmax.f32 %v25, 0.0
  %v27 = vld [vmem:[%s3] sm:$0xff]
  %v28 = vadd.f32 %v26, 1e-05
  %v29 = vrsqrt.pop %v28
  %v30 = vmul.f32 %v27, %v29
  %v31 = vld [vmem:[%s4] sm:$0xff]
  %v32 = vmul.f32 %v21, %v30
  %v33 = vsub.f32 %v31, %v32
  %v34 = vld [vmem:[%s0] sm:$0xff]
  %v35 = vunpack.c.l.bf16 %v34
  %v36 = vunpack.c.h.bf16 %v34
  %38 = vset.pattern.permute.xlu0 0
  %39 = vperm.xlu0 %38, %v30
  %v40 = vpop.permute.xlu0 %39
  %v42 = vmul.f32 %v35, %v40
  %v43 = vmul.f32 %v36, %v40
  %45 = vset.pattern.permute.xlu0 0
  %46 = vperm.xlu0 %45, %v33
  %v47 = vpop.permute.xlu0 %46
  %v49 = vadd.f32 %v42, %v47
  %v50 = vadd.f32 %v43, %v47
  %v51 = vmax.f32 %v49, 0.0
  %v52 = vmax.f32 %v50, 0.0
  %v53 = vpack.c.bf16 %v51, %v51
  %v54 = vpack.c.bf16 %v52, %v52
  %v57 = vunpack.c.l.b16 %v53
  %v58 = vunpack.c.l.b16 %v54
  %v59 = vpack.c.b16 %v58, %v57
  %vm61 = vcmask 1043456
  %vm62 = vcmask 982020
  %vm63 = vmor %vm62, %vm61
  %64 = vst.msk [vmem:[%s5] sm:$0xff] %vm63, %v59
  // Predicated region
  $region22: #{ecg_encoder_forward.10} parent=0 // pred_check
    _
  $region23: #{ecg_encoder_forward.10} parent=0 // pred_check_branch
    %66 = sbr.rel (0) target = $region25
  $region24: #{ecg_encoder_forward.10} parent=0 // pred_region
    _
  $region25: #{ecg_encoder_forward.10} parent=0 // pred_fallthru
    _
  // Predicated region
  $region26: #{ecg_encoder_forward.10} parent=0 // pred_check
    _
  $region27: #{ecg_encoder_forward.10} parent=0 // pred_check_branch
    %68 = sbr.rel (0) target = $region29
  $region28: #{ecg_encoder_forward.10} parent=0 // pred_region
    _
  $region29: #{ecg_encoder_forward.10} parent=0 // pred_fallthru
    _

// kernel: ecg_encoder_forward.12
$region0: #{ecg_encoder_forward.12}
  #allocation0 [shape = 'u32[]', space=smem, size = 0x4, offset = 0x4, fixed_abs, tag = 'smem constant byte address 0x4 - core index']
  #allocation1 [shape = 'u32[144,128]{1,0:T(1,128)}', space=vmem, size = 0x12000, scoped, tag = 'internal scratch']
  %s0 = inlined_call_operand.vmem [shape: bf16[16,116], index: 0, kind: input, shape index: {}]
  %s1 = inlined_call_operand.vmem [shape: f32[16,1], index: 1, kind: input, shape index: {}]
  %s2 = inlined_call_operand.vmem [shape: f32[16,1], index: 2, kind: input, shape index: {}]
  %s3 = inlined_call_operand.vmem [shape: f32[16,1], index: 3, kind: input, shape index: {}]
  %s4 = inlined_call_operand.vmem [shape: f32[16,1], index: 4, kind: input, shape index: {}]
  %s5 = inlined_call_operand.vmem [shape: bf16[16,116], index: 5, kind: output, shape index: {}]
  %s6 = sld [smem:[#allocation0]]
  $region30: #{ecg_encoder_forward.12} parent=0
    _
  %s8 = ssub.s32 1, %s6
  %s9 = scalar_select 0, %s8, %s6
  // Predicated region
  $region2: #{ecg_encoder_forward.12} parent=0 // pred_check
    _
  $region3: #{ecg_encoder_forward.12} parent=0 // pred_check_branch
    %11 = sbr.rel (0) target = $region5
  $region4: #{ecg_encoder_forward.12} parent=0 // pred_region
    _
  $region5: #{ecg_encoder_forward.12} parent=0 // pred_fallthru
    _
  // Predicated region
  $region6: #{ecg_encoder_forward.12} parent=0 // pred_check
    _
  $region7: #{ecg_encoder_forward.12} parent=0 // pred_check_branch
    %13 = sbr.rel (0) target = $region9
  $region8: #{ecg_encoder_forward.12} parent=0 // pred_region
    _
  $region9: #{ecg_encoder_forward.12} parent=0 // pred_fallthru
    _
  // Predicated region
  $region10: #{ecg_encoder_forward.12} parent=0 // pred_check
    _
  $region11: #{ecg_encoder_forward.12} parent=0 // pred_check_branch
    %15 = sbr.rel (0) target = $region13
  $region12: #{ecg_encoder_forward.12} parent=0 // pred_region
    _
  $region13: #{ecg_encoder_forward.12} parent=0 // pred_fallthru
    _
  // Predicated region
  $region14: #{ecg_encoder_forward.12} parent=0 // pred_check
    _
  $region15: #{ecg_encoder_forward.12} parent=0 // pred_check_branch
    %17 = sbr.rel (0) target = $region17
  $region16: #{ecg_encoder_forward.12} parent=0 // pred_region
    _
  $region17: #{ecg_encoder_forward.12} parent=0 // pred_fallthru
    _
  // Predicated region
  $region18: #{ecg_encoder_forward.12} parent=0 // pred_check
    _
  $region19: #{ecg_encoder_forward.12} parent=0 // pred_check_branch
    %19 = sbr.rel (0) target = $region21
  $region20: #{ecg_encoder_forward.12} parent=0 // pred_region
    _
  $region21: #{ecg_encoder_forward.12} parent=0 // pred_fallthru
    _
  %v20 = vld [vmem:[%s1] sm:$0xff]
  %v21 = vld [vmem:[%s1 + $0x8] sm:$0xff]
  %v22 = vmul.f32 %v20, 0.00862069
  %v23 = vmul.f32 %v21, 0.00862069
  %v24 = vld [vmem:[%s2] sm:$0xff]
  %v25 = vld [vmem:[%s2 + $0x8] sm:$0xff]
  %v26 = vmul.f32 %v24, 0.00862069
  %v27 = vmul.f32 %v25, 0.00862069
  %v28 = vmul.f32 %v22, %v22
  %v29 = vmul.f32 %v23, %v23
  %v30 = vsub.f32 %v26, %v28
  %v31 = vsub.f32 %v27, %v29
  %v32 = vmax.f32 %v30, 0.0
  %v33 = vmax.f32 %v31, 0.0
  %v34 = vld [vmem:[%s3] sm:$0xff]
  %v35 = vld [vmem:[%s3 + $0x8] sm:$0xff]
  %v36 = vadd.f32 %v32, 1e-05
  %v37 = vadd.f32 %v33, 1e-05
  %v38 = vrsqrt.pop %v36
  %v39 = vrsqrt.pop %v37
  %v40 = vmul.f32 %v34, %v38
  %v41 = vmul.f32 %v35, %v39
  %v42 = vld [vmem:[%s4] sm:$0xff]
  %v43 = vld [vmem:[%s4 + $0x8] sm:$0xff]
  %v44 = vmul.f32 %v22, %v40
  %v45 = vmul.f32 %v23, %v41
  %v46 = vsub.f32 %v42, %v44
  %v47 = vsub.f32 %v43, %v45
  %v48 = vld [vmem:[%s0] sm:$0xf]
  %v49 = vld [vmem:[%s0 + $0x4] sm:$0xf]
  %v50 = vunpack.c.l.bf16 %v48
  %v51 = vunpack.c.l.bf16 %v49
  %53 = vset.pattern.permute.xlu0 0
  %54 = vperm.xlu0 %53, %v40
  %v55 = vpop.permute.xlu0 %54
  %58 = vset.pattern.permute.xlu0 0
  %59 = vperm.xlu0 %58, %v41
  %v60 = vpop.permute.xlu0 %59
  %v62 = vmul.f32 %v50, %v55
  %v63 = vmul.f32 %v51, %v60
  %65 = vset.pattern.permute.xlu0 0
  %66 = vperm.xlu0 %65, %v46
  %v67 = vpop.permute.xlu0 %66
  %70 = vset.pattern.permute.xlu0 0
  %71 = vperm.xlu0 %70, %v47
  %v72 = vpop.permute.xlu0 %71
  %v74 = vadd.f32 %v62, %v67
  %v75 = vadd.f32 %v63, %v72
  %v76 = vmax.f32 %v74, 0.0
  %v77 = vmax.f32 %v75, 0.0
  %v78 = vpack.c.bf16 %v77, %v76
  %v80 = vunpack.c.l.b16 %v78
  %v81 = vunpack.c.h.b16 %v78
  %v82 = vpack.c.b16 %v80, %v80
  %v83 = vpack.c.b16 %v81, %v81
  %vm86 = vcmask 945152
  %87 = vst.msk [vmem:[%s5] sm:$0xf] %vm86, %v82
  %88 = vst.msk [vmem:[%s5 + $0x4] sm:$0xf] %vm86, %v83
  // Predicated region
  $region22: #{ecg_encoder_forward.12} parent=0 // pred_check
    _
  $region23: #{ecg_encoder_forward.12} parent=0 // pred_check_branch
    %90 = sbr.rel (0) target = $region25
  $region24: #{ecg_encoder_forward.12} parent=0 // pred_region
    _
  $region25: #{ecg_encoder_forward.12} parent=0 // pred_fallthru
    _
  // Predicated region
  $region26: #{ecg_encoder_forward.12} parent=0 // pred_check
    _
  $region27: #{ecg_encoder_forward.12} parent=0 // pred_check_branch
    %92 = sbr.rel (0) target = $region29
  $region28: #{ecg_encoder_forward.12} parent=0 // pred_region
    _
  $region29: #{ecg_encoder_forward.12} parent=0 // pred_fallthru
    _

// kernel: ecg_encoder_forward.11
$region0: #{ecg_encoder_forward.11}
  #allocation0 [shape = 'u32[]', space=smem, size = 0x4, offset = 0x4, fixed_abs, tag = 'smem constant byte address 0x4 - core index']
  #allocation1 [shape = 'u32[144,128]{1,0:T(1,128)}', space=vmem, size = 0x12000, scoped, tag = 'internal scratch']
  #allocation2 [shape = 'f32[16,1]{1,0:T(8,128)}', space=vmem, size = 0x2000, scoped, tag = 'scratch operand']
  #allocation3 [shape = 'f32[16,1]{1,0:T(8,128)}', space=vmem, size = 0x2000, scoped, tag = 'scratch operand']
  %s0 = inlined_call_operand.vmem [shape: bf16[8,116], index: 0, kind: input, shape index: {}]
  %s1 = inlined_call_operand.vmem [shape: bf16[8,116], index: 1, kind: input, shape index: {}]
  %s2 = inlined_call_operand.vmem [shape: bf16[1,8,14], index: 2, kind: input, shape index: {}]
  %s3 = inlined_call_operand.vmem [shape: bf16[1,8,14], index: 3, kind: input, shape index: {}]
  %s4 = inlined_call_operand.vmem [shape: bf16[16,120], index: 4, kind: input, shape index: {}]
  %s5 = inlined_call_operand.vmem [shape: f32[16,1], index: 5, kind: input, shape index: {}]
  %s6 = inlined_call_operand.vmem [shape: bf16[16,116], index: 6, kind: output, shape index: {0}]
  %s7 = inlined_call_operand.vmem [shape: f32[16,1], index: 7, kind: output, shape index: {1}]
  %s8 = inlined_call_operand.vmem [shape: f32[16,1], index: 8, kind: output, shape index: {2}]
  %9 = xla_tuple %s6, %s7, %s8
  %s10 = sld [smem:[#allocation0]]
  $region58: #{ecg_encoder_forward.11} parent=0
    _
  %s12 = ssub.s32 1, %s10
  %s13 = scalar_select 0, %s12, %s10
  // Predicated region
  $region2: #{ecg_encoder_forward.11} parent=0 // pred_check
    _
  $region3: #{ecg_encoder_forward.11} parent=0 // pred_check_branch
    %15 = sbr.rel (0) target = $region5
  $region4: #{ecg_encoder_forward.11} parent=0 // pred_region
    _
  $region5: #{ecg_encoder_forward.11} parent=0 // pred_fallthru
    _
  // Predicated region
  $region6: #{ecg_encoder_forward.11} parent=0 // pred_check
    _
  $region7: #{ecg_encoder_forward.11} parent=0 // pred_check_branch
    %17 = sbr.rel (0) target = $region9
  $region8: #{ecg_encoder_forward.11} parent=0 // pred_region
    _
  $region9: #{ecg_encoder_forward.11} parent=0 // pred_fallthru
    _
  // Predicated region
  $region10: #{ecg_encoder_forward.11} parent=0 // pred_check
    _
  $region11: #{ecg_encoder_forward.11} parent=0 // pred_check_branch
    %19 = sbr.rel (0) target = $region13
  $region12: #{ecg_encoder_forward.11} parent=0 // pred_region
    _
  $region13: #{ecg_encoder_forward.11} parent=0 // pred_fallthru
    _
  // Predicated region
  $region14: #{ecg_encoder_forward.11} parent=0 // pred_check
    _
  $region15: #{ecg_encoder_forward.11} parent=0 // pred_check_branch
    %21 = sbr.rel (0) target = $region17
  $region16: #{ecg_encoder_forward.11} parent=0 // pred_region
    _
  $region17: #{ecg_encoder_forward.11} parent=0 // pred_fallthru
    _
  // Predicated region
  $region18: #{ecg_encoder_forward.11} parent=0 // pred_check
    _
  $region19: #{ecg_encoder_forward.11} parent=0 // pred_check_branch
    %23 = sbr.rel (0) target = $region21
  $region20: #{ecg_encoder_forward.11} parent=0 // pred_region
    _
  $region21: #{ecg_encoder_forward.11} parent=0 // pred_fallthru
    _
  // Predicated region
  $region22: #{ecg_encoder_forward.11} parent=0 // pred_check
    _
  $region23: #{ecg_encoder_forward.11} parent=0 // pred_check_branch
    %25 = sbr.rel (0) target = $region25
  $region24: #{ecg_encoder_forward.11} parent=0 // pred_region
    _
  $region25: #{ecg_encoder_forward.11} parent=0 // pred_fallthru
    _
  %v27 = vld [vmem:[%s0] sm:$0xf]
  %v28 = vld [vmem:[%s2] sm:$0xf]
  %v30 = vunpack.c.l.b16 %v28
  %v31 = vpack.c.b16 %v30, %v30
  %32 = vrot.lane.b32.xlu0 %v31, 116
  %v33 = vpop.permute.xlu0 %32
  %vm34 = vcmask 949248
  %v37 = vsel %vm34, %v27, %v33
  %v38 = vld [vmem:[%s1] sm:$0xf]
  %v39 = vld [vmem:[%s3] sm:$0xf]
  %v41 = vunpack.c.l.b16 %v39
  %v42 = vpack.c.b16 %v41, %v41
  %43 = vrot.lane.b32.xlu0 %v42, 116
  %v44 = vpop.permute.xlu0 %43
  %v47 = vsel %vm34, %v38, %v44
  %v48 = vld [vmem:[%s4] sm:$0xf]
  %v49 = vld [vmem:[%s4 + $0x4] sm:$0xf]
  %v52 = vunpack.c.l.b16 %v48
  %v53 = vunpack.c.l.b16 %v49
  %v54 = vpack.c.b16 %v53, %v52
  %55 = vrot.lane.b32.xlu0 %v54, 120
  %v56 = vpop.permute.xlu0 %55
  %vm57 = vcmask 64512
  %v59 = vsel %vm57, %v56, 0
  %vm61 = vcmask 1043456
  %v62 = vsel %vm61, %v47, 0
  %64 = vmatprep.subr.bf16.mxu0 0
  %65 = vmatpush1.bf16.msra.mxu0 0
  %66 = vmatprep.subr.bf16.mxu0 0
  %67 = vmatpush1.bf16.msra.mxu0 0
  %68 = vmatprep.subr.bf16.mxu0 0
  %69 = vmatpush1.bf16.msra.mxu0 0
  %70 = vmatprep.subr.bf16.mxu0 0
  %71 = vmatpush1.bf16.msra.mxu0 0
  %72 = vmatprep.subr.bf16.mxu0 0
  %73 = vmatpush1.bf16.msra.mxu0 0
  %74 = vmatprep.subr.bf16.mxu0 0
  %75 = vmatpush1.bf16.msra.mxu0 0
  %76 = vmatprep.subr.bf16.mxu0 0
  %77 = vmatpush1.bf16.msra.mxu0 0
  %78 = vmatprep.subr.bf16.mxu0 0
  %79 = vmatpush1.bf16.msra.mxu0 %v62
  %80 = vmatprep.subr.bf16.mxu0 0
  %81 = vmatpush2.bf16.msra.mxu0 0
  %82 = vmatprep.subr.bf16.mxu0 0
  %83 = vmatpush2.bf16.msra.mxu0 0
  %84 = vmatprep.subr.bf16.mxu0 0
  %85 = vmatpush2.bf16.msra.mxu0 0
  %86 = vmatprep.subr.bf16.mxu0 0
  %87 = vmatpush2.bf16.msra.mxu0 0
  %88 = vmatprep.subr.bf16.mxu0 0
  %89 = vmatpush2.bf16.msra.mxu0 0
  %90 = vmatprep.subr.bf16.mxu0 0
  %91 = vmatpush2.bf16.msra.mxu0 0
  %92 = vmatprep.subr.bf16.mxu0 0
  %93 = vmatpush2.bf16.msra.mxu0 0
  %94 = vmatprep.subr.bf16.mxu0 0
  %95 = vmatpush2.bf16.msra.mxu0 0
  %96 = vmatprep.mubr.bf16.mxu0 0
  %97 = vmatmul.mubr.bf16.gmra.mxu0 %v59
  %v98 = vpop.f32.mrf.mxu0
  %v99 = vadd.f32 0.0, %v98
  %v100 = vpop.f32.mrf.mxu0
  %v101 = vpop.f32.mrf.mxu0
  %v102 = vadd.f32 0.0, %v101
  %v103 = vpop.f32.mrf.mxu0
  %104 = vdwg.mxu0
  %v106 = vsel %vm57, %v54, 0
  %v108 = vsel %vm61, %v37, 0
  %110 = vmatprep.subr.bf16.mxu0 0
  %111 = vmatpush1.bf16.msra.mxu0 0
  %112 = vmatprep.subr.bf16.mxu0 0
  %113 = vmatpush1.bf16.msra.mxu0 0
  %114 = vmatprep.subr.bf16.mxu0 0
  %115 = vmatpush1.bf16.msra.mxu0 0
  %116 = vmatprep.subr.bf16.mxu0 0
  %117 = vmatpush1.bf16.msra.mxu0 0
  %118 = vmatprep.subr.bf16.mxu0 0
  %119 = vmatpush1.bf16.msra.mxu0 0
  %120 = vmatprep.subr.bf16.mxu0 0
  %121 = vmatpush1.bf16.msra.mxu0 0
  %122 = vmatprep.subr.bf16.mxu0 0
  %123 = vmatpush1.bf16.msra.mxu0 0
  %124 = vmatprep.subr.bf16.mxu0 0
  %125 = vmatpush1.bf16.msra.mxu0 %v108
  %126 = vmatprep.subr.bf16.mxu0 0
  %127 = vmatpush2.bf16.msra.mxu0 0
  %128 = vmatprep.subr.bf16.mxu0 0
  %129 = vmatpush2.bf16.msra.mxu0 0
  %130 = vmatprep.subr.bf16.mxu0 0
  %131 = vmatpush2.bf16.msra.mxu0 0
  %132 = vmatprep.subr.bf16.mxu0 0
  %133 = vmatpush2.bf16.msra.mxu0 0
  %134 = vmatprep.subr.bf16.mxu0 0
  %135 = vmatpush2.bf16.msra.mxu0 0
  %136 = vmatprep.subr.bf16.mxu0 0
  %137 = vmatpush2.bf16.msra.mxu0 0
  %138 = vmatprep.subr.bf16.mxu0 0
  %139 = vmatpush2.bf16.msra.mxu0 0
  %140 = vmatprep.subr.bf16.mxu0 0
  %141 = vmatpush2.bf16.msra.mxu0 0
  %142 = vmatprep.mubr.bf16.mxu0 0
  %143 = vmatmul.mubr.bf16.gmra.mxu0 %v106
  %v144 = vpop.f32.mrf.mxu0
  %v145 = vadd.f32 %v99, %v144
  %v146 = vpop.f32.mrf.mxu0
  %v147 = vpop.f32.mrf.mxu0
  %v148 = vadd.f32 %v102, %v147
  %v149 = vpop.f32.mrf.mxu0
  %150 = vdwg.mxu0
  %151 = vrot.lane.b32.xlu0 %v54, 112
  %v152 = vpop.permute.xlu0 %151
  %154 = vrot.lane.b32.xlu0 %v37, 126
  %v155 = vpop.permute.xlu0 %154
  %v157 = vsel %vm57, %v152, 0
  %v160 = vsel %vm61, %v155, 0
  %162 = vmatprep.subr.bf16.mxu0 0
  %163 = vmatpush1.bf16.msra.mxu0 0
  %164 = vmatprep.subr.bf16.mxu0 0
  %165 = vmatpush1.bf16.msra.mxu0 0
  %166 = vmatprep.subr.bf16.mxu0 0
  %167 = vmatpush1.bf16.msra.mxu0 0
  %168 = vmatprep.subr.bf16.mxu0 0
  %169 = vmatpush1.bf16.msra.mxu0 0
  %170 = vmatprep.subr.bf16.mxu0 0
  %171 = vmatpush1.bf16.msra.mxu0 0
  %172 = vmatprep.subr.bf16.mxu0 0
  %173 = vmatpush1.bf16.msra.mxu0 0
  %174 = vmatprep.subr.bf16.mxu0 0
  %175 = vmatpush1.bf16.msra.mxu0 0
  %176 = vmatprep.subr.bf16.mxu0 0
  %177 = vmatpush1.bf16.msra.mxu0 %v160
  %178 = vmatprep.subr.bf16.mxu0 0
  %179 = vmatpush2.bf16.msra.mxu0 0
  %180 = vmatprep.subr.bf16.mxu0 0
  %181 = vmatpush2.bf16.msra.mxu0 0
  %182 = vmatprep.subr.bf16.mxu0 0
  %183 = vmatpush2.bf16.msra.mxu0 0
  %184 = vmatprep.subr.bf16.mxu0 0
  %185 = vmatpush2.bf16.msra.mxu0 0
  %186 = vmatprep.subr.bf16.mxu0 0
  %187 = vmatpush2.bf16.msra.mxu0 0
  %188 = vmatprep.subr.bf16.mxu0 0
  %189 = vmatpush2.bf16.msra.mxu0 0
  %190 = vmatprep.subr.bf16.mxu0 0
  %191 = vmatpush2.bf16.msra.mxu0 0
  %192 = vmatprep.subr.bf16.mxu0 0
  %193 = vmatpush2.bf16.msra.mxu0 0
  %194 = vmatprep.mubr.bf16.mxu0 0
  %195 = vmatmul.mubr.bf16.gmra.mxu0 %v157
  %v196 = vpop.f32.mrf.mxu0
  %v197 = vadd.f32 0.0, %v196
  %v198 = vpop.f32.mrf.mxu0
  %v199 = vpop.f32.mrf.mxu0
  %v200 = vadd.f32 0.0, %v199
  %v201 = vpop.f32.mrf.mxu0
  %202 = vdwg.mxu0
  %v203 = vadd.f32 %v145, %v197
  %v204 = vadd.f32 %v148, %v200
  %205 = vrot.lane.b32.xlu0 %v54, 104
  %v206 = vpop.permute.xlu0 %205
  %208 = vrot.lane.b32.xlu0 %v47, 126
  %v209 = vpop.permute.xlu0 %208
  %v211 = vsel %vm57, %v206, 0
  %v214 = vsel %vm61, %v209, 0
  %216 = vmatprep.subr.bf16.mxu0 0
  %217 = vmatpush1.bf16.msra.mxu0 0
  %218 = vmatprep.subr.bf16.mxu0 0
  %219 = vmatpush1.bf16.msra.mxu0 0
  %220 = vmatprep.subr.bf16.mxu0 0
  %221 = vmatpush1.bf16.msra.mxu0 0
  %222 = vmatprep.subr.bf16.mxu0 0
  %223 = vmatpush1.bf16.msra.mxu0 0
  %224 = vmatprep.subr.bf16.mxu0 0
  %225 = vmatpush1.bf16.msra.mxu0 0
  %226 = vmatprep.subr.bf16.mxu0 0
  %227 = vmatpush1.bf16.msra.mxu0 0
  %228 = vmatprep.subr.bf16.mxu0 0
  %229 = vmatpush1.bf16.msra.mxu0 0
  %230 = vmatprep.subr.bf16.mxu0 0
  %231 = vmatpush1.bf16.msra.mxu0 %v214
  %232 = vmatprep.subr.bf16.mxu0 0
  %233 = vmatpush2.bf16.msra.mxu0 0
  %234 = vmatprep.subr.bf16.mxu0 0
  %235 = vmatpush2.bf16.msra.mxu0 0
  %236 = vmatprep.subr.bf16.mxu0 0
  %237 = vmatpush2.bf16.msra.mxu0 0
  %238 = vmatprep.subr.bf16.mxu0 0
  %239 = vmatpush2.bf16.msra.mxu0 0
  %240 = vmatprep.subr.bf16.mxu0 0
  %241 = vmatpush2.bf16.msra.mxu0 0
  %242 = vmatprep.subr.bf16.mxu0 0
  %243 = vmatpush2.bf16.msra.mxu0 0
  %244 = vmatprep.subr.bf16.mxu0 0
  %245 = vmatpush2.bf16.msra.mxu0 0
  %246 = vmatprep.subr.bf16.mxu0 0
  %247 = vmatpush2.bf16.msra.mxu0 0
  %248 = vmatprep.mubr.bf16.mxu0 0
  %249 = vmatmul.mubr.bf16.gmra.mxu0 %v211
  %v250 = vpop.f32.mrf.mxu0
  %v251 = vadd.f32 0.0, %v250
  %v252 = vpop.f32.mrf.mxu0
  %v253 = vpop.f32.mrf.mxu0
  %v254 = vadd.f32 0.0, %v253
  %v255 = vpop.f32.mrf.mxu0
  %256 = vdwg.mxu0
  %v257 = vadd.f32 %v203, %v251
  %v258 = vadd.f32 %v204, %v254
  %259 = vrot.lane.b32.xlu0 %v54, 96
  %v260 = vpop.permute.xlu0 %259
  %261 = vrot.lane.b32.xlu0 %v37, 124
  %v262 = vpop.permute.xlu0 %261
  %v264 = vsel %vm57, %v260, 0
  %v267 = vsel %vm61, %v262, 0
  %269 = vmatprep.subr.bf16.mxu0 0
  %270 = vmatpush1.bf16.msra.mxu0 0
  %271 = vmatprep.subr.bf16.mxu0 0
  %272 = vmatpush1.bf16.msra.mxu0 0
  %273 = vmatprep.subr.bf16.mxu0 0
  %274 = vmatpush1.bf16.msra.mxu0 0
  %275 = vmatprep.subr.bf16.mxu0 0
  %276 = vmatpush1.bf16.msra.mxu0 0
  %277 = vmatprep.subr.bf16.mxu0 0
  %278 = vmatpush1.bf16.msra.mxu0 0
  %279 = vmatprep.subr.bf16.mxu0 0
  %280 = vmatpush1.bf16.msra.mxu0 0
  %281 = vmatprep.subr.bf16.mxu0 0
  %282 = vmatpush1.bf16.msra.mxu0 0
  %283 = vmatprep.subr.bf16.mxu0 0
  %284 = vmatpush1.bf16.msra.mxu0 %v267
  %285 = vmatprep.subr.bf16.mxu0 0
  %286 = vmatpush2.bf16.msra.mxu0 0
  %287 = vmatprep.subr.bf16.mxu0 0
  %288 = vmatpush2.bf16.msra.mxu0 0
  %289 = vmatprep.subr.bf16.mxu0 0
  %290 = vmatpush2.bf16.msra.mxu0 0
  %291 = vmatprep.subr.bf16.mxu0 0
  %292 = vmatpush2.bf16.msra.mxu0 0
  %293 = vmatprep.subr.bf16.mxu0 0
  %294 = vmatpush2.bf16.msra.mxu0 0
  %295 = vmatprep.subr.bf16.mxu0 0
  %296 = vmatpush2.bf16.msra.mxu0 0
  %297 = vmatprep.subr.bf16.mxu0 0
  %298 = vmatpush2.bf16.msra.mxu0 0
  %299 = vmatprep.subr.bf16.mxu0 0
  %300 = vmatpush2.bf16.msra.mxu0 0
  %301 = vmatprep.mubr.bf16.mxu0 0
  %302 = vmatmul.mubr.bf16.gmra.mxu0 %v264
  %v303 = vpop.f32.mrf.mxu0
  %v304 = vadd.f32 0.0, %v303
  %v305 = vpop.f32.mrf.mxu0
  %v306 = vpop.f32.mrf.mxu0
  %v307 = vadd.f32 0.0, %v306
  %v308 = vpop.f32.mrf.mxu0
  %309 = vdwg.mxu0
  %v310 = vadd.f32 %v257, %v304
  %v311 = vadd.f32 %v258, %v307
  %312 = vrot.lane.b32.xlu0 %v54, 88
  %v313 = vpop.permute.xlu0 %312
  %314 = vrot.lane.b32.xlu0 %v47, 124
  %v315 = vpop.permute.xlu0 %314
  %v317 = vsel %vm57, %v313, 0
  %v320 = vsel %vm61, %v315, 0
  %322 = vmatprep.subr.bf16.mxu0 0
  %323 = vmatpush1.bf16.msra.mxu0 0
  %324 = vmatprep.subr.bf16.mxu0 0
  %325 = vmatpush1.bf16.msra.mxu0 0
  %326 = vmatprep.subr.bf16.mxu0 0
  %327 = vmatpush1.bf16.msra.mxu0 0
  %328 = vmatprep.subr.bf16.mxu0 0
  %329 = vmatpush1.bf16.msra.mxu0 0
  %330 = vmatprep.subr.bf16.mxu0 0
  %331 = vmatpush1.bf16.msra.mxu0 0
  %332 = vmatprep.subr.bf16.mxu0 0
  %333 = vmatpush1.bf16.msra.mxu0 0
  %334 = vmatprep.subr.bf16.mxu0 0
  %335 = vmatpush1.bf16.msra.mxu0 0
  %336 = vmatprep.subr.bf16.mxu0 0
  %337 = vmatpush1.bf16.msra.mxu0 %v320
  %338 = vmatprep.subr.bf16.mxu0 0
  %339 = vmatpush2.bf16.msra.mxu0 0
  %340 = vmatprep.subr.bf16.mxu0 0
  %341 = vmatpush2.bf16.msra.mxu0 0
  %342 = vmatprep.subr.bf16.mxu0 0
  %343 = vmatpush2.bf16.msra.mxu0 0
  %344 = vmatprep.subr.bf16.mxu0 0
  %345 = vmatpush2.bf16.msra.mxu0 0
  %346 = vmatprep.subr.bf16.mxu0 0
  %347 = vmatpush2.bf16.msra.mxu0 0
  %348 = vmatprep.subr.bf16.mxu0 0
  %349 = vmatpush2.bf16.msra.mxu0 0
  %350 = vmatprep.subr.bf16.mxu0 0
  %351 = vmatpush2.bf16.msra.mxu0 0
  %352 = vmatprep.subr.bf16.mxu0 0
  %353 = vmatpush2.bf16.msra.mxu0 0
  %354 = vmatprep.mubr.bf16.mxu0 0
  %355 = vmatmul.mubr.bf16.gmra.mxu0 %v317
  %v356 = vpop.f32.mrf.mxu0
  %v357 = vadd.f32 0.0, %v356
  %v358 = vpop.f32.mrf.mxu0
  %v359 = vpop.f32.mrf.mxu0
  %v360 = vadd.f32 0.0, %v359
  %v361 = vpop.f32.mrf.mxu0
  %362 = vdwg.mxu0
  %v363 = vadd.f32 %v310, %v357
  %v364 = vadd.f32 %v311, %v360
  %365 = vrot.lane.b32.xlu0 %v54, 80
  %v366 = vpop.permute.xlu0 %365
  %367 = vrot.lane.b32.xlu0 %v37, 122
  %v368 = vpop.permute.xlu0 %367
  %v370 = vsel %vm57, %v366, 0
  %v373 = vsel %vm61, %v368, 0
  %375 = vmatprep.subr.bf16.mxu0 0
  %376 = vmatpush1.bf16.msra.mxu0 0
  %377 = vmatprep.subr.bf16.mxu0 0
  %378 = vmatpush1.bf16.msra.mxu0 0
  %379 = vmatprep.subr.bf16.mxu0 0
  %380 = vmatpush1.bf16.msra.mxu0 0
  %381 = vmatprep.subr.bf16.mxu0 0
  %382 = vmatpush1.bf16.msra.mxu0 0
  %383 = vmatprep.subr.bf16.mxu0 0
  %384 = vmatpush1.bf16.msra.mxu0 0
  %385 = vmatprep.subr.bf16.mxu0 0
  %386 = vmatpush1.bf16.msra.mxu0 0
  %387 = vmatprep.subr.bf16.mxu0 0
  %388 = vmatpush1.bf16.msra.mxu0 0
  %389 = vmatprep.subr.bf16.mxu0 0
  %390 = vmatpush1.bf16.msra.mxu0 %v373
  %391 = vmatprep.subr.bf16.mxu0 0
  %392 = vmatpush2.bf16.msra.mxu0 0
  %393 = vmatprep.subr.bf16.mxu0 0
  %394 = vmatpush2.bf16.msra.mxu0 0
  %395 = vmatprep.subr.bf16.mxu0 0
  %396 = vmatpush2.bf16.msra.mxu0 0
  %397 = vmatprep.subr.bf16.mxu0 0
  %398 = vmatpush2.bf16.msra.mxu0 0
  %399 = vmatprep.subr.bf16.mxu0 0
  %400 = vmatpush2.bf16.msra.mxu0 0
  %401 = vmatprep.subr.bf16.mxu0 0
  %402 = vmatpush2.bf16.msra.mxu0 0
  %403 = vmatprep.subr.bf16.mxu0 0
  %404 = vmatpush2.bf16.msra.mxu0 0
  %405 = vmatprep.subr.bf16.mxu0 0
  %406 = vmatpush2.bf16.msra.mxu0 0
  %407 = vmatprep.mubr.bf16.mxu0 0
  %408 = vmatmul.mubr.bf16.gmra.mxu0 %v370
  %v409 = vpop.f32.mrf.mxu0
  %v410 = vadd.f32 0.0, %v409
  %v411 = vpop.f32.mrf.mxu0
  %v412 = vpop.f32.mrf.mxu0
  %v413 = vadd.f32 0.0, %v412
  %v414 = vpop.f32.mrf.mxu0
  %415 = vdwg.mxu0
  %v416 = vadd.f32 %v363, %v410
  %v417 = vadd.f32 %v364, %v413
  %418 = vrot.lane.b32.xlu0 %v54, 72
  %v419 = vpop.permute.xlu0 %418
  %420 = vrot.lane.b32.xlu0 %v47, 122
  %v421 = vpop.permute.xlu0 %420
  %v423 = vsel %vm57, %v419, 0
  %v426 = vsel %vm61, %v421, 0
  %428 = vmatprep.subr.bf16.mxu0 0
  %429 = vmatpush1.bf16.msra.mxu0 0
  %430 = vmatprep.subr.bf16.mxu0 0
  %431 = vmatpush1.bf16.msra.mxu0 0
  %432 = vmatprep.subr.bf16.mxu0 0
  %433 = vmatpush1.bf16.msra.mxu0 0
  %434 = vmatprep.subr.bf16.mxu0 0
  %435 = vmatpush1.bf16.msra.mxu0 0
  %436 = vmatprep.subr.bf16.mxu0 0
  %437 = vmatpush1.bf16.msra.mxu0 0
  %438 = vmatprep.subr.bf16.mxu0 0
  %439 = vmatpush1.bf16.msra.mxu0 0
  %440 = vmatprep.subr.bf16.mxu0 0
  %441 = vmatpush1.bf16.msra.mxu0 0
  %442 = vmatprep.subr.bf16.mxu0 0
  %443 = vmatpush1.bf16.msra.mxu0 %v426
  %444 = vmatprep.subr.bf16.mxu0 0
  %445 = vmatpush2.bf16.msra.mxu0 0
  %446 = vmatprep.subr.bf16.mxu0 0
  %447 = vmatpush2.bf16.msra.mxu0 0
  %448 = vmatprep.subr.bf16.mxu0 0
  %449 = vmatpush2.bf16.msra.mxu0 0
  %450 = vmatprep.subr.bf16.mxu0 0
  %451 = vmatpush2.bf16.msra.mxu0 0
  %452 = vmatprep.subr.bf16.mxu0 0
  %453 = vmatpush2.bf16.msra.mxu0 0
  %454 = vmatprep.subr.bf16.mxu0 0
  %455 = vmatpush2.bf16.msra.mxu0 0
  %456 = vmatprep.subr.bf16.mxu0 0
  %457 = vmatpush2.bf16.msra.mxu0 0
  %458 = vmatprep.subr.bf16.mxu0 0
  %459 = vmatpush2.bf16.msra.mxu0 0
  %460 = vmatprep.mubr.bf16.mxu0 0
  %461 = vmatmul.mubr.bf16.gmra.mxu0 %v423
  %v462 = vpop.f32.mrf.mxu0
  %v463 = vadd.f32 0.0, %v462
  %v464 = vpop.f32.mrf.mxu0
  %v465 = vpop.f32.mrf.mxu0
  %v466 = vadd.f32 0.0, %v465
  %v467 = vpop.f32.mrf.mxu0
  %468 = vdwg.mxu0
  %v469 = vadd.f32 %v416, %v463
  %v470 = vadd.f32 %v417, %v466
  %471 = vrot.lane.b32.xlu0 %v54, 64
  %v472 = vpop.permute.xlu0 %471
  %473 = vrot.lane.b32.xlu0 %v37, 120
  %v474 = vpop.permute.xlu0 %473
  %v476 = vsel %vm57, %v472, 0
  %v479 = vsel %vm61, %v474, 0
  %481 = vmatprep.subr.bf16.mxu0 0
  %482 = vmatpush1.bf16.msra.mxu0 0
  %483 = vmatprep.subr.bf16.mxu0 0
  %484 = vmatpush1.bf16.msra.mxu0 0
  %485 = vmatprep.subr.bf16.mxu0 0
  %486 = vmatpush1.bf16.msra.mxu0 0
  %487 = vmatprep.subr.bf16.mxu0 0
  %488 = vmatpush1.bf16.msra.mxu0 0
  %489 = vmatprep.subr.bf16.mxu0 0
  %490 = vmatpush1.bf16.msra.mxu0 0
  %491 = vmatprep.subr.bf16.mxu0 0
  %492 = vmatpush1.bf16.msra.mxu0 0
  %493 = vmatprep.subr.bf16.mxu0 0
  %494 = vmatpush1.bf16.msra.mxu0 0
  %495 = vmatprep.subr.bf16.mxu0 0
  %496 = vmatpush1.bf16.msra.mxu0 %v479
  %497 = vmatprep.subr.bf16.mxu0 0
  %498 = vmatpush2.bf16.msra.mxu0 0
  %499 = vmatprep.subr.bf16.mxu0 0
  %500 = vmatpush2.bf16.msra.mxu0 0
  %501 = vmatprep.subr.bf16.mxu0 0
  %502 = vmatpush2.bf16.msra.mxu0 0
  %503 = vmatprep.subr.bf16.mxu0 0
  %504 = vmatpush2.bf16.msra.mxu0 0
  %505 = vmatprep.subr.bf16.mxu0 0
  %506 = vmatpush2.bf16.msra.mxu0 0
  %507 = vmatprep.subr.bf16.mxu0 0
  %508 = vmatpush2.bf16.msra.mxu0 0
  %509 = vmatprep.subr.bf16.mxu0 0
  %510 = vmatpush2.bf16.msra.mxu0 0
  %511 = vmatprep.subr.bf16.mxu0 0
  %512 = vmatpush2.bf16.msra.mxu0 0
  %513 = vmatprep.mubr.bf16.mxu0 0
  %514 = vmatmul.mubr.bf16.gmra.mxu0 %v476
  %v515 = vpop.f32.mrf.mxu0
  %v516 = vadd.f32 0.0, %v515
  %v517 = vpop.f32.mrf.mxu0
  %v518 = vpop.f32.mrf.mxu0
  %v519 = vadd.f32 0.0, %v518
  %v520 = vpop.f32.mrf.mxu0
  %521 = vdwg.mxu0
  %v522 = vadd.f32 %v469, %v516
  %v523 = vadd.f32 %v470, %v519
  %524 = vrot.lane.b32.xlu0 %v54, 56
  %v525 = vpop.permute.xlu0 %524
  %526 = vrot.lane.b32.xlu0 %v47, 120
  %v527 = vpop.permute.xlu0 %526
  %v529 = vsel %vm57, %v525, 0
  %v532 = vsel %vm61, %v527, 0
  %534 = vmatprep.subr.bf16.mxu0 0
  %535 = vmatpush1.bf16.msra.mxu0 0
  %536 = vmatprep.subr.bf16.mxu0 0
  %537 = vmatpush1.bf16.msra.mxu0 0
  %538 = vmatprep.subr.bf16.mxu0 0
  %539 = vmatpush1.bf16.msra.mxu0 0
  %540 = vmatprep.subr.bf16.mxu0 0
  %541 = vmatpush1.bf16.msra.mxu0 0
  %542 = vmatprep.subr.bf16.mxu0 0
  %543 = vmatpush1.bf16.msra.mxu0 0
  %544 = vmatprep.subr.bf16.mxu0 0
  %545 = vmatpush1.bf16.msra.mxu0 0
  %546 = vmatprep.subr.bf16.mxu0 0
  %547 = vmatpush1.bf16.msra.mxu0 0
  %548 = vmatprep.subr.bf16.mxu0 0
  %549 = vmatpush1.bf16.msra.mxu0 %v532
  %550 = vmatprep.subr.bf16.mxu0 0
  %551 = vmatpush2.bf16.msra.mxu0 0
  %552 = vmatprep.subr.bf16.mxu0 0
  %553 = vmatpush2.bf16.msra.mxu0 0
  %554 = vmatprep.subr.bf16.mxu0 0
  %555 = vmatpush2.bf16.msra.mxu0 0
  %556 = vmatprep.subr.bf16.mxu0 0
  %557 = vmatpush2.bf16.msra.mxu0 0
  %558 = vmatprep.subr.bf16.mxu0 0
  %559 = vmatpush2.bf16.msra.mxu0 0
  %560 = vmatprep.subr.bf16.mxu0 0
  %561 = vmatpush2.bf16.msra.mxu0 0
  %562 = vmatprep.subr.bf16.mxu0 0
  %563 = vmatpush2.bf16.msra.mxu0 0
  %564 = vmatprep.subr.bf16.mxu0 0
  %565 = vmatpush2.bf16.msra.mxu0 0
  %566 = vmatprep.mubr.bf16.mxu0 0
  %567 = vmatmul.mubr.bf16.gmra.mxu0 %v529
  %v568 = vpop.f32.mrf.mxu0
  %v569 = vadd.f32 0.0, %v568
  %v570 = vpop.f32.mrf.mxu0
  %v571 = vpop.f32.mrf.mxu0
  %v572 = vadd.f32 0.0, %v571
  %v573 = vpop.f32.mrf.mxu0
  %574 = vdwg.mxu0
  %v575 = vadd.f32 %v522, %v569
  %v576 = vadd.f32 %v523, %v572
  %577 = vrot.lane.b32.xlu0 %v54, 48
  %v578 = vpop.permute.xlu0 %577
  %579 = vrot.lane.b32.xlu0 %v37, 118
  %v580 = vpop.permute.xlu0 %579
  %v582 = vsel %vm57, %v578, 0
  %v585 = vsel %vm61, %v580, 0
  %587 = vmatprep.subr.bf16.mxu0 0
  %588 = vmatpush1.bf16.msra.mxu0 0
  %589 = vmatprep.subr.bf16.mxu0 0
  %590 = vmatpush1.bf16.msra.mxu0 0
  %591 = vmatprep.subr.bf16.mxu0 0
  %592 = vmatpush1.bf16.msra.mxu0 0
  %593 = vmatprep.subr.bf16.mxu0 0
  %594 = vmatpush1.bf16.msra.mxu0 0
  %595 = vmatprep.subr.bf16.mxu0 0
  %596 = vmatpush1.bf16.msra.mxu0 0
  %597 = vmatprep.subr.bf16.mxu0 0
  %598 = vmatpush1.bf16.msra.mxu0 0
  %599 = vmatprep.subr.bf16.mxu0 0
  %600 = vmatpush1.bf16.msra.mxu0 0
  %601 = vmatprep.subr.bf16.mxu0 0
  %602 = vmatpush1.bf16.msra.mxu0 %v585
  %603 = vmatprep.subr.bf16.mxu0 0
  %604 = vmatpush2.bf16.msra.mxu0 0
  %605 = vmatprep.subr.bf16.mxu0 0
  %606 = vmatpush2.bf16.msra.mxu0 0
  %607 = vmatprep.subr.bf16.mxu0 0
  %608 = vmatpush2.bf16.msra.mxu0 0
  %609 = vmatprep.subr.bf16.mxu0 0
  %610 = vmatpush2.bf16.msra.mxu0 0
  %611 = vmatprep.subr.bf16.mxu0 0
  %612 = vmatpush2.bf16.msra.mxu0 0
  %613 = vmatprep.subr.bf16.mxu0 0
  %614 = vmatpush2.bf16.msra.mxu0 0
  %615 = vmatprep.subr.bf16.mxu0 0
  %616 = vmatpush2.bf16.msra.mxu0 0
  %617 = vmatprep.subr.bf16.mxu0 0
  %618 = vmatpush2.bf16.msra.mxu0 0
  %619 = vmatprep.mubr.bf16.mxu0 0
  %620 = vmatmul.mubr.bf16.gmra.mxu0 %v582
  %v621 = vpop.f32.mrf.mxu0
  %v622 = vadd.f32 0.0, %v621
  %v623 = vpop.f32.mrf.mxu0
  %v624 = vpop.f32.mrf.mxu0
  %v625 = vadd.f32 0.0, %v624
  %v626 = vpop.f32.mrf.mxu0
  %627 = vdwg.mxu0
  %v628 = vadd.f32 %v575, %v622
  %v629 = vadd.f32 %v576, %v625
  %630 = vrot.lane.b32.xlu0 %v54, 40
  %v631 = vpop.permute.xlu0 %630
  %632 = vrot.lane.b32.xlu0 %v47, 118
  %v633 = vpop.permute.xlu0 %632
  %v635 = vsel %vm57, %v631, 0
  %v638 = vsel %vm61, %v633, 0
  %640 = vmatprep.subr.bf16.mxu0 0
  %641 = vmatpush1.bf16.msra.mxu0 0
  %642 = vmatprep.subr.bf16.mxu0 0
  %643 = vmatpush1.bf16.msra.mxu0 0
  %644 = vmatprep.subr.bf16.mxu0 0
  %645 = vmatpush1.bf16.msra.mxu0 0
  %646 = vmatprep.subr.bf16.mxu0 0
  %647 = vmatpush1.bf16.msra.mxu0 0
  %648 = vmatprep.subr.bf16.mxu0 0
  %649 = vmatpush1.bf16.msra.mxu0 0
  %650 = vmatprep.subr.bf16.mxu0 0
  %651 = vmatpush1.bf16.msra.mxu0 0
  %652 = vmatprep.subr.bf16.mxu0 0
  %653 = vmatpush1.bf16.msra.mxu0 0
  %654 = vmatprep.subr.bf16.mxu0 0
  %655 = vmatpush1.bf16.msra.mxu0 %v638
  %656 = vmatprep.subr.bf16.mxu0 0
  %657 = vmatpush2.bf16.msra.mxu0 0
  %658 = vmatprep.subr.bf16.mxu0 0
  %659 = vmatpush2.bf16.msra.mxu0 0
  %660 = vmatprep.subr.bf16.mxu0 0
  %661 = vmatpush2.bf16.msra.mxu0 0
  %662 = vmatprep.subr.bf16.mxu0 0
  %663 = vmatpush2.bf16.msra.mxu0 0
  %664 = vmatprep.subr.bf16.mxu0 0
  %665 = vmatpush2.bf16.msra.mxu0 0
  %666 = vmatprep.subr.bf16.mxu0 0
  %667 = vmatpush2.bf16.msra.mxu0 0
  %668 = vmatprep.subr.bf16.mxu0 0
  %669 = vmatpush2.bf16.msra.mxu0 0
  %670 = vmatprep.subr.bf16.mxu0 0
  %671 = vmatpush2.bf16.msra.mxu0 0
  %672 = vmatprep.mubr.bf16.mxu0 0
  %673 = vmatmul.mubr.bf16.gmra.mxu0 %v635
  %v674 = vpop.f32.mrf.mxu0
  %v675 = vadd.f32 0.0, %v674
  %v676 = vpop.f32.mrf.mxu0
  %v677 = vpop.f32.mrf.mxu0
  %v678 = vadd.f32 0.0, %v677
  %v679 = vpop.f32.mrf.mxu0
  %680 = vdwg.mxu0
  %v681 = vadd.f32 %v628, %v675
  %v682 = vadd.f32 %v629, %v678
  %683 = vrot.lane.b32.xlu0 %v54, 32
  %v684 = vpop.permute.xlu0 %683
  %685 = vrot.lane.b32.xlu0 %v37, 116
  %v686 = vpop.permute.xlu0 %685
  %v688 = vsel %vm57, %v684, 0
  %v691 = vsel %vm61, %v686, 0
  %693 = vmatprep.subr.bf16.mxu0 0
  %694 = vmatpush1.bf16.msra.mxu0 0
  %695 = vmatprep.subr.bf16.mxu0 0
  %696 = vmatpush1.bf16.msra.mxu0 0
  %697 = vmatprep.subr.bf16.mxu0 0
  %698 = vmatpush1.bf16.msra.mxu0 0
  %699 = vmatprep.subr.bf16.mxu0 0
  %700 = vmatpush1.bf16.msra.mxu0 0
  %701 = vmatprep.subr.bf16.mxu0 0
  %702 = vmatpush1.bf16.msra.mxu0 0
  %703 = vmatprep.subr.bf16.mxu0 0
  %704 = vmatpush1.bf16.msra.mxu0 0
  %705 = vmatprep.subr.bf16.mxu0 0
  %706 = vmatpush1.bf16.msra.mxu0 0
  %707 = vmatprep.subr.bf16.mxu0 0
  %708 = vmatpush1.bf16.msra.mxu0 %v691
  %709 = vmatprep.subr.bf16.mxu0 0
  %710 = vmatpush2.bf16.msra.mxu0 0
  %711 = vmatprep.subr.bf16.mxu0 0
  %712 = vmatpush2.bf16.msra.mxu0 0
  %713 = vmatprep.subr.bf16.mxu0 0
  %714 = vmatpush2.bf16.msra.mxu0 0
  %715 = vmatprep.subr.bf16.mxu0 0
  %716 = vmatpush2.bf16.msra.mxu0 0
  %717 = vmatprep.subr.bf16.mxu0 0
  %718 = vmatpush2.bf16.msra.mxu0 0
  %719 = vmatprep.subr.bf16.mxu0 0
  %720 = vmatpush2.bf16.msra.mxu0 0
  %721 = vmatprep.subr.bf16.mxu0 0
  %722 = vmatpush2.bf16.msra.mxu0 0
  %723 = vmatprep.subr.bf16.mxu0 0
  %724 = vmatpush2.bf16.msra.mxu0 0
  %725 = vmatprep.mubr.bf16.mxu0 0
  %726 = vmatmul.mubr.bf16.gmra.mxu0 %v688
  %v727 = vpop.f32.mrf.mxu0
  %v728 = vadd.f32 0.0, %v727
  %v729 = vpop.f32.mrf.mxu0
  %v730 = vpop.f32.mrf.mxu0
  %v731 = vadd.f32 0.0, %v730
  %v732 = vpop.f32.mrf.mxu0
  %733 = vdwg.mxu0
  %v734 = vadd.f32 %v681, %v728
  %v735 = vadd.f32 %v682, %v731
  %736 = vrot.lane.b32.xlu0 %v54, 24
  %v737 = vpop.permute.xlu0 %736
  %738 = vrot.lane.b32.xlu0 %v47, 116
  %v739 = vpop.permute.xlu0 %738
  %v741 = vsel %vm57, %v737, 0
  %v744 = vsel %vm61, %v739, 0
  %746 = vmatprep.subr.bf16.mxu0 0
  %747 = vmatpush1.bf16.msra.mxu0 0
  %748 = vmatprep.subr.bf16.mxu0 0
  %749 = vmatpush1.bf16.msra.mxu0 0
  %750 = vmatprep.subr.bf16.mxu0 0
  %751 = vmatpush1.bf16.msra.mxu0 0
  %752 = vmatprep.subr.bf16.mxu0 0
  %753 = vmatpush1.bf16.msra.mxu0 0
  %754 = vmatprep.subr.bf16.mxu0 0
  %755 = vmatpush1.bf16.msra.mxu0 0
  %756 = vmatprep.subr.bf16.mxu0 0
  %757 = vmatpush1.bf16.msra.mxu0 0
  %758 = vmatprep.subr.bf16.mxu0 0
  %759 = vmatpush1.bf16.msra.mxu0 0
  %760 = vmatprep.subr.bf16.mxu0 0
  %761 = vmatpush1.bf16.msra.mxu0 %v744
  %762 = vmatprep.subr.bf16.mxu0 0
  %763 = vmatpush2.bf16.msra.mxu0 0
  %764 = vmatprep.subr.bf16.mxu0 0
  %765 = vmatpush2.bf16.msra.mxu0 0
  %766 = vmatprep.subr.bf16.mxu0 0
  %767 = vmatpush2.bf16.msra.mxu0 0
  %768 = vmatprep.subr.bf16.mxu0 0
  %769 = vmatpush2.bf16.msra.mxu0 0
  %770 = vmatprep.subr.bf16.mxu0 0
  %771 = vmatpush2.bf16.msra.mxu0 0
  %772 = vmatprep.subr.bf16.mxu0 0
  %773 = vmatpush2.bf16.msra.mxu0 0
  %774 = vmatprep.subr.bf16.mxu0 0
  %775 = vmatpush2.bf16.msra.mxu0 0
  %776 = vmatprep.subr.bf16.mxu0 0
  %777 = vmatpush2.bf16.msra.mxu0 0
  %778 = vmatprep.mubr.bf16.mxu0 0
  %779 = vmatmul.mubr.bf16.gmra.mxu0 %v741
  %v780 = vpop.f32.mrf.mxu0
  %v781 = vadd.f32 0.0, %v780
  %v782 = vpop.f32.mrf.mxu0
  %v783 = vpop.f32.mrf.mxu0
  %v784 = vadd.f32 0.0, %v783
  %v785 = vpop.f32.mrf.mxu0
  %786 = vdwg.mxu0
  %v787 = vadd.f32 %v734, %v781
  %v788 = vadd.f32 %v735, %v784
  %789 = vrot.lane.b32.xlu0 %v54, 16
  %v790 = vpop.permute.xlu0 %789
  %791 = vrot.lane.b32.xlu0 %v37, 114
  %v792 = vpop.permute.xlu0 %791
  %793 = vrot.lane.b32.xlu0 %v33, 114
  %v794 = vpop.permute.xlu0 %793
  %vm795 = vcmask 932864
  %v796 = vsel %vm795, %v792, %v794
  %v798 = vsel %vm57, %v790, 0
  %v801 = vsel %vm61, %v796, 0
  %803 = vmatprep.subr.bf16.mxu0 0
  %804 = vmatpush1.bf16.msra.mxu0 0
  %805 = vmatprep.subr.bf16.mxu0 0
  %806 = vmatpush1.bf16.msra.mxu0 0
  %807 = vmatprep.subr.bf16.mxu0 0
  %808 = vmatpush1.bf16.msra.mxu0 0
  %809 = vmatprep.subr.bf16.mxu0 0
  %810 = vmatpush1.bf16.msra.mxu0 0
  %811 = vmatprep.subr.bf16.mxu0 0
  %812 = vmatpush1.bf16.msra.mxu0 0
  %813 = vmatprep.subr.bf16.mxu0 0
  %814 = vmatpush1.bf16.msra.mxu0 0
  %815 = vmatprep.subr.bf16.mxu0 0
  %816 = vmatpush1.bf16.msra.mxu0 0
  %817 = vmatprep.subr.bf16.mxu0 0
  %818 = vmatpush1.bf16.msra.mxu0 %v801
  %819 = vmatprep.subr.bf16.mxu0 0
  %820 = vmatpush2.bf16.msra.mxu0 0
  %821 = vmatprep.subr.bf16.mxu0 0
  %822 = vmatpush2.bf16.msra.mxu0 0
  %823 = vmatprep.subr.bf16.mxu0 0
  %824 = vmatpush2.bf16.msra.mxu0 0
  %825 = vmatprep.subr.bf16.mxu0 0
  %826 = vmatpush2.bf16.msra.mxu0 0
  %827 = vmatprep.subr.bf16.mxu0 0
  %828 = vmatpush2.bf16.msra.mxu0 0
  %829 = vmatprep.subr.bf16.mxu0 0
  %830 = vmatpush2.bf16.msra.mxu0 0
  %831 = vmatprep.subr.bf16.mxu0 0
  %832 = vmatpush2.bf16.msra.mxu0 0
  %833 = vmatprep.subr.bf16.mxu0 0
  %834 = vmatpush2.bf16.msra.mxu0 0
  %835 = vmatprep.mubr.bf16.mxu0 0
  %836 = vmatmul.mubr.bf16.gmra.mxu0 %v798
  %v837 = vpop.f32.mrf.mxu0
  %v838 = vadd.f32 0.0, %v837
  %v839 = vpop.f32.mrf.mxu0
  %v840 = vpop.f32.mrf.mxu0
  %v841 = vadd.f32 0.0, %v840
  %v842 = vpop.f32.mrf.mxu0
  %843 = vdwg.mxu0
  %v844 = vadd.f32 %v787, %v838
  %v845 = vadd.f32 %v788, %v841
  %v846 = vld [vmem:[%s5] sm:$0xff]
  %v847 = vld [vmem:[%s5 + $0x8] sm:$0xff]
  %849 = vset.pattern.permute.xlu0 0
  %850 = vperm.xlu0 %849, %v846
  %v851 = vpop.permute.xlu0 %850
  %854 = vset.pattern.permute.xlu0 0
  %855 = vperm.xlu0 %854, %v847
  %v856 = vpop.permute.xlu0 %855
  %v858 = vadd.f32 %v844, %v851
  %v859 = vadd.f32 %v845, %v856
  %v860 = vpack.c.bf16 %v859, %v858
  %v862 = vunpack.c.l.b16 %v860
  %v863 = vunpack.c.h.b16 %v860
  %v864 = vpack.c.b16 %v862, %v862
  %v865 = vpack.c.b16 %v863, %v863
  %vm868 = vcmask 945152
  %869 = vst.msk [vmem:[%s6] sm:$0xf] %vm868, %v864
  %870 = vst.msk [vmem:[%s6 + $0x4] sm:$0xf] %vm868, %v865
  %p871 = scmp.eq.s32.totalorder 0, 0
  // Predicated region
  $region26: #{ecg_encoder_forward.11} parent=0 // pred_check
    %p872 = pneg %p871
  $region27: #{ecg_encoder_forward.11} parent=0 // pred_check_branch
    %874 = sbr.rel (%p872) target = $region29
  $region28: #{ecg_encoder_forward.11} parent=0 // pred_region
    %vm875 = vcmask 7168
    %876 = vst.msk [vmem:[#allocation2] sm:$0xff] %vm875, 0.0
    %877 = vst.msk [vmem:[#allocation2 + $0x8] sm:$0xff] %vm875, 0.0
    %878 = vst.msk [vmem:[#allocation3] sm:$0xff] %vm875, 0.0
    %879 = vst.msk [vmem:[#allocation3 + $0x8] sm:$0xff] %vm875, 0.0
  $region29: #{ecg_encoder_forward.11} parent=0 // pred_fallthru
    _
  %v880 = vld [vmem:[#allocation2] sm:$0xff]
  %v881 = vld [vmem:[#allocation2 + $0x8] sm:$0xff]
  %v882 = vsel %vm34, %v858, 0.0
  %883 = vadd.xlane.f32.xlu0 %v882
  %v884 = vpop.xlane.xlu0 %883
  %v885 = vsel %vm34, %v859, 0.0
  %886 = vadd.xlane.f32.xlu0 %v885
  %v887 = vpop.xlane.xlu0 %886
  %v888 = vadd.f32 %v880, %v884
  %v889 = vadd.f32 %v881, %v887
  %vm890 = vcmask 7168
  %891 = vst.msk [vmem:[#allocation2] sm:$0xff] %vm890, %v888
  %892 = vst.msk [vmem:[#allocation2 + $0x8] sm:$0xff] %vm890, %v889
  %v893 = vld [vmem:[#allocation3] sm:$0xff]
  %v894 = vld [vmem:[#allocation3 + $0x8] sm:$0xff]
  %v895 = vmul.f32 %v858, %v858
  %v896 = vmul.f32 %v859, %v859
  %v897 = vsel %vm34, %v895, 0.0
  %898 = vadd.xlane.f32.xlu0 %v897
  %v899 = vpop.xlane.xlu0 %898
  %v900 = vsel %vm34, %v896, 0.0
  %901 = vadd.xlane.f32.xlu0 %v900
  %v902 = vpop.xlane.xlu0 %901
  %v903 = vadd.f32 %v893, %v899
  %v904 = vadd.f32 %v894, %v902
  %905 = vst.msk [vmem:[#allocation3] sm:$0xff] %vm890, %v903
  %906 = vst.msk [vmem:[#allocation3 + $0x8] sm:$0xff] %vm890, %v904
  // Predicated region
  $region30: #{ecg_encoder_forward.11} parent=0 // pred_check
    %p907 = pneg %p871
  $region31: #{ecg_encoder_forward.11} parent=0 // pred_check_branch
    %909 = sbr.rel (%p907) target = $region33
  $region32: #{ecg_encoder_forward.11} parent=0 // pred_region
    %v910 = vld [vmem:[#allocation2] sm:$0xff]
    %v911 = vld [vmem:[#allocation2 + $0x8] sm:$0xff]
    %912 = vst.msk [vmem:[%s7] sm:$0xff] %vm890, %v910
    %913 = vst.msk [vmem:[%s7 + $0x8] sm:$0xff] %vm890, %v911
    %v914 = vld [vmem:[#allocation3] sm:$0xff]
    %v915 = vld [vmem:[#allocation3 + $0x8] sm:$0xff]
    %916 = vst.msk [vmem:[%s8] sm:$0xff] %vm890, %v914
    %917 = vst.msk [vmem:[%s8 + $0x8] sm:$0xff] %vm890, %v915
  $region33: #{ecg_encoder_forward.11} parent=0 // pred_fallthru
    _
  // Predicated region
  $region34: #{ecg_encoder_forward.11} parent=0 // pred_check
    _
  $region35: #{ecg_encoder_forward.11} parent=0 // pred_check_branch
    %919 = sbr.rel (0) target = $region37
  $region36: #{ecg_encoder_forward.11} parent=0 // pred_region
    _
  $region37: #{ecg_encoder_forward.11} parent=0 // pred_fallthru
    _
  // Predicated region
  $region38: #{ecg_encoder_forward.11} parent=0 // pred_check
    _
  $region39: #{ecg_encoder_forward.11} parent=0 // pred_check_branch
    %921 = sbr.rel (0) target = $region41
  $region40: #{ecg_encoder_forward.11} parent=0 // pred_region
    _
  $region41: #{ecg_encoder_forward.11} parent=0 // pred_fallthru
    _
  // Predicated region
  $region42: #{ecg_encoder_forward.11} parent=0 // pred_check
    _
  $region43: #{ecg_encoder_forward.11} parent=0 // pred_check_branch
    %923 = sbr.rel (0) target = $region45
  $region44: #{ecg_encoder_forward.11} parent=0 // pred_region
    _
  $region45: #{ecg_encoder_forward.11} parent=0 // pred_fallthru
    _
  // Predicated region
  $region46: #{ecg_encoder_forward.11} parent=0 // pred_check
    _
  $region47: #{ecg_encoder_forward.11} parent=0 // pred_check_branch
    %925 = sbr.rel (0) target = $region49
  $region48: #{ecg_encoder_forward.11} parent=0 // pred_region
    _
  $region49: #{ecg_encoder_forward.11} parent=0 // pred_fallthru
    _
  // Predicated region
  $region50: #{ecg_encoder_forward.11} parent=0 // pred_check
    _
  $region51: #{ecg_encoder_forward.11} parent=0 // pred_check_branch
    %927 = sbr.rel (0) target = $region53
  $region52: #{ecg_encoder_forward.11} parent=0 // pred_region
    _
  $region53: #{ecg_encoder_forward.11} parent=0 // pred_fallthru
    _
  // Predicated region
  $region54: #{ecg_encoder_forward.11} parent=0 // pred_check
    _
  $region55: #{ecg_encoder_forward.11} parent=0 // pred_check_branch
    %929 = sbr.rel (0) target = $region57
  $region56: #{ecg_encoder_forward.11} parent=0 // pred_region
    _
  $region57: #{ecg_encoder_forward.11} parent=0 // pred_fallthru
    _

// kernel: ecg_encoder_forward.14
$region0: #{ecg_encoder_forward.14}
  #allocation0 [shape = 'u32[]', space=smem, size = 0x4, offset = 0x4, fixed_abs, tag = 'smem constant byte address 0x4 - core index']
  #allocation1 [shape = 'u32[144,128]{1,0:T(1,128)}', space=vmem, size = 0x12000, scoped, tag = 'internal scratch']
  %s0 = inlined_call_operand.vmem [shape: bf16[32,50], index: 0, kind: input, shape index: {}]
  %s1 = inlined_call_operand.vmem [shape: f32[32,1], index: 1, kind: input, shape index: {}]
  %s2 = inlined_call_operand.vmem [shape: f32[32,1], index: 2, kind: input, shape index: {}]
  %s3 = inlined_call_operand.vmem [shape: f32[32,1], index: 3, kind: input, shape index: {}]
  %s4 = inlined_call_operand.vmem [shape: f32[32,1], index: 4, kind: input, shape index: {}]
  %s5 = inlined_call_operand.vmem [shape: bf16[32,50], index: 5, kind: output, shape index: {}]
  %s6 = sld [smem:[#allocation0]]
  $region30: #{ecg_encoder_forward.14} parent=0
    _
  %s8 = ssub.s32 1, %s6
  %s9 = scalar_select 0, %s8, %s6
  // Predicated region
  $region2: #{ecg_encoder_forward.14} parent=0 // pred_check
    _
  $region3: #{ecg_encoder_forward.14} parent=0 // pred_check_branch
    %11 = sbr.rel (0) target = $region5
  $region4: #{ecg_encoder_forward.14} parent=0 // pred_region
    _
  $region5: #{ecg_encoder_forward.14} parent=0 // pred_fallthru
    _
  // Predicated region
  $region6: #{ecg_encoder_forward.14} parent=0 // pred_check
    _
  $region7: #{ecg_encoder_forward.14} parent=0 // pred_check_branch
    %13 = sbr.rel (0) target = $region9
  $region8: #{ecg_encoder_forward.14} parent=0 // pred_region
    _
  $region9: #{ecg_encoder_forward.14} parent=0 // pred_fallthru
    _
  // Predicated region
  $region10: #{ecg_encoder_forward.14} parent=0 // pred_check
    _
  $region11: #{ecg_encoder_forward.14} parent=0 // pred_check_branch
    %15 = sbr.rel (0) target = $region13
  $region12: #{ecg_encoder_forward.14} parent=0 // pred_region
    _
  $region13: #{ecg_encoder_forward.14} parent=0 // pred_fallthru
    _
  // Predicated region
  $region14: #{ecg_encoder_forward.14} parent=0 // pred_check
    _
  $region15: #{ecg_encoder_forward.14} parent=0 // pred_check_branch
    %17 = sbr.rel (0) target = $region17
  $region16: #{ecg_encoder_forward.14} parent=0 // pred_region
    _
  $region17: #{ecg_encoder_forward.14} parent=0 // pred_fallthru
    _
  // Predicated region
  $region18: #{ecg_encoder_forward.14} parent=0 // pred_check
    _
  $region19: #{ecg_encoder_forward.14} parent=0 // pred_check_branch
    %19 = sbr.rel (0) target = $region21
  $region20: #{ecg_encoder_forward.14} parent=0 // pred_region
    _
  $region21: #{ecg_encoder_forward.14} parent=0 // pred_fallthru
    _
  %v20 = vld [vmem:[%s1] sm:$0xff]
  %v21 = vld [vmem:[%s1 + $0x8] sm:$0xff]
  %v22 = vld [vmem:[%s1 + $0x10] sm:$0xff]
  %v23 = vld [vmem:[%s1 + $0x18] sm:$0xff]
  %v24 = vmul.f32 %v20, 0.02
  %v25 = vmul.f32 %v21, 0.02
  %v26 = vmul.f32 %v22, 0.02
  %v27 = vmul.f32 %v23, 0.02
  %v28 = vld [vmem:[%s2] sm:$0xff]
  %v29 = vld [vmem:[%s2 + $0x8] sm:$0xff]
  %v30 = vld [vmem:[%s2 + $0x10] sm:$0xff]
  %v31 = vld [vmem:[%s2 + $0x18] sm:$0xff]
  %v32 = vmul.f32 %v28, 0.02
  %v33 = vmul.f32 %v29, 0.02
  %v34 = vmul.f32 %v30, 0.02
  %v35 = vmul.f32 %v31, 0.02
  %v36 = vmul.f32 %v24, %v24
  %v37 = vmul.f32 %v25, %v25
  %v38 = vmul.f32 %v26, %v26
  %v39 = vmul.f32 %v27, %v27
  %v40 = vsub.f32 %v32, %v36
  %v41 = vsub.f32 %v33, %v37
  %v42 = vsub.f32 %v34, %v38
  %v43 = vsub.f32 %v35, %v39
  %v44 = vmax.f32 %v40, 0.0
  %v45 = vmax.f32 %v41, 0.0
  %v46 = vmax.f32 %v42, 0.0
  %v47 = vmax.f32 %v43, 0.0
  %v48 = vld [vmem:[%s3] sm:$0xff]
  %v49 = vld [vmem:[%s3 + $0x8] sm:$0xff]
  %v50 = vld [vmem:[%s3 + $0x10] sm:$0xff]
  %v51 = vld [vmem:[%s3 + $0x18] sm:$0xff]
  %v52 = vadd.f32 %v44, 1e-05
  %v53 = vadd.f32 %v45, 1e-05
  %v54 = vadd.f32 %v46, 1e-05
  %v55 = vadd.f32 %v47, 1e-05
  %v56 = vrsqrt.pop %v52
  %v57 = vrsqrt.pop %v53
  %v58 = vrsqrt.pop %v54
  %v59 = vrsqrt.pop %v55
  %v60 = vmul.f32 %v48, %v56
  %v61 = vmul.f32 %v49, %v57
  %v62 = vmul.f32 %v50, %v58
  %v63 = vmul.f32 %v51, %v59
  %v64 = vld [vmem:[%s4] sm:$0xff]
  %v65 = vld [vmem:[%s4 + $0x8] sm:$0xff]
  %v66 = vld [vmem:[%s4 + $0x10] sm:$0xff]
  %v67 = vld [vmem:[%s4 + $0x18] sm:$0xff]
  %v68 = vmul.f32 %v24, %v60
  %v69 = vmul.f32 %v25, %v61
  %v70 = vmul.f32 %v26, %v62
  %v71 = vmul.f32 %v27, %v63
  %v72 = vsub.f32 %v64, %v68
  %v73 = vsub.f32 %v65, %v69
  %v74 = vsub.f32 %v66, %v70
  %v75 = vsub.f32 %v67, %v71
  %v76 = vld [vmem:[%s0] sm:$0xf]
  %v77 = vld [vmem:[%s0 + $0x4] sm:$0xf]
  %v78 = vld [vmem:[%s0 + $0x8] sm:$0xf]
  %v79 = vld [vmem:[%s0 + $0xc] sm:$0xf]
  %v80 = vunpack.c.l.bf16 %v76
  %v81 = vunpack.c.l.bf16 %v77
  %v82 = vunpack.c.l.bf16 %v78
  %v83 = vunpack.c.l.bf16 %v79
  %85 = vset.pattern.permute.xlu0 0
  %86 = vperm.xlu0 %85, %v60
  %v87 = vpop.permute.xlu0 %86
  %90 = vset.pattern.permute.xlu0 0
  %91 = vperm.xlu0 %90, %v61
  %v92 = vpop.permute.xlu0 %91
  %95 = vset.pattern.permute.xlu0 0
  %96 = vperm.xlu0 %95, %v62
  %v97 = vpop.permute.xlu0 %96
  %100 = vset.pattern.permute.xlu0 0
  %101 = vperm.xlu0 %100, %v63
  %v102 = vpop.permute.xlu0 %101
  %v104 = vmul.f32 %v80, %v87
  %v105 = vmul.f32 %v81, %v92
  %v106 = vmul.f32 %v82, %v97
  %v107 = vmul.f32 %v83, %v102
  %109 = vset.pattern.permute.xlu0 0
  %110 = vperm.xlu0 %109, %v72
  %v111 = vpop.permute.xlu0 %110
  %114 = vset.pattern.permute.xlu0 0
  %115 = vperm.xlu0 %114, %v73
  %v116 = vpop.permute.xlu0 %115
  %119 = vset.pattern.permute.xlu0 0
  %120 = vperm.xlu0 %119, %v74
  %v121 = vpop.permute.xlu0 %120
  %124 = vset.pattern.permute.xlu0 0
  %125 = vperm.xlu0 %124, %v75
  %v126 = vpop.permute.xlu0 %125
  %v128 = vadd.f32 %v104, %v111
  %v129 = vadd.f32 %v105, %v116
  %v130 = vadd.f32 %v106, %v121
  %v131 = vadd.f32 %v107, %v126
  %v132 = vmax.f32 %v128, 0.0
  %v133 = vmax.f32 %v129, 0.0
  %v134 = vmax.f32 %v130, 0.0
  %v135 = vmax.f32 %v131, 0.0
  %v136 = vpack.c.bf16 %v133, %v132
  %v137 = vpack.c.bf16 %v135, %v134
  %v140 = vunpack.c.l.b16 %v136
  %v141 = vunpack.c.h.b16 %v136
  %v142 = vunpack.c.l.b16 %v137
  %v143 = vunpack.c.h.b16 %v137
  %v144 = vpack.c.b16 %v140, %v140
  %v145 = vpack.c.b16 %v141, %v141
  %v146 = vpack.c.b16 %v142, %v142
  %v147 = vpack.c.b16 %v143, %v143
  %vm152 = vcmask 404480
  %153 = vst.msk [vmem:[%s5] sm:$0xf] %vm152, %v144
  %154 = vst.msk [vmem:[%s5 + $0x4] sm:$0xf] %vm152, %v145
  %155 = vst.msk [vmem:[%s5 + $0x8] sm:$0xf] %vm152, %v146
  %156 = vst.msk [vmem:[%s5 + $0xc] sm:$0xf] %vm152, %v147
  // Predicated region
  $region22: #{ecg_encoder_forward.14} parent=0 // pred_check
    _
  $region23: #{ecg_encoder_forward.14} parent=0 // pred_check_branch
    %158 = sbr.rel (0) target = $region25
  $region24: #{ecg_encoder_forward.14} parent=0 // pred_region
    _
  $region25: #{ecg_encoder_forward.14} parent=0 // pred_fallthru
    _
  // Predicated region
  $region26: #{ecg_encoder_forward.14} parent=0 // pred_check
    _
  $region27: #{ecg_encoder_forward.14} parent=0 // pred_check_branch
    %160 = sbr.rel (0) target = $region29
  $region28: #{ecg_encoder_forward.14} parent=0 // pred_region
    _
  $region29: #{ecg_encoder_forward.14} parent=0 // pred_fallthru
    _

// kernel: ecg_encoder_forward.13
$region0: #{ecg_encoder_forward.13}
  #allocation0 [shape = 'u32[]', space=smem, size = 0x4, offset = 0x4, fixed_abs, tag = 'smem constant byte address 0x4 - core index']
  #allocation1 [shape = 'u32[144,128]{1,0:T(1,128)}', space=vmem, size = 0x12000, scoped, tag = 'internal scratch']
  #allocation2 [shape = 'f32[32,1]{1,0:T(8,128)}', space=vmem, size = 0x4000, scoped, tag = 'scratch operand']
  #allocation3 [shape = 'f32[32,1]{1,0:T(8,128)}', space=vmem, size = 0x4000, scoped, tag = 'scratch operand']
  %s0 = inlined_call_operand.vmem [shape: bf16[16,50], index: 0, kind: input, shape index: {}]
  %s1 = inlined_call_operand.vmem [shape: bf16[16,50], index: 1, kind: input, shape index: {}]
  %s2 = inlined_call_operand.vmem [shape: bf16[1,16,14], index: 2, kind: input, shape index: {}]
  %s3 = inlined_call_operand.vmem [shape: bf16[1,16,14], index: 3, kind: input, shape index: {}]
  %s4 = inlined_call_operand.vmem [shape: bf16[32,240], index: 4, kind: input, shape index: {}]
  %s5 = inlined_call_operand.vmem [shape: f32[32,1], index: 5, kind: input, shape index: {}]
  %s6 = inlined_call_operand.vmem [shape: bf16[32,50], index: 6, kind: output, shape index: {0}]
  %s7 = inlined_call_operand.vmem [shape: f32[32,1], index: 7, kind: output, shape index: {1}]
  %s8 = inlined_call_operand.vmem [shape: f32[32,1], index: 8, kind: output, shape index: {2}]
  %9 = xla_tuple %s6, %s7, %s8
  %s10 = sld [smem:[#allocation0]]
  $region58: #{ecg_encoder_forward.13} parent=0
    _
  %s12 = ssub.s32 1, %s10
  %s13 = scalar_select 0, %s12, %s10
  // Predicated region
  $region2: #{ecg_encoder_forward.13} parent=0 // pred_check
    _
  $region3: #{ecg_encoder_forward.13} parent=0 // pred_check_branch
    %15 = sbr.rel (0) target = $region5
  $region4: #{ecg_encoder_forward.13} parent=0 // pred_region
    _
  $region5: #{ecg_encoder_forward.13} parent=0 // pred_fallthru
    _
  // Predicated region
  $region6: #{ecg_encoder_forward.13} parent=0 // pred_check
    _
  $region7: #{ecg_encoder_forward.13} parent=0 // pred_check_branch
    %17 = sbr.rel (0) target = $region9
  $region8: #{ecg_encoder_forward.13} parent=0 // pred_region
    _
  $region9: #{ecg_encoder_forward.13} parent=0 // pred_fallthru
    _
  // Predicated region
  $region10: #{ecg_encoder_forward.13} parent=0 // pred_check
    _
  $region11: #{ecg_encoder_forward.13} parent=0 // pred_check_branch
    %19 = sbr.rel (0) target = $region13
  $region12: #{ecg_encoder_forward.13} parent=0 // pred_region
    _
  $region13: #{ecg_encoder_forward.13} parent=0 // pred_fallthru
    _
  // Predicated region
  $region14: #{ecg_encoder_forward.13} parent=0 // pred_check
    _
  $region15: #{ecg_encoder_forward.13} parent=0 // pred_check_branch
    %21 = sbr.rel (0) target = $region17
  $region16: #{ecg_encoder_forward.13} parent=0 // pred_region
    _
  $region17: #{ecg_encoder_forward.13} parent=0 // pred_fallthru
    _
  // Predicated region
  $region18: #{ecg_encoder_forward.13} parent=0 // pred_check
    _
  $region19: #{ecg_encoder_forward.13} parent=0 // pred_check_branch
    %23 = sbr.rel (0) target = $region21
  $region20: #{ecg_encoder_forward.13} parent=0 // pred_region
    _
  $region21: #{ecg_encoder_forward.13} parent=0 // pred_fallthru
    _
  // Predicated region
  $region22: #{ecg_encoder_forward.13} parent=0 // pred_check
    _
  $region23: #{ecg_encoder_forward.13} parent=0 // pred_check_branch
    %25 = sbr.rel (0) target = $region25
  $region24: #{ecg_encoder_forward.13} parent=0 // pred_region
    _
  $region25: #{ecg_encoder_forward.13} parent=0 // pred_fallthru
    _
  %v27 = vld [vmem:[%s0] sm:$0xf]
  %v28 = vld [vmem:[%s0 + $0x4] sm:$0xf]
  %v29 = vld [vmem:[%s2] sm:$0xf]
  %v30 = vld [vmem:[%s2 + $0x4] sm:$0xf]
  %v33 = vunpack.c.l.b16 %v27
  %v34 = vunpack.c.l.b16 %v28
  %v35 = vpack.c.b16 %v34, %v33
  %v38 = vunpack.c.l.b16 %v29
  %v39 = vunpack.c.l.b16 %v30
  %v40 = vpack.c.b16 %v39, %v38
  %41 = vrot.lane.b32.xlu0 %v40, 50
  %v42 = vpop.permute.xlu0 %41
  %vm43 = vcmask 408576
  %v46 = vsel %vm43, %v35, %v42
  %v48 = vld [vmem:[%s1] sm:$0xf]
  %v49 = vld [vmem:[%s1 + $0x4] sm:$0xf]
  %v50 = vld [vmem:[%s3] sm:$0xf]
  %v51 = vld [vmem:[%s3 + $0x4] sm:$0xf]
  %v54 = vunpack.c.l.b16 %v48
  %v55 = vunpack.c.l.b16 %v49
  %v56 = vpack.c.b16 %v55, %v54
  %v59 = vunpack.c.l.b16 %v50
  %v60 = vunpack.c.l.b16 %v51
  %v61 = vpack.c.b16 %v60, %v59
  %62 = vrot.lane.b32.xlu0 %v61, 50
  %v63 = vpop.permute.xlu0 %62
  %v66 = vsel %vm43, %v56, %v63
  %v68 = vld [vmem:[%s4] sm:$0xf]
  %v69 = vld [vmem:[%s4 + $0x8] sm:$0xf]
  %v70 = vld [vmem:[%s4 + $0x10] sm:$0xf]
  %v71 = vld [vmem:[%s4 + $0x18] sm:$0xf]
  %v76 = vunpack.c.l.b16 %v68
  %v77 = vunpack.c.l.b16 %v69
  %v78 = vunpack.c.l.b16 %v70
  %v79 = vunpack.c.l.b16 %v71
  %v80 = vpack.c.b16 %v77, %v76
  %v81 = vpack.c.b16 %v79, %v78
  %82 = vrot.lane.b32.xlu0 %v80, 112
  %v83 = vpop.permute.xlu0 %82
  %84 = vrot.lane.b32.xlu0 %v81, 112
  %v85 = vpop.permute.xlu0 %84
  %vm86 = vcmask 130048
  %v88 = vsel %vm86, %v83, 0
  %v91 = vsel %vm86, %v85, 0
  %93 = vmatprep.subr.bf16.mxu0 0
  %94 = vmatpush1.bf16.msra.mxu0 0
  %95 = vmatprep.subr.bf16.mxu0 0
  %96 = vmatpush1.bf16.msra.mxu0 0
  %97 = vmatprep.subr.bf16.mxu0 0
  %98 = vmatpush1.bf16.msra.mxu0 0
  %99 = vmatprep.subr.bf16.mxu0 0
  %100 = vmatpush1.bf16.msra.mxu0 0
  %101 = vmatprep.subr.bf16.mxu0 0
  %102 = vmatpush1.bf16.msra.mxu0 0
  %103 = vmatprep.subr.bf16.mxu0 0
  %104 = vmatpush1.bf16.msra.mxu0 0
  %105 = vmatprep.subr.bf16.mxu0 0
  %106 = vmatpush1.bf16.msra.mxu0 0
  %107 = vmatprep.subr.bf16.mxu0 0
  %108 = vmatpush1.bf16.msra.mxu0 %v66
  %109 = vmatprep.subr.bf16.mxu0 0
  %110 = vmatpush2.bf16.msra.mxu0 0
  %111 = vmatprep.subr.bf16.mxu0 0
  %112 = vmatpush2.bf16.msra.mxu0 0
  %113 = vmatprep.subr.bf16.mxu0 0
  %114 = vmatpush2.bf16.msra.mxu0 0
  %115 = vmatprep.subr.bf16.mxu0 0
  %116 = vmatpush2.bf16.msra.mxu0 0
  %117 = vmatprep.subr.bf16.mxu0 0
  %118 = vmatpush2.bf16.msra.mxu0 0
  %119 = vmatprep.subr.bf16.mxu0 0
  %120 = vmatpush2.bf16.msra.mxu0 0
  %121 = vmatprep.subr.bf16.mxu0 0
  %122 = vmatpush2.bf16.msra.mxu0 0
  %123 = vmatprep.subr.bf16.mxu0 0
  %124 = vmatpush2.bf16.msra.mxu0 0
  %125 = vmatprep.mubr.bf16.mxu0 0
  %126 = vmatmul.mubr.bf16.gmra.mxu0 %v88
  %v127 = vpop.f32.mrf.mxu0
  %v128 = vadd.f32 0.0, %v127
  %v129 = vpop.f32.mrf.mxu0
  %v130 = vpop.f32.mrf.mxu0
  %v131 = vadd.f32 0.0, %v130
  %v132 = vpop.f32.mrf.mxu0
  %133 = vmatprep.mubr.bf16.mxu0 0
  %134 = vmatmul.mubr.bf16.gmra.mxu0 %v91
  %v135 = vpop.f32.mrf.mxu0
  %v136 = vadd.f32 0.0, %v135
  %v137 = vpop.f32.mrf.mxu0
  %v138 = vpop.f32.mrf.mxu0
  %v139 = vadd.f32 0.0, %v138
  %v140 = vpop.f32.mrf.mxu0
  %141 = vdwg.mxu0
  %v143 = vsel %vm86, %v80, 0
  %v146 = vsel %vm86, %v81, 0
  %148 = vmatprep.subr.bf16.mxu0 0
  %149 = vmatpush1.bf16.msra.mxu0 0
  %150 = vmatprep.subr.bf16.mxu0 0
  %151 = vmatpush1.bf16.msra.mxu0 0
  %152 = vmatprep.subr.bf16.mxu0 0
  %153 = vmatpush1.bf16.msra.mxu0 0
  %154 = vmatprep.subr.bf16.mxu0 0
  %155 = vmatpush1.bf16.msra.mxu0 0
  %156 = vmatprep.subr.bf16.mxu0 0
  %157 = vmatpush1.bf16.msra.mxu0 0
  %158 = vmatprep.subr.bf16.mxu0 0
  %159 = vmatpush1.bf16.msra.mxu0 0
  %160 = vmatprep.subr.bf16.mxu0 0
  %161 = vmatpush1.bf16.msra.mxu0 0
  %162 = vmatprep.subr.bf16.mxu0 0
  %163 = vmatpush1.bf16.msra.mxu0 %v46
  %164 = vmatprep.subr.bf16.mxu0 0
  %165 = vmatpush2.bf16.msra.mxu0 0
  %166 = vmatprep.subr.bf16.mxu0 0
  %167 = vmatpush2.bf16.msra.mxu0 0
  %168 = vmatprep.subr.bf16.mxu0 0
  %169 = vmatpush2.bf16.msra.mxu0 0
  %170 = vmatprep.subr.bf16.mxu0 0
  %171 = vmatpush2.bf16.msra.mxu0 0
  %172 = vmatprep.subr.bf16.mxu0 0
  %173 = vmatpush2.bf16.msra.mxu0 0
  %174 = vmatprep.subr.bf16.mxu0 0
  %175 = vmatpush2.bf16.msra.mxu0 0
  %176 = vmatprep.subr.bf16.mxu0 0
  %177 = vmatpush2.bf16.msra.mxu0 0
  %178 = vmatprep.subr.bf16.mxu0 0
  %179 = vmatpush2.bf16.msra.mxu0 0
  %180 = vmatprep.mubr.bf16.mxu0 0
  %181 = vmatmul.mubr.bf16.gmra.mxu0 %v143
  %v182 = vpop.f32.mrf.mxu0
  %v183 = vadd.f32 %v128, %v182
  %v184 = vpop.f32.mrf.mxu0
  %v185 = vpop.f32.mrf.mxu0
  %v186 = vadd.f32 %v131, %v185
  %v187 = vpop.f32.mrf.mxu0
  %188 = vmatprep.mubr.bf16.mxu0 0
  %189 = vmatmul.mubr.bf16.gmra.mxu0 %v146
  %v190 = vpop.f32.mrf.mxu0
  %v191 = vadd.f32 %v136, %v190
  %v192 = vpop.f32.mrf.mxu0
  %v193 = vpop.f32.mrf.mxu0
  %v194 = vadd.f32 %v139, %v193
  %v195 = vpop.f32.mrf.mxu0
  %196 = vdwg.mxu0
  %197 = vrot.lane.b32.xlu0 %v80, 96
  %v198 = vpop.permute.xlu0 %197
  %199 = vrot.lane.b32.xlu0 %v81, 96
  %v200 = vpop.permute.xlu0 %199
  %202 = vrot.lane.b32.xlu0 %v46, 126
  %v203 = vpop.permute.xlu0 %202
  %v206 = vsel %vm86, %v198, 0
  %v209 = vsel %vm86, %v200, 0
  %211 = vmatprep.subr.bf16.mxu0 0
  %212 = vmatpush1.bf16.msra.mxu0 0
  %213 = vmatprep.subr.bf16.mxu0 0
  %214 = vmatpush1.bf16.msra.mxu0 0
  %215 = vmatprep.subr.bf16.mxu0 0
  %216 = vmatpush1.bf16.msra.mxu0 0
  %217 = vmatprep.subr.bf16.mxu0 0
  %218 = vmatpush1.bf16.msra.mxu0 0
  %219 = vmatprep.subr.bf16.mxu0 0
  %220 = vmatpush1.bf16.msra.mxu0 0
  %221 = vmatprep.subr.bf16.mxu0 0
  %222 = vmatpush1.bf16.msra.mxu0 0
  %223 = vmatprep.subr.bf16.mxu0 0
  %224 = vmatpush1.bf16.msra.mxu0 0
  %225 = vmatprep.subr.bf16.mxu0 0
  %226 = vmatpush1.bf16.msra.mxu0 %v203
  %227 = vmatprep.subr.bf16.mxu0 0
  %228 = vmatpush2.bf16.msra.mxu0 0
  %229 = vmatprep.subr.bf16.mxu0 0
  %230 = vmatpush2.bf16.msra.mxu0 0
  %231 = vmatprep.subr.bf16.mxu0 0
  %232 = vmatpush2.bf16.msra.mxu0 0
  %233 = vmatprep.subr.bf16.mxu0 0
  %234 = vmatpush2.bf16.msra.mxu0 0
  %235 = vmatprep.subr.bf16.mxu0 0
  %236 = vmatpush2.bf16.msra.mxu0 0
  %237 = vmatprep.subr.bf16.mxu0 0
  %238 = vmatpush2.bf16.msra.mxu0 0
  %239 = vmatprep.subr.bf16.mxu0 0
  %240 = vmatpush2.bf16.msra.mxu0 0
  %241 = vmatprep.subr.bf16.mxu0 0
  %242 = vmatpush2.bf16.msra.mxu0 0
  %243 = vmatprep.mubr.bf16.mxu0 0
  %244 = vmatmul.mubr.bf16.gmra.mxu0 %v206
  %v245 = vpop.f32.mrf.mxu0
  %v246 = vadd.f32 0.0, %v245
  %v247 = vpop.f32.mrf.mxu0
  %v248 = vpop.f32.mrf.mxu0
  %v249 = vadd.f32 0.0, %v248
  %v250 = vpop.f32.mrf.mxu0
  %251 = vmatprep.mubr.bf16.mxu0 0
  %252 = vmatmul.mubr.bf16.gmra.mxu0 %v209
  %v253 = vpop.f32.mrf.mxu0
  %v254 = vadd.f32 0.0, %v253
  %v255 = vpop.f32.mrf.mxu0
  %v256 = vpop.f32.mrf.mxu0
  %v257 = vadd.f32 0.0, %v256
  %v258 = vpop.f32.mrf.mxu0
  %259 = vdwg.mxu0
  %v260 = vadd.f32 %v183, %v246
  %v261 = vadd.f32 %v186, %v249
  %v262 = vadd.f32 %v191, %v254
  %v263 = vadd.f32 %v194, %v257
  %264 = vrot.lane.b32.xlu0 %v80, 80
  %v265 = vpop.permute.xlu0 %264
  %266 = vrot.lane.b32.xlu0 %v81, 80
  %v267 = vpop.permute.xlu0 %266
  %269 = vrot.lane.b32.xlu0 %v66, 126
  %v270 = vpop.permute.xlu0 %269
  %v273 = vsel %vm86, %v265, 0
  %v276 = vsel %vm86, %v267, 0
  %278 = vmatprep.subr.bf16.mxu0 0
  %279 = vmatpush1.bf16.msra.mxu0 0
  %280 = vmatprep.subr.bf16.mxu0 0
  %281 = vmatpush1.bf16.msra.mxu0 0
  %282 = vmatprep.subr.bf16.mxu0 0
  %283 = vmatpush1.bf16.msra.mxu0 0
  %284 = vmatprep.subr.bf16.mxu0 0
  %285 = vmatpush1.bf16.msra.mxu0 0
  %286 = vmatprep.subr.bf16.mxu0 0
  %287 = vmatpush1.bf16.msra.mxu0 0
  %288 = vmatprep.subr.bf16.mxu0 0
  %289 = vmatpush1.bf16.msra.mxu0 0
  %290 = vmatprep.subr.bf16.mxu0 0
  %291 = vmatpush1.bf16.msra.mxu0 0
  %292 = vmatprep.subr.bf16.mxu0 0
  %293 = vmatpush1.bf16.msra.mxu0 %v270
  %294 = vmatprep.subr.bf16.mxu0 0
  %295 = vmatpush2.bf16.msra.mxu0 0
  %296 = vmatprep.subr.bf16.mxu0 0
  %297 = vmatpush2.bf16.msra.mxu0 0
  %298 = vmatprep.subr.bf16.mxu0 0
  %299 = vmatpush2.bf16.msra.mxu0 0
  %300 = vmatprep.subr.bf16.mxu0 0
  %301 = vmatpush2.bf16.msra.mxu0 0
  %302 = vmatprep.subr.bf16.mxu0 0
  %303 = vmatpush2.bf16.msra.mxu0 0
  %304 = vmatprep.subr.bf16.mxu0 0
  %305 = vmatpush2.bf16.msra.mxu0 0
  %306 = vmatprep.subr.bf16.mxu0 0
  %307 = vmatpush2.bf16.msra.mxu0 0
  %308 = vmatprep.subr.bf16.mxu0 0
  %309 = vmatpush2.bf16.msra.mxu0 0
  %310 = vmatprep.mubr.bf16.mxu0 0
  %311 = vmatmul.mubr.bf16.gmra.mxu0 %v273
  %v312 = vpop.f32.mrf.mxu0
  %v313 = vadd.f32 0.0, %v312
  %v314 = vpop.f32.mrf.mxu0
  %v315 = vpop.f32.mrf.mxu0
  %v316 = vadd.f32 0.0, %v315
  %v317 = vpop.f32.mrf.mxu0
  %318 = vmatprep.mubr.bf16.mxu0 0
  %319 = vmatmul.mubr.bf16.gmra.mxu0 %v276
  %v320 = vpop.f32.mrf.mxu0
  %v321 = vadd.f32 0.0, %v320
  %v322 = vpop.f32.mrf.mxu0
  %v323 = vpop.f32.mrf.mxu0
  %v324 = vadd.f32 0.0, %v323
  %v325 = vpop.f32.mrf.mxu0
  %326 = vdwg.mxu0
  %v327 = vadd.f32 %v260, %v313
  %v328 = vadd.f32 %v261, %v316
  %v329 = vadd.f32 %v262, %v321
  %v330 = vadd.f32 %v263, %v324
  %331 = vrot.lane.b32.xlu0 %v80, 64
  %v332 = vpop.permute.xlu0 %331
  %333 = vrot.lane.b32.xlu0 %v81, 64
  %v334 = vpop.permute.xlu0 %333
  %335 = vrot.lane.b32.xlu0 %v46, 124
  %v336 = vpop.permute.xlu0 %335
  %v339 = vsel %vm86, %v332, 0
  %v342 = vsel %vm86, %v334, 0
  %344 = vmatprep.subr.bf16.mxu0 0
  %345 = vmatpush1.bf16.msra.mxu0 0
  %346 = vmatprep.subr.bf16.mxu0 0
  %347 = vmatpush1.bf16.msra.mxu0 0
  %348 = vmatprep.subr.bf16.mxu0 0
  %349 = vmatpush1.bf16.msra.mxu0 0
  %350 = vmatprep.subr.bf16.mxu0 0
  %351 = vmatpush1.bf16.msra.mxu0 0
  %352 = vmatprep.subr.bf16.mxu0 0
  %353 = vmatpush1.bf16.msra.mxu0 0
  %354 = vmatprep.subr.bf16.mxu0 0
  %355 = vmatpush1.bf16.msra.mxu0 0
  %356 = vmatprep.subr.bf16.mxu0 0
  %357 = vmatpush1.bf16.msra.mxu0 0
  %358 = vmatprep.subr.bf16.mxu0 0
  %359 = vmatpush1.bf16.msra.mxu0 %v336
  %360 = vmatprep.subr.bf16.mxu0 0
  %361 = vmatpush2.bf16.msra.mxu0 0
  %362 = vmatprep.subr.bf16.mxu0 0
  %363 = vmatpush2.bf16.msra.mxu0 0
  %364 = vmatprep.subr.bf16.mxu0 0
  %365 = vmatpush2.bf16.msra.mxu0 0
  %366 = vmatprep.subr.bf16.mxu0 0
  %367 = vmatpush2.bf16.msra.mxu0 0
  %368 = vmatprep.subr.bf16.mxu0 0
  %369 = vmatpush2.bf16.msra.mxu0 0
  %370 = vmatprep.subr.bf16.mxu0 0
  %371 = vmatpush2.bf16.msra.mxu0 0
  %372 = vmatprep.subr.bf16.mxu0 0
  %373 = vmatpush2.bf16.msra.mxu0 0
  %374 = vmatprep.subr.bf16.mxu0 0
  %375 = vmatpush2.bf16.msra.mxu0 0
  %376 = vmatprep.mubr.bf16.mxu0 0
  %377 = vmatmul.mubr.bf16.gmra.mxu0 %v339
  %v378 = vpop.f32.mrf.mxu0
  %v379 = vadd.f32 0.0, %v378
  %v380 = vpop.f32.mrf.mxu0
  %v381 = vpop.f32.mrf.mxu0
  %v382 = vadd.f32 0.0, %v381
  %v383 = vpop.f32.mrf.mxu0
  %384 = vmatprep.mubr.bf16.mxu0 0
  %385 = vmatmul.mubr.bf16.gmra.mxu0 %v342
  %v386 = vpop.f32.mrf.mxu0
  %v387 = vadd.f32 0.0, %v386
  %v388 = vpop.f32.mrf.mxu0
  %v389 = vpop.f32.mrf.mxu0
  %v390 = vadd.f32 0.0, %v389
  %v391 = vpop.f32.mrf.mxu0
  %392 = vdwg.mxu0
  %v393 = vadd.f32 %v327, %v379
  %v394 = vadd.f32 %v328, %v382
  %v395 = vadd.f32 %v329, %v387
  %v396 = vadd.f32 %v330, %v390
  %397 = vrot.lane.b32.xlu0 %v80, 48
  %v398 = vpop.permute.xlu0 %397
  %399 = vrot.lane.b32.xlu0 %v81, 48
  %v400 = vpop.permute.xlu0 %399
  %401 = vrot.lane.b32.xlu0 %v66, 124
  %v402 = vpop.permute.xlu0 %401
  %v405 = vsel %vm86, %v398, 0
  %v408 = vsel %vm86, %v400, 0
  %410 = vmatprep.subr.bf16.mxu0 0
  %411 = vmatpush1.bf16.msra.mxu0 0
  %412 = vmatprep.subr.bf16.mxu0 0
  %413 = vmatpush1.bf16.msra.mxu0 0
  %414 = vmatprep.subr.bf16.mxu0 0
  %415 = vmatpush1.bf16.msra.mxu0 0
  %416 = vmatprep.subr.bf16.mxu0 0
  %417 = vmatpush1.bf16.msra.mxu0 0
  %418 = vmatprep.subr.bf16.mxu0 0
  %419 = vmatpush1.bf16.msra.mxu0 0
  %420 = vmatprep.subr.bf16.mxu0 0
  %421 = vmatpush1.bf16.msra.mxu0 0
  %422 = vmatprep.subr.bf16.mxu0 0
  %423 = vmatpush1.bf16.msra.mxu0 0
  %424 = vmatprep.subr.bf16.mxu0 0
  %425 = vmatpush1.bf16.msra.mxu0 %v402
  %426 = vmatprep.subr.bf16.mxu0 0
  %427 = vmatpush2.bf16.msra.mxu0 0
  %428 = vmatprep.subr.bf16.mxu0 0
  %429 = vmatpush2.bf16.msra.mxu0 0
  %430 = vmatprep.subr.bf16.mxu0 0
  %431 = vmatpush2.bf16.msra.mxu0 0
  %432 = vmatprep.subr.bf16.mxu0 0
  %433 = vmatpush2.bf16.msra.mxu0 0
  %434 = vmatprep.subr.bf16.mxu0 0
  %435 = vmatpush2.bf16.msra.mxu0 0
  %436 = vmatprep.subr.bf16.mxu0 0
  %437 = vmatpush2.bf16.msra.mxu0 0
  %438 = vmatprep.subr.bf16.mxu0 0
  %439 = vmatpush2.bf16.msra.mxu0 0
  %440 = vmatprep.subr.bf16.mxu0 0
  %441 = vmatpush2.bf16.msra.mxu0 0
  %442 = vmatprep.mubr.bf16.mxu0 0
  %443 = vmatmul.mubr.bf16.gmra.mxu0 %v405
  %v444 = vpop.f32.mrf.mxu0
  %v445 = vadd.f32 0.0, %v444
  %v446 = vpop.f32.mrf.mxu0
  %v447 = vpop.f32.mrf.mxu0
  %v448 = vadd.f32 0.0, %v447
  %v449 = vpop.f32.mrf.mxu0
  %450 = vmatprep.mubr.bf16.mxu0 0
  %451 = vmatmul.mubr.bf16.gmra.mxu0 %v408
  %v452 = vpop.f32.mrf.mxu0
  %v453 = vadd.f32 0.0, %v452
  %v454 = vpop.f32.mrf.mxu0
  %v455 = vpop.f32.mrf.mxu0
  %v456 = vadd.f32 0.0, %v455
  %v457 = vpop.f32.mrf.mxu0
  %458 = vdwg.mxu0
  %v459 = vadd.f32 %v393, %v445
  %v460 = vadd.f32 %v394, %v448
  %v461 = vadd.f32 %v395, %v453
  %v462 = vadd.f32 %v396, %v456
  %463 = vrot.lane.b32.xlu0 %v80, 32
  %v464 = vpop.permute.xlu0 %463
  %465 = vrot.lane.b32.xlu0 %v81, 32
  %v466 = vpop.permute.xlu0 %465
  %467 = vrot.lane.b32.xlu0 %v46, 122
  %v468 = vpop.permute.xlu0 %467
  %v471 = vsel %vm86, %v464, 0
  %v474 = vsel %vm86, %v466, 0
  %476 = vmatprep.subr.bf16.mxu0 0
  %477 = vmatpush1.bf16.msra.mxu0 0
  %478 = vmatprep.subr.bf16.mxu0 0
  %479 = vmatpush1.bf16.msra.mxu0 0
  %480 = vmatprep.subr.bf16.mxu0 0
  %481 = vmatpush1.bf16.msra.mxu0 0
  %482 = vmatprep.subr.bf16.mxu0 0
  %483 = vmatpush1.bf16.msra.mxu0 0
  %484 = vmatprep.subr.bf16.mxu0 0
  %485 = vmatpush1.bf16.msra.mxu0 0
  %486 = vmatprep.subr.bf16.mxu0 0
  %487 = vmatpush1.bf16.msra.mxu0 0
  %488 = vmatprep.subr.bf16.mxu0 0
  %489 = vmatpush1.bf16.msra.mxu0 0
  %490 = vmatprep.subr.bf16.mxu0 0
  %491 = vmatpush1.bf16.msra.mxu0 %v468
  %492 = vmatprep.subr.bf16.mxu0 0
  %493 = vmatpush2.bf16.msra.mxu0 0
  %494 = vmatprep.subr.bf16.mxu0 0
  %495 = vmatpush2.bf16.msra.mxu0 0
  %496 = vmatprep.subr.bf16.mxu0 0
  %497 = vmatpush2.bf16.msra.mxu0 0
  %498 = vmatprep.subr.bf16.mxu0 0
  %499 = vmatpush2.bf16.msra.mxu0 0
  %500 = vmatprep.subr.bf16.mxu0 0
  %501 = vmatpush2.bf16.msra.mxu0 0
  %502 = vmatprep.subr.bf16.mxu0 0
  %503 = vmatpush2.bf16.msra.mxu0 0
  %504 = vmatprep.subr.bf16.mxu0 0
  %505 = vmatpush2.bf16.msra.mxu0 0
  %506 = vmatprep.subr.bf16.mxu0 0
  %507 = vmatpush2.bf16.msra.mxu0 0
  %508 = vmatprep.mubr.bf16.mxu0 0
  %509 = vmatmul.mubr.bf16.gmra.mxu0 %v471
  %v510 = vpop.f32.mrf.mxu0
  %v511 = vadd.f32 0.0, %v510
  %v512 = vpop.f32.mrf.mxu0
  %v513 = vpop.f32.mrf.mxu0
  %v514 = vadd.f32 0.0, %v513
  %v515 = vpop.f32.mrf.mxu0
  %516 = vmatprep.mubr.bf16.mxu0 0
  %517 = vmatmul.mubr.bf16.gmra.mxu0 %v474
  %v518 = vpop.f32.mrf.mxu0
  %v519 = vadd.f32 0.0, %v518
  %v520 = vpop.f32.mrf.mxu0
  %v521 = vpop.f32.mrf.mxu0
  %v522 = vadd.f32 0.0, %v521
  %v523 = vpop.f32.mrf.mxu0
  %524 = vdwg.mxu0
  %v525 = vadd.f32 %v459, %v511
  %v526 = vadd.f32 %v460, %v514
  %v527 = vadd.f32 %v461, %v519
  %v528 = vadd.f32 %v462, %v522
  %529 = vrot.lane.b32.xlu0 %v80, 16
  %v530 = vpop.permute.xlu0 %529
  %531 = vrot.lane.b32.xlu0 %v81, 16
  %v532 = vpop.permute.xlu0 %531
  %533 = vrot.lane.b32.xlu0 %v66, 122
  %v534 = vpop.permute.xlu0 %533
  %v537 = vsel %vm86, %v530, 0
  %v540 = vsel %vm86, %v532, 0
  %542 = vmatprep.subr.bf16.mxu0 0
  %543 = vmatpush1.bf16.msra.mxu0 0
  %544 = vmatprep.subr.bf16.mxu0 0
  %545 = vmatpush1.bf16.msra.mxu0 0
  %546 = vmatprep.subr.bf16.mxu0 0
  %547 = vmatpush1.bf16.msra.mxu0 0
  %548 = vmatprep.subr.bf16.mxu0 0
  %549 = vmatpush1.bf16.msra.mxu0 0
  %550 = vmatprep.subr.bf16.mxu0 0
  %551 = vmatpush1.bf16.msra.mxu0 0
  %552 = vmatprep.subr.bf16.mxu0 0
  %553 = vmatpush1.bf16.msra.mxu0 0
  %554 = vmatprep.subr.bf16.mxu0 0
  %555 = vmatpush1.bf16.msra.mxu0 0
  %556 = vmatprep.subr.bf16.mxu0 0
  %557 = vmatpush1.bf16.msra.mxu0 %v534
  %558 = vmatprep.subr.bf16.mxu0 0
  %559 = vmatpush2.bf16.msra.mxu0 0
  %560 = vmatprep.subr.bf16.mxu0 0
  %561 = vmatpush2.bf16.msra.mxu0 0
  %562 = vmatprep.subr.bf16.mxu0 0
  %563 = vmatpush2.bf16.msra.mxu0 0
  %564 = vmatprep.subr.bf16.mxu0 0
  %565 = vmatpush2.bf16.msra.mxu0 0
  %566 = vmatprep.subr.bf16.mxu0 0
  %567 = vmatpush2.bf16.msra.mxu0 0
  %568 = vmatprep.subr.bf16.mxu0 0
  %569 = vmatpush2.bf16.msra.mxu0 0
  %570 = vmatprep.subr.bf16.mxu0 0
  %571 = vmatpush2.bf16.msra.mxu0 0
  %572 = vmatprep.subr.bf16.mxu0 0
  %573 = vmatpush2.bf16.msra.mxu0 0
  %574 = vmatprep.mubr.bf16.mxu0 0
  %575 = vmatmul.mubr.bf16.gmra.mxu0 %v537
  %v576 = vpop.f32.mrf.mxu0
  %v577 = vadd.f32 0.0, %v576
  %v578 = vpop.f32.mrf.mxu0
  %v579 = vpop.f32.mrf.mxu0
  %v580 = vadd.f32 0.0, %v579
  %v581 = vpop.f32.mrf.mxu0
  %582 = vmatprep.mubr.bf16.mxu0 0
  %583 = vmatmul.mubr.bf16.gmra.mxu0 %v540
  %v584 = vpop.f32.mrf.mxu0
  %v585 = vadd.f32 0.0, %v584
  %v586 = vpop.f32.mrf.mxu0
  %v587 = vpop.f32.mrf.mxu0
  %v588 = vadd.f32 0.0, %v587
  %v589 = vpop.f32.mrf.mxu0
  %590 = vdwg.mxu0
  %v591 = vadd.f32 %v525, %v577
  %v592 = vadd.f32 %v526, %v580
  %v593 = vadd.f32 %v527, %v585
  %v594 = vadd.f32 %v528, %v588
  %v595 = vld [vmem:[%s4 + $0x4] sm:$0xf]
  %v596 = vld [vmem:[%s4 + $0xc] sm:$0xf]
  %v597 = vld [vmem:[%s4 + $0x14] sm:$0xf]
  %v598 = vld [vmem:[%s4 + $0x1c] sm:$0xf]
  %v603 = vunpack.c.l.b16 %v595
  %v604 = vunpack.c.l.b16 %v596
  %v605 = vunpack.c.l.b16 %v597
  %v606 = vunpack.c.l.b16 %v598
  %v607 = vpack.c.b16 %v604, %v603
  %v608 = vpack.c.b16 %v606, %v605
  %609 = vrot.lane.b32.xlu0 %v46, 120
  %v610 = vpop.permute.xlu0 %609
  %v613 = vsel %vm86, %v607, 0
  %v616 = vsel %vm86, %v608, 0
  %618 = vmatprep.subr.bf16.mxu0 0
  %619 = vmatpush1.bf16.msra.mxu0 0
  %620 = vmatprep.subr.bf16.mxu0 0
  %621 = vmatpush1.bf16.msra.mxu0 0
  %622 = vmatprep.subr.bf16.mxu0 0
  %623 = vmatpush1.bf16.msra.mxu0 0
  %624 = vmatprep.subr.bf16.mxu0 0
  %625 = vmatpush1.bf16.msra.mxu0 0
  %626 = vmatprep.subr.bf16.mxu0 0
  %627 = vmatpush1.bf16.msra.mxu0 0
  %628 = vmatprep.subr.bf16.mxu0 0
  %629 = vmatpush1.bf16.msra.mxu0 0
  %630 = vmatprep.subr.bf16.mxu0 0
  %631 = vmatpush1.bf16.msra.mxu0 0
  %632 = vmatprep.subr.bf16.mxu0 0
  %633 = vmatpush1.bf16.msra.mxu0 %v610
  %634 = vmatprep.subr.bf16.mxu0 0
  %635 = vmatpush2.bf16.msra.mxu0 0
  %636 = vmatprep.subr.bf16.mxu0 0
  %637 = vmatpush2.bf16.msra.mxu0 0
  %638 = vmatprep.subr.bf16.mxu0 0
  %639 = vmatpush2.bf16.msra.mxu0 0
  %640 = vmatprep.subr.bf16.mxu0 0
  %641 = vmatpush2.bf16.msra.mxu0 0
  %642 = vmatprep.subr.bf16.mxu0 0
  %643 = vmatpush2.bf16.msra.mxu0 0
  %644 = vmatprep.subr.bf16.mxu0 0
  %645 = vmatpush2.bf16.msra.mxu0 0
  %646 = vmatprep.subr.bf16.mxu0 0
  %647 = vmatpush2.bf16.msra.mxu0 0
  %648 = vmatprep.subr.bf16.mxu0 0
  %649 = vmatpush2.bf16.msra.mxu0 0
  %650 = vmatprep.mubr.bf16.mxu0 0
  %651 = vmatmul.mubr.bf16.gmra.mxu0 %v613
  %v652 = vpop.f32.mrf.mxu0
  %v653 = vadd.f32 0.0, %v652
  %v654 = vpop.f32.mrf.mxu0
  %v655 = vpop.f32.mrf.mxu0
  %v656 = vadd.f32 0.0, %v655
  %v657 = vpop.f32.mrf.mxu0
  %658 = vmatprep.mubr.bf16.mxu0 0
  %659 = vmatmul.mubr.bf16.gmra.mxu0 %v616
  %v660 = vpop.f32.mrf.mxu0
  %v661 = vadd.f32 0.0, %v660
  %v662 = vpop.f32.mrf.mxu0
  %v663 = vpop.f32.mrf.mxu0
  %v664 = vadd.f32 0.0, %v663
  %v665 = vpop.f32.mrf.mxu0
  %666 = vdwg.mxu0
  %v667 = vadd.f32 %v591, %v653
  %v668 = vadd.f32 %v592, %v656
  %v669 = vadd.f32 %v593, %v661
  %v670 = vadd.f32 %v594, %v664
  %671 = vrot.lane.b32.xlu0 %v607, 112
  %v672 = vpop.permute.xlu0 %671
  %673 = vrot.lane.b32.xlu0 %v608, 112
  %v674 = vpop.permute.xlu0 %673
  %675 = vrot.lane.b32.xlu0 %v66, 120
  %v676 = vpop.permute.xlu0 %675
  %v679 = vsel %vm86, %v672, 0
  %v682 = vsel %vm86, %v674, 0
  %684 = vmatprep.subr.bf16.mxu0 0
  %685 = vmatpush1.bf16.msra.mxu0 0
  %686 = vmatprep.subr.bf16.mxu0 0
  %687 = vmatpush1.bf16.msra.mxu0 0
  %688 = vmatprep.subr.bf16.mxu0 0
  %689 = vmatpush1.bf16.msra.mxu0 0
  %690 = vmatprep.subr.bf16.mxu0 0
  %691 = vmatpush1.bf16.msra.mxu0 0
  %692 = vmatprep.subr.bf16.mxu0 0
  %693 = vmatpush1.bf16.msra.mxu0 0
  %694 = vmatprep.subr.bf16.mxu0 0
  %695 = vmatpush1.bf16.msra.mxu0 0
  %696 = vmatprep.subr.bf16.mxu0 0
  %697 = vmatpush1.bf16.msra.mxu0 0
  %698 = vmatprep.subr.bf16.mxu0 0
  %699 = vmatpush1.bf16.msra.mxu0 %v676
  %700 = vmatprep.subr.bf16.mxu0 0
  %701 = vmatpush2.bf16.msra.mxu0 0
  %702 = vmatprep.subr.bf16.mxu0 0
  %703 = vmatpush2.bf16.msra.mxu0 0
  %704 = vmatprep.subr.bf16.mxu0 0
  %705 = vmatpush2.bf16.msra.mxu0 0
  %706 = vmatprep.subr.bf16.mxu0 0
  %707 = vmatpush2.bf16.msra.mxu0 0
  %708 = vmatprep.subr.bf16.mxu0 0
  %709 = vmatpush2.bf16.msra.mxu0 0
  %710 = vmatprep.subr.bf16.mxu0 0
  %711 = vmatpush2.bf16.msra.mxu0 0
  %712 = vmatprep.subr.bf16.mxu0 0
  %713 = vmatpush2.bf16.msra.mxu0 0
  %714 = vmatprep.subr.bf16.mxu0 0
  %715 = vmatpush2.bf16.msra.mxu0 0
  %716 = vmatprep.mubr.bf16.mxu0 0
  %717 = vmatmul.mubr.bf16.gmra.mxu0 %v679
  %v718 = vpop.f32.mrf.mxu0
  %v719 = vadd.f32 0.0, %v718
  %v720 = vpop.f32.mrf.mxu0
  %v721 = vpop.f32.mrf.mxu0
  %v722 = vadd.f32 0.0, %v721
  %v723 = vpop.f32.mrf.mxu0
  %724 = vmatprep.mubr.bf16.mxu0 0
  %725 = vmatmul.mubr.bf16.gmra.mxu0 %v682
  %v726 = vpop.f32.mrf.mxu0
  %v727 = vadd.f32 0.0, %v726
  %v728 = vpop.f32.mrf.mxu0
  %v729 = vpop.f32.mrf.mxu0
  %v730 = vadd.f32 0.0, %v729
  %v731 = vpop.f32.mrf.mxu0
  %732 = vdwg.mxu0
  %v733 = vadd.f32 %v667, %v719
  %v734 = vadd.f32 %v668, %v722
  %v735 = vadd.f32 %v669, %v727
  %v736 = vadd.f32 %v670, %v730
  %737 = vrot.lane.b32.xlu0 %v607, 96
  %v738 = vpop.permute.xlu0 %737
  %739 = vrot.lane.b32.xlu0 %v608, 96
  %v740 = vpop.permute.xlu0 %739
  %741 = vrot.lane.b32.xlu0 %v46, 118
  %v742 = vpop.permute.xlu0 %741
  %v745 = vsel %vm86, %v738, 0
  %v748 = vsel %vm86, %v740, 0
  %750 = vmatprep.subr.bf16.mxu0 0
  %751 = vmatpush1.bf16.msra.mxu0 0
  %752 = vmatprep.subr.bf16.mxu0 0
  %753 = vmatpush1.bf16.msra.mxu0 0
  %754 = vmatprep.subr.bf16.mxu0 0
  %755 = vmatpush1.bf16.msra.mxu0 0
  %756 = vmatprep.subr.bf16.mxu0 0
  %757 = vmatpush1.bf16.msra.mxu0 0
  %758 = vmatprep.subr.bf16.mxu0 0
  %759 = vmatpush1.bf16.msra.mxu0 0
  %760 = vmatprep.subr.bf16.mxu0 0
  %761 = vmatpush1.bf16.msra.mxu0 0
  %762 = vmatprep.subr.bf16.mxu0 0
  %763 = vmatpush1.bf16.msra.mxu0 0
  %764 = vmatprep.subr.bf16.mxu0 0
  %765 = vmatpush1.bf16.msra.mxu0 %v742
  %766 = vmatprep.subr.bf16.mxu0 0
  %767 = vmatpush2.bf16.msra.mxu0 0
  %768 = vmatprep.subr.bf16.mxu0 0
  %769 = vmatpush2.bf16.msra.mxu0 0
  %770 = vmatprep.subr.bf16.mxu0 0
  %771 = vmatpush2.bf16.msra.mxu0 0
  %772 = vmatprep.subr.bf16.mxu0 0
  %773 = vmatpush2.bf16.msra.mxu0 0
  %774 = vmatprep.subr.bf16.mxu0 0
  %775 = vmatpush2.bf16.msra.mxu0 0
  %776 = vmatprep.subr.bf16.mxu0 0
  %777 = vmatpush2.bf16.msra.mxu0 0
  %778 = vmatprep.subr.bf16.mxu0 0
  %779 = vmatpush2.bf16.msra.mxu0 0
  %780 = vmatprep.subr.bf16.mxu0 0
  %781 = vmatpush2.bf16.msra.mxu0 0
  %782 = vmatprep.mubr.bf16.mxu0 0
  %783 = vmatmul.mubr.bf16.gmra.mxu0 %v745
  %v784 = vpop.f32.mrf.mxu0
  %v785 = vadd.f32 0.0, %v784
  %v786 = vpop.f32.mrf.mxu0
  %v787 = vpop.f32.mrf.mxu0
  %v788 = vadd.f32 0.0, %v787
  %v789 = vpop.f32.mrf.mxu0
  %790 = vmatprep.mubr.bf16.mxu0 0
  %791 = vmatmul.mubr.bf16.gmra.mxu0 %v748
  %v792 = vpop.f32.mrf.mxu0
  %v793 = vadd.f32 0.0, %v792
  %v794 = vpop.f32.mrf.mxu0
  %v795 = vpop.f32.mrf.mxu0
  %v796 = vadd.f32 0.0, %v795
  %v797 = vpop.f32.mrf.mxu0
  %798 = vdwg.mxu0
  %v799 = vadd.f32 %v733, %v785
  %v800 = vadd.f32 %v734, %v788
  %v801 = vadd.f32 %v735, %v793
  %v802 = vadd.f32 %v736, %v796
  %803 = vrot.lane.b32.xlu0 %v607, 80
  %v804 = vpop.permute.xlu0 %803
  %805 = vrot.lane.b32.xlu0 %v608, 80
  %v806 = vpop.permute.xlu0 %805
  %807 = vrot.lane.b32.xlu0 %v66, 118
  %v808 = vpop.permute.xlu0 %807
  %v811 = vsel %vm86, %v804, 0
  %v814 = vsel %vm86, %v806, 0
  %816 = vmatprep.subr.bf16.mxu0 0
  %817 = vmatpush1.bf16.msra.mxu0 0
  %818 = vmatprep.subr.bf16.mxu0 0
  %819 = vmatpush1.bf16.msra.mxu0 0
  %820 = vmatprep.subr.bf16.mxu0 0
  %821 = vmatpush1.bf16.msra.mxu0 0
  %822 = vmatprep.subr.bf16.mxu0 0
  %823 = vmatpush1.bf16.msra.mxu0 0
  %824 = vmatprep.subr.bf16.mxu0 0
  %825 = vmatpush1.bf16.msra.mxu0 0
  %826 = vmatprep.subr.bf16.mxu0 0
  %827 = vmatpush1.bf16.msra.mxu0 0
  %828 = vmatprep.subr.bf16.mxu0 0
  %829 = vmatpush1.bf16.msra.mxu0 0
  %830 = vmatprep.subr.bf16.mxu0 0
  %831 = vmatpush1.bf16.msra.mxu0 %v808
  %832 = vmatprep.subr.bf16.mxu0 0
  %833 = vmatpush2.bf16.msra.mxu0 0
  %834 = vmatprep.subr.bf16.mxu0 0
  %835 = vmatpush2.bf16.msra.mxu0 0
  %836 = vmatprep.subr.bf16.mxu0 0
  %837 = vmatpush2.bf16.msra.mxu0 0
  %838 = vmatprep.subr.bf16.mxu0 0
  %839 = vmatpush2.bf16.msra.mxu0 0
  %840 = vmatprep.subr.bf16.mxu0 0
  %841 = vmatpush2.bf16.msra.mxu0 0
  %842 = vmatprep.subr.bf16.mxu0 0
  %843 = vmatpush2.bf16.msra.mxu0 0
  %844 = vmatprep.subr.bf16.mxu0 0
  %845 = vmatpush2.bf16.msra.mxu0 0
  %846 = vmatprep.subr.bf16.mxu0 0
  %847 = vmatpush2.bf16.msra.mxu0 0
  %848 = vmatprep.mubr.bf16.mxu0 0
  %849 = vmatmul.mubr.bf16.gmra.mxu0 %v811
  %v850 = vpop.f32.mrf.mxu0
  %v851 = vadd.f32 0.0, %v850
  %v852 = vpop.f32.mrf.mxu0
  %v853 = vpop.f32.mrf.mxu0
  %v854 = vadd.f32 0.0, %v853
  %v855 = vpop.f32.mrf.mxu0
  %856 = vmatprep.mubr.bf16.mxu0 0
  %857 = vmatmul.mubr.bf16.gmra.mxu0 %v814
  %v858 = vpop.f32.mrf.mxu0
  %v859 = vadd.f32 0.0, %v858
  %v860 = vpop.f32.mrf.mxu0
  %v861 = vpop.f32.mrf.mxu0
  %v862 = vadd.f32 0.0, %v861
  %v863 = vpop.f32.mrf.mxu0
  %864 = vdwg.mxu0
  %v865 = vadd.f32 %v799, %v851
  %v866 = vadd.f32 %v800, %v854
  %v867 = vadd.f32 %v801, %v859
  %v868 = vadd.f32 %v802, %v862
  %869 = vrot.lane.b32.xlu0 %v607, 64
  %v870 = vpop.permute.xlu0 %869
  %871 = vrot.lane.b32.xlu0 %v608, 64
  %v872 = vpop.permute.xlu0 %871
  %873 = vrot.lane.b32.xlu0 %v46, 116
  %v874 = vpop.permute.xlu0 %873
  %v877 = vsel %vm86, %v870, 0
  %v880 = vsel %vm86, %v872, 0
  %882 = vmatprep.subr.bf16.mxu0 0
  %883 = vmatpush1.bf16.msra.mxu0 0
  %884 = vmatprep.subr.bf16.mxu0 0
  %885 = vmatpush1.bf16.msra.mxu0 0
  %886 = vmatprep.subr.bf16.mxu0 0
  %887 = vmatpush1.bf16.msra.mxu0 0
  %888 = vmatprep.subr.bf16.mxu0 0
  %889 = vmatpush1.bf16.msra.mxu0 0
  %890 = vmatprep.subr.bf16.mxu0 0
  %891 = vmatpush1.bf16.msra.mxu0 0
  %892 = vmatprep.subr.bf16.mxu0 0
  %893 = vmatpush1.bf16.msra.mxu0 0
  %894 = vmatprep.subr.bf16.mxu0 0
  %895 = vmatpush1.bf16.msra.mxu0 0
  %896 = vmatprep.subr.bf16.mxu0 0
  %897 = vmatpush1.bf16.msra.mxu0 %v874
  %898 = vmatprep.subr.bf16.mxu0 0
  %899 = vmatpush2.bf16.msra.mxu0 0
  %900 = vmatprep.subr.bf16.mxu0 0
  %901 = vmatpush2.bf16.msra.mxu0 0
  %902 = vmatprep.subr.bf16.mxu0 0
  %903 = vmatpush2.bf16.msra.mxu0 0
  %904 = vmatprep.subr.bf16.mxu0 0
  %905 = vmatpush2.bf16.msra.mxu0 0
  %906 = vmatprep.subr.bf16.mxu0 0
  %907 = vmatpush2.bf16.msra.mxu0 0
  %908 = vmatprep.subr.bf16.mxu0 0
  %909 = vmatpush2.bf16.msra.mxu0 0
  %910 = vmatprep.subr.bf16.mxu0 0
  %911 = vmatpush2.bf16.msra.mxu0 0
  %912 = vmatprep.subr.bf16.mxu0 0
  %913 = vmatpush2.bf16.msra.mxu0 0
  %914 = vmatprep.mubr.bf16.mxu0 0
  %915 = vmatmul.mubr.bf16.gmra.mxu0 %v877
  %v916 = vpop.f32.mrf.mxu0
  %v917 = vadd.f32 0.0, %v916
  %v918 = vpop.f32.mrf.mxu0
  %v919 = vpop.f32.mrf.mxu0
  %v920 = vadd.f32 0.0, %v919
  %v921 = vpop.f32.mrf.mxu0
  %922 = vmatprep.mubr.bf16.mxu0 0
  %923 = vmatmul.mubr.bf16.gmra.mxu0 %v880
  %v924 = vpop.f32.mrf.mxu0
  %v925 = vadd.f32 0.0, %v924
  %v926 = vpop.f32.mrf.mxu0
  %v927 = vpop.f32.mrf.mxu0
  %v928 = vadd.f32 0.0, %v927
  %v929 = vpop.f32.mrf.mxu0
  %930 = vdwg.mxu0
  %v931 = vadd.f32 %v865, %v917
  %v932 = vadd.f32 %v866, %v920
  %v933 = vadd.f32 %v867, %v925
  %v934 = vadd.f32 %v868, %v928
  %935 = vrot.lane.b32.xlu0 %v607, 48
  %v936 = vpop.permute.xlu0 %935
  %937 = vrot.lane.b32.xlu0 %v608, 48
  %v938 = vpop.permute.xlu0 %937
  %939 = vrot.lane.b32.xlu0 %v66, 116
  %v940 = vpop.permute.xlu0 %939
  %v943 = vsel %vm86, %v936, 0
  %v946 = vsel %vm86, %v938, 0
  %948 = vmatprep.subr.bf16.mxu0 0
  %949 = vmatpush1.bf16.msra.mxu0 0
  %950 = vmatprep.subr.bf16.mxu0 0
  %951 = vmatpush1.bf16.msra.mxu0 0
  %952 = vmatprep.subr.bf16.mxu0 0
  %953 = vmatpush1.bf16.msra.mxu0 0
  %954 = vmatprep.subr.bf16.mxu0 0
  %955 = vmatpush1.bf16.msra.mxu0 0
  %956 = vmatprep.subr.bf16.mxu0 0
  %957 = vmatpush1.bf16.msra.mxu0 0
  %958 = vmatprep.subr.bf16.mxu0 0
  %959 = vmatpush1.bf16.msra.mxu0 0
  %960 = vmatprep.subr.bf16.mxu0 0
  %961 = vmatpush1.bf16.msra.mxu0 0
  %962 = vmatprep.subr.bf16.mxu0 0
  %963 = vmatpush1.bf16.msra.mxu0 %v940
  %964 = vmatprep.subr.bf16.mxu0 0
  %965 = vmatpush2.bf16.msra.mxu0 0
  %966 = vmatprep.subr.bf16.mxu0 0
  %967 = vmatpush2.bf16.msra.mxu0 0
  %968 = vmatprep.subr.bf16.mxu0 0
  %969 = vmatpush2.bf16.msra.mxu0 0
  %970 = vmatprep.subr.bf16.mxu0 0
  %971 = vmatpush2.bf16.msra.mxu0 0
  %972 = vmatprep.subr.bf16.mxu0 0
  %973 = vmatpush2.bf16.msra.mxu0 0
  %974 = vmatprep.subr.bf16.mxu0 0
  %975 = vmatpush2.bf16.msra.mxu0 0
  %976 = vmatprep.subr.bf16.mxu0 0
  %977 = vmatpush2.bf16.msra.mxu0 0
  %978 = vmatprep.subr.bf16.mxu0 0
  %979 = vmatpush2.bf16.msra.mxu0 0
  %980 = vmatprep.mubr.bf16.mxu0 0
  %981 = vmatmul.mubr.bf16.gmra.mxu0 %v943
  %v982 = vpop.f32.mrf.mxu0
  %v983 = vadd.f32 0.0, %v982
  %v984 = vpop.f32.mrf.mxu0
  %v985 = vpop.f32.mrf.mxu0
  %v986 = vadd.f32 0.0, %v985
  %v987 = vpop.f32.mrf.mxu0
  %988 = vmatprep.mubr.bf16.mxu0 0
  %989 = vmatmul.mubr.bf16.gmra.mxu0 %v946
  %v990 = vpop.f32.mrf.mxu0
  %v991 = vadd.f32 0.0, %v990
  %v992 = vpop.f32.mrf.mxu0
  %v993 = vpop.f32.mrf.mxu0
  %v994 = vadd.f32 0.0, %v993
  %v995 = vpop.f32.mrf.mxu0
  %996 = vdwg.mxu0
  %v997 = vadd.f32 %v931, %v983
  %v998 = vadd.f32 %v932, %v986
  %v999 = vadd.f32 %v933, %v991
  %v1000 = vadd.f32 %v934, %v994
  %1001 = vrot.lane.b32.xlu0 %v607, 32
  %v1002 = vpop.permute.xlu0 %1001
  %1003 = vrot.lane.b32.xlu0 %v608, 32
  %v1004 = vpop.permute.xlu0 %1003
  %1005 = vrot.lane.b32.xlu0 %v46, 114
  %v1006 = vpop.permute.xlu0 %1005
  %v1009 = vsel %vm86, %v1002, 0
  %v1012 = vsel %vm86, %v1004, 0
  %1014 = vmatprep.subr.bf16.mxu0 0
  %1015 = vmatpush1.bf16.msra.mxu0 0
  %1016 = vmatprep.subr.bf16.mxu0 0
  %1017 = vmatpush1.bf16.msra.mxu0 0
  %1018 = vmatprep.subr.bf16.mxu0 0
  %1019 = vmatpush1.bf16.msra.mxu0 0
  %1020 = vmatprep.subr.bf16.mxu0 0
  %1021 = vmatpush1.bf16.msra.mxu0 0
  %1022 = vmatprep.subr.bf16.mxu0 0
  %1023 = vmatpush1.bf16.msra.mxu0 0
  %1024 = vmatprep.subr.bf16.mxu0 0
  %1025 = vmatpush1.bf16.msra.mxu0 0
  %1026 = vmatprep.subr.bf16.mxu0 0
  %1027 = vmatpush1.bf16.msra.mxu0 0
  %1028 = vmatprep.subr.bf16.mxu0 0
  %1029 = vmatpush1.bf16.msra.mxu0 %v1006
  %1030 = vmatprep.subr.bf16.mxu0 0
  %1031 = vmatpush2.bf16.msra.mxu0 0
  %1032 = vmatprep.subr.bf16.mxu0 0
  %1033 = vmatpush2.bf16.msra.mxu0 0
  %1034 = vmatprep.subr.bf16.mxu0 0
  %1035 = vmatpush2.bf16.msra.mxu0 0
  %1036 = vmatprep.subr.bf16.mxu0 0
  %1037 = vmatpush2.bf16.msra.mxu0 0
  %1038 = vmatprep.subr.bf16.mxu0 0
  %1039 = vmatpush2.bf16.msra.mxu0 0
  %1040 = vmatprep.subr.bf16.mxu0 0
  %1041 = vmatpush2.bf16.msra.mxu0 0
  %1042 = vmatprep.subr.bf16.mxu0 0
  %1043 = vmatpush2.bf16.msra.mxu0 0
  %1044 = vmatprep.subr.bf16.mxu0 0
  %1045 = vmatpush2.bf16.msra.mxu0 0
  %1046 = vmatprep.mubr.bf16.mxu0 0
  %1047 = vmatmul.mubr.bf16.gmra.mxu0 %v1009
  %v1048 = vpop.f32.mrf.mxu0
  %v1049 = vadd.f32 0.0, %v1048
  %v1050 = vpop.f32.mrf.mxu0
  %v1051 = vpop.f32.mrf.mxu0
  %v1052 = vadd.f32 0.0, %v1051
  %v1053 = vpop.f32.mrf.mxu0
  %1054 = vmatprep.mubr.bf16.mxu0 0
  %1055 = vmatmul.mubr.bf16.gmra.mxu0 %v1012
  %v1056 = vpop.f32.mrf.mxu0
  %v1057 = vadd.f32 0.0, %v1056
  %v1058 = vpop.f32.mrf.mxu0
  %v1059 = vpop.f32.mrf.mxu0
  %v1060 = vadd.f32 0.0, %v1059
  %v1061 = vpop.f32.mrf.mxu0
  %1062 = vdwg.mxu0
  %v1063 = vadd.f32 %v997, %v1049
  %v1064 = vadd.f32 %v998, %v1052
  %v1065 = vadd.f32 %v999, %v1057
  %v1066 = vadd.f32 %v1000, %v1060
  %v1067 = vld [vmem:[%s5] sm:$0xff]
  %v1068 = vld [vmem:[%s5 + $0x8] sm:$0xff]
  %v1069 = vld [vmem:[%s5 + $0x10] sm:$0xff]
  %v1070 = vld [vmem:[%s5 + $0x18] sm:$0xff]
  %1072 = vset.pattern.permute.xlu0 0
  %1073 = vperm.xlu0 %1072, %v1067
  %v1074 = vpop.permute.xlu0 %1073
  %1077 = vset.pattern.permute.xlu0 0
  %1078 = vperm.xlu0 %1077, %v1068
  %v1079 = vpop.permute.xlu0 %1078
  %1082 = vset.pattern.permute.xlu0 0
  %1083 = vperm.xlu0 %1082, %v1069
  %v1084 = vpop.permute.xlu0 %1083
  %1087 = vset.pattern.permute.xlu0 0
  %1088 = vperm.xlu0 %1087, %v1070
  %v1089 = vpop.permute.xlu0 %1088
  %v1091 = vadd.f32 %v1063, %v1074
  %v1092 = vadd.f32 %v1064, %v1079
  %v1093 = vadd.f32 %v1065, %v1084
  %v1094 = vadd.f32 %v1066, %v1089
  %v1095 = vpack.c.bf16 %v1092, %v1091
  %v1096 = vpack.c.bf16 %v1094, %v1093
  %v1099 = vunpack.c.l.b16 %v1095
  %v1100 = vunpack.c.h.b16 %v1095
  %v1101 = vunpack.c.l.b16 %v1096
  %v1102 = vunpack.c.h.b16 %v1096
  %v1103 = vpack.c.b16 %v1099, %v1099
  %v1104 = vpack.c.b16 %v1100, %v1100
  %v1105 = vpack.c.b16 %v1101, %v1101
  %v1106 = vpack.c.b16 %v1102, %v1102
  %vm1111 = vcmask 404480
  %1112 = vst.msk [vmem:[%s6] sm:$0xf] %vm1111, %v1103
  %1113 = vst.msk [vmem:[%s6 + $0x4] sm:$0xf] %vm1111, %v1104
  %1114 = vst.msk [vmem:[%s6 + $0x8] sm:$0xf] %vm1111, %v1105
  %1115 = vst.msk [vmem:[%s6 + $0xc] sm:$0xf] %vm1111, %v1106
  %p1116 = scmp.eq.s32.totalorder 0, 0
  // Predicated region
  $region26: #{ecg_encoder_forward.13} parent=0 // pred_check
    %p1117 = pneg %p1116
  $region27: #{ecg_encoder_forward.13} parent=0 // pred_check_branch
    %1119 = sbr.rel (%p1117) target = $region29
  $region28: #{ecg_encoder_forward.13} parent=0 // pred_region
    %vm1120 = vcmask 7168
    %1121 = vst.msk [vmem:[#allocation2] sm:$0xff] %vm1120, 0.0
    %1122 = vst.msk [vmem:[#allocation2 + $0x8] sm:$0xff] %vm1120, 0.0
    %1123 = vst.msk [vmem:[#allocation2 + $0x10] sm:$0xff] %vm1120, 0.0
    %1124 = vst.msk [vmem:[#allocation2 + $0x18] sm:$0xff] %vm1120, 0.0
    %1125 = vst.msk [vmem:[#allocation3] sm:$0xff] %vm1120, 0.0
    %1126 = vst.msk [vmem:[#allocation3 + $0x8] sm:$0xff] %vm1120, 0.0
    %1127 = vst.msk [vmem:[#allocation3 + $0x10] sm:$0xff] %vm1120, 0.0
    %1128 = vst.msk [vmem:[#allocation3 + $0x18] sm:$0xff] %vm1120, 0.0
  $region29: #{ecg_encoder_forward.13} parent=0 // pred_fallthru
    _
  %v1129 = vld [vmem:[#allocation2] sm:$0xff]
  %v1130 = vld [vmem:[#allocation2 + $0x8] sm:$0xff]
  %v1131 = vld [vmem:[#allocation2 + $0x10] sm:$0xff]
  %v1132 = vld [vmem:[#allocation2 + $0x18] sm:$0xff]
  %v1133 = vsel %vm43, %v1091, 0.0
  %1134 = vadd.xlane.f32.xlu0 %v1133
  %v1135 = vpop.xlane.xlu0 %1134
  %v1136 = vsel %vm43, %v1092, 0.0
  %1137 = vadd.xlane.f32.xlu0 %v1136
  %v1138 = vpop.xlane.xlu0 %1137
  %v1139 = vsel %vm43, %v1093, 0.0
  %1140 = vadd.xlane.f32.xlu0 %v1139
  %v1141 = vpop.xlane.xlu0 %1140
  %v1142 = vsel %vm43, %v1094, 0.0
  %1143 = vadd.xlane.f32.xlu0 %v1142
  %v1144 = vpop.xlane.xlu0 %1143
  %v1145 = vadd.f32 %v1129, %v1135
  %v1146 = vadd.f32 %v1130, %v1138
  %v1147 = vadd.f32 %v1131, %v1141
  %v1148 = vadd.f32 %v1132, %v1144
  %vm1149 = vcmask 7168
  %1150 = vst.msk [vmem:[#allocation2] sm:$0xff] %vm1149, %v1145
  %1151 = vst.msk [vmem:[#allocation2 + $0x8] sm:$0xff] %vm1149, %v1146
  %1152 = vst.msk [vmem:[#allocation2 + $0x10] sm:$0xff] %vm1149, %v1147
  %1153 = vst.msk [vmem:[#allocation2 + $0x18] sm:$0xff] %vm1149, %v1148
  %v1154 = vld [vmem:[#allocation3] sm:$0xff]
  %v1155 = vld [vmem:[#allocation3 + $0x8] sm:$0xff]
  %v1156 = vld [vmem:[#allocation3 + $0x10] sm:$0xff]
  %v1157 = vld [vmem:[#allocation3 + $0x18] sm:$0xff]
  %v1158 = vmul.f32 %v1091, %v1091
  %v1159 = vmul.f32 %v1092, %v1092
  %v1160 = vmul.f32 %v1093, %v1093
  %v1161 = vmul.f32 %v1094, %v1094
  %v1162 = vsel %vm43, %v1158, 0.0
  %1163 = vadd.xlane.f32.xlu0 %v1162
  %v1164 = vpop.xlane.xlu0 %1163
  %v1165 = vsel %vm43, %v1159, 0.0
  %1166 = vadd.xlane.f32.xlu0 %v1165
  %v1167 = vpop.xlane.xlu0 %1166
  %v1168 = vsel %vm43, %v1160, 0.0
  %1169 = vadd.xlane.f32.xlu0 %v1168
  %v1170 = vpop.xlane.xlu0 %1169
  %v1171 = vsel %vm43, %v1161, 0.0
  %1172 = vadd.xlane.f32.xlu0 %v1171
  %v1173 = vpop.xlane.xlu0 %1172
  %v1174 = vadd.f32 %v1154, %v1164
  %v1175 = vadd.f32 %v1155, %v1167
  %v1176 = vadd.f32 %v1156, %v1170
  %v1177 = vadd.f32 %v1157, %v1173
  %1178 = vst.msk [vmem:[#allocation3] sm:$0xff] %vm1149, %v1174
  %1179 = vst.msk [vmem:[#allocation3 + $0x8] sm:$0xff] %vm1149, %v1175
  %1180 = vst.msk [vmem:[#allocation3 + $0x10] sm:$0xff] %vm1149, %v1176
  %1181 = vst.msk [vmem:[#allocation3 + $0x18] sm:$0xff] %vm1149, %v1177
  // Predicated region
  $region30: #{ecg_encoder_forward.13} parent=0 // pred_check
    %p1182 = pneg %p1116
  $region31: #{ecg_encoder_forward.13} parent=0 // pred_check_branch
    %1184 = sbr.rel (%p1182) target = $region33
  $region32: #{ecg_encoder_forward.13} parent=0 // pred_region
    %v1185 = vld [vmem:[#allocation2] sm:$0xff]
    %v1186 = vld [vmem:[#allocation2 + $0x8] sm:$0xff]
    %v1187 = vld [vmem:[#allocation2 + $0x10] sm:$0xff]
    %v1188 = vld [vmem:[#allocation2 + $0x18] sm:$0xff]
    %1189 = vst.msk [vmem:[%s7] sm:$0xff] %vm1149, %v1185
    %1190 = vst.msk [vmem:[%s7 + $0x8] sm:$0xff] %vm1149, %v1186
    %1191 = vst.msk [vmem:[%s7 + $0x10] sm:$0xff] %vm1149, %v1187
    %1192 = vst.msk [vmem:[%s7 + $0x18] sm:$0xff] %vm1149, %v1188
    %v1193 = vld [vmem:[#allocation3] sm:$0xff]
    %v1194 = vld [vmem:[#allocation3 + $0x8] sm:$0xff]
    %v1195 = vld [vmem:[#allocation3 + $0x10] sm:$0xff]
    %v1196 = vld [vmem:[#allocation3 + $0x18] sm:$0xff]
    %1197 = vst.msk [vmem:[%s8] sm:$0xff] %vm1149, %v1193
    %1198 = vst.msk [vmem:[%s8 + $0x8] sm:$0xff] %vm1149, %v1194
    %1199 = vst.msk [vmem:[%s8 + $0x10] sm:$0xff] %vm1149, %v1195
    %1200 = vst.msk [vmem:[%s8 + $0x18] sm:$0xff] %vm1149, %v1196
  $region33: #{ecg_encoder_forward.13} parent=0 // pred_fallthru
    _
  // Predicated region
  $region34: #{ecg_encoder_forward.13} parent=0 // pred_check
    _
  $region35: #{ecg_encoder_forward.13} parent=0 // pred_check_branch
    %1202 = sbr.rel (0) target = $region37
  $region36: #{ecg_encoder_forward.13} parent=0 // pred_region
    _
  $region37: #{ecg_encoder_forward.13} parent=0 // pred_fallthru
    _
  // Predicated region
  $region38: #{ecg_encoder_forward.13} parent=0 // pred_check
    _
  $region39: #{ecg_encoder_forward.13} parent=0 // pred_check_branch
    %1204 = sbr.rel (0) target = $region41
  $region40: #{ecg_encoder_forward.13} parent=0 // pred_region
    _
  $region41: #{ecg_encoder_forward.13} parent=0 // pred_fallthru
    _
  // Predicated region
  $region42: #{ecg_encoder_forward.13} parent=0 // pred_check
    _
  $region43: #{ecg_encoder_forward.13} parent=0 // pred_check_branch
    %1206 = sbr.rel (0) target = $region45
  $region44: #{ecg_encoder_forward.13} parent=0 // pred_region
    _
  $region45: #{ecg_encoder_forward.13} parent=0 // pred_fallthru
    _
  // Predicated region
  $region46: #{ecg_encoder_forward.13} parent=0 // pred_check
    _
  $region47: #{ecg_encoder_forward.13} parent=0 // pred_check_branch
    %1208 = sbr.rel (0) target = $region49
  $region48: #{ecg_encoder_forward.13} parent=0 // pred_region
    _
  $region49: #{ecg_encoder_forward.13} parent=0 // pred_fallthru
    _
  // Predicated region
  $region50: #{ecg_encoder_forward.13} parent=0 // pred_check
    _
  $region51: #{ecg_encoder_forward.13} parent=0 // pred_check_branch
    %1210 = sbr.rel (0) target = $region53
  $region52: #{ecg_encoder_forward.13} parent=0 // pred_region
    _
  $region53: #{ecg_encoder_forward.13} parent=0 // pred_fallthru
    _
  // Predicated region
  $region54: #{ecg_encoder_forward.13} parent=0 // pred_check
    _
  $region55: #{ecg_encoder_forward.13} parent=0 // pred_check_branch
    %1212 = sbr.rel (0) target = $region57
  $region56: #{ecg_encoder_forward.13} parent=0 // pred_region
    _
  $region57: #{ecg_encoder_forward.13} parent=0 // pred_fallthru
    _

// kernel: ecg_encoder_forward.16
$region0: #{ecg_encoder_forward.16}
  #allocation0 [shape = 'u32[]', space=smem, size = 0x4, offset = 0x4, fixed_abs, tag = 'smem constant byte address 0x4 - core index']
  #allocation1 [shape = 'u32[144,128]{1,0:T(1,128)}', space=vmem, size = 0x12000, scoped, tag = 'internal scratch']
  %s0 = inlined_call_operand.vmem [shape: bf16[64,18], index: 0, kind: input, shape index: {}]
  %s1 = inlined_call_operand.vmem [shape: f32[64,1], index: 1, kind: input, shape index: {}]
  %s2 = inlined_call_operand.vmem [shape: f32[64,1], index: 2, kind: input, shape index: {}]
  %s3 = inlined_call_operand.vmem [shape: f32[64,1], index: 3, kind: input, shape index: {}]
  %s4 = inlined_call_operand.vmem [shape: f32[64,1], index: 4, kind: input, shape index: {}]
  %s5 = inlined_call_operand.vmem [shape: bf16[64,18], index: 5, kind: output, shape index: {}]
  %s6 = sld [smem:[#allocation0]]
  $region30: #{ecg_encoder_forward.16} parent=0
    _
  %s8 = ssub.s32 1, %s6
  %s9 = scalar_select 0, %s8, %s6
  // Predicated region
  $region2: #{ecg_encoder_forward.16} parent=0 // pred_check
    _
  $region3: #{ecg_encoder_forward.16} parent=0 // pred_check_branch
    %11 = sbr.rel (0) target = $region5
  $region4: #{ecg_encoder_forward.16} parent=0 // pred_region
    _
  $region5: #{ecg_encoder_forward.16} parent=0 // pred_fallthru
    _
  // Predicated region
  $region6: #{ecg_encoder_forward.16} parent=0 // pred_check
    _
  $region7: #{ecg_encoder_forward.16} parent=0 // pred_check_branch
    %13 = sbr.rel (0) target = $region9
  $region8: #{ecg_encoder_forward.16} parent=0 // pred_region
    _
  $region9: #{ecg_encoder_forward.16} parent=0 // pred_fallthru
    _
  // Predicated region
  $region10: #{ecg_encoder_forward.16} parent=0 // pred_check
    _
  $region11: #{ecg_encoder_forward.16} parent=0 // pred_check_branch
    %15 = sbr.rel (0) target = $region13
  $region12: #{ecg_encoder_forward.16} parent=0 // pred_region
    _
  $region13: #{ecg_encoder_forward.16} parent=0 // pred_fallthru
    _
  // Predicated region
  $region14: #{ecg_encoder_forward.16} parent=0 // pred_check
    _
  $region15: #{ecg_encoder_forward.16} parent=0 // pred_check_branch
    %17 = sbr.rel (0) target = $region17
  $region16: #{ecg_encoder_forward.16} parent=0 // pred_region
    _
  $region17: #{ecg_encoder_forward.16} parent=0 // pred_fallthru
    _
  // Predicated region
  $region18: #{ecg_encoder_forward.16} parent=0 // pred_check
    _
  $region19: #{ecg_encoder_forward.16} parent=0 // pred_check_branch
    %19 = sbr.rel (0) target = $region21
  $region20: #{ecg_encoder_forward.16} parent=0 // pred_region
    _
  $region21: #{ecg_encoder_forward.16} parent=0 // pred_fallthru
    _
  %v20 = vld [vmem:[%s1] sm:$0xff]
  %v21 = vld [vmem:[%s1 + $0x8] sm:$0xff]
  %v22 = vld [vmem:[%s1 + $0x10] sm:$0xff]
  %v23 = vld [vmem:[%s1 + $0x18] sm:$0xff]
  %v24 = vld [vmem:[%s1 + $0x20] sm:$0xff]
  %v25 = vld [vmem:[%s1 + $0x28] sm:$0xff]
  %v26 = vld [vmem:[%s1 + $0x30] sm:$0xff]
  %v27 = vld [vmem:[%s1 + $0x38] sm:$0xff]
  %v28 = vmul.f32 %v20, 0.055555556
  %v29 = vmul.f32 %v21, 0.055555556
  %v30 = vmul.f32 %v22, 0.055555556
  %v31 = vmul.f32 %v23, 0.055555556
  %v32 = vmul.f32 %v24, 0.055555556
  %v33 = vmul.f32 %v25, 0.055555556
  %v34 = vmul.f32 %v26, 0.055555556
  %v35 = vmul.f32 %v27, 0.055555556
  %v36 = vld [vmem:[%s2] sm:$0xff]
  %v37 = vld [vmem:[%s2 + $0x8] sm:$0xff]
  %v38 = vld [vmem:[%s2 + $0x10] sm:$0xff]
  %v39 = vld [vmem:[%s2 + $0x18] sm:$0xff]
  %v40 = vld [vmem:[%s2 + $0x20] sm:$0xff]
  %v41 = vld [vmem:[%s2 + $0x28] sm:$0xff]
  %v42 = vld [vmem:[%s2 + $0x30] sm:$0xff]
  %v43 = vld [vmem:[%s2 + $0x38] sm:$0xff]
  %v44 = vmul.f32 %v36, 0.055555556
  %v45 = vmul.f32 %v37, 0.055555556
  %v46 = vmul.f32 %v38, 0.055555556
  %v47 = vmul.f32 %v39, 0.055555556
  %v48 = vmul.f32 %v40, 0.055555556
  %v49 = vmul.f32 %v41, 0.055555556
  %v50 = vmul.f32 %v42, 0.055555556
  %v51 = vmul.f32 %v43, 0.055555556
  %v52 = vmul.f32 %v28, %v28
  %v53 = vmul.f32 %v29, %v29
  %v54 = vmul.f32 %v30, %v30
  %v55 = vmul.f32 %v31, %v31
  %v56 = vmul.f32 %v32, %v32
  %v57 = vmul.f32 %v33, %v33
  %v58 = vmul.f32 %v34, %v34
  %v59 = vmul.f32 %v35, %v35
  %v60 = vsub.f32 %v44, %v52
  %v61 = vsub.f32 %v45, %v53
  %v62 = vsub.f32 %v46, %v54
  %v63 = vsub.f32 %v47, %v55
  %v64 = vsub.f32 %v48, %v56
  %v65 = vsub.f32 %v49, %v57
  %v66 = vsub.f32 %v50, %v58
  %v67 = vsub.f32 %v51, %v59
  %v68 = vmax.f32 %v60, 0.0
  %v69 = vmax.f32 %v61, 0.0
  %v70 = vmax.f32 %v62, 0.0
  %v71 = vmax.f32 %v63, 0.0
  %v72 = vmax.f32 %v64, 0.0
  %v73 = vmax.f32 %v65, 0.0
  %v74 = vmax.f32 %v66, 0.0
  %v75 = vmax.f32 %v67, 0.0
  %v76 = vld [vmem:[%s3] sm:$0xff]
  %v77 = vld [vmem:[%s3 + $0x8] sm:$0xff]
  %v78 = vld [vmem:[%s3 + $0x10] sm:$0xff]
  %v79 = vld [vmem:[%s3 + $0x18] sm:$0xff]
  %v80 = vld [vmem:[%s3 + $0x20] sm:$0xff]
  %v81 = vld [vmem:[%s3 + $0x28] sm:$0xff]
  %v82 = vld [vmem:[%s3 + $0x30] sm:$0xff]
  %v83 = vld [vmem:[%s3 + $0x38] sm:$0xff]
  %v84 = vadd.f32 %v68, 1e-05
  %v85 = vadd.f32 %v69, 1e-05
  %v86 = vadd.f32 %v70, 1e-05
  %v87 = vadd.f32 %v71, 1e-05
  %v88 = vadd.f32 %v72, 1e-05
  %v89 = vadd.f32 %v73, 1e-05
  %v90 = vadd.f32 %v74, 1e-05
  %v91 = vadd.f32 %v75, 1e-05
  %v92 = vrsqrt.pop %v84
  %v93 = vrsqrt.pop %v85
  %v94 = vrsqrt.pop %v86
  %v95 = vrsqrt.pop %v87
  %v96 = vrsqrt.pop %v88
  %v97 = vrsqrt.pop %v89
  %v98 = vrsqrt.pop %v90
  %v99 = vrsqrt.pop %v91
  %v100 = vmul.f32 %v76, %v92
  %v101 = vmul.f32 %v77, %v93
  %v102 = vmul.f32 %v78, %v94
  %v103 = vmul.f32 %v79, %v95
  %v104 = vmul.f32 %v80, %v96
  %v105 = vmul.f32 %v81, %v97
  %v106 = vmul.f32 %v82, %v98
  %v107 = vmul.f32 %v83, %v99
  %v108 = vld [vmem:[%s4] sm:$0xff]
  %v109 = vld [vmem:[%s4 + $0x8] sm:$0xff]
  %v110 = vld [vmem:[%s4 + $0x10] sm:$0xff]
  %v111 = vld [vmem:[%s4 + $0x18] sm:$0xff]
  %v112 = vld [vmem:[%s4 + $0x20] sm:$0xff]
  %v113 = vld [vmem:[%s4 + $0x28] sm:$0xff]
  %v114 = vld [vmem:[%s4 + $0x30] sm:$0xff]
  %v115 = vld [vmem:[%s4 + $0x38] sm:$0xff]
  %v116 = vmul.f32 %v28, %v100
  %v117 = vmul.f32 %v29, %v101
  %v118 = vmul.f32 %v30, %v102
  %v119 = vmul.f32 %v31, %v103
  %v120 = vmul.f32 %v32, %v104
  %v121 = vmul.f32 %v33, %v105
  %v122 = vmul.f32 %v34, %v106
  %v123 = vmul.f32 %v35, %v107
  %v124 = vsub.f32 %v108, %v116
  %v125 = vsub.f32 %v109, %v117
  %v126 = vsub.f32 %v110, %v118
  %v127 = vsub.f32 %v111, %v119
  %v128 = vsub.f32 %v112, %v120
  %v129 = vsub.f32 %v113, %v121
  %v130 = vsub.f32 %v114, %v122
  %v131 = vsub.f32 %v115, %v123
  %v132 = vld [vmem:[%s0] sm:$0xf]
  %v133 = vld [vmem:[%s0 + $0x4] sm:$0xf]
  %v134 = vld [vmem:[%s0 + $0x8] sm:$0xf]
  %v135 = vld [vmem:[%s0 + $0xc] sm:$0xf]
  %v136 = vld [vmem:[%s0 + $0x10] sm:$0xf]
  %v137 = vld [vmem:[%s0 + $0x14] sm:$0xf]
  %v138 = vld [vmem:[%s0 + $0x18] sm:$0xf]
  %v139 = vld [vmem:[%s0 + $0x1c] sm:$0xf]
  %v140 = vunpack.c.l.bf16 %v132
  %v141 = vunpack.c.l.bf16 %v133
  %v142 = vunpack.c.l.bf16 %v134
  %v143 = vunpack.c.l.bf16 %v135
  %v144 = vunpack.c.l.bf16 %v136
  %v145 = vunpack.c.l.bf16 %v137
  %v146 = vunpack.c.l.bf16 %v138
  %v147 = vunpack.c.l.bf16 %v139
  %149 = vset.pattern.permute.xlu0 0
  %150 = vperm.xlu0 %149, %v100
  %v151 = vpop.permute.xlu0 %150
  %154 = vset.pattern.permute.xlu0 0
  %155 = vperm.xlu0 %154, %v101
  %v156 = vpop.permute.xlu0 %155
  %159 = vset.pattern.permute.xlu0 0
  %160 = vperm.xlu0 %159, %v102
  %v161 = vpop.permute.xlu0 %160
  %164 = vset.pattern.permute.xlu0 0
  %165 = vperm.xlu0 %164, %v103
  %v166 = vpop.permute.xlu0 %165
  %169 = vset.pattern.permute.xlu0 0
  %170 = vperm.xlu0 %169, %v104
  %v171 = vpop.permute.xlu0 %170
  %174 = vset.pattern.permute.xlu0 0
  %175 = vperm.xlu0 %174, %v105
  %v176 = vpop.permute.xlu0 %175
  %179 = vset.pattern.permute.xlu0 0
  %180 = vperm.xlu0 %179, %v106
  %v181 = vpop.permute.xlu0 %180
  %184 = vset.pattern.permute.xlu0 0
  %185 = vperm.xlu0 %184, %v107
  %v186 = vpop.permute.xlu0 %185
  %v188 = vmul.f32 %v140, %v151
  %v189 = vmul.f32 %v141, %v156
  %v190 = vmul.f32 %v142, %v161
  %v191 = vmul.f32 %v143, %v166
  %v192 = vmul.f32 %v144, %v171
  %v193 = vmul.f32 %v145, %v176
  %v194 = vmul.f32 %v146, %v181
  %v195 = vmul.f32 %v147, %v186
  %197 = vset.pattern.permute.xlu0 0
  %198 = vperm.xlu0 %197, %v124
  %v199 = vpop.permute.xlu0 %198
  %202 = vset.pattern.permute.xlu0 0
  %203 = vperm.xlu0 %202, %v125
  %v204 = vpop.permute.xlu0 %203
  %207 = vset.pattern.permute.xlu0 0
  %208 = vperm.xlu0 %207, %v126
  %v209 = vpop.permute.xlu0 %208
  %212 = vset.pattern.permute.xlu0 0
  %213 = vperm.xlu0 %212, %v127
  %v214 = vpop.permute.xlu0 %213
  %217 = vset.pattern.permute.xlu0 0
  %218 = vperm.xlu0 %217, %v128
  %v219 = vpop.permute.xlu0 %218
  %222 = vset.pattern.permute.xlu0 0
  %223 = vperm.xlu0 %222, %v129
  %v224 = vpop.permute.xlu0 %223
  %227 = vset.pattern.permute.xlu0 0
  %228 = vperm.xlu0 %227, %v130
  %v229 = vpop.permute.xlu0 %228
  %232 = vset.pattern.permute.xlu0 0
  %233 = vperm.xlu0 %232, %v131
  %v234 = vpop.permute.xlu0 %233
  %v236 = vadd.f32 %v188, %v199
  %v237 = vadd.f32 %v189, %v204
  %v238 = vadd.f32 %v190, %v209
  %v239 = vadd.f32 %v191, %v214
  %v240 = vadd.f32 %v192, %v219
  %v241 = vadd.f32 %v193, %v224
  %v242 = vadd.f32 %v194, %v229
  %v243 = vadd.f32 %v195, %v234
  %v244 = vmax.f32 %v236, 0.0
  %v245 = vmax.f32 %v237, 0.0
  %v246 = vmax.f32 %v238, 0.0
  %v247 = vmax.f32 %v239, 0.0
  %v248 = vmax.f32 %v240, 0.0
  %v249 = vmax.f32 %v241, 0.0
  %v250 = vmax.f32 %v242, 0.0
  %v251 = vmax.f32 %v243, 0.0
  %v252 = vpack.c.bf16 %v245, %v244
  %v253 = vpack.c.bf16 %v247, %v246
  %v254 = vpack.c.bf16 %v249, %v248
  %v255 = vpack.c.bf16 %v251, %v250
  %v260 = vunpack.c.l.b16 %v252
  %v261 = vunpack.c.h.b16 %v252
  %v262 = vunpack.c.l.b16 %v253
  %v263 = vunpack.c.h.b16 %v253
  %v264 = vunpack.c.l.b16 %v254
  %v265 = vunpack.c.h.b16 %v254
  %v266 = vunpack.c.l.b16 %v255
  %v267 = vunpack.c.h.b16 %v255
  %v268 = vpack.c.b16 %v260, %v260
  %v269 = vpack.c.b16 %v261, %v261
  %v270 = vpack.c.b16 %v262, %v262
  %v271 = vpack.c.b16 %v263, %v263
  %v272 = vpack.c.b16 %v264, %v264
  %v273 = vpack.c.b16 %v265, %v265
  %v274 = vpack.c.b16 %v266, %v266
  %v275 = vpack.c.b16 %v267, %v267
  %vm284 = vcmask 142336
  %285 = vst.msk [vmem:[%s5] sm:$0xf] %vm284, %v268
  %286 = vst.msk [vmem:[%s5 + $0x4] sm:$0xf] %vm284, %v269
  %287 = vst.msk [vmem:[%s5 + $0x8] sm:$0xf] %vm284, %v270
  %288 = vst.msk [vmem:[%s5 + $0xc] sm:$0xf] %vm284, %v271
  %289 = vst.msk [vmem:[%s5 + $0x10] sm:$0xf] %vm284, %v272
  %290 = vst.msk [vmem:[%s5 + $0x14] sm:$0xf] %vm284, %v273
  %291 = vst.msk [vmem:[%s5 + $0x18] sm:$0xf] %vm284, %v274
  %292 = vst.msk [vmem:[%s5 + $0x1c] sm:$0xf] %vm284, %v275
  // Predicated region
  $region22: #{ecg_encoder_forward.16} parent=0 // pred_check
    _
  $region23: #{ecg_encoder_forward.16} parent=0 // pred_check_branch
    %294 = sbr.rel (0) target = $region25
  $region24: #{ecg_encoder_forward.16} parent=0 // pred_region
    _
  $region25: #{ecg_encoder_forward.16} parent=0 // pred_fallthru
    _
  // Predicated region
  $region26: #{ecg_encoder_forward.16} parent=0 // pred_check
    _
  $region27: #{ecg_encoder_forward.16} parent=0 // pred_check_branch
    %296 = sbr.rel (0) target = $region29
  $region28: #{ecg_encoder_forward.16} parent=0 // pred_region
    _
  $region29: #{ecg_encoder_forward.16} parent=0 // pred_fallthru
    _

// kernel: ecg_encoder_forward.17
$region0: #{ecg_encoder_forward.17}
  #allocation0 [shape = 'u32[]', space=smem, size = 0x4, offset = 0x4, fixed_abs, tag = 'smem constant byte address 0x4 - core index']
  #allocation1 [shape = 'u32[144,128]{1,0:T(1,128)}', space=vmem, size = 0x12000, scoped, tag = 'internal scratch']
  #allocation2 [shape = 'f32[2,64]{1,0:T(2,128)}', space=vmem, size = 0x400, scoped, tag = 'scratch operand']
  #allocation3 [shape = 'f32[1,1]{1,0:T(1,128)S(1)}', space=vmem, size = 0x200, scoped, tag = 'scoped memory for ecg_encoder_forward.17']
  %s0 = inlined_call_operand.vmem [shape: bf16[64,18], index: 0, kind: input, shape index: {}]
  %s1 = inlined_call_operand.vmem [shape: f32[1,64], index: 1, kind: input, shape index: {}]
  %s2 = inlined_call_operand.<no memory space> [shape: f32[1,1], index: 2, kind: input, shape index: {}]
  %s3 = inlined_call_operand.vmem [shape: f32[64,16], index: 3, kind: input, shape index: {}]
  %s4 = inlined_call_operand.vmem [shape: f32[1,16], index: 4, kind: input, shape index: {}]
  %s5 = inlined_call_operand.hbm [shape: f32[2,16], index: 5, kind: output, shape index: {}]
  %s6 = sld [smem:[#allocation0]]
  $region38: #{ecg_encoder_forward.17} parent=0
    _
  %s8 = ssub.s32 1, %s6
  %s9 = scalar_select 0, %s8, %s6
  %v10 = vstv %s2
  %11 = vst [vmem:[#allocation3] sm:$0x1] %v10
  $region1: #{ecg_encoder_forward.17} parent=0
    #allocation4 [shape = 'u8[1024]{0}', space=vmem, size = 0x400, scoped, tag = 'output window, operand 0, single buffered']
    #allocation5 [shape = 's32[1]{0}', space=sflag, size = 0x4, scoped, tag = 'scoped memory for ecg_encoder_forward.17']
    %12 = vsyncpa [#allocation5], 0
    // Predicated region
    $region2: #{ecg_encoder_forward.17} parent=1 // pred_check
      _
    $region3: #{ecg_encoder_forward.17} parent=1 // pred_check_branch
      %14 = sbr.rel (0) target = $region5
    $region4: #{ecg_encoder_forward.17} parent=1 // pred_region
      _
    $region5: #{ecg_encoder_forward.17} parent=1 // pred_fallthru
      _
    // Predicated region
    $region6: #{ecg_encoder_forward.17} parent=1 // pred_check
      _
    $region7: #{ecg_encoder_forward.17} parent=1 // pred_check_branch
      %16 = sbr.rel (0) target = $region9
    $region8: #{ecg_encoder_forward.17} parent=1 // pred_region
      _
    $region9: #{ecg_encoder_forward.17} parent=1 // pred_fallthru
      _
    // Predicated region
    $region10: #{ecg_encoder_forward.17} parent=1 // pred_check
      _
    $region11: #{ecg_encoder_forward.17} parent=1 // pred_check_branch
      %18 = sbr.rel (0) target = $region13
    $region12: #{ecg_encoder_forward.17} parent=1 // pred_region
      _
    $region13: #{ecg_encoder_forward.17} parent=1 // pred_fallthru
      _
    // Predicated region
    $region14: #{ecg_encoder_forward.17} parent=1 // pred_check
      _
    $region15: #{ecg_encoder_forward.17} parent=1 // pred_check_branch
      %20 = sbr.rel (0) target = $region17
    $region16: #{ecg_encoder_forward.17} parent=1 // pred_region
      _
    $region17: #{ecg_encoder_forward.17} parent=1 // pred_fallthru
      _
    // Predicated region
    $region18: #{ecg_encoder_forward.17} parent=1 // pred_check
      _
    $region19: #{ecg_encoder_forward.17} parent=1 // pred_check_branch
      %22 = sbr.rel (0) target = $region21
    $region20: #{ecg_encoder_forward.17} parent=1 // pred_region
      _
    $region21: #{ecg_encoder_forward.17} parent=1 // pred_fallthru
      _
    %p23 = scmp.eq.s32.totalorder 0, 0
    // Predicated region
    $region22: #{ecg_encoder_forward.17} parent=1 // pred_check
      %p24 = pneg %p23
    $region23: #{ecg_encoder_forward.17} parent=1 // pred_check_branch
      %26 = sbr.rel (%p24) target = $region25
    $region24: #{ecg_encoder_forward.17} parent=1 // pred_region
      %vm27 = vcmask 517120
      %28 = vst.msk [vmem:[#allocation2] sm:$0x3] %vm27, 0.0
    $region25: #{ecg_encoder_forward.17} parent=1 // pred_fallthru
      _
    %v29 = vld [vmem:[%s0] sm:$0xf]
    %v30 = vld [vmem:[%s0 + $0x4] sm:$0xf]
    %v31 = vld [vmem:[%s0 + $0x8] sm:$0xf]
    %v32 = vld [vmem:[%s0 + $0xc] sm:$0xf]
    %v33 = vld [vmem:[%s0 + $0x10] sm:$0xf]
    %v34 = vld [vmem:[%s0 + $0x14] sm:$0xf]
    %v35 = vld [vmem:[%s0 + $0x18] sm:$0xf]
    %v36 = vld [vmem:[%s0 + $0x1c] sm:$0xf]
    %v37 = vunpack.c.l.bf16 %v29
    %v38 = vunpack.c.l.bf16 %v30
    %v39 = vunpack.c.l.bf16 %v31
    %v40 = vunpack.c.l.bf16 %v32
    %v41 = vunpack.c.l.bf16 %v33
    %v42 = vunpack.c.l.bf16 %v34
    %v43 = vunpack.c.l.bf16 %v35
    %v44 = vunpack.c.l.bf16 %v36
    %v45 = vld [vmem:[%s1] sm:$0x1]
    %v46 = vld [vmem:[#allocation3] sm:$0x1]
    %48 = vset.pattern.permute.xlu0 0
    %49 = vperm.xlu0 %48, %v46
    %v50 = vpop.permute.xlu0 %49
    %v52 = vlaneseq
    %v53 = vshrl.u32 %v52, 7
    %v54 = vsub.s32 0, %v53
    %v55 = vrot.slane %v50, %v54
    %vm56 = vcmask 523264
    %v58 = vsel %vm56, %v45, 0
    %60 = vmatprep.subr.mxu0 0.0
    %61 = vmatpush1.msra.mxu0 0.0
    %62 = vmatprep.subr.mxu0 0.0
    %63 = vmatpush1.msra.mxu0 0.0
    %64 = vmatprep.subr.mxu0 0.0
    %65 = vmatpush1.msra.mxu0 0.0
    %66 = vmatprep.subr.mxu0 0.0
    %67 = vmatpush1.msra.mxu0 0.0
    %68 = vmatprep.subr.mxu0 0.0
    %69 = vmatpush1.msra.mxu0 0.0
    %70 = vmatprep.subr.mxu0 0.0
    %71 = vmatpush1.msra.mxu0 0.0
    %72 = vmatprep.subr.mxu0 0.0
    %73 = vmatpush1.msra.mxu0 0.0
    %74 = vmatprep.subr.mxu0 0.0
    %75 = vmatpush1.msra.mxu0 0.0
    %76 = vmatprep.subr.mxu0 0.0
    %77 = vmatpush1.msra.mxu0 %v44
    %78 = vmatprep.subr.mxu0 0.0
    %79 = vmatpush1.msra.mxu0 %v43
    %80 = vmatprep.subr.mxu0 0.0
    %81 = vmatpush1.msra.mxu0 %v42
    %82 = vmatprep.subr.mxu0 0.0
    %83 = vmatpush1.msra.mxu0 %v41
    %84 = vmatprep.subr.mxu0 0.0
    %85 = vmatpush1.msra.mxu0 %v40
    %86 = vmatprep.subr.mxu0 0.0
    %87 = vmatpush1.msra.mxu0 %v39
    %88 = vmatprep.subr.mxu0 0.0
    %89 = vmatpush1.msra.mxu0 %v38
    %90 = vmatprep.subr.mxu0 0.0
    %91 = vmatpush1.msra.mxu0 %v37
    %92 = vmatprep.subr.mxu0 0.0
    %93 = vmatpush2.msra.mxu0 0.0
    %94 = vmatprep.subr.mxu0 0.0
    %95 = vmatpush2.msra.mxu0 0.0
    %96 = vmatprep.subr.mxu0 0.0
    %97 = vmatpush2.msra.mxu0 0.0
    %98 = vmatprep.subr.mxu0 0.0
    %99 = vmatpush2.msra.mxu0 0.0
    %100 = vmatprep.subr.mxu0 0.0
    %101 = vmatpush2.msra.mxu0 0.0
    %102 = vmatprep.subr.mxu0 0.0
    %103 = vmatpush2.msra.mxu0 0.0
    %104 = vmatprep.subr.mxu0 0.0
    %105 = vmatpush2.msra.mxu0 0.0
    %106 = vmatprep.subr.mxu0 0.0
    %107 = vmatpush2.msra.mxu0 0.0
    %108 = vmatprep.subr.mxu0 0.0
    %109 = vmatpush2.msra.mxu0 0.0
    %110 = vmatprep.subr.mxu0 0.0
    %111 = vmatpush2.msra.mxu0 0.0
    %112 = vmatprep.subr.mxu0 0.0
    %113 = vmatpush2.msra.mxu0 0.0
    %114 = vmatprep.subr.mxu0 0.0
    %115 = vmatpush2.msra.mxu0 0.0
    %116 = vmatprep.subr.mxu0 0.0
    %117 = vmatpush2.msra.mxu0 0.0
    %118 = vmatprep.subr.mxu0 0.0
    %119 = vmatpush2.msra.mxu0 0.0
    %120 = vmatprep.subr.mxu0 0.0
    %121 = vmatpush2.msra.mxu0 0.0
    %122 = vmatprep.subr.mxu0 0.0
    %123 = vmatpush2.msra.mxu0 0.0
    %124 = vmatprep.mubr.f32.mxu0 0.0
    %125 = vmatmul.mubr.f32.gmra.mxu0 %v58
    %v126 = vpop.f32.mrf.mxu0
    %v127 = vadd.f32 %v55, %v126
    %v128 = vpop.f32.mrf.mxu0
    %129 = vdwg.mxu0
    %v130 = vxor.u32 %v127, 2147483648
    %v131 = vmul.f32 %v130, 1.442695
    %v132 = vpow.pop %v131
    %v133 = vadd.f32 %v132, 1.0
    %v134 = vrcp.pop %v133
    %v135 = vmul.f32 1.0, %v134
    %v136 = vlaneseq
    %v137 = vshrl.u32 %v136, 7
    %v138 = vsub.s32 0, %v137
    %v139 = vrot.slane %v135, %v138
    %v140 = vmul.f32 %v37, %v139
    %v141 = vmul.f32 %v38, %v139
    %v142 = vmul.f32 %v39, %v139
    %v143 = vmul.f32 %v40, %v139
    %v144 = vmul.f32 %v41, %v139
    %v145 = vmul.f32 %v42, %v139
    %v146 = vmul.f32 %v43, %v139
    %v147 = vmul.f32 %v44, %v139
    %v148 = vlaneseq
    %v149 = vshrl.u32 %v148, 7
    %v150 = vadd.s32 %v149, 8
    %v151 = vadd.s32 %v149, 16
    %v152 = vlaneseq
    %v153 = vand.u32 %v152, 127
    %vm154 = vcmp.lt.s32.totalorder %v149, 0
    %v155 = vsub.s32 0, %v149
    %v156 = vsel %vm154, %v155, %v149
    %v157 = vshrl.u32 %v156, 1
    %v158 = vand.u32 %v156, 1
    %v159 = vsub.s32 0, %v158
    %v160 = vsel %vm154, %v159, %v158
    %vm161 = vcmp.lt.s32.totalorder %v150, 0
    %v162 = vsub.s32 0, %v150
    %v163 = vsel %vm161, %v162, %v150
    %v164 = vshrl.u32 %v163, 1
    %v165 = vand.u32 %v163, 1
    %v166 = vsub.s32 0, %v165
    %v167 = vsel %vm161, %v166, %v165
    %vm168 = vcmp.lt.s32.totalorder %v151, 0
    %v169 = vsub.s32 0, %v151
    %v170 = vsel %vm168, %v169, %v151
    %v171 = vshrl.u32 %v170, 1
    %v172 = vand.u32 %v170, 1
    %v173 = vsub.s32 0, %v172
    %v174 = vsel %vm168, %v173, %v172
    %vm175 = vcmp.ne.s32.totalorder %v160, 0
    %vm176 = vcmp.ne.s32.totalorder %v167, 0
    %vm177 = vcmp.ne.s32.totalorder %v174, 0
    %vm178 = vcmp.lt.s32.totalorder %v160, 0
    %vm179 = vcmp.lt.s32.totalorder %v167, 0
    %vm180 = vcmp.lt.s32.totalorder %v174, 0
    %vm181 = vmand %vm178, %vm175
    %vm182 = vmand %vm179, %vm176
    %vm183 = vmand %vm180, %vm177
    %v184 = vadd.s32 %v160, 2
    %v185 = vadd.s32 %v167, 2
    %v186 = vadd.s32 %v174, 2
    %v187 = vsel %vm181, %v184, %v160
    %v188 = vsel %vm182, %v185, %v167
    %v189 = vsel %vm183, %v186, %v174
    %vm190 = vcmp.eq.s32.totalorder %v187, %v153
    %vm191 = vcmp.eq.s32.totalorder %v188, %v153
    %vm192 = vcmp.eq.s32.totalorder %v189, %v153
    %v193 = vsel %vm190, 1, 0
    %v194 = vsel %vm191, 1, 0
    %v195 = vsel %vm192, 1, 0
    %v196 = vcvt.s32.f32 %v193
    %v197 = vcvt.s32.f32 %v194
    %v198 = vcvt.s32.f32 %v195
    %v199 = vld [vmem:[#allocation2] sm:$0x3]
    %200 = vxpose.xlu0.b32.start [1/16] %v196, 128
    %201 = vxpose.xlu0.b32.cont [2/16] %v197, 128
    %202 = vxpose.xlu0.b32.cont [3/16] %v198, 128
    %203 = vxpose.xlu0.b32.cont [4/16] 0.0, 128
    %204 = vxpose.xlu0.b32.cont [5/16] 0.0, 128
    %205 = vxpose.xlu0.b32.cont [6/16] 0.0, 128
    %206 = vxpose.xlu0.b32.cont [7/16] 0.0, 128
    %207 = vxpose.xlu0.b32.cont [8/16] 0.0, 128
    %208 = vxpose.xlu0.b32.cont [9/16] 0.0, 128
    %209 = vxpose.xlu0.b32.cont [10/16] 0.0, 128
    %210 = vxpose.xlu0.b32.cont [11/16] 0.0, 128
    %211 = vxpose.xlu0.b32.cont [12/16] 0.0, 128
    %212 = vxpose.xlu0.b32.cont [13/16] 0.0, 128
    %213 = vxpose.xlu0.b32.cont [14/16] 0.0, 128
    %214 = vxpose.xlu0.b32.cont [15/16] 0.0, 128
    %215 = vxpose.xlu0.b32.end [16/16] 0.0, 128
    %v216 = vpop.trf.xlu0
    %v217 = vpop.trf.xlu0
    %v218 = vpop.trf.xlu0
    %v219 = vpop.trf.xlu0
    %v220 = vpop.trf.xlu0
    %v221 = vpop.trf.xlu0
    %v222 = vpop.trf.xlu0
    %v223 = vpop.trf.xlu0
    %v224 = vpop.trf.xlu0
    %v225 = vpop.trf.xlu0
    %v226 = vpop.trf.xlu0
    %v227 = vpop.trf.xlu0
    %v228 = vpop.trf.xlu0
    %v229 = vpop.trf.xlu0
    %v230 = vpop.trf.xlu0
    %v231 = vpop.trf.xlu0
    %vm232 = vcmask 146432
    %v234 = vsel %vm232, %v216, 0
    %v237 = vsel %vm232, %v140, 0
    %v240 = vsel %vm232, %v141, 0
    %v243 = vsel %vm232, %v142, 0
    %v246 = vsel %vm232, %v143, 0
    %v249 = vsel %vm232, %v144, 0
    %v252 = vsel %vm232, %v145, 0
    %v255 = vsel %vm232, %v146, 0
    %v258 = vsel %vm232, %v147, 0
    %260 = vmatprep.subr.mxu0 0.0
    %261 = vmatpush1.xpose.msra.mxu0 0.0
    %262 = vmatprep.subr.mxu0 0.0
    %263 = vmatpush1.xpose.msra.mxu0 0.0
    %264 = vmatprep.subr.mxu0 0.0
    %265 = vmatpush1.xpose.msra.mxu0 0.0
    %266 = vmatprep.subr.mxu0 0.0
    %267 = vmatpush1.xpose.msra.mxu0 0.0
    %268 = vmatprep.subr.mxu0 0.0
    %269 = vmatpush1.xpose.msra.mxu0 0.0
    %270 = vmatprep.subr.mxu0 0.0
    %271 = vmatpush1.xpose.msra.mxu0 0.0
    %272 = vmatprep.subr.mxu0 0.0
    %273 = vmatpush1.xpose.msra.mxu0 0.0
    %274 = vmatprep.subr.mxu0 0.0
    %275 = vmatpush1.xpose.msra.mxu0 0.0
    %276 = vmatprep.subr.mxu0 0.0
    %277 = vmatpush1.xpose.msra.mxu0 %v258
    %278 = vmatprep.subr.mxu0 0.0
    %279 = vmatpush1.xpose.msra.mxu0 %v255
    %280 = vmatprep.subr.mxu0 0.0
    %281 = vmatpush1.xpose.msra.mxu0 %v252
    %282 = vmatprep.subr.mxu0 0.0
    %283 = vmatpush1.xpose.msra.mxu0 %v249
    %284 = vmatprep.subr.mxu0 0.0
    %285 = vmatpush1.xpose.msra.mxu0 %v246
    %286 = vmatprep.subr.mxu0 0.0
    %287 = vmatpush1.xpose.msra.mxu0 %v243
    %288 = vmatprep.subr.mxu0 0.0
    %289 = vmatpush1.xpose.msra.mxu0 %v240
    %290 = vmatprep.subr.mxu0 0.0
    %291 = vmatpush1.xpose.msra.mxu0 %v237
    %292 = vmatprep.subr.mxu0 0.0
    %293 = vmatpush2.xpose.msra.mxu0 0.0
    %294 = vmatprep.subr.mxu0 0.0
    %295 = vmatpush2.xpose.msra.mxu0 0.0
    %296 = vmatprep.subr.mxu0 0.0
    %297 = vmatpush2.xpose.msra.mxu0 0.0
    %298 = vmatprep.subr.mxu0 0.0
    %299 = vmatpush2.xpose.msra.mxu0 0.0
    %300 = vmatprep.subr.mxu0 0.0
    %301 = vmatpush2.xpose.msra.mxu0 0.0
    %302 = vmatprep.subr.mxu0 0.0
    %303 = vmatpush2.xpose.msra.mxu0 0.0
    %304 = vmatprep.subr.mxu0 0.0
    %305 = vmatpush2.xpose.msra.mxu0 0.0
    %306 = vmatprep.subr.mxu0 0.0
    %307 = vmatpush2.xpose.msra.mxu0 0.0
    %308 = vmatprep.subr.mxu0 0.0
    %309 = vmatpush2.xpose.msra.mxu0 0.0
    %310 = vmatprep.subr.mxu0 0.0
    %311 = vmatpush2.xpose.msra.mxu0 0.0
    %312 = vmatprep.subr.mxu0 0.0
    %313 = vmatpush2.xpose.msra.mxu0 0.0
    %314 = vmatprep.subr.mxu0 0.0
    %315 = vmatpush2.xpose.msra.mxu0 0.0
    %316 = vmatprep.subr.mxu0 0.0
    %317 = vmatpush2.xpose.msra.mxu0 0.0
    %318 = vmatprep.subr.mxu0 0.0
    %319 = vmatpush2.xpose.msra.mxu0 0.0
    %320 = vmatprep.subr.mxu0 0.0
    %321 = vmatpush2.xpose.msra.mxu0 0.0
    %322 = vmatprep.subr.mxu0 0.0
    %323 = vmatpush2.xpose.msra.mxu0 0.0
    %324 = vmatprep.mubr.f32.mxu0 0.0
    %325 = vmatmul.mubr.f32.gmra.mxu0 %v234
    %v326 = vpop.f32.mrf.mxu0
    %v327 = vadd.f32 0.0, %v326
    %v328 = vpop.f32.mrf.mxu0
    %329 = vdwg.mxu0
    %v330 = vadd.f32 %v199, %v327
    %vm331 = vcmask 517120
    %332 = vst.msk [vmem:[#allocation2] sm:$0x3] %vm331, %v330
    // Predicated region
    $region26: #{ecg_encoder_forward.17} parent=1 // pred_check
      %p333 = pneg %p23
    $region27: #{ecg_encoder_forward.17} parent=1 // pred_check_branch
      %335 = sbr.rel (%p333) target = $region29
    $region28: #{ecg_encoder_forward.17} parent=1 // pred_region
      %v336 = vld [vmem:[#allocation2] sm:$0x3]
      %v337 = vmul.f32 %v336, 0.11111111
      %v338 = vld [vmem:[%s3] sm:$0xff]
      %v339 = vld [vmem:[%s3 + $0x8] sm:$0xff]
      %v340 = vld [vmem:[%s3 + $0x10] sm:$0xff]
      %v341 = vld [vmem:[%s3 + $0x18] sm:$0xff]
      %v342 = vld [vmem:[%s3 + $0x20] sm:$0xff]
      %v343 = vld [vmem:[%s3 + $0x28] sm:$0xff]
      %v344 = vld [vmem:[%s3 + $0x30] sm:$0xff]
      %v345 = vld [vmem:[%s3 + $0x38] sm:$0xff]
      %v346 = vld [vmem:[%s4] sm:$0x1]
      %v348 = vlaneseq
      %v349 = vshrl.u32 %v348, 7
      %v350 = vsub.s32 0, %v349
      %v351 = vrot.slane %v346, %v350
      %v354 = vsel %vm56, %v337, 0
      %356 = vmatprep.subr.mxu0 0.0
      %357 = vmatpush1.msra.mxu0 0.0
      %358 = vmatprep.subr.mxu0 0.0
      %359 = vmatpush1.msra.mxu0 0.0
      %360 = vmatprep.subr.mxu0 0.0
      %361 = vmatpush1.msra.mxu0 0.0
      %362 = vmatprep.subr.mxu0 0.0
      %363 = vmatpush1.msra.mxu0 0.0
      %364 = vmatprep.subr.mxu0 0.0
      %365 = vmatpush1.msra.mxu0 0.0
      %366 = vmatprep.subr.mxu0 0.0
      %367 = vmatpush1.msra.mxu0 0.0
      %368 = vmatprep.subr.mxu0 0.0
      %369 = vmatpush1.msra.mxu0 0.0
      %370 = vmatprep.subr.mxu0 0.0
      %371 = vmatpush1.msra.mxu0 0.0
      %372 = vmatprep.subr.mxu0 0.0
      %373 = vmatpush1.msra.mxu0 %v345
      %374 = vmatprep.subr.mxu0 0.0
      %375 = vmatpush1.msra.mxu0 %v344
      %376 = vmatprep.subr.mxu0 0.0
      %377 = vmatpush1.msra.mxu0 %v343
      %378 = vmatprep.subr.mxu0 0.0
      %379 = vmatpush1.msra.mxu0 %v342
      %380 = vmatprep.subr.mxu0 0.0
      %381 = vmatpush1.msra.mxu0 %v341
      %382 = vmatprep.subr.mxu0 0.0
      %383 = vmatpush1.msra.mxu0 %v340
      %384 = vmatprep.subr.mxu0 0.0
      %385 = vmatpush1.msra.mxu0 %v339
      %386 = vmatprep.subr.mxu0 0.0
      %387 = vmatpush1.msra.mxu0 %v338
      %388 = vmatprep.subr.mxu0 0.0
      %389 = vmatpush2.msra.mxu0 0.0
      %390 = vmatprep.subr.mxu0 0.0
      %391 = vmatpush2.msra.mxu0 0.0
      %392 = vmatprep.subr.mxu0 0.0
      %393 = vmatpush2.msra.mxu0 0.0
      %394 = vmatprep.subr.mxu0 0.0
      %395 = vmatpush2.msra.mxu0 0.0
      %396 = vmatprep.subr.mxu0 0.0
      %397 = vmatpush2.msra.mxu0 0.0
      %398 = vmatprep.subr.mxu0 0.0
      %399 = vmatpush2.msra.mxu0 0.0
      %400 = vmatprep.subr.mxu0 0.0
      %401 = vmatpush2.msra.mxu0 0.0
      %402 = vmatprep.subr.mxu0 0.0
      %403 = vmatpush2.msra.mxu0 0.0
      %404 = vmatprep.subr.mxu0 0.0
      %405 = vmatpush2.msra.mxu0 0.0
      %406 = vmatprep.subr.mxu0 0.0
      %407 = vmatpush2.msra.mxu0 0.0
      %408 = vmatprep.subr.mxu0 0.0
      %409 = vmatpush2.msra.mxu0 0.0
      %410 = vmatprep.subr.mxu0 0.0
      %411 = vmatpush2.msra.mxu0 0.0
      %412 = vmatprep.subr.mxu0 0.0
      %413 = vmatpush2.msra.mxu0 0.0
      %414 = vmatprep.subr.mxu0 0.0
      %415 = vmatpush2.msra.mxu0 0.0
      %416 = vmatprep.subr.mxu0 0.0
      %417 = vmatpush2.msra.mxu0 0.0
      %418 = vmatprep.subr.mxu0 0.0
      %419 = vmatpush2.msra.mxu0 0.0
      %420 = vmatprep.mubr.f32.mxu0 0.0
      %421 = vmatmul.mubr.f32.gmra.mxu0 %v354
      %v422 = vpop.f32.mrf.mxu0
      %v423 = vadd.f32 %v351, %v422
      %v424 = vpop.f32.mrf.mxu0
      %425 = vdwg.mxu0
      %v426 = vmul.f32 %v423, %v423
      %vm427 = vcmask 123904
      %v428 = vsel %vm427, %v426, 0.0
      %429 = vadd.xlane.f32.xlu0 %v428
      %v430 = vpop.xlane.xlu0 %429
      %v431 = vmax.f32 %v430, 1e-24
      %v432 = vrsqrt.pop %v431
      %v433 = vmul.f32 %v423, %v432
      %434 = vst.msk [vmem:[#allocation4] sm:$0x3] %vm427, %v433
    $region29: #{ecg_encoder_forward.17} parent=1 // pred_fallthru
      _
    // Predicated region
    $region30: #{ecg_encoder_forward.17} parent=1 // pred_check
      _
    $region31: #{ecg_encoder_forward.17} parent=1 // pred_check_branch
      %436 = sbr.rel (0) target = $region33
    $region32: #{ecg_encoder_forward.17} parent=1 // pred_region
      %s438 = ssub.s32 32, 32
      %439 = vsyncadd [#allocation5], %s438
      %s441 = sshll.u32 [#allocation4], 4
      %s442 = int_to_ptr.vmem [resolvable:$true] %s441
      %444 = dma.vmem_to_hbm [thread:$0]  %s442, 32, %s5, [#allocation5]
    $region33: #{ecg_encoder_forward.17} parent=1 // pred_fallthru
      _
    // Predicated region
    $region34: #{ecg_encoder_forward.17} parent=1 // pred_check
      _
    $region35: #{ecg_encoder_forward.17} parent=1 // pred_check_branch
      %446 = sbr.rel (0) target = $region37
    $region36: #{ecg_encoder_forward.17} parent=1 // pred_region
      %447 = dma.done [#allocation5], 32
    $region37: #{ecg_encoder_forward.17} parent=1 // pred_fallthru
      _
    %448 = vsyncpa [#allocation5], 1

// kernel: ecg_encoder_forward.15
$region0: #{ecg_encoder_forward.15}
  #allocation0 [shape = 'u32[]', space=smem, size = 0x4, offset = 0x4, fixed_abs, tag = 'smem constant byte address 0x4 - core index']
  #allocation1 [shape = 'u32[144,128]{1,0:T(1,128)}', space=vmem, size = 0x12000, scoped, tag = 'internal scratch']
  #allocation2 [shape = 'f32[64,1]{1,0:T(8,128)}', space=vmem, size = 0x8000, scoped, tag = 'scratch operand']
  #allocation3 [shape = 'f32[64,1]{1,0:T(8,128)}', space=vmem, size = 0x8000, scoped, tag = 'scratch operand']
  %s0 = inlined_call_operand.vmem [shape: bf16[32,18], index: 0, kind: input, shape index: {}]
  %s1 = inlined_call_operand.vmem [shape: bf16[32,18], index: 1, kind: input, shape index: {}]
  %s2 = inlined_call_operand.vmem [shape: bf16[1,32,14], index: 2, kind: input, shape index: {}]
  %s3 = inlined_call_operand.vmem [shape: bf16[1,32,14], index: 3, kind: input, shape index: {}]
  %s4 = inlined_call_operand.vmem [shape: bf16[64,480], index: 4, kind: input, shape index: {}]
  %s5 = inlined_call_operand.vmem [shape: f32[64,1], index: 5, kind: input, shape index: {}]
  %s6 = inlined_call_operand.vmem [shape: bf16[64,18], index: 6, kind: output, shape index: {0}]
  %s7 = inlined_call_operand.vmem [shape: f32[64,1], index: 7, kind: output, shape index: {1}]
  %s8 = inlined_call_operand.vmem [shape: f32[64,1], index: 8, kind: output, shape index: {2}]
  %9 = xla_tuple %s6, %s7, %s8
  %s10 = sld [smem:[#allocation0]]
  $region58: #{ecg_encoder_forward.15} parent=0
    _
  %s12 = ssub.s32 1, %s10
  %s13 = scalar_select 0, %s12, %s10
  // Predicated region
  $region2: #{ecg_encoder_forward.15} parent=0 // pred_check
    _
  $region3: #{ecg_encoder_forward.15} parent=0 // pred_check_branch
    %15 = sbr.rel (0) target = $region5
  $region4: #{ecg_encoder_forward.15} parent=0 // pred_region
    _
  $region5: #{ecg_encoder_forward.15} parent=0 // pred_fallthru
    _
  // Predicated region
  $region6: #{ecg_encoder_forward.15} parent=0 // pred_check
    _
  $region7: #{ecg_encoder_forward.15} parent=0 // pred_check_branch
    %17 = sbr.rel (0) target = $region9
  $region8: #{ecg_encoder_forward.15} parent=0 // pred_region
    _
  $region9: #{ecg_encoder_forward.15} parent=0 // pred_fallthru
    _
  // Predicated region
  $region10: #{ecg_encoder_forward.15} parent=0 // pred_check
    _
  $region11: #{ecg_encoder_forward.15} parent=0 // pred_check_branch
    %19 = sbr.rel (0) target = $region13
  $region12: #{ecg_encoder_forward.15} parent=0 // pred_region
    _
  $region13: #{ecg_encoder_forward.15} parent=0 // pred_fallthru
    _
  // Predicated region
  $region14: #{ecg_encoder_forward.15} parent=0 // pred_check
    _
  $region15: #{ecg_encoder_forward.15} parent=0 // pred_check_branch
    %21 = sbr.rel (0) target = $region17
  $region16: #{ecg_encoder_forward.15} parent=0 // pred_region
    _
  $region17: #{ecg_encoder_forward.15} parent=0 // pred_fallthru
    _
  // Predicated region
  $region18: #{ecg_encoder_forward.15} parent=0 // pred_check
    _
  $region19: #{ecg_encoder_forward.15} parent=0 // pred_check_branch
    %23 = sbr.rel (0) target = $region21
  $region20: #{ecg_encoder_forward.15} parent=0 // pred_region
    _
  $region21: #{ecg_encoder_forward.15} parent=0 // pred_fallthru
    _
  // Predicated region
  $region22: #{ecg_encoder_forward.15} parent=0 // pred_check
    _
  $region23: #{ecg_encoder_forward.15} parent=0 // pred_check_branch
    %25 = sbr.rel (0) target = $region25
  $region24: #{ecg_encoder_forward.15} parent=0 // pred_region
    _
  $region25: #{ecg_encoder_forward.15} parent=0 // pred_fallthru
    _
  %v27 = vld [vmem:[%s0] sm:$0xf]
  %v28 = vld [vmem:[%s0 + $0x4] sm:$0xf]
  %v29 = vld [vmem:[%s0 + $0x8] sm:$0xf]
  %v30 = vld [vmem:[%s0 + $0xc] sm:$0xf]
  %v31 = vld [vmem:[%s2] sm:$0xf]
  %v32 = vld [vmem:[%s2 + $0x4] sm:$0xf]
  %v33 = vld [vmem:[%s2 + $0x8] sm:$0xf]
  %v34 = vld [vmem:[%s2 + $0xc] sm:$0xf]
  %v39 = vunpack.c.l.b16 %v27
  %v40 = vunpack.c.l.b16 %v28
  %v41 = vunpack.c.l.b16 %v29
  %v42 = vunpack.c.l.b16 %v30
  %v43 = vpack.c.b16 %v40, %v39
  %v44 = vpack.c.b16 %v42, %v41
  %v49 = vunpack.c.l.b16 %v31
  %v50 = vunpack.c.l.b16 %v32
  %v51 = vunpack.c.l.b16 %v33
  %v52 = vunpack.c.l.b16 %v34
  %v53 = vpack.c.b16 %v50, %v49
  %v54 = vpack.c.b16 %v52, %v51
  %55 = vrot.lane.b32.xlu0 %v53, 18
  %v56 = vpop.permute.xlu0 %55
  %57 = vrot.lane.b32.xlu0 %v54, 18
  %v58 = vpop.permute.xlu0 %57
  %vm59 = vcmask 146432
  %v62 = vsel %vm59, %v43, %v56
  %v66 = vsel %vm59, %v44, %v58
  %v68 = vld [vmem:[%s1] sm:$0xf]
  %v69 = vld [vmem:[%s1 + $0x4] sm:$0xf]
  %v70 = vld [vmem:[%s1 + $0x8] sm:$0xf]
  %v71 = vld [vmem:[%s1 + $0xc] sm:$0xf]
  %v72 = vld [vmem:[%s3] sm:$0xf]
  %v73 = vld [vmem:[%s3 + $0x4] sm:$0xf]
  %v74 = vld [vmem:[%s3 + $0x8] sm:$0xf]
  %v75 = vld [vmem:[%s3 + $0xc] sm:$0xf]
  %v80 = vunpack.c.l.b16 %v68
  %v81 = vunpack.c.l.b16 %v69
  %v82 = vunpack.c.l.b16 %v70
  %v83 = vunpack.c.l.b16 %v71
  %v84 = vpack.c.b16 %v81, %v80
  %v85 = vpack.c.b16 %v83, %v82
  %v90 = vunpack.c.l.b16 %v72
  %v91 = vunpack.c.l.b16 %v73
  %v92 = vunpack.c.l.b16 %v74
  %v93 = vunpack.c.l.b16 %v75
  %v94 = vpack.c.b16 %v91, %v90
  %v95 = vpack.c.b16 %v93, %v92
  %96 = vrot.lane.b32.xlu0 %v94, 18
  %v97 = vpop.permute.xlu0 %96
  %98 = vrot.lane.b32.xlu0 %v95, 18
  %v99 = vpop.permute.xlu0 %98
  %v102 = vsel %vm59, %v84, %v97
  %v106 = vsel %vm59, %v85, %v99
  %v108 = vld [vmem:[%s4] sm:$0xf]
  %v109 = vld [vmem:[%s4 + $0x10] sm:$0xf]
  %v110 = vld [vmem:[%s4 + $0x20] sm:$0xf]
  %v111 = vld [vmem:[%s4 + $0x30] sm:$0xf]
  %v112 = vld [vmem:[%s4 + $0x40] sm:$0xf]
  %v113 = vld [vmem:[%s4 + $0x50] sm:$0xf]
  %v114 = vld [vmem:[%s4 + $0x60] sm:$0xf]
  %v115 = vld [vmem:[%s4 + $0x70] sm:$0xf]
  %v124 = vunpack.c.l.b16 %v108
  %v125 = vunpack.c.l.b16 %v109
  %v126 = vunpack.c.l.b16 %v110
  %v127 = vunpack.c.l.b16 %v111
  %v128 = vunpack.c.l.b16 %v112
  %v129 = vunpack.c.l.b16 %v113
  %v130 = vunpack.c.l.b16 %v114
  %v131 = vunpack.c.l.b16 %v115
  %v132 = vpack.c.b16 %v125, %v124
  %v133 = vpack.c.b16 %v127, %v126
  %v134 = vpack.c.b16 %v129, %v128
  %v135 = vpack.c.b16 %v131, %v130
  %136 = vrot.lane.b32.xlu0 %v132, 96
  %v137 = vpop.permute.xlu0 %136
  %138 = vrot.lane.b32.xlu0 %v133, 96
  %v139 = vpop.permute.xlu0 %138
  %140 = vrot.lane.b32.xlu0 %v134, 96
  %v141 = vpop.permute.xlu0 %140
  %142 = vrot.lane.b32.xlu0 %v135, 96
  %v143 = vpop.permute.xlu0 %142
  %vm144 = vcmask 261120
  %v146 = vsel %vm144, %v137, 0
  %v149 = vsel %vm144, %v139, 0
  %v152 = vsel %vm144, %v141, 0
  %v155 = vsel %vm144, %v143, 0
  %157 = vmatprep.subr.bf16.mxu0 0
  %158 = vmatpush1.bf16.msra.mxu0 0
  %159 = vmatprep.subr.bf16.mxu0 0
  %160 = vmatpush1.bf16.msra.mxu0 0
  %161 = vmatprep.subr.bf16.mxu0 0
  %162 = vmatpush1.bf16.msra.mxu0 0
  %163 = vmatprep.subr.bf16.mxu0 0
  %164 = vmatpush1.bf16.msra.mxu0 0
  %165 = vmatprep.subr.bf16.mxu0 0
  %166 = vmatpush1.bf16.msra.mxu0 0
  %167 = vmatprep.subr.bf16.mxu0 0
  %168 = vmatpush1.bf16.msra.mxu0 0
  %169 = vmatprep.subr.bf16.mxu0 0
  %170 = vmatpush1.bf16.msra.mxu0 %v106
  %171 = vmatprep.subr.bf16.mxu0 0
  %172 = vmatpush1.bf16.msra.mxu0 %v102
  %173 = vmatprep.subr.bf16.mxu0 0
  %174 = vmatpush2.bf16.msra.mxu0 0
  %175 = vmatprep.subr.bf16.mxu0 0
  %176 = vmatpush2.bf16.msra.mxu0 0
  %177 = vmatprep.subr.bf16.mxu0 0
  %178 = vmatpush2.bf16.msra.mxu0 0
  %179 = vmatprep.subr.bf16.mxu0 0
  %180 = vmatpush2.bf16.msra.mxu0 0
  %181 = vmatprep.subr.bf16.mxu0 0
  %182 = vmatpush2.bf16.msra.mxu0 0
  %183 = vmatprep.subr.bf16.mxu0 0
  %184 = vmatpush2.bf16.msra.mxu0 0
  %185 = vmatprep.subr.bf16.mxu0 0
  %186 = vmatpush2.bf16.msra.mxu0 0
  %187 = vmatprep.subr.bf16.mxu0 0
  %188 = vmatpush2.bf16.msra.mxu0 0
  %189 = vmatprep.mubr.bf16.mxu0 0
  %190 = vmatmul.mubr.bf16.gmra.mxu0 %v146
  %v191 = vpop.f32.mrf.mxu0
  %v192 = vadd.f32 0.0, %v191
  %v193 = vpop.f32.mrf.mxu0
  %v194 = vpop.f32.mrf.mxu0
  %v195 = vadd.f32 0.0, %v194
  %v196 = vpop.f32.mrf.mxu0
  %197 = vmatprep.mubr.bf16.mxu0 0
  %198 = vmatmul.mubr.bf16.gmra.mxu0 %v149
  %v199 = vpop.f32.mrf.mxu0
  %v200 = vadd.f32 0.0, %v199
  %v201 = vpop.f32.mrf.mxu0
  %v202 = vpop.f32.mrf.mxu0
  %v203 = vadd.f32 0.0, %v202
  %v204 = vpop.f32.mrf.mxu0
  %205 = vmatprep.mubr.bf16.mxu0 0
  %206 = vmatmul.mubr.bf16.gmra.mxu0 %v152
  %v207 = vpop.f32.mrf.mxu0
  %v208 = vadd.f32 0.0, %v207
  %v209 = vpop.f32.mrf.mxu0
  %v210 = vpop.f32.mrf.mxu0
  %v211 = vadd.f32 0.0, %v210
  %v212 = vpop.f32.mrf.mxu0
  %213 = vmatprep.mubr.bf16.mxu0 0
  %214 = vmatmul.mubr.bf16.gmra.mxu0 %v155
  %v215 = vpop.f32.mrf.mxu0
  %v216 = vadd.f32 0.0, %v215
  %v217 = vpop.f32.mrf.mxu0
  %v218 = vpop.f32.mrf.mxu0
  %v219 = vadd.f32 0.0, %v218
  %v220 = vpop.f32.mrf.mxu0
  %221 = vdwg.mxu0
  %v223 = vsel %vm144, %v132, 0
  %v226 = vsel %vm144, %v133, 0
  %v229 = vsel %vm144, %v134, 0
  %v232 = vsel %vm144, %v135, 0
  %234 = vmatprep.subr.bf16.mxu0 0
  %235 = vmatpush1.bf16.msra.mxu0 0
  %236 = vmatprep.subr.bf16.mxu0 0
  %237 = vmatpush1.bf16.msra.mxu0 0
  %238 = vmatprep.subr.bf16.mxu0 0
  %239 = vmatpush1.bf16.msra.mxu0 0
  %240 = vmatprep.subr.bf16.mxu0 0
  %241 = vmatpush1.bf16.msra.mxu0 0
  %242 = vmatprep.subr.bf16.mxu0 0
  %243 = vmatpush1.bf16.msra.mxu0 0
  %244 = vmatprep.subr.bf16.mxu0 0
  %245 = vmatpush1.bf16.msra.mxu0 0
  %246 = vmatprep.subr.bf16.mxu0 0
  %247 = vmatpush1.bf16.msra.mxu0 %v66
  %248 = vmatprep.subr.bf16.mxu0 0
  %249 = vmatpush1.bf16.msra.mxu0 %v62
  %250 = vmatprep.subr.bf16.mxu0 0
  %251 = vmatpush2.bf16.msra.mxu0 0
  %252 = vmatprep.subr.bf16.mxu0 0
  %253 = vmatpush2.bf16.msra.mxu0 0
  %254 = vmatprep.subr.bf16.mxu0 0
  %255 = vmatpush2.bf16.msra.mxu0 0
  %256 = vmatprep.subr.bf16.mxu0 0
  %257 = vmatpush2.bf16.msra.mxu0 0
  %258 = vmatprep.subr.bf16.mxu0 0
  %259 = vmatpush2.bf16.msra.mxu0 0
  %260 = vmatprep.subr.bf16.mxu0 0
  %261 = vmatpush2.bf16.msra.mxu0 0
  %262 = vmatprep.subr.bf16.mxu0 0
  %263 = vmatpush2.bf16.msra.mxu0 0
  %264 = vmatprep.subr.bf16.mxu0 0
  %265 = vmatpush2.bf16.msra.mxu0 0
  %266 = vmatprep.mubr.bf16.mxu0 0
  %267 = vmatmul.mubr.bf16.gmra.mxu0 %v223
  %v268 = vpop.f32.mrf.mxu0
  %v269 = vadd.f32 %v192, %v268
  %v270 = vpop.f32.mrf.mxu0
  %v271 = vpop.f32.mrf.mxu0
  %v272 = vadd.f32 %v195, %v271
  %v273 = vpop.f32.mrf.mxu0
  %274 = vmatprep.mubr.bf16.mxu0 0
  %275 = vmatmul.mubr.bf16.gmra.mxu0 %v226
  %v276 = vpop.f32.mrf.mxu0
  %v277 = vadd.f32 %v200, %v276
  %v278 = vpop.f32.mrf.mxu0
  %v279 = vpop.f32.mrf.mxu0
  %v280 = vadd.f32 %v203, %v279
  %v281 = vpop.f32.mrf.mxu0
  %282 = vmatprep.mubr.bf16.mxu0 0
  %283 = vmatmul.mubr.bf16.gmra.mxu0 %v229
  %v284 = vpop.f32.mrf.mxu0
  %v285 = vadd.f32 %v208, %v284
  %v286 = vpop.f32.mrf.mxu0
  %v287 = vpop.f32.mrf.mxu0
  %v288 = vadd.f32 %v211, %v287
  %v289 = vpop.f32.mrf.mxu0
  %290 = vmatprep.mubr.bf16.mxu0 0
  %291 = vmatmul.mubr.bf16.gmra.mxu0 %v232
  %v292 = vpop.f32.mrf.mxu0
  %v293 = vadd.f32 %v216, %v292
  %v294 = vpop.f32.mrf.mxu0
  %v295 = vpop.f32.mrf.mxu0
  %v296 = vadd.f32 %v219, %v295
  %v297 = vpop.f32.mrf.mxu0
  %298 = vdwg.mxu0
  %299 = vrot.lane.b32.xlu0 %v132, 64
  %v300 = vpop.permute.xlu0 %299
  %301 = vrot.lane.b32.xlu0 %v133, 64
  %v302 = vpop.permute.xlu0 %301
  %303 = vrot.lane.b32.xlu0 %v134, 64
  %v304 = vpop.permute.xlu0 %303
  %305 = vrot.lane.b32.xlu0 %v135, 64
  %v306 = vpop.permute.xlu0 %305
  %309 = vrot.lane.b32.xlu0 %v62, 126
  %v310 = vpop.permute.xlu0 %309
  %311 = vrot.lane.b32.xlu0 %v66, 126
  %v312 = vpop.permute.xlu0 %311
  %v316 = vsel %vm144, %v300, 0
  %v319 = vsel %vm144, %v302, 0
  %v322 = vsel %vm144, %v304, 0
  %v325 = vsel %vm144, %v306, 0
  %327 = vmatprep.subr.bf16.mxu0 0
  %328 = vmatpush1.bf16.msra.mxu0 0
  %329 = vmatprep.subr.bf16.mxu0 0
  %330 = vmatpush1.bf16.msra.mxu0 0
  %331 = vmatprep.subr.bf16.mxu0 0
  %332 = vmatpush1.bf16.msra.mxu0 0
  %333 = vmatprep.subr.bf16.mxu0 0
  %334 = vmatpush1.bf16.msra.mxu0 0
  %335 = vmatprep.subr.bf16.mxu0 0
  %336 = vmatpush1.bf16.msra.mxu0 0
  %337 = vmatprep.subr.bf16.mxu0 0
  %338 = vmatpush1.bf16.msra.mxu0 0
  %339 = vmatprep.subr.bf16.mxu0 0
  %340 = vmatpush1.bf16.msra.mxu0 %v312
  %341 = vmatprep.subr.bf16.mxu0 0
  %342 = vmatpush1.bf16.msra.mxu0 %v310
  %343 = vmatprep.subr.bf16.mxu0 0
  %344 = vmatpush2.bf16.msra.mxu0 0
  %345 = vmatprep.subr.bf16.mxu0 0
  %346 = vmatpush2.bf16.msra.mxu0 0
  %347 = vmatprep.subr.bf16.mxu0 0
  %348 = vmatpush2.bf16.msra.mxu0 0
  %349 = vmatprep.subr.bf16.mxu0 0
  %350 = vmatpush2.bf16.msra.mxu0 0
  %351 = vmatprep.subr.bf16.mxu0 0
  %352 = vmatpush2.bf16.msra.mxu0 0
  %353 = vmatprep.subr.bf16.mxu0 0
  %354 = vmatpush2.bf16.msra.mxu0 0
  %355 = vmatprep.subr.bf16.mxu0 0
  %356 = vmatpush2.bf16.msra.mxu0 0
  %357 = vmatprep.subr.bf16.mxu0 0
  %358 = vmatpush2.bf16.msra.mxu0 0
  %359 = vmatprep.mubr.bf16.mxu0 0
  %360 = vmatmul.mubr.bf16.gmra.mxu0 %v316
  %v361 = vpop.f32.mrf.mxu0
  %v362 = vadd.f32 0.0, %v361
  %v363 = vpop.f32.mrf.mxu0
  %v364 = vpop.f32.mrf.mxu0
  %v365 = vadd.f32 0.0, %v364
  %v366 = vpop.f32.mrf.mxu0
  %367 = vmatprep.mubr.bf16.mxu0 0
  %368 = vmatmul.mubr.bf16.gmra.mxu0 %v319
  %v369 = vpop.f32.mrf.mxu0
  %v370 = vadd.f32 0.0, %v369
  %v371 = vpop.f32.mrf.mxu0
  %v372 = vpop.f32.mrf.mxu0
  %v373 = vadd.f32 0.0, %v372
  %v374 = vpop.f32.mrf.mxu0
  %375 = vmatprep.mubr.bf16.mxu0 0
  %376 = vmatmul.mubr.bf16.gmra.mxu0 %v322
  %v377 = vpop.f32.mrf.mxu0
  %v378 = vadd.f32 0.0, %v377
  %v379 = vpop.f32.mrf.mxu0
  %v380 = vpop.f32.mrf.mxu0
  %v381 = vadd.f32 0.0, %v380
  %v382 = vpop.f32.mrf.mxu0
  %383 = vmatprep.mubr.bf16.mxu0 0
  %384 = vmatmul.mubr.bf16.gmra.mxu0 %v325
  %v385 = vpop.f32.mrf.mxu0
  %v386 = vadd.f32 0.0, %v385
  %v387 = vpop.f32.mrf.mxu0
  %v388 = vpop.f32.mrf.mxu0
  %v389 = vadd.f32 0.0, %v388
  %v390 = vpop.f32.mrf.mxu0
  %391 = vdwg.mxu0
  %v392 = vadd.f32 %v269, %v362
  %v393 = vadd.f32 %v272, %v365
  %v394 = vadd.f32 %v277, %v370
  %v395 = vadd.f32 %v280, %v373
  %v396 = vadd.f32 %v285, %v378
  %v397 = vadd.f32 %v288, %v381
  %v398 = vadd.f32 %v293, %v386
  %v399 = vadd.f32 %v296, %v389
  %400 = vrot.lane.b32.xlu0 %v132, 32
  %v401 = vpop.permute.xlu0 %400
  %402 = vrot.lane.b32.xlu0 %v133, 32
  %v403 = vpop.permute.xlu0 %402
  %404 = vrot.lane.b32.xlu0 %v134, 32
  %v405 = vpop.permute.xlu0 %404
  %406 = vrot.lane.b32.xlu0 %v135, 32
  %v407 = vpop.permute.xlu0 %406
  %410 = vrot.lane.b32.xlu0 %v102, 126
  %v411 = vpop.permute.xlu0 %410
  %412 = vrot.lane.b32.xlu0 %v106, 126
  %v413 = vpop.permute.xlu0 %412
  %v417 = vsel %vm144, %v401, 0
  %v420 = vsel %vm144, %v403, 0
  %v423 = vsel %vm144, %v405, 0
  %v426 = vsel %vm144, %v407, 0
  %428 = vmatprep.subr.bf16.mxu0 0
  %429 = vmatpush1.bf16.msra.mxu0 0
  %430 = vmatprep.subr.bf16.mxu0 0
  %431 = vmatpush1.bf16.msra.mxu0 0
  %432 = vmatprep.subr.bf16.mxu0 0
  %433 = vmatpush1.bf16.msra.mxu0 0
  %434 = vmatprep.subr.bf16.mxu0 0
  %435 = vmatpush1.bf16.msra.mxu0 0
  %436 = vmatprep.subr.bf16.mxu0 0
  %437 = vmatpush1.bf16.msra.mxu0 0
  %438 = vmatprep.subr.bf16.mxu0 0
  %439 = vmatpush1.bf16.msra.mxu0 0
  %440 = vmatprep.subr.bf16.mxu0 0
  %441 = vmatpush1.bf16.msra.mxu0 %v413
  %442 = vmatprep.subr.bf16.mxu0 0
  %443 = vmatpush1.bf16.msra.mxu0 %v411
  %444 = vmatprep.subr.bf16.mxu0 0
  %445 = vmatpush2.bf16.msra.mxu0 0
  %446 = vmatprep.subr.bf16.mxu0 0
  %447 = vmatpush2.bf16.msra.mxu0 0
  %448 = vmatprep.subr.bf16.mxu0 0
  %449 = vmatpush2.bf16.msra.mxu0 0
  %450 = vmatprep.subr.bf16.mxu0 0
  %451 = vmatpush2.bf16.msra.mxu0 0
  %452 = vmatprep.subr.bf16.mxu0 0
  %453 = vmatpush2.bf16.msra.mxu0 0
  %454 = vmatprep.subr.bf16.mxu0 0
  %455 = vmatpush2.bf16.msra.mxu0 0
  %456 = vmatprep.subr.bf16.mxu0 0
  %457 = vmatpush2.bf16.msra.mxu0 0
  %458 = vmatprep.subr.bf16.mxu0 0
  %459 = vmatpush2.bf16.msra.mxu0 0
  %460 = vmatprep.mubr.bf16.mxu0 0
  %461 = vmatmul.mubr.bf16.gmra.mxu0 %v417
  %v462 = vpop.f32.mrf.mxu0
  %v463 = vadd.f32 0.0, %v462
  %v464 = vpop.f32.mrf.mxu0
  %v465 = vpop.f32.mrf.mxu0
  %v466 = vadd.f32 0.0, %v465
  %v467 = vpop.f32.mrf.mxu0
  %468 = vmatprep.mubr.bf16.mxu0 0
  %469 = vmatmul.mubr.bf16.gmra.mxu0 %v420
  %v470 = vpop.f32.mrf.mxu0
  %v471 = vadd.f32 0.0, %v470
  %v472 = vpop.f32.mrf.mxu0
  %v473 = vpop.f32.mrf.mxu0
  %v474 = vadd.f32 0.0, %v473
  %v475 = vpop.f32.mrf.mxu0
  %476 = vmatprep.mubr.bf16.mxu0 0
  %477 = vmatmul.mubr.bf16.gmra.mxu0 %v423
  %v478 = vpop.f32.mrf.mxu0
  %v479 = vadd.f32 0.0, %v478
  %v480 = vpop.f32.mrf.mxu0
  %v481 = vpop.f32.mrf.mxu0
  %v482 = vadd.f32 0.0, %v481
  %v483 = vpop.f32.mrf.mxu0
  %484 = vmatprep.mubr.bf16.mxu0 0
  %485 = vmatmul.mubr.bf16.gmra.mxu0 %v426
  %v486 = vpop.f32.mrf.mxu0
  %v487 = vadd.f32 0.0, %v486
  %v488 = vpop.f32.mrf.mxu0
  %v489 = vpop.f32.mrf.mxu0
  %v490 = vadd.f32 0.0, %v489
  %v491 = vpop.f32.mrf.mxu0
  %492 = vdwg.mxu0
  %v493 = vadd.f32 %v392, %v463
  %v494 = vadd.f32 %v393, %v466
  %v495 = vadd.f32 %v394, %v471
  %v496 = vadd.f32 %v395, %v474
  %v497 = vadd.f32 %v396, %v479
  %v498 = vadd.f32 %v397, %v482
  %v499 = vadd.f32 %v398, %v487
  %v500 = vadd.f32 %v399, %v490
  %v501 = vld [vmem:[%s4 + $0x4] sm:$0xf]
  %v502 = vld [vmem:[%s4 + $0x14] sm:$0xf]
  %v503 = vld [vmem:[%s4 + $0x24] sm:$0xf]
  %v504 = vld [vmem:[%s4 + $0x34] sm:$0xf]
  %v505 = vld [vmem:[%s4 + $0x44] sm:$0xf]
  %v506 = vld [vmem:[%s4 + $0x54] sm:$0xf]
  %v507 = vld [vmem:[%s4 + $0x64] sm:$0xf]
  %v508 = vld [vmem:[%s4 + $0x74] sm:$0xf]
  %v517 = vunpack.c.l.b16 %v501
  %v518 = vunpack.c.l.b16 %v502
  %v519 = vunpack.c.l.b16 %v503
  %v520 = vunpack.c.l.b16 %v504
  %v521 = vunpack.c.l.b16 %v505
  %v522 = vunpack.c.l.b16 %v506
  %v523 = vunpack.c.l.b16 %v507
  %v524 = vunpack.c.l.b16 %v508
  %v525 = vpack.c.b16 %v518, %v517
  %v526 = vpack.c.b16 %v520, %v519
  %v527 = vpack.c.b16 %v522, %v521
  %v528 = vpack.c.b16 %v524, %v523
  %529 = vrot.lane.b32.xlu0 %v62, 124
  %v530 = vpop.permute.xlu0 %529
  %531 = vrot.lane.b32.xlu0 %v66, 124
  %v532 = vpop.permute.xlu0 %531
  %v536 = vsel %vm144, %v525, 0
  %v539 = vsel %vm144, %v526, 0
  %v542 = vsel %vm144, %v527, 0
  %v545 = vsel %vm144, %v528, 0
  %547 = vmatprep.subr.bf16.mxu0 0
  %548 = vmatpush1.bf16.msra.mxu0 0
  %549 = vmatprep.subr.bf16.mxu0 0
  %550 = vmatpush1.bf16.msra.mxu0 0
  %551 = vmatprep.subr.bf16.mxu0 0
  %552 = vmatpush1.bf16.msra.mxu0 0
  %553 = vmatprep.subr.bf16.mxu0 0
  %554 = vmatpush1.bf16.msra.mxu0 0
  %555 = vmatprep.subr.bf16.mxu0 0
  %556 = vmatpush1.bf16.msra.mxu0 0
  %557 = vmatprep.subr.bf16.mxu0 0
  %558 = vmatpush1.bf16.msra.mxu0 0
  %559 = vmatprep.subr.bf16.mxu0 0
  %560 = vmatpush1.bf16.msra.mxu0 %v532
  %561 = vmatprep.subr.bf16.mxu0 0
  %562 = vmatpush1.bf16.msra.mxu0 %v530
  %563 = vmatprep.subr.bf16.mxu0 0
  %564 = vmatpush2.bf16.msra.mxu0 0
  %565 = vmatprep.subr.bf16.mxu0 0
  %566 = vmatpush2.bf16.msra.mxu0 0
  %567 = vmatprep.subr.bf16.mxu0 0
  %568 = vmatpush2.bf16.msra.mxu0 0
  %569 = vmatprep.subr.bf16.mxu0 0
  %570 = vmatpush2.bf16.msra.mxu0 0
  %571 = vmatprep.subr.bf16.mxu0 0
  %572 = vmatpush2.bf16.msra.mxu0 0
  %573 = vmatprep.subr.bf16.mxu0 0
  %574 = vmatpush2.bf16.msra.mxu0 0
  %575 = vmatprep.subr.bf16.mxu0 0
  %576 = vmatpush2.bf16.msra.mxu0 0
  %577 = vmatprep.subr.bf16.mxu0 0
  %578 = vmatpush2.bf16.msra.mxu0 0
  %579 = vmatprep.mubr.bf16.mxu0 0
  %580 = vmatmul.mubr.bf16.gmra.mxu0 %v536
  %v581 = vpop.f32.mrf.mxu0
  %v582 = vadd.f32 0.0, %v581
  %v583 = vpop.f32.mrf.mxu0
  %v584 = vpop.f32.mrf.mxu0
  %v585 = vadd.f32 0.0, %v584
  %v586 = vpop.f32.mrf.mxu0
  %587 = vmatprep.mubr.bf16.mxu0 0
  %588 = vmatmul.mubr.bf16.gmra.mxu0 %v539
  %v589 = vpop.f32.mrf.mxu0
  %v590 = vadd.f32 0.0, %v589
  %v591 = vpop.f32.mrf.mxu0
  %v592 = vpop.f32.mrf.mxu0
  %v593 = vadd.f32 0.0, %v592
  %v594 = vpop.f32.mrf.mxu0
  %595 = vmatprep.mubr.bf16.mxu0 0
  %596 = vmatmul.mubr.bf16.gmra.mxu0 %v542
  %v597 = vpop.f32.mrf.mxu0
  %v598 = vadd.f32 0.0, %v597
  %v599 = vpop.f32.mrf.mxu0
  %v600 = vpop.f32.mrf.mxu0
  %v601 = vadd.f32 0.0, %v600
  %v602 = vpop.f32.mrf.mxu0
  %603 = vmatprep.mubr.bf16.mxu0 0
  %604 = vmatmul.mubr.bf16.gmra.mxu0 %v545
  %v605 = vpop.f32.mrf.mxu0
  %v606 = vadd.f32 0.0, %v605
  %v607 = vpop.f32.mrf.mxu0
  %v608 = vpop.f32.mrf.mxu0
  %v609 = vadd.f32 0.0, %v608
  %v610 = vpop.f32.mrf.mxu0
  %611 = vdwg.mxu0
  %v612 = vadd.f32 %v493, %v582
  %v613 = vadd.f32 %v494, %v585
  %v614 = vadd.f32 %v495, %v590
  %v615 = vadd.f32 %v496, %v593
  %v616 = vadd.f32 %v497, %v598
  %v617 = vadd.f32 %v498, %v601
  %v618 = vadd.f32 %v499, %v606
  %v619 = vadd.f32 %v500, %v609
  %620 = vrot.lane.b32.xlu0 %v525, 96
  %v621 = vpop.permute.xlu0 %620
  %622 = vrot.lane.b32.xlu0 %v526, 96
  %v623 = vpop.permute.xlu0 %622
  %624 = vrot.lane.b32.xlu0 %v527, 96
  %v625 = vpop.permute.xlu0 %624
  %626 = vrot.lane.b32.xlu0 %v528, 96
  %v627 = vpop.permute.xlu0 %626
  %628 = vrot.lane.b32.xlu0 %v102, 124
  %v629 = vpop.permute.xlu0 %628
  %630 = vrot.lane.b32.xlu0 %v106, 124
  %v631 = vpop.permute.xlu0 %630
  %v635 = vsel %vm144, %v621, 0
  %v638 = vsel %vm144, %v623, 0
  %v641 = vsel %vm144, %v625, 0
  %v644 = vsel %vm144, %v627, 0
  %646 = vmatprep.subr.bf16.mxu0 0
  %647 = vmatpush1.bf16.msra.mxu0 0
  %648 = vmatprep.subr.bf16.mxu0 0
  %649 = vmatpush1.bf16.msra.mxu0 0
  %650 = vmatprep.subr.bf16.mxu0 0
  %651 = vmatpush1.bf16.msra.mxu0 0
  %652 = vmatprep.subr.bf16.mxu0 0
  %653 = vmatpush1.bf16.msra.mxu0 0
  %654 = vmatprep.subr.bf16.mxu0 0
  %655 = vmatpush1.bf16.msra.mxu0 0
  %656 = vmatprep.subr.bf16.mxu0 0
  %657 = vmatpush1.bf16.msra.mxu0 0
  %658 = vmatprep.subr.bf16.mxu0 0
  %659 = vmatpush1.bf16.msra.mxu0 %v631
  %660 = vmatprep.subr.bf16.mxu0 0
  %661 = vmatpush1.bf16.msra.mxu0 %v629
  %662 = vmatprep.subr.bf16.mxu0 0
  %663 = vmatpush2.bf16.msra.mxu0 0
  %664 = vmatprep.subr.bf16.mxu0 0
  %665 = vmatpush2.bf16.msra.mxu0 0
  %666 = vmatprep.subr.bf16.mxu0 0
  %667 = vmatpush2.bf16.msra.mxu0 0
  %668 = vmatprep.subr.bf16.mxu0 0
  %669 = vmatpush2.bf16.msra.mxu0 0
  %670 = vmatprep.subr.bf16.mxu0 0
  %671 = vmatpush2.bf16.msra.mxu0 0
  %672 = vmatprep.subr.bf16.mxu0 0
  %673 = vmatpush2.bf16.msra.mxu0 0
  %674 = vmatprep.subr.bf16.mxu0 0
  %675 = vmatpush2.bf16.msra.mxu0 0
  %676 = vmatprep.subr.bf16.mxu0 0
  %677 = vmatpush2.bf16.msra.mxu0 0
  %678 = vmatprep.mubr.bf16.mxu0 0
  %679 = vmatmul.mubr.bf16.gmra.mxu0 %v635
  %v680 = vpop.f32.mrf.mxu0
  %v681 = vadd.f32 0.0, %v680
  %v682 = vpop.f32.mrf.mxu0
  %v683 = vpop.f32.mrf.mxu0
  %v684 = vadd.f32 0.0, %v683
  %v685 = vpop.f32.mrf.mxu0
  %686 = vmatprep.mubr.bf16.mxu0 0
  %687 = vmatmul.mubr.bf16.gmra.mxu0 %v638
  %v688 = vpop.f32.mrf.mxu0
  %v689 = vadd.f32 0.0, %v688
  %v690 = vpop.f32.mrf.mxu0
  %v691 = vpop.f32.mrf.mxu0
  %v692 = vadd.f32 0.0, %v691
  %v693 = vpop.f32.mrf.mxu0
  %694 = vmatprep.mubr.bf16.mxu0 0
  %695 = vmatmul.mubr.bf16.gmra.mxu0 %v641
  %v696 = vpop.f32.mrf.mxu0
  %v697 = vadd.f32 0.0, %v696
  %v698 = vpop.f32.mrf.mxu0
  %v699 = vpop.f32.mrf.mxu0
  %v700 = vadd.f32 0.0, %v699
  %v701 = vpop.f32.mrf.mxu0
  %702 = vmatprep.mubr.bf16.mxu0 0
  %703 = vmatmul.mubr.bf16.gmra.mxu0 %v644
  %v704 = vpop.f32.mrf.mxu0
  %v705 = vadd.f32 0.0, %v704
  %v706 = vpop.f32.mrf.mxu0
  %v707 = vpop.f32.mrf.mxu0
  %v708 = vadd.f32 0.0, %v707
  %v709 = vpop.f32.mrf.mxu0
  %710 = vdwg.mxu0
  %v711 = vadd.f32 %v612, %v681
  %v712 = vadd.f32 %v613, %v684
  %v713 = vadd.f32 %v614, %v689
  %v714 = vadd.f32 %v615, %v692
  %v715 = vadd.f32 %v616, %v697
  %v716 = vadd.f32 %v617, %v700
  %v717 = vadd.f32 %v618, %v705
  %v718 = vadd.f32 %v619, %v708
  %719 = vrot.lane.b32.xlu0 %v525, 64
  %v720 = vpop.permute.xlu0 %719
  %721 = vrot.lane.b32.xlu0 %v526, 64
  %v722 = vpop.permute.xlu0 %721
  %723 = vrot.lane.b32.xlu0 %v527, 64
  %v724 = vpop.permute.xlu0 %723
  %725 = vrot.lane.b32.xlu0 %v528, 64
  %v726 = vpop.permute.xlu0 %725
  %727 = vrot.lane.b32.xlu0 %v62, 122
  %v728 = vpop.permute.xlu0 %727
  %729 = vrot.lane.b32.xlu0 %v66, 122
  %v730 = vpop.permute.xlu0 %729
  %v734 = vsel %vm144, %v720, 0
  %v737 = vsel %vm144, %v722, 0
  %v740 = vsel %vm144, %v724, 0
  %v743 = vsel %vm144, %v726, 0
  %745 = vmatprep.subr.bf16.mxu0 0
  %746 = vmatpush1.bf16.msra.mxu0 0
  %747 = vmatprep.subr.bf16.mxu0 0
  %748 = vmatpush1.bf16.msra.mxu0 0
  %749 = vmatprep.subr.bf16.mxu0 0
  %750 = vmatpush1.bf16.msra.mxu0 0
  %751 = vmatprep.subr.bf16.mxu0 0
  %752 = vmatpush1.bf16.msra.mxu0 0
  %753 = vmatprep.subr.bf16.mxu0 0
  %754 = vmatpush1.bf16.msra.mxu0 0
  %755 = vmatprep.subr.bf16.mxu0 0
  %756 = vmatpush1.bf16.msra.mxu0 0
  %757 = vmatprep.subr.bf16.mxu0 0
  %758 = vmatpush1.bf16.msra.mxu0 %v730
  %759 = vmatprep.subr.bf16.mxu0 0
  %760 = vmatpush1.bf16.msra.mxu0 %v728
  %761 = vmatprep.subr.bf16.mxu0 0
  %762 = vmatpush2.bf16.msra.mxu0 0
  %763 = vmatprep.subr.bf16.mxu0 0
  %764 = vmatpush2.bf16.msra.mxu0 0
  %765 = vmatprep.subr.bf16.mxu0 0
  %766 = vmatpush2.bf16.msra.mxu0 0
  %767 = vmatprep.subr.bf16.mxu0 0
  %768 = vmatpush2.bf16.msra.mxu0 0
  %769 = vmatprep.subr.bf16.mxu0 0
  %770 = vmatpush2.bf16.msra.mxu0 0
  %771 = vmatprep.subr.bf16.mxu0 0
  %772 = vmatpush2.bf16.msra.mxu0 0
  %773 = vmatprep.subr.bf16.mxu0 0
  %774 = vmatpush2.bf16.msra.mxu0 0
  %775 = vmatprep.subr.bf16.mxu0 0
  %776 = vmatpush2.bf16.msra.mxu0 0
  %777 = vmatprep.mubr.bf16.mxu0 0
  %778 = vmatmul.mubr.bf16.gmra.mxu0 %v734
  %v779 = vpop.f32.mrf.mxu0
  %v780 = vadd.f32 0.0, %v779
  %v781 = vpop.f32.mrf.mxu0
  %v782 = vpop.f32.mrf.mxu0
  %v783 = vadd.f32 0.0, %v782
  %v784 = vpop.f32.mrf.mxu0
  %785 = vmatprep.mubr.bf16.mxu0 0
  %786 = vmatmul.mubr.bf16.gmra.mxu0 %v737
  %v787 = vpop.f32.mrf.mxu0
  %v788 = vadd.f32 0.0, %v787
  %v789 = vpop.f32.mrf.mxu0
  %v790 = vpop.f32.mrf.mxu0
  %v791 = vadd.f32 0.0, %v790
  %v792 = vpop.f32.mrf.mxu0
  %793 = vmatprep.mubr.bf16.mxu0 0
  %794 = vmatmul.mubr.bf16.gmra.mxu0 %v740
  %v795 = vpop.f32.mrf.mxu0
  %v796 = vadd.f32 0.0, %v795
  %v797 = vpop.f32.mrf.mxu0
  %v798 = vpop.f32.mrf.mxu0
  %v799 = vadd.f32 0.0, %v798
  %v800 = vpop.f32.mrf.mxu0
  %801 = vmatprep.mubr.bf16.mxu0 0
  %802 = vmatmul.mubr.bf16.gmra.mxu0 %v743
  %v803 = vpop.f32.mrf.mxu0
  %v804 = vadd.f32 0.0, %v803
  %v805 = vpop.f32.mrf.mxu0
  %v806 = vpop.f32.mrf.mxu0
  %v807 = vadd.f32 0.0, %v806
  %v808 = vpop.f32.mrf.mxu0
  %809 = vdwg.mxu0
  %v810 = vadd.f32 %v711, %v780
  %v811 = vadd.f32 %v712, %v783
  %v812 = vadd.f32 %v713, %v788
  %v813 = vadd.f32 %v714, %v791
  %v814 = vadd.f32 %v715, %v796
  %v815 = vadd.f32 %v716, %v799
  %v816 = vadd.f32 %v717, %v804
  %v817 = vadd.f32 %v718, %v807
  %818 = vrot.lane.b32.xlu0 %v525, 32
  %v819 = vpop.permute.xlu0 %818
  %820 = vrot.lane.b32.xlu0 %v526, 32
  %v821 = vpop.permute.xlu0 %820
  %822 = vrot.lane.b32.xlu0 %v527, 32
  %v823 = vpop.permute.xlu0 %822
  %824 = vrot.lane.b32.xlu0 %v528, 32
  %v825 = vpop.permute.xlu0 %824
  %826 = vrot.lane.b32.xlu0 %v102, 122
  %v827 = vpop.permute.xlu0 %826
  %828 = vrot.lane.b32.xlu0 %v106, 122
  %v829 = vpop.permute.xlu0 %828
  %v833 = vsel %vm144, %v819, 0
  %v836 = vsel %vm144, %v821, 0
  %v839 = vsel %vm144, %v823, 0
  %v842 = vsel %vm144, %v825, 0
  %844 = vmatprep.subr.bf16.mxu0 0
  %845 = vmatpush1.bf16.msra.mxu0 0
  %846 = vmatprep.subr.bf16.mxu0 0
  %847 = vmatpush1.bf16.msra.mxu0 0
  %848 = vmatprep.subr.bf16.mxu0 0
  %849 = vmatpush1.bf16.msra.mxu0 0
  %850 = vmatprep.subr.bf16.mxu0 0
  %851 = vmatpush1.bf16.msra.mxu0 0
  %852 = vmatprep.subr.bf16.mxu0 0
  %853 = vmatpush1.bf16.msra.mxu0 0
  %854 = vmatprep.subr.bf16.mxu0 0
  %855 = vmatpush1.bf16.msra.mxu0 0
  %856 = vmatprep.subr.bf16.mxu0 0
  %857 = vmatpush1.bf16.msra.mxu0 %v829
  %858 = vmatprep.subr.bf16.mxu0 0
  %859 = vmatpush1.bf16.msra.mxu0 %v827
  %860 = vmatprep.subr.bf16.mxu0 0
  %861 = vmatpush2.bf16.msra.mxu0 0
  %862 = vmatprep.subr.bf16.mxu0 0
  %863 = vmatpush2.bf16.msra.mxu0 0
  %864 = vmatprep.subr.bf16.mxu0 0
  %865 = vmatpush2.bf16.msra.mxu0 0
  %866 = vmatprep.subr.bf16.mxu0 0
  %867 = vmatpush2.bf16.msra.mxu0 0
  %868 = vmatprep.subr.bf16.mxu0 0
  %869 = vmatpush2.bf16.msra.mxu0 0
  %870 = vmatprep.subr.bf16.mxu0 0
  %871 = vmatpush2.bf16.msra.mxu0 0
  %872 = vmatprep.subr.bf16.mxu0 0
  %873 = vmatpush2.bf16.msra.mxu0 0
  %874 = vmatprep.subr.bf16.mxu0 0
  %875 = vmatpush2.bf16.msra.mxu0 0
  %876 = vmatprep.mubr.bf16.mxu0 0
  %877 = vmatmul.mubr.bf16.gmra.mxu0 %v833
  %v878 = vpop.f32.mrf.mxu0
  %v879 = vadd.f32 0.0, %v878
  %v880 = vpop.f32.mrf.mxu0
  %v881 = vpop.f32.mrf.mxu0
  %v882 = vadd.f32 0.0, %v881
  %v883 = vpop.f32.mrf.mxu0
  %884 = vmatprep.mubr.bf16.mxu0 0
  %885 = vmatmul.mubr.bf16.gmra.mxu0 %v836
  %v886 = vpop.f32.mrf.mxu0
  %v887 = vadd.f32 0.0, %v886
  %v888 = vpop.f32.mrf.mxu0
  %v889 = vpop.f32.mrf.mxu0
  %v890 = vadd.f32 0.0, %v889
  %v891 = vpop.f32.mrf.mxu0
  %892 = vmatprep.mubr.bf16.mxu0 0
  %893 = vmatmul.mubr.bf16.gmra.mxu0 %v839
  %v894 = vpop.f32.mrf.mxu0
  %v895 = vadd.f32 0.0, %v894
  %v896 = vpop.f32.mrf.mxu0
  %v897 = vpop.f32.mrf.mxu0
  %v898 = vadd.f32 0.0, %v897
  %v899 = vpop.f32.mrf.mxu0
  %900 = vmatprep.mubr.bf16.mxu0 0
  %901 = vmatmul.mubr.bf16.gmra.mxu0 %v842
  %v902 = vpop.f32.mrf.mxu0
  %v903 = vadd.f32 0.0, %v902
  %v904 = vpop.f32.mrf.mxu0
  %v905 = vpop.f32.mrf.mxu0
  %v906 = vadd.f32 0.0, %v905
  %v907 = vpop.f32.mrf.mxu0
  %908 = vdwg.mxu0
  %v909 = vadd.f32 %v810, %v879
  %v910 = vadd.f32 %v811, %v882
  %v911 = vadd.f32 %v812, %v887
  %v912 = vadd.f32 %v813, %v890
  %v913 = vadd.f32 %v814, %v895
  %v914 = vadd.f32 %v815, %v898
  %v915 = vadd.f32 %v816, %v903
  %v916 = vadd.f32 %v817, %v906
  %v917 = vld [vmem:[%s4 + $0x8] sm:$0xf]
  %v918 = vld [vmem:[%s4 + $0x18] sm:$0xf]
  %v919 = vld [vmem:[%s4 + $0x28] sm:$0xf]
  %v920 = vld [vmem:[%s4 + $0x38] sm:$0xf]
  %v921 = vld [vmem:[%s4 + $0x48] sm:$0xf]
  %v922 = vld [vmem:[%s4 + $0x58] sm:$0xf]
  %v923 = vld [vmem:[%s4 + $0x68] sm:$0xf]
  %v924 = vld [vmem:[%s4 + $0x78] sm:$0xf]
  %v933 = vunpack.c.l.b16 %v917
  %v934 = vunpack.c.l.b16 %v918
  %v935 = vunpack.c.l.b16 %v919
  %v936 = vunpack.c.l.b16 %v920
  %v937 = vunpack.c.l.b16 %v921
  %v938 = vunpack.c.l.b16 %v922
  %v939 = vunpack.c.l.b16 %v923
  %v940 = vunpack.c.l.b16 %v924
  %v941 = vpack.c.b16 %v934, %v933
  %v942 = vpack.c.b16 %v936, %v935
  %v943 = vpack.c.b16 %v938, %v937
  %v944 = vpack.c.b16 %v940, %v939
  %945 = vrot.lane.b32.xlu0 %v62, 120
  %v946 = vpop.permute.xlu0 %945
  %947 = vrot.lane.b32.xlu0 %v66, 120
  %v948 = vpop.permute.xlu0 %947
  %v952 = vsel %vm144, %v941, 0
  %v955 = vsel %vm144, %v942, 0
  %v958 = vsel %vm144, %v943, 0
  %v961 = vsel %vm144, %v944, 0
  %963 = vmatprep.subr.bf16.mxu0 0
  %964 = vmatpush1.bf16.msra.mxu0 0
  %965 = vmatprep.subr.bf16.mxu0 0
  %966 = vmatpush1.bf16.msra.mxu0 0
  %967 = vmatprep.subr.bf16.mxu0 0
  %968 = vmatpush1.bf16.msra.mxu0 0
  %969 = vmatprep.subr.bf16.mxu0 0
  %970 = vmatpush1.bf16.msra.mxu0 0
  %971 = vmatprep.subr.bf16.mxu0 0
  %972 = vmatpush1.bf16.msra.mxu0 0
  %973 = vmatprep.subr.bf16.mxu0 0
  %974 = vmatpush1.bf16.msra.mxu0 0
  %975 = vmatprep.subr.bf16.mxu0 0
  %976 = vmatpush1.bf16.msra.mxu0 %v948
  %977 = vmatprep.subr.bf16.mxu0 0
  %978 = vmatpush1.bf16.msra.mxu0 %v946
  %979 = vmatprep.subr.bf16.mxu0 0
  %980 = vmatpush2.bf16.msra.mxu0 0
  %981 = vmatprep.subr.bf16.mxu0 0
  %982 = vmatpush2.bf16.msra.mxu0 0
  %983 = vmatprep.subr.bf16.mxu0 0
  %984 = vmatpush2.bf16.msra.mxu0 0
  %985 = vmatprep.subr.bf16.mxu0 0
  %986 = vmatpush2.bf16.msra.mxu0 0
  %987 = vmatprep.subr.bf16.mxu0 0
  %988 = vmatpush2.bf16.msra.mxu0 0
  %989 = vmatprep.subr.bf16.mxu0 0
  %990 = vmatpush2.bf16.msra.mxu0 0
  %991 = vmatprep.subr.bf16.mxu0 0
  %992 = vmatpush2.bf16.msra.mxu0 0
  %993 = vmatprep.subr.bf16.mxu0 0
  %994 = vmatpush2.bf16.msra.mxu0 0
  %995 = vmatprep.mubr.bf16.mxu0 0
  %996 = vmatmul.mubr.bf16.gmra.mxu0 %v952
  %v997 = vpop.f32.mrf.mxu0
  %v998 = vadd.f32 0.0, %v997
  %v999 = vpop.f32.mrf.mxu0
  %v1000 = vpop.f32.mrf.mxu0
  %v1001 = vadd.f32 0.0, %v1000
  %v1002 = vpop.f32.mrf.mxu0
  %1003 = vmatprep.mubr.bf16.mxu0 0
  %1004 = vmatmul.mubr.bf16.gmra.mxu0 %v955
  %v1005 = vpop.f32.mrf.mxu0
  %v1006 = vadd.f32 0.0, %v1005
  %v1007 = vpop.f32.mrf.mxu0
  %v1008 = vpop.f32.mrf.mxu0
  %v1009 = vadd.f32 0.0, %v1008
  %v1010 = vpop.f32.mrf.mxu0
  %1011 = vmatprep.mubr.bf16.mxu0 0
  %1012 = vmatmul.mubr.bf16.gmra.mxu0 %v958
  %v1013 = vpop.f32.mrf.mxu0
  %v1014 = vadd.f32 0.0, %v1013
  %v1015 = vpop.f32.mrf.mxu0
  %v1016 = vpop.f32.mrf.mxu0
  %v1017 = vadd.f32 0.0, %v1016
  %v1018 = vpop.f32.mrf.mxu0
  %1019 = vmatprep.mubr.bf16.mxu0 0
  %1020 = vmatmul.mubr.bf16.gmra.mxu0 %v961
  %v1021 = vpop.f32.mrf.mxu0
  %v1022 = vadd.f32 0.0, %v1021
  %v1023 = vpop.f32.mrf.mxu0
  %v1024 = vpop.f32.mrf.mxu0
  %v1025 = vadd.f32 0.0, %v1024
  %v1026 = vpop.f32.mrf.mxu0
  %1027 = vdwg.mxu0
  %v1028 = vadd.f32 %v909, %v998
  %v1029 = vadd.f32 %v910, %v1001
  %v1030 = vadd.f32 %v911, %v1006
  %v1031 = vadd.f32 %v912, %v1009
  %v1032 = vadd.f32 %v913, %v1014
  %v1033 = vadd.f32 %v914, %v1017
  %v1034 = vadd.f32 %v915, %v1022
  %v1035 = vadd.f32 %v916, %v1025
  %1036 = vrot.lane.b32.xlu0 %v941, 96
  %v1037 = vpop.permute.xlu0 %1036
  %1038 = vrot.lane.b32.xlu0 %v942, 96
  %v1039 = vpop.permute.xlu0 %1038
  %1040 = vrot.lane.b32.xlu0 %v943, 96
  %v1041 = vpop.permute.xlu0 %1040
  %1042 = vrot.lane.b32.xlu0 %v944, 96
  %v1043 = vpop.permute.xlu0 %1042
  %1044 = vrot.lane.b32.xlu0 %v102, 120
  %v1045 = vpop.permute.xlu0 %1044
  %1046 = vrot.lane.b32.xlu0 %v106, 120
  %v1047 = vpop.permute.xlu0 %1046
  %v1051 = vsel %vm144, %v1037, 0
  %v1054 = vsel %vm144, %v1039, 0
  %v1057 = vsel %vm144, %v1041, 0
  %v1060 = vsel %vm144, %v1043, 0
  %1062 = vmatprep.subr.bf16.mxu0 0
  %1063 = vmatpush1.bf16.msra.mxu0 0
  %1064 = vmatprep.subr.bf16.mxu0 0
  %1065 = vmatpush1.bf16.msra.mxu0 0
  %1066 = vmatprep.subr.bf16.mxu0 0
  %1067 = vmatpush1.bf16.msra.mxu0 0
  %1068 = vmatprep.subr.bf16.mxu0 0
  %1069 = vmatpush1.bf16.msra.mxu0 0
  %1070 = vmatprep.subr.bf16.mxu0 0
  %1071 = vmatpush1.bf16.msra.mxu0 0
  %1072 = vmatprep.subr.bf16.mxu0 0
  %1073 = vmatpush1.bf16.msra.mxu0 0
  %1074 = vmatprep.subr.bf16.mxu0 0
  %1075 = vmatpush1.bf16.msra.mxu0 %v1047
  %1076 = vmatprep.subr.bf16.mxu0 0
  %1077 = vmatpush1.bf16.msra.mxu0 %v1045
  %1078 = vmatprep.subr.bf16.mxu0 0
  %1079 = vmatpush2.bf16.msra.mxu0 0
  %1080 = vmatprep.subr.bf16.mxu0 0
  %1081 = vmatpush2.bf16.msra.mxu0 0
  %1082 = vmatprep.subr.bf16.mxu0 0
  %1083 = vmatpush2.bf16.msra.mxu0 0
  %1084 = vmatprep.subr.bf16.mxu0 0
  %1085 = vmatpush2.bf16.msra.mxu0 0
  %1086 = vmatprep.subr.bf16.mxu0 0
  %1087 = vmatpush2.bf16.msra.mxu0 0
  %1088 = vmatprep.subr.bf16.mxu0 0
  %1089 = vmatpush2.bf16.msra.mxu0 0
  %1090 = vmatprep.subr.bf16.mxu0 0
  %1091 = vmatpush2.bf16.msra.mxu0 0
  %1092 = vmatprep.subr.bf16.mxu0 0
  %1093 = vmatpush2.bf16.msra.mxu0 0
  %1094 = vmatprep.mubr.bf16.mxu0 0
  %1095 = vmatmul.mubr.bf16.gmra.mxu0 %v1051
  %v1096 = vpop.f32.mrf.mxu0
  %v1097 = vadd.f32 0.0, %v1096
  %v1098 = vpop.f32.mrf.mxu0
  %v1099 = vpop.f32.mrf.mxu0
  %v1100 = vadd.f32 0.0, %v1099
  %v1101 = vpop.f32.mrf.mxu0
  %1102 = vmatprep.mubr.bf16.mxu0 0
  %1103 = vmatmul.mubr.bf16.gmra.mxu0 %v1054
  %v1104 = vpop.f32.mrf.mxu0
  %v1105 = vadd.f32 0.0, %v1104
  %v1106 = vpop.f32.mrf.mxu0
  %v1107 = vpop.f32.mrf.mxu0
  %v1108 = vadd.f32 0.0, %v1107
  %v1109 = vpop.f32.mrf.mxu0
  %1110 = vmatprep.mubr.bf16.mxu0 0
  %1111 = vmatmul.mubr.bf16.gmra.mxu0 %v1057
  %v1112 = vpop.f32.mrf.mxu0
  %v1113 = vadd.f32 0.0, %v1112
  %v1114 = vpop.f32.mrf.mxu0
  %v1115 = vpop.f32.mrf.mxu0
  %v1116 = vadd.f32 0.0, %v1115
  %v1117 = vpop.f32.mrf.mxu0
  %1118 = vmatprep.mubr.bf16.mxu0 0
  %1119 = vmatmul.mubr.bf16.gmra.mxu0 %v1060
  %v1120 = vpop.f32.mrf.mxu0
  %v1121 = vadd.f32 0.0, %v1120
  %v1122 = vpop.f32.mrf.mxu0
  %v1123 = vpop.f32.mrf.mxu0
  %v1124 = vadd.f32 0.0, %v1123
  %v1125 = vpop.f32.mrf.mxu0
  %1126 = vdwg.mxu0
  %v1127 = vadd.f32 %v1028, %v1097
  %v1128 = vadd.f32 %v1029, %v1100
  %v1129 = vadd.f32 %v1030, %v1105
  %v1130 = vadd.f32 %v1031, %v1108
  %v1131 = vadd.f32 %v1032, %v1113
  %v1132 = vadd.f32 %v1033, %v1116
  %v1133 = vadd.f32 %v1034, %v1121
  %v1134 = vadd.f32 %v1035, %v1124
  %1135 = vrot.lane.b32.xlu0 %v941, 64
  %v1136 = vpop.permute.xlu0 %1135
  %1137 = vrot.lane.b32.xlu0 %v942, 64
  %v1138 = vpop.permute.xlu0 %1137
  %1139 = vrot.lane.b32.xlu0 %v943, 64
  %v1140 = vpop.permute.xlu0 %1139
  %1141 = vrot.lane.b32.xlu0 %v944, 64
  %v1142 = vpop.permute.xlu0 %1141
  %1143 = vrot.lane.b32.xlu0 %v62, 118
  %v1144 = vpop.permute.xlu0 %1143
  %1145 = vrot.lane.b32.xlu0 %v66, 118
  %v1146 = vpop.permute.xlu0 %1145
  %v1150 = vsel %vm144, %v1136, 0
  %v1153 = vsel %vm144, %v1138, 0
  %v1156 = vsel %vm144, %v1140, 0
  %v1159 = vsel %vm144, %v1142, 0
  %1161 = vmatprep.subr.bf16.mxu0 0
  %1162 = vmatpush1.bf16.msra.mxu0 0
  %1163 = vmatprep.subr.bf16.mxu0 0
  %1164 = vmatpush1.bf16.msra.mxu0 0
  %1165 = vmatprep.subr.bf16.mxu0 0
  %1166 = vmatpush1.bf16.msra.mxu0 0
  %1167 = vmatprep.subr.bf16.mxu0 0
  %1168 = vmatpush1.bf16.msra.mxu0 0
  %1169 = vmatprep.subr.bf16.mxu0 0
  %1170 = vmatpush1.bf16.msra.mxu0 0
  %1171 = vmatprep.subr.bf16.mxu0 0
  %1172 = vmatpush1.bf16.msra.mxu0 0
  %1173 = vmatprep.subr.bf16.mxu0 0
  %1174 = vmatpush1.bf16.msra.mxu0 %v1146
  %1175 = vmatprep.subr.bf16.mxu0 0
  %1176 = vmatpush1.bf16.msra.mxu0 %v1144
  %1177 = vmatprep.subr.bf16.mxu0 0
  %1178 = vmatpush2.bf16.msra.mxu0 0
  %1179 = vmatprep.subr.bf16.mxu0 0
  %1180 = vmatpush2.bf16.msra.mxu0 0
  %1181 = vmatprep.subr.bf16.mxu0 0
  %1182 = vmatpush2.bf16.msra.mxu0 0
  %1183 = vmatprep.subr.bf16.mxu0 0
  %1184 = vmatpush2.bf16.msra.mxu0 0
  %1185 = vmatprep.subr.bf16.mxu0 0
  %1186 = vmatpush2.bf16.msra.mxu0 0
  %1187 = vmatprep.subr.bf16.mxu0 0
  %1188 = vmatpush2.bf16.msra.mxu0 0
  %1189 = vmatprep.subr.bf16.mxu0 0
  %1190 = vmatpush2.bf16.msra.mxu0 0
  %1191 = vmatprep.subr.bf16.mxu0 0
  %1192 = vmatpush2.bf16.msra.mxu0 0
  %1193 = vmatprep.mubr.bf16.mxu0 0
  %1194 = vmatmul.mubr.bf16.gmra.mxu0 %v1150
  %v1195 = vpop.f32.mrf.mxu0
  %v1196 = vadd.f32 0.0, %v1195
  %v1197 = vpop.f32.mrf.mxu0
  %v1198 = vpop.f32.mrf.mxu0
  %v1199 = vadd.f32 0.0, %v1198
  %v1200 = vpop.f32.mrf.mxu0
  %1201 = vmatprep.mubr.bf16.mxu0 0
  %1202 = vmatmul.mubr.bf16.gmra.mxu0 %v1153
  %v1203 = vpop.f32.mrf.mxu0
  %v1204 = vadd.f32 0.0, %v1203
  %v1205 = vpop.f32.mrf.mxu0
  %v1206 = vpop.f32.mrf.mxu0
  %v1207 = vadd.f32 0.0, %v1206
  %v1208 = vpop.f32.mrf.mxu0
  %1209 = vmatprep.mubr.bf16.mxu0 0
  %1210 = vmatmul.mubr.bf16.gmra.mxu0 %v1156
  %v1211 = vpop.f32.mrf.mxu0
  %v1212 = vadd.f32 0.0, %v1211
  %v1213 = vpop.f32.mrf.mxu0
  %v1214 = vpop.f32.mrf.mxu0
  %v1215 = vadd.f32 0.0, %v1214
  %v1216 = vpop.f32.mrf.mxu0
  %1217 = vmatprep.mubr.bf16.mxu0 0
  %1218 = vmatmul.mubr.bf16.gmra.mxu0 %v1159
  %v1219 = vpop.f32.mrf.mxu0
  %v1220 = vadd.f32 0.0, %v1219
  %v1221 = vpop.f32.mrf.mxu0
  %v1222 = vpop.f32.mrf.mxu0
  %v1223 = vadd.f32 0.0, %v1222
  %v1224 = vpop.f32.mrf.mxu0
  %1225 = vdwg.mxu0
  %v1226 = vadd.f32 %v1127, %v1196
  %v1227 = vadd.f32 %v1128, %v1199
  %v1228 = vadd.f32 %v1129, %v1204
  %v1229 = vadd.f32 %v1130, %v1207
  %v1230 = vadd.f32 %v1131, %v1212
  %v1231 = vadd.f32 %v1132, %v1215
  %v1232 = vadd.f32 %v1133, %v1220
  %v1233 = vadd.f32 %v1134, %v1223
  %1234 = vrot.lane.b32.xlu0 %v941, 32
  %v1235 = vpop.permute.xlu0 %1234
  %1236 = vrot.lane.b32.xlu0 %v942, 32
  %v1237 = vpop.permute.xlu0 %1236
  %1238 = vrot.lane.b32.xlu0 %v943, 32
  %v1239 = vpop.permute.xlu0 %1238
  %1240 = vrot.lane.b32.xlu0 %v944, 32
  %v1241 = vpop.permute.xlu0 %1240
  %1242 = vrot.lane.b32.xlu0 %v102, 118
  %v1243 = vpop.permute.xlu0 %1242
  %1244 = vrot.lane.b32.xlu0 %v106, 118
  %v1245 = vpop.permute.xlu0 %1244
  %v1249 = vsel %vm144, %v1235, 0
  %v1252 = vsel %vm144, %v1237, 0
  %v1255 = vsel %vm144, %v1239, 0
  %v1258 = vsel %vm144, %v1241, 0
  %1260 = vmatprep.subr.bf16.mxu0 0
  %1261 = vmatpush1.bf16.msra.mxu0 0
  %1262 = vmatprep.subr.bf16.mxu0 0
  %1263 = vmatpush1.bf16.msra.mxu0 0
  %1264 = vmatprep.subr.bf16.mxu0 0
  %1265 = vmatpush1.bf16.msra.mxu0 0
  %1266 = vmatprep.subr.bf16.mxu0 0
  %1267 = vmatpush1.bf16.msra.mxu0 0
  %1268 = vmatprep.subr.bf16.mxu0 0
  %1269 = vmatpush1.bf16.msra.mxu0 0
  %1270 = vmatprep.subr.bf16.mxu0 0
  %1271 = vmatpush1.bf16.msra.mxu0 0
  %1272 = vmatprep.subr.bf16.mxu0 0
  %1273 = vmatpush1.bf16.msra.mxu0 %v1245
  %1274 = vmatprep.subr.bf16.mxu0 0
  %1275 = vmatpush1.bf16.msra.mxu0 %v1243
  %1276 = vmatprep.subr.bf16.mxu0 0
  %1277 = vmatpush2.bf16.msra.mxu0 0
  %1278 = vmatprep.subr.bf16.mxu0 0
  %1279 = vmatpush2.bf16.msra.mxu0 0
  %1280 = vmatprep.subr.bf16.mxu0 0
  %1281 = vmatpush2.bf16.msra.mxu0 0
  %1282 = vmatprep.subr.bf16.mxu0 0
  %1283 = vmatpush2.bf16.msra.mxu0 0
  %1284 = vmatprep.subr.bf16.mxu0 0
  %1285 = vmatpush2.bf16.msra.mxu0 0
  %1286 = vmatprep.subr.bf16.mxu0 0
  %1287 = vmatpush2.bf16.msra.mxu0 0
  %1288 = vmatprep.subr.bf16.mxu0 0
  %1289 = vmatpush2.bf16.msra.mxu0 0
  %1290 = vmatprep.subr.bf16.mxu0 0
  %1291 = vmatpush2.bf16.msra.mxu0 0
  %1292 = vmatprep.mubr.bf16.mxu0 0
  %1293 = vmatmul.mubr.bf16.gmra.mxu0 %v1249
  %v1294 = vpop.f32.mrf.mxu0
  %v1295 = vadd.f32 0.0, %v1294
  %v1296 = vpop.f32.mrf.mxu0
  %v1297 = vpop.f32.mrf.mxu0
  %v1298 = vadd.f32 0.0, %v1297
  %v1299 = vpop.f32.mrf.mxu0
  %1300 = vmatprep.mubr.bf16.mxu0 0
  %1301 = vmatmul.mubr.bf16.gmra.mxu0 %v1252
  %v1302 = vpop.f32.mrf.mxu0
  %v1303 = vadd.f32 0.0, %v1302
  %v1304 = vpop.f32.mrf.mxu0
  %v1305 = vpop.f32.mrf.mxu0
  %v1306 = vadd.f32 0.0, %v1305
  %v1307 = vpop.f32.mrf.mxu0
  %1308 = vmatprep.mubr.bf16.mxu0 0
  %1309 = vmatmul.mubr.bf16.gmra.mxu0 %v1255
  %v1310 = vpop.f32.mrf.mxu0
  %v1311 = vadd.f32 0.0, %v1310
  %v1312 = vpop.f32.mrf.mxu0
  %v1313 = vpop.f32.mrf.mxu0
  %v1314 = vadd.f32 0.0, %v1313
  %v1315 = vpop.f32.mrf.mxu0
  %1316 = vmatprep.mubr.bf16.mxu0 0
  %1317 = vmatmul.mubr.bf16.gmra.mxu0 %v1258
  %v1318 = vpop.f32.mrf.mxu0
  %v1319 = vadd.f32 0.0, %v1318
  %v1320 = vpop.f32.mrf.mxu0
  %v1321 = vpop.f32.mrf.mxu0
  %v1322 = vadd.f32 0.0, %v1321
  %v1323 = vpop.f32.mrf.mxu0
  %1324 = vdwg.mxu0
  %v1325 = vadd.f32 %v1226, %v1295
  %v1326 = vadd.f32 %v1227, %v1298
  %v1327 = vadd.f32 %v1228, %v1303
  %v1328 = vadd.f32 %v1229, %v1306
  %v1329 = vadd.f32 %v1230, %v1311
  %v1330 = vadd.f32 %v1231, %v1314
  %v1331 = vadd.f32 %v1232, %v1319
  %v1332 = vadd.f32 %v1233, %v1322
  %v1333 = vld [vmem:[%s4 + $0xc] sm:$0xf]
  %v1334 = vld [vmem:[%s4 + $0x1c] sm:$0xf]
  %v1335 = vld [vmem:[%s4 + $0x2c] sm:$0xf]
  %v1336 = vld [vmem:[%s4 + $0x3c] sm:$0xf]
  %v1337 = vld [vmem:[%s4 + $0x4c] sm:$0xf]
  %v1338 = vld [vmem:[%s4 + $0x5c] sm:$0xf]
  %v1339 = vld [vmem:[%s4 + $0x6c] sm:$0xf]
  %v1340 = vld [vmem:[%s4 + $0x7c] sm:$0xf]
  %v1349 = vunpack.c.l.b16 %v1333
  %v1350 = vunpack.c.l.b16 %v1334
  %v1351 = vunpack.c.l.b16 %v1335
  %v1352 = vunpack.c.l.b16 %v1336
  %v1353 = vunpack.c.l.b16 %v1337
  %v1354 = vunpack.c.l.b16 %v1338
  %v1355 = vunpack.c.l.b16 %v1339
  %v1356 = vunpack.c.l.b16 %v1340
  %v1357 = vpack.c.b16 %v1350, %v1349
  %v1358 = vpack.c.b16 %v1352, %v1351
  %v1359 = vpack.c.b16 %v1354, %v1353
  %v1360 = vpack.c.b16 %v1356, %v1355
  %1361 = vrot.lane.b32.xlu0 %v62, 116
  %v1362 = vpop.permute.xlu0 %1361
  %1363 = vrot.lane.b32.xlu0 %v66, 116
  %v1364 = vpop.permute.xlu0 %1363
  %v1368 = vsel %vm144, %v1357, 0
  %v1371 = vsel %vm144, %v1358, 0
  %v1374 = vsel %vm144, %v1359, 0
  %v1377 = vsel %vm144, %v1360, 0
  %1379 = vmatprep.subr.bf16.mxu0 0
  %1380 = vmatpush1.bf16.msra.mxu0 0
  %1381 = vmatprep.subr.bf16.mxu0 0
  %1382 = vmatpush1.bf16.msra.mxu0 0
  %1383 = vmatprep.subr.bf16.mxu0 0
  %1384 = vmatpush1.bf16.msra.mxu0 0
  %1385 = vmatprep.subr.bf16.mxu0 0
  %1386 = vmatpush1.bf16.msra.mxu0 0
  %1387 = vmatprep.subr.bf16.mxu0 0
  %1388 = vmatpush1.bf16.msra.mxu0 0
  %1389 = vmatprep.subr.bf16.mxu0 0
  %1390 = vmatpush1.bf16.msra.mxu0 0
  %1391 = vmatprep.subr.bf16.mxu0 0
  %1392 = vmatpush1.bf16.msra.mxu0 %v1364
  %1393 = vmatprep.subr.bf16.mxu0 0
  %1394 = vmatpush1.bf16.msra.mxu0 %v1362
  %1395 = vmatprep.subr.bf16.mxu0 0
  %1396 = vmatpush2.bf16.msra.mxu0 0
  %1397 = vmatprep.subr.bf16.mxu0 0
  %1398 = vmatpush2.bf16.msra.mxu0 0
  %1399 = vmatprep.subr.bf16.mxu0 0
  %1400 = vmatpush2.bf16.msra.mxu0 0
  %1401 = vmatprep.subr.bf16.mxu0 0
  %1402 = vmatpush2.bf16.msra.mxu0 0
  %1403 = vmatprep.subr.bf16.mxu0 0
  %1404 = vmatpush2.bf16.msra.mxu0 0
  %1405 = vmatprep.subr.bf16.mxu0 0
  %1406 = vmatpush2.bf16.msra.mxu0 0
  %1407 = vmatprep.subr.bf16.mxu0 0
  %1408 = vmatpush2.bf16.msra.mxu0 0
  %1409 = vmatprep.subr.bf16.mxu0 0
  %1410 = vmatpush2.bf16.msra.mxu0 0
  %1411 = vmatprep.mubr.bf16.mxu0 0
  %1412 = vmatmul.mubr.bf16.gmra.mxu0 %v1368
  %v1413 = vpop.f32.mrf.mxu0
  %v1414 = vadd.f32 0.0, %v1413
  %v1415 = vpop.f32.mrf.mxu0
  %v1416 = vpop.f32.mrf.mxu0
  %v1417 = vadd.f32 0.0, %v1416
  %v1418 = vpop.f32.mrf.mxu0
  %1419 = vmatprep.mubr.bf16.mxu0 0
  %1420 = vmatmul.mubr.bf16.gmra.mxu0 %v1371
  %v1421 = vpop.f32.mrf.mxu0
  %v1422 = vadd.f32 0.0, %v1421
  %v1423 = vpop.f32.mrf.mxu0
  %v1424 = vpop.f32.mrf.mxu0
  %v1425 = vadd.f32 0.0, %v1424
  %v1426 = vpop.f32.mrf.mxu0
  %1427 = vmatprep.mubr.bf16.mxu0 0
  %1428 = vmatmul.mubr.bf16.gmra.mxu0 %v1374
  %v1429 = vpop.f32.mrf.mxu0
  %v1430 = vadd.f32 0.0, %v1429
  %v1431 = vpop.f32.mrf.mxu0
  %v1432 = vpop.f32.mrf.mxu0
  %v1433 = vadd.f32 0.0, %v1432
  %v1434 = vpop.f32.mrf.mxu0
  %1435 = vmatprep.mubr.bf16.mxu0 0
  %1436 = vmatmul.mubr.bf16.gmra.mxu0 %v1377
  %v1437 = vpop.f32.mrf.mxu0
  %v1438 = vadd.f32 0.0, %v1437
  %v1439 = vpop.f32.mrf.mxu0
  %v1440 = vpop.f32.mrf.mxu0
  %v1441 = vadd.f32 0.0, %v1440
  %v1442 = vpop.f32.mrf.mxu0
  %1443 = vdwg.mxu0
  %v1444 = vadd.f32 %v1325, %v1414
  %v1445 = vadd.f32 %v1326, %v1417
  %v1446 = vadd.f32 %v1327, %v1422
  %v1447 = vadd.f32 %v1328, %v1425
  %v1448 = vadd.f32 %v1329, %v1430
  %v1449 = vadd.f32 %v1330, %v1433
  %v1450 = vadd.f32 %v1331, %v1438
  %v1451 = vadd.f32 %v1332, %v1441
  %1452 = vrot.lane.b32.xlu0 %v1357, 96
  %v1453 = vpop.permute.xlu0 %1452
  %1454 = vrot.lane.b32.xlu0 %v1358, 96
  %v1455 = vpop.permute.xlu0 %1454
  %1456 = vrot.lane.b32.xlu0 %v1359, 96
  %v1457 = vpop.permute.xlu0 %1456
  %1458 = vrot.lane.b32.xlu0 %v1360, 96
  %v1459 = vpop.permute.xlu0 %1458
  %1460 = vrot.lane.b32.xlu0 %v102, 116
  %v1461 = vpop.permute.xlu0 %1460
  %1462 = vrot.lane.b32.xlu0 %v106, 116
  %v1463 = vpop.permute.xlu0 %1462
  %v1467 = vsel %vm144, %v1453, 0
  %v1470 = vsel %vm144, %v1455, 0
  %v1473 = vsel %vm144, %v1457, 0
  %v1476 = vsel %vm144, %v1459, 0
  %1478 = vmatprep.subr.bf16.mxu0 0
  %1479 = vmatpush1.bf16.msra.mxu0 0
  %1480 = vmatprep.subr.bf16.mxu0 0
  %1481 = vmatpush1.bf16.msra.mxu0 0
  %1482 = vmatprep.subr.bf16.mxu0 0
  %1483 = vmatpush1.bf16.msra.mxu0 0
  %1484 = vmatprep.subr.bf16.mxu0 0
  %1485 = vmatpush1.bf16.msra.mxu0 0
  %1486 = vmatprep.subr.bf16.mxu0 0
  %1487 = vmatpush1.bf16.msra.mxu0 0
  %1488 = vmatprep.subr.bf16.mxu0 0
  %1489 = vmatpush1.bf16.msra.mxu0 0
  %1490 = vmatprep.subr.bf16.mxu0 0
  %1491 = vmatpush1.bf16.msra.mxu0 %v1463
  %1492 = vmatprep.subr.bf16.mxu0 0
  %1493 = vmatpush1.bf16.msra.mxu0 %v1461
  %1494 = vmatprep.subr.bf16.mxu0 0
  %1495 = vmatpush2.bf16.msra.mxu0 0
  %1496 = vmatprep.subr.bf16.mxu0 0
  %1497 = vmatpush2.bf16.msra.mxu0 0
  %1498 = vmatprep.subr.bf16.mxu0 0
  %1499 = vmatpush2.bf16.msra.mxu0 0
  %1500 = vmatprep.subr.bf16.mxu0 0
  %1501 = vmatpush2.bf16.msra.mxu0 0
  %1502 = vmatprep.subr.bf16.mxu0 0
  %1503 = vmatpush2.bf16.msra.mxu0 0
  %1504 = vmatprep.subr.bf16.mxu0 0
  %1505 = vmatpush2.bf16.msra.mxu0 0
  %1506 = vmatprep.subr.bf16.mxu0 0
  %1507 = vmatpush2.bf16.msra.mxu0 0
  %1508 = vmatprep.subr.bf16.mxu0 0
  %1509 = vmatpush2.bf16.msra.mxu0 0
  %1510 = vmatprep.mubr.bf16.mxu0 0
  %1511 = vmatmul.mubr.bf16.gmra.mxu0 %v1467
  %v1512 = vpop.f32.mrf.mxu0
  %v1513 = vadd.f32 0.0, %v1512
  %v1514 = vpop.f32.mrf.mxu0
  %v1515 = vpop.f32.mrf.mxu0
  %v1516 = vadd.f32 0.0, %v1515
  %v1517 = vpop.f32.mrf.mxu0
  %1518 = vmatprep.mubr.bf16.mxu0 0
  %1519 = vmatmul.mubr.bf16.gmra.mxu0 %v1470
  %v1520 = vpop.f32.mrf.mxu0
  %v1521 = vadd.f32 0.0, %v1520
  %v1522 = vpop.f32.mrf.mxu0
  %v1523 = vpop.f32.mrf.mxu0
  %v1524 = vadd.f32 0.0, %v1523
  %v1525 = vpop.f32.mrf.mxu0
  %1526 = vmatprep.mubr.bf16.mxu0 0
  %1527 = vmatmul.mubr.bf16.gmra.mxu0 %v1473
  %v1528 = vpop.f32.mrf.mxu0
  %v1529 = vadd.f32 0.0, %v1528
  %v1530 = vpop.f32.mrf.mxu0
  %v1531 = vpop.f32.mrf.mxu0
  %v1532 = vadd.f32 0.0, %v1531
  %v1533 = vpop.f32.mrf.mxu0
  %1534 = vmatprep.mubr.bf16.mxu0 0
  %1535 = vmatmul.mubr.bf16.gmra.mxu0 %v1476
  %v1536 = vpop.f32.mrf.mxu0
  %v1537 = vadd.f32 0.0, %v1536
  %v1538 = vpop.f32.mrf.mxu0
  %v1539 = vpop.f32.mrf.mxu0
  %v1540 = vadd.f32 0.0, %v1539
  %v1541 = vpop.f32.mrf.mxu0
  %1542 = vdwg.mxu0
  %v1543 = vadd.f32 %v1444, %v1513
  %v1544 = vadd.f32 %v1445, %v1516
  %v1545 = vadd.f32 %v1446, %v1521
  %v1546 = vadd.f32 %v1447, %v1524
  %v1547 = vadd.f32 %v1448, %v1529
  %v1548 = vadd.f32 %v1449, %v1532
  %v1549 = vadd.f32 %v1450, %v1537
  %v1550 = vadd.f32 %v1451, %v1540
  %1551 = vrot.lane.b32.xlu0 %v1357, 64
  %v1552 = vpop.permute.xlu0 %1551
  %1553 = vrot.lane.b32.xlu0 %v1358, 64
  %v1554 = vpop.permute.xlu0 %1553
  %1555 = vrot.lane.b32.xlu0 %v1359, 64
  %v1556 = vpop.permute.xlu0 %1555
  %1557 = vrot.lane.b32.xlu0 %v1360, 64
  %v1558 = vpop.permute.xlu0 %1557
  %1559 = vrot.lane.b32.xlu0 %v62, 114
  %v1560 = vpop.permute.xlu0 %1559
  %1561 = vrot.lane.b32.xlu0 %v66, 114
  %v1562 = vpop.permute.xlu0 %1561
  %v1566 = vsel %vm144, %v1552, 0
  %v1569 = vsel %vm144, %v1554, 0
  %v1572 = vsel %vm144, %v1556, 0
  %v1575 = vsel %vm144, %v1558, 0
  %1577 = vmatprep.subr.bf16.mxu0 0
  %1578 = vmatpush1.bf16.msra.mxu0 0
  %1579 = vmatprep.subr.bf16.mxu0 0
  %1580 = vmatpush1.bf16.msra.mxu0 0
  %1581 = vmatprep.subr.bf16.mxu0 0
  %1582 = vmatpush1.bf16.msra.mxu0 0
  %1583 = vmatprep.subr.bf16.mxu0 0
  %1584 = vmatpush1.bf16.msra.mxu0 0
  %1585 = vmatprep.subr.bf16.mxu0 0
  %1586 = vmatpush1.bf16.msra.mxu0 0
  %1587 = vmatprep.subr.bf16.mxu0 0
  %1588 = vmatpush1.bf16.msra.mxu0 0
  %1589 = vmatprep.subr.bf16.mxu0 0
  %1590 = vmatpush1.bf16.msra.mxu0 %v1562
  %1591 = vmatprep.subr.bf16.mxu0 0
  %1592 = vmatpush1.bf16.msra.mxu0 %v1560
  %1593 = vmatprep.subr.bf16.mxu0 0
  %1594 = vmatpush2.bf16.msra.mxu0 0
  %1595 = vmatprep.subr.bf16.mxu0 0
  %1596 = vmatpush2.bf16.msra.mxu0 0
  %1597 = vmatprep.subr.bf16.mxu0 0
  %1598 = vmatpush2.bf16.msra.mxu0 0
  %1599 = vmatprep.subr.bf16.mxu0 0
  %1600 = vmatpush2.bf16.msra.mxu0 0
  %1601 = vmatprep.subr.bf16.mxu0 0
  %1602 = vmatpush2.bf16.msra.mxu0 0
  %1603 = vmatprep.subr.bf16.mxu0 0
  %1604 = vmatpush2.bf16.msra.mxu0 0
  %1605 = vmatprep.subr.bf16.mxu0 0
  %1606 = vmatpush2.bf16.msra.mxu0 0
  %1607 = vmatprep.subr.bf16.mxu0 0
  %1608 = vmatpush2.bf16.msra.mxu0 0
  %1609 = vmatprep.mubr.bf16.mxu0 0
  %1610 = vmatmul.mubr.bf16.gmra.mxu0 %v1566
  %v1611 = vpop.f32.mrf.mxu0
  %v1612 = vadd.f32 0.0, %v1611
  %v1613 = vpop.f32.mrf.mxu0
  %v1614 = vpop.f32.mrf.mxu0
  %v1615 = vadd.f32 0.0, %v1614
  %v1616 = vpop.f32.mrf.mxu0
  %1617 = vmatprep.mubr.bf16.mxu0 0
  %1618 = vmatmul.mubr.bf16.gmra.mxu0 %v1569
  %v1619 = vpop.f32.mrf.mxu0
  %v1620 = vadd.f32 0.0, %v1619
  %v1621 = vpop.f32.mrf.mxu0
  %v1622 = vpop.f32.mrf.mxu0
  %v1623 = vadd.f32 0.0, %v1622
  %v1624 = vpop.f32.mrf.mxu0
  %1625 = vmatprep.mubr.bf16.mxu0 0
  %1626 = vmatmul.mubr.bf16.gmra.mxu0 %v1572
  %v1627 = vpop.f32.mrf.mxu0
  %v1628 = vadd.f32 0.0, %v1627
  %v1629 = vpop.f32.mrf.mxu0
  %v1630 = vpop.f32.mrf.mxu0
  %v1631 = vadd.f32 0.0, %v1630
  %v1632 = vpop.f32.mrf.mxu0
  %1633 = vmatprep.mubr.bf16.mxu0 0
  %1634 = vmatmul.mubr.bf16.gmra.mxu0 %v1575
  %v1635 = vpop.f32.mrf.mxu0
  %v1636 = vadd.f32 0.0, %v1635
  %v1637 = vpop.f32.mrf.mxu0
  %v1638 = vpop.f32.mrf.mxu0
  %v1639 = vadd.f32 0.0, %v1638
  %v1640 = vpop.f32.mrf.mxu0
  %1641 = vdwg.mxu0
  %v1642 = vadd.f32 %v1543, %v1612
  %v1643 = vadd.f32 %v1544, %v1615
  %v1644 = vadd.f32 %v1545, %v1620
  %v1645 = vadd.f32 %v1546, %v1623
  %v1646 = vadd.f32 %v1547, %v1628
  %v1647 = vadd.f32 %v1548, %v1631
  %v1648 = vadd.f32 %v1549, %v1636
  %v1649 = vadd.f32 %v1550, %v1639
  %v1650 = vld [vmem:[%s5] sm:$0xff]
  %v1651 = vld [vmem:[%s5 + $0x8] sm:$0xff]
  %v1652 = vld [vmem:[%s5 + $0x10] sm:$0xff]
  %v1653 = vld [vmem:[%s5 + $0x18] sm:$0xff]
  %v1654 = vld [vmem:[%s5 + $0x20] sm:$0xff]
  %v1655 = vld [vmem:[%s5 + $0x28] sm:$0xff]
  %v1656 = vld [vmem:[%s5 + $0x30] sm:$0xff]
  %v1657 = vld [vmem:[%s5 + $0x38] sm:$0xff]
  %1659 = vset.pattern.permute.xlu0 0
  %1660 = vperm.xlu0 %1659, %v1650
  %v1661 = vpop.permute.xlu0 %1660
  %1664 = vset.pattern.permute.xlu0 0
  %1665 = vperm.xlu0 %1664, %v1651
  %v1666 = vpop.permute.xlu0 %1665
  %1669 = vset.pattern.permute.xlu0 0
  %1670 = vperm.xlu0 %1669, %v1652
  %v1671 = vpop.permute.xlu0 %1670
  %1674 = vset.pattern.permute.xlu0 0
  %1675 = vperm.xlu0 %1674, %v1653
  %v1676 = vpop.permute.xlu0 %1675
  %1679 = vset.pattern.permute.xlu0 0
  %1680 = vperm.xlu0 %1679, %v1654
  %v1681 = vpop.permute.xlu0 %1680
  %1684 = vset.pattern.permute.xlu0 0
  %1685 = vperm.xlu0 %1684, %v1655
  %v1686 = vpop.permute.xlu0 %1685
  %1689 = vset.pattern.permute.xlu0 0
  %1690 = vperm.xlu0 %1689, %v1656
  %v1691 = vpop.permute.xlu0 %1690
  %1694 = vset.pattern.permute.xlu0 0
  %1695 = vperm.xlu0 %1694, %v1657
  %v1696 = vpop.permute.xlu0 %1695
  %v1698 = vadd.f32 %v1642, %v1661
  %v1699 = vadd.f32 %v1643, %v1666
  %v1700 = vadd.f32 %v1644, %v1671
  %v1701 = vadd.f32 %v1645, %v1676
  %v1702 = vadd.f32 %v1646, %v1681
  %v1703 = vadd.f32 %v1647, %v1686
  %v1704 = vadd.f32 %v1648, %v1691
  %v1705 = vadd.f32 %v1649, %v1696
  %v1706 = vpack.c.bf16 %v1699, %v1698
  %v1707 = vpack.c.bf16 %v1701, %v1700
  %v1708 = vpack.c.bf16 %v1703, %v1702
  %v1709 = vpack.c.bf16 %v1705, %v1704
  %v1714 = vunpack.c.l.b16 %v1706
  %v1715 = vunpack.c.h.b16 %v1706
  %v1716 = vunpack.c.l.b16 %v1707
  %v1717 = vunpack.c.h.b16 %v1707
  %v1718 = vunpack.c.l.b16 %v1708
  %v1719 = vunpack.c.h.b16 %v1708
  %v1720 = vunpack.c.l.b16 %v1709
  %v1721 = vunpack.c.h.b16 %v1709
  %v1722 = vpack.c.b16 %v1714, %v1714
  %v1723 = vpack.c.b16 %v1715, %v1715
  %v1724 = vpack.c.b16 %v1716, %v1716
  %v1725 = vpack.c.b16 %v1717, %v1717
  %v1726 = vpack.c.b16 %v1718, %v1718
  %v1727 = vpack.c.b16 %v1719, %v1719
  %v1728 = vpack.c.b16 %v1720, %v1720
  %v1729 = vpack.c.b16 %v1721, %v1721
  %vm1738 = vcmask 142336
  %1739 = vst.msk [vmem:[%s6] sm:$0xf] %vm1738, %v1722
  %1740 = vst.msk [vmem:[%s6 + $0x4] sm:$0xf] %vm1738, %v1723
  %1741 = vst.msk [vmem:[%s6 + $0x8] sm:$0xf] %vm1738, %v1724
  %1742 = vst.msk [vmem:[%s6 + $0xc] sm:$0xf] %vm1738, %v1725
  %1743 = vst.msk [vmem:[%s6 + $0x10] sm:$0xf] %vm1738, %v1726
  %1744 = vst.msk [vmem:[%s6 + $0x14] sm:$0xf] %vm1738, %v1727
  %1745 = vst.msk [vmem:[%s6 + $0x18] sm:$0xf] %vm1738, %v1728
  %1746 = vst.msk [vmem:[%s6 + $0x1c] sm:$0xf] %vm1738, %v1729
  %p1747 = scmp.eq.s32.totalorder 0, 0
  // Predicated region
  $region26: #{ecg_encoder_forward.15} parent=0 // pred_check
    %p1748 = pneg %p1747
  $region27: #{ecg_encoder_forward.15} parent=0 // pred_check_branch
    %1750 = sbr.rel (%p1748) target = $region29
  $region28: #{ecg_encoder_forward.15} parent=0 // pred_region
    %vm1751 = vcmask 7168
    %1752 = vst.msk [vmem:[#allocation2] sm:$0xff] %vm1751, 0.0
    %1753 = vst.msk [vmem:[#allocation2 + $0x8] sm:$0xff] %vm1751, 0.0
    %1754 = vst.msk [vmem:[#allocation2 + $0x10] sm:$0xff] %vm1751, 0.0
    %1755 = vst.msk [vmem:[#allocation2 + $0x18] sm:$0xff] %vm1751, 0.0
    %1756 = vst.msk [vmem:[#allocation2 + $0x20] sm:$0xff] %vm1751, 0.0
    %1757 = vst.msk [vmem:[#allocation2 + $0x28] sm:$0xff] %vm1751, 0.0
    %1758 = vst.msk [vmem:[#allocation2 + $0x30] sm:$0xff] %vm1751, 0.0
    %1759 = vst.msk [vmem:[#allocation2 + $0x38] sm:$0xff] %vm1751, 0.0
    %1760 = vst.msk [vmem:[#allocation3] sm:$0xff] %vm1751, 0.0
    %1761 = vst.msk [vmem:[#allocation3 + $0x8] sm:$0xff] %vm1751, 0.0
    %1762 = vst.msk [vmem:[#allocation3 + $0x10] sm:$0xff] %vm1751, 0.0
    %1763 = vst.msk [vmem:[#allocation3 + $0x18] sm:$0xff] %vm1751, 0.0
    %1764 = vst.msk [vmem:[#allocation3 + $0x20] sm:$0xff] %vm1751, 0.0
    %1765 = vst.msk [vmem:[#allocation3 + $0x28] sm:$0xff] %vm1751, 0.0
    %1766 = vst.msk [vmem:[#allocation3 + $0x30] sm:$0xff] %vm1751, 0.0
    %1767 = vst.msk [vmem:[#allocation3 + $0x38] sm:$0xff] %vm1751, 0.0
  $region29: #{ecg_encoder_forward.15} parent=0 // pred_fallthru
    _
  %v1768 = vld [vmem:[#allocation2] sm:$0xff]
  %v1769 = vld [vmem:[#allocation2 + $0x8] sm:$0xff]
  %v1770 = vld [vmem:[#allocation2 + $0x10] sm:$0xff]
  %v1771 = vld [vmem:[#allocation2 + $0x18] sm:$0xff]
  %v1772 = vld [vmem:[#allocation2 + $0x20] sm:$0xff]
  %v1773 = vld [vmem:[#allocation2 + $0x28] sm:$0xff]
  %v1774 = vld [vmem:[#allocation2 + $0x30] sm:$0xff]
  %v1775 = vld [vmem:[#allocation2 + $0x38] sm:$0xff]
  %v1776 = vsel %vm59, %v1698, 0.0
  %1777 = vadd.xlane.f32.xlu0 %v1776
  %v1778 = vpop.xlane.xlu0 %1777
  %v1779 = vsel %vm59, %v1699, 0.0
  %1780 = vadd.xlane.f32.xlu0 %v1779
  %v1781 = vpop.xlane.xlu0 %1780
  %v1782 = vsel %vm59, %v1700, 0.0
  %1783 = vadd.xlane.f32.xlu0 %v1782
  %v1784 = vpop.xlane.xlu0 %1783
  %v1785 = vsel %vm59, %v1701, 0.0
  %1786 = vadd.xlane.f32.xlu0 %v1785
  %v1787 = vpop.xlane.xlu0 %1786
  %v1788 = vsel %vm59, %v1702, 0.0
  %1789 = vadd.xlane.f32.xlu0 %v1788
  %v1790 = vpop.xlane.xlu0 %1789
  %v1791 = vsel %vm59, %v1703, 0.0
  %1792 = vadd.xlane.f32.xlu0 %v1791
  %v1793 = vpop.xlane.xlu0 %1792
  %v1794 = vsel %vm59, %v1704, 0.0
  %1795 = vadd.xlane.f32.xlu0 %v1794
  %v1796 = vpop.xlane.xlu0 %1795
  %v1797 = vsel %vm59, %v1705, 0.0
  %1798 = vadd.xlane.f32.xlu0 %v1797
  %v1799 = vpop.xlane.xlu0 %1798
  %v1800 = vadd.f32 %v1768, %v1778
  %v1801 = vadd.f32 %v1769, %v1781
  %v1802 = vadd.f32 %v1770, %v1784
  %v1803 = vadd.f32 %v1771, %v1787
  %v1804 = vadd.f32 %v1772, %v1790
  %v1805 = vadd.f32 %v1773, %v1793
  %v1806 = vadd.f32 %v1774, %v1796
  %v1807 = vadd.f32 %v1775, %v1799
  %vm1808 = vcmask 7168
  %1809 = vst.msk [vmem:[#allocation2] sm:$0xff] %vm1808, %v1800
  %1810 = vst.msk [vmem:[#allocation2 + $0x8] sm:$0xff] %vm1808, %v1801
  %1811 = vst.msk [vmem:[#allocation2 + $0x10] sm:$0xff] %vm1808, %v1802
  %1812 = vst.msk [vmem:[#allocation2 + $0x18] sm:$0xff] %vm1808, %v1803
  %1813 = vst.msk [vmem:[#allocation2 + $0x20] sm:$0xff] %vm1808, %v1804
  %1814 = vst.msk [vmem:[#allocation2 + $0x28] sm:$0xff] %vm1808, %v1805
  %1815 = vst.msk [vmem:[#allocation2 + $0x30] sm:$0xff] %vm1808, %v1806
  %1816 = vst.msk [vmem:[#allocation2 + $0x38] sm:$0xff] %vm1808, %v1807
  %v1817 = vld [vmem:[#allocation3] sm:$0xff]
  %v1818 = vld [vmem:[#allocation3 + $0x8] sm:$0xff]
  %v1819 = vld [vmem:[#allocation3 + $0x10] sm:$0xff]
  %v1820 = vld [vmem:[#allocation3 + $0x18] sm:$0xff]
  %v1821 = vld [vmem:[#allocation3 + $0x20] sm:$0xff]
  %v1822 = vld [vmem:[#allocation3 + $0x28] sm:$0xff]
  %v1823 = vld [vmem:[#allocation3 + $0x30] sm:$0xff]
  %v1824 = vld [vmem:[#allocation3 + $0x38] sm:$0xff]
  %v1825 = vmul.f32 %v1698, %v1698
  %v1826 = vmul.f32 %v1699, %v1699
  %v1827 = vmul.f32 %v1700, %v1700
  %v1828 = vmul.f32 %v1701, %v1701
  %v1829 = vmul.f32 %v1702, %v1702
  %v1830 = vmul.f32 %v1703, %v1703
  %v1831 = vmul.f32 %v1704, %v1704
  %v1832 = vmul.f32 %v1705, %v1705
  %v1833 = vsel %vm59, %v1825, 0.0
  %1834 = vadd.xlane.f32.xlu0 %v1833
  %v1835 = vpop.xlane.xlu0 %1834
  %v1836 = vsel %vm59, %v1826, 0.0
  %1837 = vadd.xlane.f32.xlu0 %v1836
  %v1838 = vpop.xlane.xlu0 %1837
  %v1839 = vsel %vm59, %v1827, 0.0
  %1840 = vadd.xlane.f32.xlu0 %v1839
  %v1841 = vpop.xlane.xlu0 %1840
  %v1842 = vsel %vm59, %v1828, 0.0
  %1843 = vadd.xlane.f32.xlu0 %v1842
  %v1844 = vpop.xlane.xlu0 %1843
  %v1845 = vsel %vm59, %v1829, 0.0
  %1846 = vadd.xlane.f32.xlu0 %v1845
  %v1847 = vpop.xlane.xlu0 %1846
  %v1848 = vsel %vm59, %v1830, 0.0
  %1849 = vadd.xlane.f32.xlu0 %v1848
  %v1850 = vpop.xlane.xlu0 %1849
  %v1851 = vsel %vm59, %v1831, 0.0
  %1852 = vadd.xlane.f32.xlu0 %v1851
  %v1853 = vpop.xlane.xlu0 %1852
  %v1854 = vsel %vm59, %v1832, 0.0
  %1855 = vadd.xlane.f32.xlu0 %v1854
  %v1856 = vpop.xlane.xlu0 %1855
  %v1857 = vadd.f32 %v1817, %v1835
  %v1858 = vadd.f32 %v1818, %v1838
  %v1859 = vadd.f32 %v1819, %v1841
  %v1860 = vadd.f32 %v1820, %v1844
  %v1861 = vadd.f32 %v1821, %v1847
  %v1862 = vadd.f32 %v1822, %v1850
  %v1863 = vadd.f32 %v1823, %v1853
  %v1864 = vadd.f32 %v1824, %v1856
  %1865 = vst.msk [vmem:[#allocation3] sm:$0xff] %vm1808, %v1857
  %1866 = vst.msk [vmem:[#allocation3 + $0x8] sm:$0xff] %vm1808, %v1858
  %1867 = vst.msk [vmem:[#allocation3 + $0x10] sm:$0xff] %vm1808, %v1859
  %1868 = vst.msk [vmem:[#allocation3 + $0x18] sm:$0xff] %vm1808, %v1860
  %1869 = vst.msk [vmem:[#allocation3 + $0x20] sm:$0xff] %vm1808, %v1861
  %1870 = vst.msk [vmem:[#allocation3 + $0x28] sm:$0xff] %vm1808, %v1862
  %1871 = vst.msk [vmem:[#allocation3 + $0x30] sm:$0xff] %vm1808, %v1863
  %1872 = vst.msk [vmem:[#allocation3 + $0x38] sm:$0xff] %vm1808, %v1864
  // Predicated region
  $region30: #{ecg_encoder_forward.15} parent=0 // pred_check
    %p1873 = pneg %p1747
  $region31: #{ecg_encoder_forward.15} parent=0 // pred_check_branch
    %1875 = sbr.rel (%p1873) target = $region33
  $region32: #{ecg_encoder_forward.15} parent=0 // pred_region
    %v1876 = vld [vmem:[#allocation2] sm:$0xff]
    %v1877 = vld [vmem:[#allocation2 + $0x8] sm:$0xff]
    %v1878 = vld [vmem:[#allocation2 + $0x10] sm:$0xff]
    %v1879 = vld [vmem:[#allocation2 + $0x18] sm:$0xff]
    %v1880 = vld [vmem:[#allocation2 + $0x20] sm:$0xff]
    %v1881 = vld [vmem:[#allocation2 + $0x28] sm:$0xff]
    %v1882 = vld [vmem:[#allocation2 + $0x30] sm:$0xff]
    %v1883 = vld [vmem:[#allocation2 + $0x38] sm:$0xff]
    %1884 = vst.msk [vmem:[%s7] sm:$0xff] %vm1808, %v1876
    %1885 = vst.msk [vmem:[%s7 + $0x8] sm:$0xff] %vm1808, %v1877
    %1886 = vst.msk [vmem:[%s7 + $0x10] sm:$0xff] %vm1808, %v1878
    %1887 = vst.msk [vmem:[%s7 + $0x18] sm:$0xff] %vm1808, %v1879
    %1888 = vst.msk [vmem:[%s7 + $0x20] sm:$0xff] %vm1808, %v1880
    %1889 = vst.msk [vmem:[%s7 + $0x28] sm:$0xff] %vm1808, %v1881
    %1890 = vst.msk [vmem:[%s7 + $0x30] sm:$0xff] %vm1808, %v1882
    %1891 = vst.msk [vmem:[%s7 + $0x38] sm:$0xff] %vm1808, %v1883
    %v1892 = vld [vmem:[#allocation3] sm:$0xff]
    %v1893 = vld [vmem:[#allocation3 + $0x8] sm:$0xff]
    %v1894 = vld [vmem:[#allocation3 + $0x10] sm:$0xff]
    %v1895 = vld [vmem:[#allocation3 + $0x18] sm:$0xff]
    %v1896 = vld [vmem:[#allocation3 + $0x20] sm:$0xff]
    %v1897 = vld [vmem:[#allocation3 + $0x28] sm:$0xff]
    %v1898 = vld [vmem:[#allocation3 + $0x30] sm:$0xff]
    %v1899 = vld [vmem:[#allocation3 + $0x38] sm:$0xff]
    %1900 = vst.msk [vmem:[%s8] sm:$0xff] %vm1808, %v1892
    %1901 = vst.msk [vmem:[%s8 + $0x8] sm:$0xff] %vm1808, %v1893
    %1902 = vst.msk [vmem:[%s8 + $0x10] sm:$0xff] %vm1808, %v1894
    %1903 = vst.msk [vmem:[%s8 + $0x18] sm:$0xff] %vm1808, %v1895
    %1904 = vst.msk [vmem:[%s8 + $0x20] sm:$0xff] %vm1808, %v1896
    %1905 = vst.msk [vmem:[%s8 + $0x28] sm:$0xff] %vm1808, %v1897
    %1906 = vst.msk [vmem:[%s8 + $0x30] sm:$0xff] %vm1808, %v1898
    %1907 = vst.msk [vmem:[%s8 + $0x38] sm:$0xff] %vm1808, %v1899
  $region33: #{ecg_encoder_forward.15} parent=0 // pred_fallthru
    _
  // Predicated region
  $region34: #{ecg_encoder_forward.15} parent=0 // pred_check
    _
  $region35: #{ecg_encoder_forward.15} parent=0 // pred_check_branch
    %1909 = sbr.rel (0) target = $region37
  $region36: #{ecg_encoder_forward.15} parent=0 // pred_region
    _
  $region37: #{ecg_encoder_forward.15} parent=0 // pred_fallthru
    _
  // Predicated region
  $region38: #{ecg_encoder_forward.15} parent=0 // pred_check
    _
  $region39: #{ecg_encoder_forward.15} parent=0 // pred_check_branch
    %1911 = sbr.rel (0) target = $region41
  $region40: #{ecg_encoder_forward.15} parent=0 // pred_region
    _
  $region41: #{ecg_encoder_forward.15} parent=0 // pred_fallthru
    _
  // Predicated region
  $region42: #{ecg_encoder_forward.15} parent=0 // pred_check
    _
  $region43: #{ecg_encoder_forward.15} parent=0 // pred_check_branch
    %1913 = sbr.rel (0) target = $region45
  $region44: #{ecg_encoder_forward.15} parent=0 // pred_region
    _
  $region45: #{ecg_encoder_forward.15} parent=0 // pred_fallthru
    _
  // Predicated region
  $region46: #{ecg_encoder_forward.15} parent=0 // pred_check
    _
  $region47: #{ecg_encoder_forward.15} parent=0 // pred_check_branch
    %1915 = sbr.rel (0) target = $region49
  $region48: #{ecg_encoder_forward.15} parent=0 // pred_region
    _
  $region49: #{ecg_encoder_forward.15} parent=0 // pred_fallthru
    _
  // Predicated region
  $region50: #{ecg_encoder_forward.15} parent=0 // pred_check
    _
  $region51: #{ecg_encoder_forward.15} parent=0 // pred_check_branch
    %1917 = sbr.rel (0) target = $region53
  $region52: #{ecg_encoder_forward.15} parent=0 // pred_region
    _
  $region53: #{ecg_encoder_forward.15} parent=0 // pred_fallthru
    _
  // Predicated region
  $region54: #{ecg_encoder_forward.15} parent=0 // pred_check
    _
  $region55: #{ecg_encoder_forward.15} parent=0 // pred_check_branch
    %1919 = sbr.rel (0) target = $region57
  $region56: #{ecg_encoder_forward.15} parent=0 // pred_region
    _
  $region57: #{ecg_encoder_forward.15} parent=0 // pred_fallthru
    _

</llo_original>
